<compile_context>
chip_gen: v5e
topology: v5e:2x2
jax: 0.10.0
libtpu: 0.0.40
codegen_flags: <defaults>
</compile_context>

<pallas_src>
import math
import functools

import jax
import jax.numpy as jnp
from jax import lax
from jax.experimental import pallas as pl
from jax.experimental.pallas import tpu as pltpu


# ----------------------------- in-kernel helpers ------------------------------

def _attend(q_all, k_all, v_all, wo_ref, bo, mask, num_heads, dk):
    """All heads of scaled-dot-product attention + output projection.

    q_all: (Sq, D) — already scaled by 1/sqrt(dk) (folded into W_q).
    k_all, v_all: (Sk, D).
    mask: float {0,1}, broadcastable to (Sq, Sk).
    wo_ref: (H, dk, D) ref — output projection split per head (pre-transposed).
    Returns (Sq, D).
    """
    acc = None
    for h in range(num_heads):
        lo = h * dk
        q = q_all[:, lo:lo + dk]
        k = k_all[:, lo:lo + dk]
        v = v_all[:, lo:lo + dk]
        # scores = q @ k^T without materializing a transpose
        s = lax.dot_general(q, k, (((1,), (1,)), ((), ())),
                            preferred_element_type=jnp.float32)          # (Sq, Sk)
        s = jnp.where(mask != 0.0, s, -1e9)                              # masked_fill
        s = s - jnp.max(s, axis=-1, keepdims=True)
        p = jnp.exp(s)
        p = p * pl.reciprocal(jnp.sum(p, axis=-1, keepdims=True), approx=True)
        oh = jnp.dot(p, v, preferred_element_type=jnp.float32)           # (Sq, dk)
        c = jnp.dot(oh, wo_ref[h], preferred_element_type=jnp.float32)   # (Sq, D)
        acc = c if acc is None else acc + c
    return acc + bo


def _add_ln(x, y, g, b):
    """LayerNorm(x + y) over the last dim, eps = 1e-5 (PyTorch default)."""
    z = x + y
    mu = jnp.mean(z, axis=-1, keepdims=True)
    var = jnp.mean((z - mu) ** 2, axis=-1, keepdims=True)
    return (z - mu) * lax.rsqrt(var + 1e-5) * g + b


def _ffn(x, w1, b1, w2, b2):
    h = jnp.dot(x, w1, preferred_element_type=jnp.float32) + b1
    h = jnp.maximum(h, 0.0)
    return jnp.dot(h, w2, preferred_element_type=jnp.float32) + b2


# ------------------------------- Pallas kernels -------------------------------

def _encoder_layer_kernel(x_ref, mask_ref,
                          wqkv_ref, bqkv_ref, wo_ref, bo_ref,
                          ln1g_ref, ln1b_ref,
                          ffw1_ref, ffb1_ref, ffw2_ref, ffb2_ref,
                          ln2g_ref, ln2b_ref,
                          o_ref, *, num_heads, dk):
    x = x_ref[0]                      # (S, D)
    m = mask_ref[0]                   # (1, S)  key-pad mask
    d = num_heads * dk

    qkv = jnp.dot(x, wqkv_ref[...], preferred_element_type=jnp.float32) + bqkv_ref[...]
    attn = _attend(qkv[:, :d], qkv[:, d:2 * d], qkv[:, 2 * d:3 * d],
                   wo_ref, bo_ref[...], m, num_heads, dk)
    x1 = _add_ln(x, attn, ln1g_ref[...], ln1b_ref[...])
    ff = _ffn(x1, ffw1_ref[...], ffb1_ref[...], ffw2_ref[...], ffb2_ref[...])
    o_ref[0] = _add_ln(x1, ff, ln2g_ref[...], ln2b_ref[...])


def _decoder_layer_kernel(x_ref, enc_ref, tmask_ref, smask_ref,
                          s_wqkv_ref, s_bqkv_ref, s_wo_ref, s_bo_ref,
                          ln1g_ref, ln1b_ref,
                          c_wq_ref, c_bq_ref, c_wkv_ref, c_bkv_ref, c_wo_ref, c_bo_ref,
                          ln2g_ref, ln2b_ref,
                          ffw1_ref, ffb1_ref, ffw2_ref, ffb2_ref,
                          ln3g_ref, ln3b_ref,
                          o_ref, *, num_heads, dk):
    x = x_ref[0]                      # (St, D)
    enc = enc_ref[0]                  # (Ss, D)
    tm = tmask_ref[0]                 # (St, St) causal + pad mask
    sm = smask_ref[0]                 # (1, Ss)  key-pad mask
    d = num_heads * dk

    # masked self-attention
    qkv = jnp.dot(x, s_wqkv_ref[...], preferred_element_type=jnp.float32) + s_bqkv_ref[...]
    attn = _attend(qkv[:, :d], qkv[:, d:2 * d], qkv[:, 2 * d:3 * d],
                   s_wo_ref, s_bo_ref[...], tm, num_heads, dk)
    x = _add_ln(x, attn, ln1g_ref[...], ln1b_ref[...])

    # cross-attention (Q from decoder, K/V from encoder output)
    q = jnp.dot(x, c_wq_ref[...], preferred_element_type=jnp.float32) + c_bq_ref[...]
    kv = jnp.dot(enc, c_wkv_ref[...], preferred_element_type=jnp.float32) + c_bkv_ref[...]
    attn = _attend(q, kv[:, :d], kv[:, d:2 * d],
                   c_wo_ref, c_bo_ref[...], sm, num_heads, dk)
    x = _add_ln(x, attn, ln2g_ref[...], ln2b_ref[...])

    # feed-forward
    ff = _ffn(x, ffw1_ref[...], ffb1_ref[...], ffw2_ref[...], ffb2_ref[...])
    o_ref[0] = _add_ln(x, ff, ln3g_ref[...], ln3b_ref[...])


def _linear_kernel(x_ref, w_ref, b_ref, o_ref):
    # weight is pre-transposed to (K, N): no in-kernel transpose
    o_ref[...] = jnp.dot(x_ref[...], w_ref[...],
                         preferred_element_type=jnp.float32) + b_ref[...]


# ------------------------------- Pallas wrappers -------------------------------

def _rep_spec(a):
    """Full-array block replicated across the batch grid."""
    zeros = (0,) * a.ndim
    return pl.BlockSpec(a.shape, lambda b, _z=zeros: _z)


def encoder_layer_pallas(p, x, src_mask, num_heads):
    B, S, D = x.shape
    dk = D // num_heads
    kern = functools.partial(_encoder_layer_kernel, num_heads=num_heads, dk=dk)
    weights = (p["w_qkv"], p["b_qkv"], p["w_o"], p["b_o"],
               p["ln1_g"], p["ln1_b"],
               p["ff_w1"], p["ff_b1"], p["ff_w2"], p["ff_b2"],
               p["ln2_g"], p["ln2_b"])
    return pl.pallas_call(
        kern,
        out_shape=jax.ShapeDtypeStruct((B, S, D), jnp.float32),
        grid=(B,),
        in_specs=[pl.BlockSpec((1, S, D), lambda b: (b, 0, 0)),
                  pl.BlockSpec((1, 1, S), lambda b: (b, 0, 0))]
                 + [_rep_spec(w) for w in weights],
        out_specs=pl.BlockSpec((1, S, D), lambda b: (b, 0, 0)),
        compiler_params=pltpu.CompilerParams(
            dimension_semantics=("parallel",)),
    )(x, src_mask, *weights)


def decoder_layer_pallas(p, x, enc, src_mask, tgt_mask, num_heads):
    B, St, D = x.shape
    Ss = enc.shape[1]
    dk = D // num_heads
    kern = functools.partial(_decoder_layer_kernel, num_heads=num_heads, dk=dk)
    weights = (p["self_w_qkv"], p["self_b_qkv"], p["self_w_o"], p["self_b_o"],
               p["ln1_g"], p["ln1_b"],
               p["cross_w_q"], p["cross_b_q"], p["cross_w_kv"], p["cross_b_kv"],
               p["cross_w_o"], p["cross_b_o"],
               p["ln2_g"], p["ln2_b"],
               p["ff_w1"], p["ff_b1"], p["ff_w2"], p["ff_b2"],
               p["ln3_g"], p["ln3_b"])
    return pl.pallas_call(
        kern,
        out_shape=jax.ShapeDtypeStruct((B, St, D), jnp.float32),
        grid=(B,),
        in_specs=[pl.BlockSpec((1, St, D), lambda b: (b, 0, 0)),
                  pl.BlockSpec((1, Ss, D), lambda b: (b, 0, 0)),
                  pl.BlockSpec((1, St, St), lambda b: (b, 0, 0)),
                  pl.BlockSpec((1, 1, Ss), lambda b: (b, 0, 0))]
                 + [_rep_spec(w) for w in weights],
        out_specs=pl.BlockSpec((1, St, D), lambda b: (b, 0, 0)),
        compiler_params=pltpu.CompilerParams(
            dimension_semantics=("parallel",)),
    )(x, enc, tgt_mask, src_mask, *weights)


def final_linear_pallas(x2d, w_t, b_row):
    M = x2d.shape[0]
    N = w_t.shape[1]
    return pl.pallas_call(
        _linear_kernel,
        out_shape=jax.ShapeDtypeStruct((M, N), jnp.float32),
    )(x2d, w_t, b_row)


def transformer_forward(kparams, src, tgt, num_heads, tgt_vocab):
    B, Ss = src.shape
    St = tgt.shape[1]

    # compact masks (float {0,1}); no head / query-dim duplication
    src_mask = (src != 0).astype(jnp.float32)[:, None, :]          # (B,1,Ss)
    tgt_pad = (tgt != 0).astype(jnp.float32)[:, :, None]           # (B,St,1)
    nopeak = jnp.tril(jnp.ones((St, St), jnp.float32))             # (St,St)
    tgt_mask = tgt_pad * nopeak[None]                              # (B,St,St)

    pe = kparams["pe"]
    enc = kparams["enc_emb"][src] + pe[:Ss]
    dec = kparams["dec_emb"][tgt] + pe[:St]
    # TODO(synk): dropout (train mode) is not reproduced; eval-mode identity used.

    for lp in kparams["enc_layers"]:
        enc = encoder_layer_pallas(lp, enc, src_mask, num_heads)
    for lp in kparams["dec_layers"]:
        dec = decoder_layer_pallas(lp, dec, enc, src_mask, tgt_mask, num_heads)

    D = dec.shape[-1]
    out = final_linear_pallas(dec.reshape(B * St, D),
                              kparams["fc_w_t"], kparams["fc_b_row"])
    return out[:, :tgt_vocab].reshape(B, St, tgt_vocab)


# ------------------------------ parameter init --------------------------------

class _KeyGen:
    def __init__(self, key):
        self._key = key
        self._i = 0

    def __call__(self):
        self._i += 1
        return jax.random.fold_in(self._key, self._i)


def _init_linear(kg, in_f, out_f):
    bound = 1.0 / math.sqrt(in_f)
    w = jax.random.uniform(kg(), (out_f, in_f), jnp.float32, -bound, bound)
    b = jax.random.uniform(kg(), (out_f,), jnp.float32, -bound, bound)
    return w, b


def _init_mha(kg, d_model):
    p = {}
    for name in ("q", "k", "v", "o"):
        w, b = _init_linear(kg, d_model, d_model)
        p["w" + name] = w
        p["b" + name] = b
    return p


def _init_enc_layer(kg, d_model, d_ff):
    w1, b1 = _init_linear(kg, d_model, d_ff)
    w2, b2 = _init_linear(kg, d_ff, d_model)
    return dict(
        self_attn=_init_mha(kg, d_model),
        ff_w1=w1, ff_b1=b1, ff_w2=w2, ff_b2=b2,
        ln1_g=jnp.ones((d_model,), jnp.float32), ln1_b=jnp.zeros((d_model,), jnp.float32),
        ln2_g=jnp.ones((d_model,), jnp.float32), ln2_b=jnp.zeros((d_model,), jnp.float32),
    )


def _init_dec_layer(kg, d_model, d_ff):
    p = _init_enc_layer(kg, d_model, d_ff)
    p["cross_attn"] = _init_mha(kg, d_model)
    p["ln3_g"] = jnp.ones((d_model,), jnp.float32)
    p["ln3_b"] = jnp.zeros((d_model,), jnp.float32)
    return p


def init_transformer(key, src_vocab, tgt_vocab, d_model, num_layers, d_ff, max_seq):
    kg = _KeyGen(key)
    pos = jnp.arange(max_seq, dtype=jnp.float32)[:, None]
    div = jnp.exp(jnp.arange(0, d_model, 2, dtype=jnp.float32)
                  * (-math.log(10000.0) / d_model))
    pe = jnp.zeros((max_seq, d_model), jnp.float32)
    pe = pe.at[:, 0::2].set(jnp.sin(pos * div))
    pe = pe.at[:, 1::2].set(jnp.cos(pos * div))
    fc_w, fc_b = _init_linear(kg, d_model, tgt_vocab)
    return dict(
        enc_emb=jax.random.normal(kg(), (src_vocab, d_model), jnp.float32),
        dec_emb=jax.random.normal(kg(), (tgt_vocab, d_model), jnp.float32),
        pe=pe,
        enc_layers=[_init_enc_layer(kg, d_model, d_ff) for _ in range(num_layers)],
        dec_layers=[_init_dec_layer(kg, d_model, d_ff) for _ in range(num_layers)],
        fc_w=fc_w, fc_b=fc_b,
    )


def prepare_params(params, num_heads):
    """Re-layout raw (PyTorch-convention) params for the fused Pallas kernels.

    - weights pre-transposed to (in, out)
    - Q/K/V concatenated into one (D, 3D) weight (K/V into (D, 2D) for cross)
    - 1/sqrt(d_k) folded into W_q / b_q
    - W_o split per head as (H, d_k, D)
    - biases / LN params as (1, N) row vectors
    - vocab head padded to a 128-lane-dense output
    """
    d_model = params["enc_emb"].shape[1]
    dk = d_model // num_heads
    scale = 1.0 / math.sqrt(dk)

    def row(v):
        return v.reshape(1, -1).astype(jnp.float32)

    def mha_self(p):
        w_qkv = jnp.concatenate([p["wq"].T * scale, p["wk"].T, p["wv"].T], axis=1)
        b_qkv = jnp.concatenate([p["bq"] * scale, p["bk"], p["bv"]]).reshape(1, -1)
        return dict(w_qkv=w_qkv, b_qkv=b_qkv,
                    w_o=p["wo"].T.reshape(num_heads, dk, d_model),
                    b_o=row(p["bo"]))

    def mha_cross(p):
        w_kv = jnp.concatenate([p["wk"].T, p["wv"].T], axis=1)
        b_kv = jnp.concatenate([p["bk"], p["bv"]]).reshape(1, -1)
        return dict(w_q=p["wq"].T * scale, b_q=row(p["bq"] * scale),
                    w_kv=w_kv, b_kv=b_kv,
                    w_o=p["wo"].T.reshape(num_heads, dk, d_model),
                    b_o=row(p["bo"]))

    def ffn(p):
        return dict(ff_w1=p["ff_w1"].T, ff_b1=row(p["ff_b1"]),
                    ff_w2=p["ff_w2"].T, ff_b2=row(p["ff_b2"]))

    enc_layers = []
    for lp in params["enc_layers"]:
        sa = mha_self(lp["self_attn"])
        enc_layers.append(dict(
            w_qkv=sa["w_qkv"], b_qkv=sa["b_qkv"], w_o=sa["w_o"], b_o=sa["b_o"],
            ln1_g=row(lp["ln1_g"]), ln1_b=row(lp["ln1_b"]),
            ln2_g=row(lp["ln2_g"]), ln2_b=row(lp["ln2_b"]),
            **ffn(lp)))

    dec_layers = []
    for lp in params["dec_layers"]:
        sa = mha_self(lp["self_attn"])
        ca = mha_cross(lp["cross_attn"])
        dec_layers.append(dict(
            self_w_qkv=sa["w_qkv"], self_b_qkv=sa["b_qkv"],
            self_w_o=sa["w_o"], self_b_o=sa["b_o"],
            cross_w_q=ca["w_q"], cross_b_q=ca["b_q"],
            cross_w_kv=ca["w_kv"], cross_b_kv=ca["b_kv"],
            cross_w_o=ca["w_o"], cross_b_o=ca["b_o"],
            ln1_g=row(lp["ln1_g"]), ln1_b=row(lp["ln1_b"]),
            ln2_g=row(lp["ln2_g"]), ln2_b=row(lp["ln2_b"]),
            ln3_g=row(lp["ln3_g"]), ln3_b=row(lp["ln3_b"]),
            **ffn(lp)))

    # lane-dense (multiple-of-128) vocabulary head: pad N, slice back outside
    tgt_vocab = params["fc_w"].shape[0]
    n_pad = 128 * pl.cdiv(tgt_vocab, 128)
    fc_w_t = jnp.zeros((d_model, n_pad), jnp.float32).at[:, :tgt_vocab].set(params["fc_w"].T)
    fc_b_row = jnp.zeros((1, n_pad), jnp.float32).at[0, :tgt_vocab].set(params["fc_b"])

    return dict(enc_emb=params["enc_emb"], dec_emb=params["dec_emb"], pe=params["pe"],
                enc_layers=enc_layers, dec_layers=dec_layers,
                fc_w_t=fc_w_t, fc_b_row=fc_b_row)


# ------------------------- pure-JAX reference (for check) ----------------------

def _ref_linear(x, w, b):
    return x @ w.T + b


def _ref_ln(x, g, b):
    mu = x.mean(-1, keepdims=True)
    var = ((x - mu) ** 2).mean(-1, keepdims=True)
    return (x - mu) / jnp.sqrt(var + 1e-5) * g + b


def _ref_mha(p, q_in, k_in, v_in, mask, H):
    B, Sq, D = q_in.shape
    Sk = k_in.shape[1]
    dk = D // H

    def proj(x, w, b, S):
        return _ref_linear(x, w, b).reshape(B, S, H, dk).transpose(0, 2, 1, 3)

    Q = proj(q_in, p["wq"], p["bq"], Sq)
    K = proj(k_in, p["wk"], p["bk"], Sk)
    V = proj(v_in, p["wv"], p["bv"], Sk)
    s = jnp.einsum("bhqd,bhkd->bhqk", Q, K) / math.sqrt(dk)
    s = jnp.where(jnp.broadcast_to(mask, s.shape), s, -1e9)
    pr = jax.nn.softmax(s, axis=-1)
    o = jnp.einsum("bhqk,bhkd->bhqd", pr, V).transpose(0, 2, 1, 3).reshape(B, Sq, D)
    return _ref_linear(o, p["wo"], p["bo"])


def _ref_forward(params, src, tgt, H):
    B, Ss = src.shape
    St = tgt.shape[1]
    src_mask = (src != 0)[:, None, None, :]
    tgt_mask = (tgt != 0)[:, None, :, None] & jnp.tril(jnp.ones((St, St), bool))[None, None]
    pe = params["pe"]
    enc = params["enc_emb"][src] + pe[:Ss]
    for lp in params["enc_layers"]:
        a = _ref_mha(lp["self_attn"], enc, enc, enc, src_mask, H)
        enc = _ref_ln(enc + a, lp["ln1_g"], lp["ln1_b"])
        f = _ref_linear(jnp.maximum(_ref_linear(enc, lp["ff_w1"], lp["ff_b1"]), 0.0),
                        lp["ff_w2"], lp["ff_b2"])
        enc = _ref_ln(enc + f, lp["ln2_g"], lp["ln2_b"])
    dec = params["dec_emb"][tgt] + pe[:St]
    for lp in params["dec_layers"]:
        a = _ref_mha(lp["self_attn"], dec, dec, dec, tgt_mask, H)
        dec = _ref_ln(dec + a, lp["ln1_g"], lp["ln1_b"])
        a = _ref_mha(lp["cross_attn"], dec, enc, enc, src_mask, H)
        dec = _ref_ln(dec + a, lp["ln2_g"], lp["ln2_b"])
        f = _ref_linear(jnp.maximum(_ref_linear(dec, lp["ff_w1"], lp["ff_b1"]), 0.0),
                        lp["ff_w2"], lp["ff_b2"])
        dec = _ref_ln(dec + f, lp["ln3_g"], lp["ln3_b"])
    return _ref_linear(dec, params["fc_w"], params["fc_b"])


# ------------------------------------ main -------------------------------------

if __name__ == "__main__":
    SRC_VOCAB = 16
    TGT_VOCAB = 16
    D_MODEL = 32
    NUM_HEADS = 4
    NUM_LAYERS = 2
    D_FF = 64
    MAX_SEQ = 16
    B, S = 2, 8

    root = jax.random.PRNGKey(0)
    k_params, k_src, k_tgt = jax.random.split(root, 3)

    raw_params = init_transformer(k_params, SRC_VOCAB, TGT_VOCAB,
                                  D_MODEL, NUM_LAYERS, D_FF, MAX_SEQ)
    kparams = prepare_params(raw_params, NUM_HEADS)

    # include a few 0 tokens so the padding-mask path is exercised
    src = jax.random.randint(k_src, (B, S), 0, SRC_VOCAB, dtype=jnp.int32)
    tgt = jax.random.randint(k_tgt, (B, S), 0, TGT_VOCAB, dtype=jnp.int32)

    fwd = jax.jit(functools.partial(transformer_forward,
                                    num_heads=NUM_HEADS, tgt_vocab=TGT_VOCAB))
    out = jax.block_until_ready(fwd(kparams, src, tgt))

    ref = _ref_forward(raw_params, src, tgt, NUM_HEADS)
    assert out.shape == (B, S, TGT_VOCAB), out.shape
    max_err = float(jnp.max(jnp.abs(out - ref)))
    # 5e-3 headroom for the EUP approx-reciprocal softmax; f32 everywhere else.
    assert jnp.allclose(out, ref, atol=5e-3, rtol=5e-3), max_err

    print("KERNEL_OK")
</pallas_src>

<mosaic_0001>
module attributes {stable_mosaic.version = 11 : i64} {
  func.func @_linear_kernel(%arg0: memref<16x32xf32, #tpu.memory_space<vmem>>, %arg1: memref<32x128xf32, #tpu.memory_space<vmem>>, %arg2: memref<1x128xf32, #tpu.memory_space<vmem>>, %arg3: memref<16x128xf32, #tpu.memory_space<vmem>>) attributes {dimension_semantics = [], scalar_prefetch = 0 : i64, scratch_operands = 0 : i64, tpu.core_type = #tpu.core_type<tc>} {
    %c0 = arith.constant 0 : index
    %c0_0 = arith.constant 0 : index
    %0 = vector.load %arg0[%c0, %c0_0] : memref<16x32xf32, #tpu.memory_space<vmem>>, vector<16x32xf32>
    %c0_1 = arith.constant 0 : index
    %c0_2 = arith.constant 0 : index
    %1 = vector.load %arg1[%c0_1, %c0_2] : memref<32x128xf32, #tpu.memory_space<vmem>>, vector<32x128xf32>
    %cst = arith.constant dense<0.000000e+00> : vector<16x128xf32>
    %2 = tpu.matmul %0, %1, %cst {dimension_numbers = #tpu.dot_dimension_numbers<[1], [0], [0], [1], [0, 0, 1, 1], [], []>} : vector<16x32xf32>, vector<32x128xf32>, vector<16x128xf32> -> vector<16x128xf32>
    %c0_3 = arith.constant 0 : index
    %c0_4 = arith.constant 0 : index
    %3 = vector.load %arg2[%c0_3, %c0_4] : memref<1x128xf32, #tpu.memory_space<vmem>>, vector<1x128xf32>
    %4 = vector.broadcast %3 : vector<1x128xf32> to vector<16x128xf32>
    %5 = arith.addf %2, %4 : vector<16x128xf32>
    %c0_5 = arith.constant 0 : index
    %c0_6 = arith.constant 0 : index
    %6 = vector.load %arg3[%c0_5, %c0_6] : memref<16x128xf32, #tpu.memory_space<vmem>>, vector<16x128xf32>
    tpu.vector_store %arg3[%c0_5, %c0_6], %5 {strides = array<i32>} : memref<16x128xf32, #tpu.memory_space<vmem>>, vector<16x128xf32>,
    return
  }
}

module attributes {stable_mosaic.version = 11 : i64} {
  func.func @_encoder_layer_kernel(%arg0: i32, %arg1: memref<1x8x32xf32, #tpu.memory_space<vmem>>, %arg2: memref<1x1x8xf32, #tpu.memory_space<vmem>>, %arg3: memref<32x96xf32, #tpu.memory_space<vmem>>, %arg4: memref<1x96xf32, #tpu.memory_space<vmem>>, %arg5: memref<4x8x32xf32, #tpu.memory_space<vmem>>, %arg6: memref<1x32xf32, #tpu.memory_space<vmem>>, %arg7: memref<1x32xf32, #tpu.memory_space<vmem>>, %arg8: memref<1x32xf32, #tpu.memory_space<vmem>>, %arg9: memref<32x64xf32, #tpu.memory_space<vmem>>, %arg10: memref<1x64xf32, #tpu.memory_space<vmem>>, %arg11: memref<64x32xf32, #tpu.memory_space<vmem>>, %arg12: memref<1x32xf32, #tpu.memory_space<vmem>>, %arg13: memref<1x32xf32, #tpu.memory_space<vmem>>, %arg14: memref<1x32xf32, #tpu.memory_space<vmem>>, %arg15: memref<1x8x32xf32, #tpu.memory_space<vmem>>) attributes {dimension_semantics = [#tpu.dimension_semantics<parallel>], iteration_bounds = array<i64: 2>, scalar_prefetch = 0 : i64, scratch_operands = 0 : i64, tpu.core_type = #tpu.core_type<tc>, window_params = [{transform_indices = @transform_0, window_bounds = array<i64: 1, 8, 32>}, {transform_indices = @transform_1, window_bounds = array<i64: 1, 1, 8>}, {pipeline_mode = #tpu.pipeline_mode<synchronous>, transform_indices = @transform_2, window_bounds = array<i64: 32, 96>}, {pipeline_mode = #tpu.pipeline_mode<synchronous>, transform_indices = @transform_3, window_bounds = array<i64: 1, 96>}, {pipeline_mode = #tpu.pipeline_mode<synchronous>, transform_indices = @transform_4, window_bounds = array<i64: 4, 8, 32>}, {pipeline_mode = #tpu.pipeline_mode<synchronous>, transform_indices = @transform_5, window_bounds = array<i64: 1, 32>}, {pipeline_mode = #tpu.pipeline_mode<synchronous>, transform_indices = @transform_6, window_bounds = array<i64: 1, 32>}, {pipeline_mode = #tpu.pipeline_mode<synchronous>, transform_indices = @transform_7, window_bounds = array<i64: 1, 32>}, {pipeline_mode = #tpu.pipeline_mode<synchronous>, transform_indices = @transform_8, window_bounds = array<i64: 32, 64>}, {pipeline_mode = #tpu.pipeline_mode<synchronous>, transform_indices = @transform_9, window_bounds = array<i64: 1, 64>}, {pipeline_mode = #tpu.pipeline_mode<synchronous>, transform_indices = @transform_10, window_bounds = array<i64: 64, 32>}, {pipeline_mode = #tpu.pipeline_mode<synchronous>, transform_indices = @transform_11, window_bounds = array<i64: 1, 32>}, {pipeline_mode = #tpu.pipeline_mode<synchronous>, transform_indices = @transform_12, window_bounds = array<i64: 1, 32>}, {pipeline_mode = #tpu.pipeline_mode<synchronous>, transform_indices = @transform_13, window_bounds = array<i64: 1, 32>}, {transform_indices = @transform_14, window_bounds = array<i64: 1, 8, 32>}]} {
    %c0 = arith.constant 0 : index
    %c0_0 = arith.constant 0 : index
    %c0_1 = arith.constant 0 : index
    %0 = vector.load %arg1[%c0, %c0_0, %c0_1] : memref<1x8x32xf32, #tpu.memory_space<vmem>>, vector<1x8x32xf32>
    %1 = vector.shape_cast %0 : vector<1x8x32xf32> to vector<8x32xf32>
    %c0_2 = arith.constant 0 : index
    %c0_3 = arith.constant 0 : index
    %c0_4 = arith.constant 0 : index
    %2 = vector.load %arg2[%c0_2, %c0_3, %c0_4] : memref<1x1x8xf32, #tpu.memory_space<vmem>>, vector<1x1x8xf32>
    %3 = vector.shape_cast %2 : vector<1x1x8xf32> to vector<1x8xf32>
    %c0_5 = arith.constant 0 : index
    %c0_6 = arith.constant 0 : index
    %4 = vector.load %arg3[%c0_5, %c0_6] : memref<32x96xf32, #tpu.memory_space<vmem>>, vector<32x96xf32>
    %cst = arith.constant dense<0.000000e+00> : vector<8x96xf32>
    %5 = tpu.matmul %1, %4, %cst {dimension_numbers = #tpu.dot_dimension_numbers<[1], [0], [0], [1], [0, 0, 1, 1], [], []>} : vector<8x32xf32>, vector<32x96xf32>, vector<8x96xf32> -> vector<8x96xf32>
    %c0_7 = arith.constant 0 : index
    %c0_8 = arith.constant 0 : index
    %6 = vector.load %arg4[%c0_7, %c0_8] : memref<1x96xf32, #tpu.memory_space<vmem>>, vector<1x96xf32>
    %7 = vector.broadcast %6 : vector<1x96xf32> to vector<8x96xf32>
    %8 = arith.addf %5, %7 : vector<8x96xf32>
    %9 = vector.extract_strided_slice %8 {offsets = [0, 0], sizes = [8, 32], strides = [1, 1]} : vector<8x96xf32> to vector<8x32xf32>
    %10 = vector.extract_strided_slice %8 {offsets = [0, 32], sizes = [8, 32], strides = [1, 1]} : vector<8x96xf32> to vector<8x32xf32>
    %11 = vector.extract_strided_slice %8 {offsets = [0, 64], sizes = [8, 32], strides = [1, 1]} : vector<8x96xf32> to vector<8x32xf32>
    %c0_9 = arith.constant 0 : index
    %c0_10 = arith.constant 0 : index
    %12 = vector.load %arg6[%c0_9, %c0_10] : memref<1x32xf32, #tpu.memory_space<vmem>>, vector<1x32xf32>
    %13 = vector.extract_strided_slice %9 {offsets = [0, 0], sizes = [8, 8], strides = [1, 1]} : vector<8x32xf32> to vector<8x8xf32>
    %14 = vector.extract_strided_slice %10 {offsets = [0, 0], sizes = [8, 8], strides = [1, 1]} : vector<8x32xf32> to vector<8x8xf32>
    %15 = vector.extract_strided_slice %11 {offsets = [0, 0], sizes = [8, 8], strides = [1, 1]} : vector<8x32xf32> to vector<8x8xf32>
    %cst_11 = arith.constant dense<0.000000e+00> : vector<8x8xf32>
    %16 = tpu.matmul %13, %14, %cst_11 {dimension_numbers = #tpu.dot_dimension_numbers<[1], [1], [0], [0], [0, 0, 1, 0], [], []>} : vector<8x8xf32>, vector<8x8xf32>, vector<8x8xf32> -> vector<8x8xf32>
    %cst_12 = arith.constant 0.000000e+00 : f32
    %17 = vector.broadcast %cst_12 : f32 to vector<1x8xf32>
    %18 = arith.cmpf one, %3, %17 : vector<1x8xf32>
    %cst_13 = arith.constant -1.000000e+09 : f32
    %19 = vector.shape_cast %18 : vector<1x8xi1> to vector<1x8xi1>
    %20 = vector.broadcast %19 : vector<1x8xi1> to vector<8x8xi1>
    %21 = vector.broadcast %cst_13 : f32 to vector<8x8xf32>
    %22 = arith.select %20, %16, %21 : vector<8x8xi1>, vector<8x8xf32>
    %cst_14 = arith.constant dense<0xFF800000> : vector<8xf32>
    %23 = vector.multi_reduction <maximumf>, %22, %cst_14 [1] : vector<8x8xf32> to vector<8xf32>
    %24 = vector.shape_cast %23 : vector<8xf32> to vector<8x1xf32>
    %25 = vector.broadcast %24 : vector<8x1xf32> to vector<8x8xf32>
    %26 = arith.subf %22, %25 : vector<8x8xf32>
    %27 = math.exp %26 : vector<8x8xf32>
    %cst_15 = arith.constant dense<0.000000e+00> : vector<8xf32>
    %28 = vector.multi_reduction <add>, %27, %cst_15 [1] : vector<8x8xf32> to vector<8xf32>
    %29 = vector.shape_cast %28 : vector<8xf32> to vector<8x1xf32>
    %30 = tpu.reciprocal %29 {approx = true} : vector<8x1xf32> -> vector<8x1xf32>
    %31 = vector.broadcast %30 : vector<8x1xf32> to vector<8x8xf32>
    %32 = arith.mulf %27, %31 : vector<8x8xf32>
    %cst_16 = arith.constant dense<0.000000e+00> : vector<8x8xf32>
    %33 = tpu.matmul %32, %15, %cst_16 {dimension_numbers = #tpu.dot_dimension_numbers<[1], [0], [0], [1], [0, 0, 1, 1], [], []>} : vector<8x8xf32>, vector<8x8xf32>, vector<8x8xf32> -> vector<8x8xf32>
    %c0_17 = arith.constant 0 : index
    %c0_18 = arith.constant 0 : index
    %c0_19 = arith.constant 0 : index
    %34 = vector.load %arg5[%c0_17, %c0_18, %c0_19] : memref<4x8x32xf32, #tpu.memory_space<vmem>>, vector<1x8x32xf32>
    %35 = vector.shape_cast %34 : vector<1x8x32xf32> to vector<8x32xf32>
    %cst_20 = arith.constant dense<0.000000e+00> : vector<8x32xf32>
    %36 = tpu.matmul %33, %35, %cst_20 {dimension_numbers = #tpu.dot_dimension_numbers<[1], [0], [0], [1], [0, 0, 1, 1], [], []>} : vector<8x8xf32>, vector<8x32xf32>, vector<8x32xf32> -> vector<8x32xf32>
    %37 = vector.extract_strided_slice %9 {offsets = [0, 8], sizes = [8, 8], strides = [1, 1]} : vector<8x32xf32> to vector<8x8xf32>
    %38 = vector.extract_strided_slice %10 {offsets = [0, 8], sizes = [8, 8], strides = [1, 1]} : vector<8x32xf32> to vector<8x8xf32>
    %39 = vector.extract_strided_slice %11 {offsets = [0, 8], sizes = [8, 8], strides = [1, 1]} : vector<8x32xf32> to vector<8x8xf32>
    %cst_21 = arith.constant dense<0.000000e+00> : vector<8x8xf32>
    %40 = tpu.matmul %37, %38, %cst_21 {dimension_numbers = #tpu.dot_dimension_numbers<[1], [1], [0], [0], [0, 0, 1, 0], [], []>} : vector<8x8xf32>, vector<8x8xf32>, vector<8x8xf32> -> vector<8x8xf32>
    %cst_22 = arith.constant 0.000000e+00 : f32
    %41 = vector.broadcast %cst_22 : f32 to vector<1x8xf32>
    %42 = arith.cmpf one, %3, %41 : vector<1x8xf32>
    %cst_23 = arith.constant -1.000000e+09 : f32
    %43 = vector.shape_cast %42 : vector<1x8xi1> to vector<1x8xi1>
    %44 = vector.broadcast %43 : vector<1x8xi1> to vector<8x8xi1>
    %45 = vector.broadcast %cst_23 : f32 to vector<8x8xf32>
    %46 = arith.select %44, %40, %45 : vector<8x8xi1>, vector<8x8xf32>
    %cst_24 = arith.constant dense<0xFF800000> : vector<8xf32>
    %47 = vector.multi_reduction <maximumf>, %46, %cst_24 [1] : vector<8x8xf32> to vector<8xf32>
    %48 = vector.shape_cast %47 : vector<8xf32> to vector<8x1xf32>
    %49 = vector.broadcast %48 : vector<8x1xf32> to vector<8x8xf32>
    %50 = arith.subf %46, %49 : vector<8x8xf32>
    %51 = math.exp %50 : vector<8x8xf32>
    %cst_25 = arith.constant dense<0.000000e+00> : vector<8xf32>
    %52 = vector.multi_reduction <add>, %51, %cst_25 [1] : vector<8x8xf32> to vector<8xf32>
    %53 = vector.shape_cast %52 : vector<8xf32> to vector<8x1xf32>
    %54 = tpu.reciprocal %53 {approx = true} : vector<8x1xf32> -> vector<8x1xf32>
    %55 = vector.broadcast %54 : vector<8x1xf32> to vector<8x8xf32>
    %56 = arith.mulf %51, %55 : vector<8x8xf32>
    %cst_26 = arith.constant dense<0.000000e+00> : vector<8x8xf32>
    %57 = tpu.matmul %56, %39, %cst_26 {dimension_numbers = #tpu.dot_dimension_numbers<[1], [0], [0], [1], [0, 0, 1, 1], [], []>} : vector<8x8xf32>, vector<8x8xf32>, vector<8x8xf32> -> vector<8x8xf32>
    %c1 = arith.constant 1 : index
    %c0_27 = arith.constant 0 : index
    %c0_28 = arith.constant 0 : index
    %58 = vector.load %arg5[%c1, %c0_27, %c0_28] : memref<4x8x32xf32, #tpu.memory_space<vmem>>, vector<1x8x32xf32>
    %59 = vector.shape_cast %58 : vector<1x8x32xf32> to vector<8x32xf32>
    %cst_29 = arith.constant dense<0.000000e+00> : vector<8x32xf32>
    %60 = tpu.matmul %57, %59, %cst_29 {dimension_numbers = #tpu.dot_dimension_numbers<[1], [0], [0], [1], [0, 0, 1, 1], [], []>} : vector<8x8xf32>, vector<8x32xf32>, vector<8x32xf32> -> vector<8x32xf32>
    %61 = arith.addf %36, %60 : vector<8x32xf32>
    %62 = vector.extract_strided_slice %9 {offsets = [0, 16], sizes = [8, 8], strides = [1, 1]} : vector<8x32xf32> to vector<8x8xf32>
    %63 = vector.extract_strided_slice %10 {offsets = [0, 16], sizes = [8, 8], strides = [1, 1]} : vector<8x32xf32> to vector<8x8xf32>
    %64 = vector.extract_strided_slice %11 {offsets = [0, 16], sizes = [8, 8], strides = [1, 1]} : vector<8x32xf32> to vector<8x8xf32>
    %cst_30 = arith.constant dense<0.000000e+00> : vector<8x8xf32>
    %65 = tpu.matmul %62, %63, %cst_30 {dimension_numbers = #tpu.dot_dimension_numbers<[1], [1], [0], [0], [0, 0, 1, 0], [], []>} : vector<8x8xf32>, vector<8x8xf32>, vector<8x8xf32> -> vector<8x8xf32>
    %cst_31 = arith.constant 0.000000e+00 : f32
    %66 = vector.broadcast %cst_31 : f32 to vector<1x8xf32>
    %67 = arith.cmpf one, %3, %66 : vector<1x8xf32>
    %cst_32 = arith.constant -1.000000e+09 : f32
    %68 = vector.shape_cast %67 : vector<1x8xi1> to vector<1x8xi1>
    %69 = vector.broadcast %68 : vector<1x8xi1> to vector<8x8xi1>
    %70 = vector.broadcast %cst_32 : f32 to vector<8x8xf32>
    %71 = arith.select %69, %65, %70 : vector<8x8xi1>, vector<8x8xf32>
    %cst_33 = arith.constant dense<0xFF800000> : vector<8xf32>
    %72 = vector.multi_reduction <maximumf>, %71, %cst_33 [1] : vector<8x8xf32> to vector<8xf32>
    %73 = vector.shape_cast %72 : vector<8xf32> to vector<8x1xf32>
    %74 = vector.broadcast %73 : vector<8x1xf32> to vector<8x8xf32>
    %75 = arith.subf %71, %74 : vector<8x8xf32>
    %76 = math.exp %75 : vector<8x8xf32>
    %cst_34 = arith.constant dense<0.000000e+00> : vector<8xf32>
    %77 = vector.multi_reduction <add>, %76, %cst_34 [1] : vector<8x8xf32> to vector<8xf32>
    %78 = vector.shape_cast %77 : vector<8xf32> to vector<8x1xf32>
    %79 = tpu.reciprocal %78 {approx = true} : vector<8x1xf32> -> vector<8x1xf32>
    %80 = vector.broadcast %79 : vector<8x1xf32> to vector<8x8xf32>
    %81 = arith.mulf %76, %80 : vector<8x8xf32>
    %cst_35 = arith.constant dense<0.000000e+00> : vector<8x8xf32>
    %82 = tpu.matmul %81, %64, %cst_35 {dimension_numbers = #tpu.dot_dimension_numbers<[1], [0], [0], [1], [0, 0, 1, 1], [], []>} : vector<8x8xf32>, vector<8x8xf32>, vector<8x8xf32> -> vector<8x8xf32>
    %c2 = arith.constant 2 : index
    %c0_36 = arith.constant 0 : index
    %c0_37 = arith.constant 0 : index
    %83 = vector.load %arg5[%c2, %c0_36, %c0_37] : memref<4x8x32xf32, #tpu.memory_space<vmem>>, vector<1x8x32xf32>
    %84 = vector.shape_cast %83 : vector<1x8x32xf32> to vector<8x32xf32>
    %cst_38 = arith.constant dense<0.000000e+00> : vector<8x32xf32>
    %85 = tpu.matmul %82, %84, %cst_38 {dimension_numbers = #tpu.dot_dimension_numbers<[1], [0], [0], [1], [0, 0, 1, 1], [], []>} : vector<8x8xf32>, vector<8x32xf32>, vector<8x32xf32> -> vector<8x32xf32>
    %86 = arith.addf %61, %85 : vector<8x32xf32>
    %87 = vector.extract_strided_slice %9 {offsets = [0, 24], sizes = [8, 8], strides = [1, 1]} : vector<8x32xf32> to vector<8x8xf32>
    %88 = vector.extract_strided_slice %10 {offsets = [0, 24], sizes = [8, 8], strides = [1, 1]} : vector<8x32xf32> to vector<8x8xf32>
    %89 = vector.extract_strided_slice %11 {offsets = [0, 24], sizes = [8, 8], strides = [1, 1]} : vector<8x32xf32> to vector<8x8xf32>
    %cst_39 = arith.constant dense<0.000000e+00> : vector<8x8xf32>
    %90 = tpu.matmul %87, %88, %cst_39 {dimension_numbers = #tpu.dot_dimension_numbers<[1], [1], [0], [0], [0, 0, 1, 0], [], []>} : vector<8x8xf32>, vector<8x8xf32>, vector<8x8xf32> -> vector<8x8xf32>
    %cst_40 = arith.constant 0.000000e+00 : f32
    %91 = vector.broadcast %cst_40 : f32 to vector<1x8xf32>
    %92 = arith.cmpf one, %3, %91 : vector<1x8xf32>
    %cst_41 = arith.constant -1.000000e+09 : f32
    %93 = vector.shape_cast %92 : vector<1x8xi1> to vector<1x8xi1>
    %94 = vector.broadcast %93 : vector<1x8xi1> to vector<8x8xi1>
    %95 = vector.broadcast %cst_41 : f32 to vector<8x8xf32>
    %96 = arith.select %94, %90, %95 : vector<8x8xi1>, vector<8x8xf32>
    %cst_42 = arith.constant dense<0xFF800000> : vector<8xf32>
    %97 = vector.multi_reduction <maximumf>, %96, %cst_42 [1] : vector<8x8xf32> to vector<8xf32>
    %98 = vector.shape_cast %97 : vector<8xf32> to vector<8x1xf32>
    %99 = vector.broadcast %98 : vector<8x1xf32> to vector<8x8xf32>
    %100 = arith.subf %96, %99 : vector<8x8xf32>
    %101 = math.exp %100 : vector<8x8xf32>
    %cst_43 = arith.constant dense<0.000000e+00> : vector<8xf32>
    %102 = vector.multi_reduction <add>, %101, %cst_43 [1] : vector<8x8xf32> to vector<8xf32>
    %103 = vector.shape_cast %102 : vector<8xf32> to vector<8x1xf32>
    %104 = tpu.reciprocal %103 {approx = true} : vector<8x1xf32> -> vector<8x1xf32>
    %105 = vector.broadcast %104 : vector<8x1xf32> to vector<8x8xf32>
    %106 = arith.mulf %101, %105 : vector<8x8xf32>
    %cst_44 = arith.constant dense<0.000000e+00> : vector<8x8xf32>
    %107 = tpu.matmul %106, %89, %cst_44 {dimension_numbers = #tpu.dot_dimension_numbers<[1], [0], [0], [1], [0, 0, 1, 1], [], []>} : vector<8x8xf32>, vector<8x8xf32>, vector<8x8xf32> -> vector<8x8xf32>
    %c3 = arith.constant 3 : index
    %c0_45 = arith.constant 0 : index
    %c0_46 = arith.constant 0 : index
    %108 = vector.load %arg5[%c3, %c0_45, %c0_46] : memref<4x8x32xf32, #tpu.memory_space<vmem>>, vector<1x8x32xf32>
    %109 = vector.shape_cast %108 : vector<1x8x32xf32> to vector<8x32xf32>
    %cst_47 = arith.constant dense<0.000000e+00> : vector<8x32xf32>
    %110 = tpu.matmul %107, %109, %cst_47 {dimension_numbers = #tpu.dot_dimension_numbers<[1], [0], [0], [1], [0, 0, 1, 1], [], []>} : vector<8x8xf32>, vector<8x32xf32>, vector<8x32xf32> -> vector<8x32xf32>
    %111 = arith.addf %86, %110 : vector<8x32xf32>
    %112 = vector.broadcast %12 : vector<1x32xf32> to vector<8x32xf32>
    %113 = arith.addf %111, %112 : vector<8x32xf32>
    %c0_48 = arith.constant 0 : index
    %c0_49 = arith.constant 0 : index
    %114 = vector.load %arg7[%c0_48, %c0_49] : memref<1x32xf32, #tpu.memory_space<vmem>>, vector<1x32xf32>
    %c0_50 = arith.constant 0 : index
    %c0_51 = arith.constant 0 : index
    %115 = vector.load %arg8[%c0_50, %c0_51] : memref<1x32xf32, #tpu.memory_space<vmem>>, vector<1x32xf32>
    %116 = arith.addf %1, %113 : vector<8x32xf32>
    %cst_52 = arith.constant dense<0.000000e+00> : vector<8xf32>
    %117 = vector.multi_reduction <add>, %116, %cst_52 [1] : vector<8x32xf32> to vector<8xf32>
    %118 = vector.shape_cast %117 : vector<8xf32> to vector<8x1xf32>
    %cst_53 = arith.constant 3.200000e+01 : f32
    %119 = vector.broadcast %cst_53 : f32 to vector<8x1xf32>
    %120 = arith.divf %118, %119 : vector<8x1xf32>
    %121 = vector.broadcast %120 : vector<8x1xf32> to vector<8x32xf32>
    %122 = arith.subf %116, %121 : vector<8x32xf32>
    %123 = arith.mulf %122, %122 : vector<8x32xf32>
    %cst_54 = arith.constant dense<0.000000e+00> : vector<8xf32>
    %124 = vector.multi_reduction <add>, %123, %cst_54 [1] : vector<8x32xf32> to vector<8xf32>
    %125 = vector.shape_cast %124 : vector<8xf32> to vector<8x1xf32>
    %cst_55 = arith.constant 3.200000e+01 : f32
    %126 = vector.broadcast %cst_55 : f32 to vector<8x1xf32>
    %127 = arith.divf %125, %126 : vector<8x1xf32>
    %128 = vector.broadcast %120 : vector<8x1xf32> to vector<8x32xf32>
    %129 = arith.subf %116, %128 : vector<8x32xf32>
    %cst_56 = arith.constant 9.99999974E-6 : f32
    %130 = vector.broadcast %cst_56 : f32 to vector<8x1xf32>
    %131 = arith.addf %127, %130 : vector<8x1xf32>
    %132 = math.rsqrt %131 : vector<8x1xf32>
    %133 = vector.broadcast %132 : vector<8x1xf32> to vector<8x32xf32>
    %134 = arith.mulf %129, %133 : vector<8x32xf32>
    %135 = vector.broadcast %114 : vector<1x32xf32> to vector<8x32xf32>
    %136 = arith.mulf %134, %135 : vector<8x32xf32>
    %137 = vector.broadcast %115 : vector<1x32xf32> to vector<8x32xf32>
    %138 = arith.addf %136, %137 : vector<8x32xf32>
    %c0_57 = arith.constant 0 : index
    %c0_58 = arith.constant 0 : index
    %139 = vector.load %arg9[%c0_57, %c0_58] : memref<32x64xf32, #tpu.memory_space<vmem>>, vector<32x64xf32>
    %c0_59 = arith.constant 0 : index
    %c0_60 = arith.constant 0 : index
    %140 = vector.load %arg10[%c0_59, %c0_60] : memref<1x64xf32, #tpu.memory_space<vmem>>, vector<1x64xf32>
    %c0_61 = arith.constant 0 : index
    %c0_62 = arith.constant 0 : index
    %141 = vector.load %arg11[%c0_61, %c0_62] : memref<64x32xf32, #tpu.memory_space<vmem>>, vector<64x32xf32>
    %c0_63 = arith.constant 0 : index
    %c0_64 = arith.constant 0 : index
    %142 = vector.load %arg12[%c0_63, %c0_64] : memref<1x32xf32, #tpu.memory_space<vmem>>, vector<1x32xf32>
    %cst_65 = arith.constant dense<0.000000e+00> : vector<8x64xf32>
    %143 = tpu.matmul %138, %139, %cst_65 {dimension_numbers = #tpu.dot_dimension_numbers<[1], [0], [0], [1], [0, 0, 1, 1], [], []>} : vector<8x32xf32>, vector<32x64xf32>, vector<8x64xf32> -> vector<8x64xf32>
    %144 = vector.broadcast %140 : vector<1x64xf32> to vector<8x64xf32>
    %145 = arith.addf %143, %144 : vector<8x64xf32>
    %cst_66 = arith.constant 0.000000e+00 : f32
    %146 = vector.broadcast %cst_66 : f32 to vector<8x64xf32>
    %147 = arith.maximumf %145, %146 : vector<8x64xf32>
    %cst_67 = arith.constant dense<0.000000e+00> : vector<8x32xf32>
    %148 = tpu.matmul %147, %141, %cst_67 {dimension_numbers = #tpu.dot_dimension_numbers<[1], [0], [0], [1], [0, 0, 1, 1], [], []>} : vector<8x64xf32>, vector<64x32xf32>, vector<8x32xf32> -> vector<8x32xf32>
    %149 = vector.broadcast %142 : vector<1x32xf32> to vector<8x32xf32>
    %150 = arith.addf %148, %149 : vector<8x32xf32>
    %c0_68 = arith.constant 0 : index
    %c0_69 = arith.constant 0 : index
    %151 = vector.load %arg13[%c0_68, %c0_69] : memref<1x32xf32, #tpu.memory_space<vmem>>, vector<1x32xf32>
    %c0_70 = arith.constant 0 : index
    %c0_71 = arith.constant 0 : index
    %152 = vector.load %arg14[%c0_70, %c0_71] : memref<1x32xf32, #tpu.memory_space<vmem>>, vector<1x32xf32>
    %153 = arith.addf %138, %150 : vector<8x32xf32>
    %cst_72 = arith.constant dense<0.000000e+00> : vector<8xf32>
    %154 = vector.multi_reduction <add>, %153, %cst_72 [1] : vector<8x32xf32> to vector<8xf32>
    %155 = vector.shape_cast %154 : vector<8xf32> to vector<8x1xf32>
    %cst_73 = arith.constant 3.200000e+01 : f32
    %156 = vector.broadcast %cst_73 : f32 to vector<8x1xf32>
    %157 = arith.divf %155, %156 : vector<8x1xf32>
    %158 = vector.broadcast %157 : vector<8x1xf32> to vector<8x32xf32>
    %159 = arith.subf %153, %158 : vector<8x32xf32>
    %160 = arith.mulf %159, %159 : vector<8x32xf32>
    %cst_74 = arith.constant dense<0.000000e+00> : vector<8xf32>
    %161 = vector.multi_reduction <add>, %160, %cst_74 [1] : vector<8x32xf32> to vector<8xf32>
    %162 = vector.shape_cast %161 : vector<8xf32> to vector<8x1xf32>
    %cst_75 = arith.constant 3.200000e+01 : f32
    %163 = vector.broadcast %cst_75 : f32 to vector<8x1xf32>
    %164 = arith.divf %162, %163 : vector<8x1xf32>
    %165 = vector.broadcast %157 : vector<8x1xf32> to vector<8x32xf32>
    %166 = arith.subf %153, %165 : vector<8x32xf32>
    %cst_76 = arith.constant 9.99999974E-6 : f32
    %167 = vector.broadcast %cst_76 : f32 to vector<8x1xf32>
    %168 = arith.addf %164, %167 : vector<8x1xf32>
    %169 = math.rsqrt %168 : vector<8x1xf32>
    %170 = vector.broadcast %169 : vector<8x1xf32> to vector<8x32xf32>
    %171 = arith.mulf %166, %170 : vector<8x32xf32>
    %172 = vector.broadcast %151 : vector<1x32xf32> to vector<8x32xf32>
    %173 = arith.mulf %171, %172 : vector<8x32xf32>
    %174 = vector.broadcast %152 : vector<1x32xf32> to vector<8x32xf32>
    %175 = arith.addf %173, %174 : vector<8x32xf32>
    %c0_77 = arith.constant 0 : index
    %c0_78 = arith.constant 0 : index
    %c0_79 = arith.constant 0 : index
    %176 = vector.load %arg15[%c0_77, %c0_78, %c0_79] : memref<1x8x32xf32, #tpu.memory_space<vmem>>, vector<1x8x32xf32>
    %177 = vector.shape_cast %176 : vector<1x8x32xf32> to vector<8x32xf32>
    %178 = vector.shape_cast %175 : vector<8x32xf32> to vector<1x8x32xf32>
    tpu.vector_store %arg15[%c0_77, %c0_78, %c0_79], %178 {strides = array<i32>} : memref<1x8x32xf32, #tpu.memory_space<vmem>>, vector<1x8x32xf32>,
    return
  }
  func.func @transform_0(%arg0: i32) -> (i32, i32, i32) {
    %c0_i32 = arith.constant 0 : i32
    %c0_i32_0 = arith.constant 0 : i32
    %c0_i32_1 = arith.constant 0 : i32
    return %arg0, %c0_i32, %c0_i32_0 : i32, i32, i32
  }
  func.func @transform_1(%arg0: i32) -> (i32, i32, i32) {
    %c0_i32 = arith.constant 0 : i32
    %c0_i32_0 = arith.constant 0 : i32
    %c0_i32_1 = arith.constant 0 : i32
    return %arg0, %c0_i32, %c0_i32_0 : i32, i32, i32
  }
  func.func @transform_2(%arg0: i32) -> (i32, i32) {
    %c0_i32 = arith.constant 0 : i32
    %c0_i32_0 = arith.constant 0 : i32
    %c0_i32_1 = arith.constant 0 : i32
    return %c0_i32, %c0_i32_0 : i32, i32
  }
  func.func @transform_3(%arg0: i32) -> (i32, i32) {
    %c0_i32 = arith.constant 0 : i32
    %c0_i32_0 = arith.constant 0 : i32
    %c0_i32_1 = arith.constant 0 : i32
    return %c0_i32, %c0_i32_0 : i32, i32
  }
  func.func @transform_4(%arg0: i32) -> (i32, i32, i32) {
    %c0_i32 = arith.constant 0 : i32
    %c0_i32_0 = arith.constant 0 : i32
    %c0_i32_1 = arith.constant 0 : i32
    %c0_i32_2 = arith.constant 0 : i32
    return %c0_i32, %c0_i32_0, %c0_i32_1 : i32, i32, i32
  }
  func.func @transform_5(%arg0: i32) -> (i32, i32) {
    %c0_i32 = arith.constant 0 : i32
    %c0_i32_0 = arith.constant 0 : i32
    %c0_i32_1 = arith.constant 0 : i32
    return %c0_i32, %c0_i32_0 : i32, i32
  }
  func.func @transform_6(%arg0: i32) -> (i32, i32) {
    %c0_i32 = arith.constant 0 : i32
    %c0_i32_0 = arith.constant 0 : i32
    %c0_i32_1 = arith.constant 0 : i32
    return %c0_i32, %c0_i32_0 : i32, i32
  }
  func.func @transform_7(%arg0: i32) -> (i32, i32) {
    %c0_i32 = arith.constant 0 : i32
    %c0_i32_0 = arith.constant 0 : i32
    %c0_i32_1 = arith.constant 0 : i32
    return %c0_i32, %c0_i32_0 : i32, i32
  }
  func.func @transform_8(%arg0: i32) -> (i32, i32) {
    %c0_i32 = arith.constant 0 : i32
    %c0_i32_0 = arith.constant 0 : i32
    %c0_i32_1 = arith.constant 0 : i32
    return %c0_i32, %c0_i32_0 : i32, i32
  }
  func.func @transform_9(%arg0: i32) -> (i32, i32) {
    %c0_i32 = arith.constant 0 : i32
    %c0_i32_0 = arith.constant 0 : i32
    %c0_i32_1 = arith.constant 0 : i32
    return %c0_i32, %c0_i32_0 : i32, i32
  }
  func.func @transform_10(%arg0: i32) -> (i32, i32) {
    %c0_i32 = arith.constant 0 : i32
    %c0_i32_0 = arith.constant 0 : i32
    %c0_i32_1 = arith.constant 0 : i32
    return %c0_i32, %c0_i32_0 : i32, i32
  }
  func.func @transform_11(%arg0: i32) -> (i32, i32) {
    %c0_i32 = arith.constant 0 : i32
    %c0_i32_0 = arith.constant 0 : i32
    %c0_i32_1 = arith.constant 0 : i32
    return %c0_i32, %c0_i32_0 : i32, i32
  }
  func.func @transform_12(%arg0: i32) -> (i32, i32) {
    %c0_i32 = arith.constant 0 : i32
    %c0_i32_0 = arith.constant 0 : i32
    %c0_i32_1 = arith.constant 0 : i32
    return %c0_i32, %c0_i32_0 : i32, i32
  }
  func.func @transform_13(%arg0: i32) -> (i32, i32) {
    %c0_i32 = arith.constant 0 : i32
    %c0_i32_0 = arith.constant 0 : i32
    %c0_i32_1 = arith.constant 0 : i32
    return %c0_i32, %c0_i32_0 : i32, i32
  }
  func.func @transform_14(%arg0: i32) -> (i32, i32, i32) {
    %c0_i32 = arith.constant 0 : i32
    %c0_i32_0 = arith.constant 0 : i32
    %c0_i32_1 = arith.constant 0 : i32
    return %arg0, %c0_i32, %c0_i32_0 : i32, i32, i32
  }
}

module attributes {stable_mosaic.version = 11 : i64} {
  func.func @_decoder_layer_kernel(%arg0: i32, %arg1: memref<1x8x32xf32, #tpu.memory_space<vmem>>, %arg2: memref<1x8x32xf32, #tpu.memory_space<vmem>>, %arg3: memref<1x8x8xf32, #tpu.memory_space<vmem>>, %arg4: memref<1x1x8xf32, #tpu.memory_space<vmem>>, %arg5: memref<32x96xf32, #tpu.memory_space<vmem>>, %arg6: memref<1x96xf32, #tpu.memory_space<vmem>>, %arg7: memref<4x8x32xf32, #tpu.memory_space<vmem>>, %arg8: memref<1x32xf32, #tpu.memory_space<vmem>>, %arg9: memref<1x32xf32, #tpu.memory_space<vmem>>, %arg10: memref<1x32xf32, #tpu.memory_space<vmem>>, %arg11: memref<32x32xf32, #tpu.memory_space<vmem>>, %arg12: memref<1x32xf32, #tpu.memory_space<vmem>>, %arg13: memref<32x64xf32, #tpu.memory_space<vmem>>, %arg14: memref<1x64xf32, #tpu.memory_space<vmem>>, %arg15: memref<4x8x32xf32, #tpu.memory_space<vmem>>, %arg16: memref<1x32xf32, #tpu.memory_space<vmem>>, %arg17: memref<1x32xf32, #tpu.memory_space<vmem>>, %arg18: memref<1x32xf32, #tpu.memory_space<vmem>>, %arg19: memref<32x64xf32, #tpu.memory_space<vmem>>, %arg20: memref<1x64xf32, #tpu.memory_space<vmem>>, %arg21: memref<64x32xf32, #tpu.memory_space<vmem>>, %arg22: memref<1x32xf32, #tpu.memory_space<vmem>>, %arg23: memref<1x32xf32, #tpu.memory_space<vmem>>, %arg24: memref<1x32xf32, #tpu.memory_space<vmem>>, %arg25: memref<1x8x32xf32, #tpu.memory_space<vmem>>) attributes {dimension_semantics = [#tpu.dimension_semantics<parallel>], iteration_bounds = array<i64: 2>, scalar_prefetch = 0 : i64, scratch_operands = 0 : i64, tpu.core_type = #tpu.core_type<tc>, window_params = [{transform_indices = @transform_0, window_bounds = array<i64: 1, 8, 32>}, {transform_indices = @transform_1, window_bounds = array<i64: 1, 8, 32>}, {transform_indices = @transform_2, window_bounds = array<i64: 1, 8, 8>}, {transform_indices = @transform_3, window_bounds = array<i64: 1, 1, 8>}, {pipeline_mode = #tpu.pipeline_mode<synchronous>, transform_indices = @transform_4, window_bounds = array<i64: 32, 96>}, {pipeline_mode = #tpu.pipeline_mode<synchronous>, transform_indices = @transform_5, window_bounds = array<i64: 1, 96>}, {pipeline_mode = #tpu.pipeline_mode<synchronous>, transform_indices = @transform_6, window_bounds = array<i64: 4, 8, 32>}, {pipeline_mode = #tpu.pipeline_mode<synchronous>, transform_indices = @transform_7, window_bounds = array<i64: 1, 32>}, {pipeline_mode = #tpu.pipeline_mode<synchronous>, transform_indices = @transform_8, window_bounds = array<i64: 1, 32>}, {pipeline_mode = #tpu.pipeline_mode<synchronous>, transform_indices = @transform_9, window_bounds = array<i64: 1, 32>}, {pipeline_mode = #tpu.pipeline_mode<synchronous>, transform_indices = @transform_10, window_bounds = array<i64: 32, 32>}, {pipeline_mode = #tpu.pipeline_mode<synchronous>, transform_indices = @transform_11, window_bounds = array<i64: 1, 32>}, {pipeline_mode = #tpu.pipeline_mode<synchronous>, transform_indices = @transform_12, window_bounds = array<i64: 32, 64>}, {pipeline_mode = #tpu.pipeline_mode<synchronous>, transform_indices = @transform_13, window_bounds = array<i64: 1, 64>}, {pipeline_mode = #tpu.pipeline_mode<synchronous>, transform_indices = @transform_14, window_bounds = array<i64: 4, 8, 32>}, {pipeline_mode = #tpu.pipeline_mode<synchronous>, transform_indices = @transform_15, window_bounds = array<i64: 1, 32>}, {pipeline_mode = #tpu.pipeline_mode<synchronous>, transform_indices = @transform_16, window_bounds = array<i64: 1, 32>}, {pipeline_mode = #tpu.pipeline_mode<synchronous>, transform_indices = @transform_17, window_bounds = array<i64: 1, 32>}, {pipeline_mode = #tpu.pipeline_mode<synchronous>, transform_indices = @transform_18, window_bounds = array<i64: 32, 64>}, {pipeline_mode = #tpu.pipeline_mode<synchronous>, transform_indices = @transform_19, window_bounds = array<i64: 1, 64>}, {pipeline_mode = #tpu.pipeline_mode<synchronous>, transform_indices = @transform_20, window_bounds = array<i64: 64, 32>}, {pipeline_mode = #tpu.pipeline_mode<synchronous>, transform_indices = @transform_21, window_bounds = array<i64: 1, 32>}, {pipeline_mode = #tpu.pipeline_mode<synchronous>, transform_indices = @transform_22, window_bounds = array<i64: 1, 32>}, {pipeline_mode = #tpu.pipeline_mode<synchronous>, transform_indices = @transform_23, window_bounds = array<i64: 1, 32>}, {transform_indices = @transform_24, window_bounds = array<i64: 1, 8, 32>}]} {
    %c0 = arith.constant 0 : index
    %c0_0 = arith.constant 0 : index
    %c0_1 = arith.constant 0 : index
    %0 = vector.load %arg1[%c0, %c0_0, %c0_1] : memref<1x8x32xf32, #tpu.memory_space<vmem>>, vector<1x8x32xf32>
    %1 = vector.shape_cast %0 : vector<1x8x32xf32> to vector<8x32xf32>
    %c0_2 = arith.constant 0 : index
    %c0_3 = arith.constant 0 : index
    %c0_4 = arith.constant 0 : index
    %2 = vector.load %arg2[%c0_2, %c0_3, %c0_4] : memref<1x8x32xf32, #tpu.memory_space<vmem>>, vector<1x8x32xf32>
    %3 = vector.shape_cast %2 : vector<1x8x32xf32> to vector<8x32xf32>
    %c0_5 = arith.constant 0 : index
    %c0_6 = arith.constant 0 : index
    %c0_7 = arith.constant 0 : index
    %4 = vector.load %arg3[%c0_5, %c0_6, %c0_7] : memref<1x8x8xf32, #tpu.memory_space<vmem>>, vector<1x8x8xf32>
    %5 = vector.shape_cast %4 : vector<1x8x8xf32> to vector<8x8xf32>
    %c0_8 = arith.constant 0 : index
    %c0_9 = arith.constant 0 : index
    %c0_10 = arith.constant 0 : index
    %6 = vector.load %arg4[%c0_8, %c0_9, %c0_10] : memref<1x1x8xf32, #tpu.memory_space<vmem>>, vector<1x1x8xf32>
    %7 = vector.shape_cast %6 : vector<1x1x8xf32> to vector<1x8xf32>
    %c0_11 = arith.constant 0 : index
    %c0_12 = arith.constant 0 : index
    %8 = vector.load %arg5[%c0_11, %c0_12] : memref<32x96xf32, #tpu.memory_space<vmem>>, vector<32x96xf32>
    %cst = arith.constant dense<0.000000e+00> : vector<8x96xf32>
    %9 = tpu.matmul %1, %8, %cst {dimension_numbers = #tpu.dot_dimension_numbers<[1], [0], [0], [1], [0, 0, 1, 1], [], []>} : vector<8x32xf32>, vector<32x96xf32>, vector<8x96xf32> -> vector<8x96xf32>
    %c0_13 = arith.constant 0 : index
    %c0_14 = arith.constant 0 : index
    %10 = vector.load %arg6[%c0_13, %c0_14] : memref<1x96xf32, #tpu.memory_space<vmem>>, vector<1x96xf32>
    %11 = vector.broadcast %10 : vector<1x96xf32> to vector<8x96xf32>
    %12 = arith.addf %9, %11 : vector<8x96xf32>
    %13 = vector.extract_strided_slice %12 {offsets = [0, 0], sizes = [8, 32], strides = [1, 1]} : vector<8x96xf32> to vector<8x32xf32>
    %14 = vector.extract_strided_slice %12 {offsets = [0, 32], sizes = [8, 32], strides = [1, 1]} : vector<8x96xf32> to vector<8x32xf32>
    %15 = vector.extract_strided_slice %12 {offsets = [0, 64], sizes = [8, 32], strides = [1, 1]} : vector<8x96xf32> to vector<8x32xf32>
    %c0_15 = arith.constant 0 : index
    %c0_16 = arith.constant 0 : index
    %16 = vector.load %arg8[%c0_15, %c0_16] : memref<1x32xf32, #tpu.memory_space<vmem>>, vector<1x32xf32>
    %17 = vector.extract_strided_slice %13 {offsets = [0, 0], sizes = [8, 8], strides = [1, 1]} : vector<8x32xf32> to vector<8x8xf32>
    %18 = vector.extract_strided_slice %14 {offsets = [0, 0], sizes = [8, 8], strides = [1, 1]} : vector<8x32xf32> to vector<8x8xf32>
    %19 = vector.extract_strided_slice %15 {offsets = [0, 0], sizes = [8, 8], strides = [1, 1]} : vector<8x32xf32> to vector<8x8xf32>
    %cst_17 = arith.constant dense<0.000000e+00> : vector<8x8xf32>
    %20 = tpu.matmul %17, %18, %cst_17 {dimension_numbers = #tpu.dot_dimension_numbers<[1], [1], [0], [0], [0, 0, 1, 0], [], []>} : vector<8x8xf32>, vector<8x8xf32>, vector<8x8xf32> -> vector<8x8xf32>
    %cst_18 = arith.constant 0.000000e+00 : f32
    %21 = vector.broadcast %cst_18 : f32 to vector<8x8xf32>
    %22 = arith.cmpf one, %5, %21 : vector<8x8xf32>
    %cst_19 = arith.constant -1.000000e+09 : f32
    %23 = vector.broadcast %cst_19 : f32 to vector<8x8xf32>
    %24 = arith.select %22, %20, %23 : vector<8x8xi1>, vector<8x8xf32>
    %cst_20 = arith.constant dense<0xFF800000> : vector<8xf32>
    %25 = vector.multi_reduction <maximumf>, %24, %cst_20 [1] : vector<8x8xf32> to vector<8xf32>
    %26 = vector.shape_cast %25 : vector<8xf32> to vector<8x1xf32>
    %27 = vector.broadcast %26 : vector<8x1xf32> to vector<8x8xf32>
    %28 = arith.subf %24, %27 : vector<8x8xf32>
    %29 = math.exp %28 : vector<8x8xf32>
    %cst_21 = arith.constant dense<0.000000e+00> : vector<8xf32>
    %30 = vector.multi_reduction <add>, %29, %cst_21 [1] : vector<8x8xf32> to vector<8xf32>
    %31 = vector.shape_cast %30 : vector<8xf32> to vector<8x1xf32>
    %32 = tpu.reciprocal %31 {approx = true} : vector<8x1xf32> -> vector<8x1xf32>
    %33 = vector.broadcast %32 : vector<8x1xf32> to vector<8x8xf32>
    %34 = arith.mulf %29, %33 : vector<8x8xf32>
    %cst_22 = arith.constant dense<0.000000e+00> : vector<8x8xf32>
    %35 = tpu.matmul %34, %19, %cst_22 {dimension_numbers = #tpu.dot_dimension_numbers<[1], [0], [0], [1], [0, 0, 1, 1], [], []>} : vector<8x8xf32>, vector<8x8xf32>, vector<8x8xf32> -> vector<8x8xf32>
    %c0_23 = arith.constant 0 : index
    %c0_24 = arith.constant 0 : index
    %c0_25 = arith.constant 0 : index
    %36 = vector.load %arg7[%c0_23, %c0_24, %c0_25] : memref<4x8x32xf32, #tpu.memory_space<vmem>>, vector<1x8x32xf32>
    %37 = vector.shape_cast %36 : vector<1x8x32xf32> to vector<8x32xf32>
    %cst_26 = arith.constant dense<0.000000e+00> : vector<8x32xf32>
    %38 = tpu.matmul %35, %37, %cst_26 {dimension_numbers = #tpu.dot_dimension_numbers<[1], [0], [0], [1], [0, 0, 1, 1], [], []>} : vector<8x8xf32>, vector<8x32xf32>, vector<8x32xf32> -> vector<8x32xf32>
    %39 = vector.extract_strided_slice %13 {offsets = [0, 8], sizes = [8, 8], strides = [1, 1]} : vector<8x32xf32> to vector<8x8xf32>
    %40 = vector.extract_strided_slice %14 {offsets = [0, 8], sizes = [8, 8], strides = [1, 1]} : vector<8x32xf32> to vector<8x8xf32>
    %41 = vector.extract_strided_slice %15 {offsets = [0, 8], sizes = [8, 8], strides = [1, 1]} : vector<8x32xf32> to vector<8x8xf32>
    %cst_27 = arith.constant dense<0.000000e+00> : vector<8x8xf32>
    %42 = tpu.matmul %39, %40, %cst_27 {dimension_numbers = #tpu.dot_dimension_numbers<[1], [1], [0], [0], [0, 0, 1, 0], [], []>} : vector<8x8xf32>, vector<8x8xf32>, vector<8x8xf32> -> vector<8x8xf32>
    %cst_28 = arith.constant 0.000000e+00 : f32
    %43 = vector.broadcast %cst_28 : f32 to vector<8x8xf32>
    %44 = arith.cmpf one, %5, %43 : vector<8x8xf32>
    %cst_29 = arith.constant -1.000000e+09 : f32
    %45 = vector.broadcast %cst_29 : f32 to vector<8x8xf32>
    %46 = arith.select %44, %42, %45 : vector<8x8xi1>, vector<8x8xf32>
    %cst_30 = arith.constant dense<0xFF800000> : vector<8xf32>
    %47 = vector.multi_reduction <maximumf>, %46, %cst_30 [1] : vector<8x8xf32> to vector<8xf32>
    %48 = vector.shape_cast %47 : vector<8xf32> to vector<8x1xf32>
    %49 = vector.broadcast %48 : vector<8x1xf32> to vector<8x8xf32>
    %50 = arith.subf %46, %49 : vector<8x8xf32>
    %51 = math.exp %50 : vector<8x8xf32>
    %cst_31 = arith.constant dense<0.000000e+00> : vector<8xf32>
    %52 = vector.multi_reduction <add>, %51, %cst_31 [1] : vector<8x8xf32> to vector<8xf32>
    %53 = vector.shape_cast %52 : vector<8xf32> to vector<8x1xf32>
    %54 = tpu.reciprocal %53 {approx = true} : vector<8x1xf32> -> vector<8x1xf32>
    %55 = vector.broadcast %54 : vector<8x1xf32> to vector<8x8xf32>
    %56 = arith.mulf %51, %55 : vector<8x8xf32>
    %cst_32 = arith.constant dense<0.000000e+00> : vector<8x8xf32>
    %57 = tpu.matmul %56, %41, %cst_32 {dimension_numbers = #tpu.dot_dimension_numbers<[1], [0], [0], [1], [0, 0, 1, 1], [], []>} : vector<8x8xf32>, vector<8x8xf32>, vector<8x8xf32> -> vector<8x8xf32>
    %c1 = arith.constant 1 : index
    %c0_33 = arith.constant 0 : index
    %c0_34 = arith.constant 0 : index
    %58 = vector.load %arg7[%c1, %c0_33, %c0_34] : memref<4x8x32xf32, #tpu.memory_space<vmem>>, vector<1x8x32xf32>
    %59 = vector.shape_cast %58 : vector<1x8x32xf32> to vector<8x32xf32>
    %cst_35 = arith.constant dense<0.000000e+00> : vector<8x32xf32>
    %60 = tpu.matmul %57, %59, %cst_35 {dimension_numbers = #tpu.dot_dimension_numbers<[1], [0], [0], [1], [0, 0, 1, 1], [], []>} : vector<8x8xf32>, vector<8x32xf32>, vector<8x32xf32> -> vector<8x32xf32>
    %61 = arith.addf %38, %60 : vector<8x32xf32>
    %62 = vector.extract_strided_slice %13 {offsets = [0, 16], sizes = [8, 8], strides = [1, 1]} : vector<8x32xf32> to vector<8x8xf32>
    %63 = vector.extract_strided_slice %14 {offsets = [0, 16], sizes = [8, 8], strides = [1, 1]} : vector<8x32xf32> to vector<8x8xf32>
    %64 = vector.extract_strided_slice %15 {offsets = [0, 16], sizes = [8, 8], strides = [1, 1]} : vector<8x32xf32> to vector<8x8xf32>
    %cst_36 = arith.constant dense<0.000000e+00> : vector<8x8xf32>
    %65 = tpu.matmul %62, %63, %cst_36 {dimension_numbers = #tpu.dot_dimension_numbers<[1], [1], [0], [0], [0, 0, 1, 0], [], []>} : vector<8x8xf32>, vector<8x8xf32>, vector<8x8xf32> -> vector<8x8xf32>
    %cst_37 = arith.constant 0.000000e+00 : f32
    %66 = vector.broadcast %cst_37 : f32 to vector<8x8xf32>
    %67 = arith.cmpf one, %5, %66 : vector<8x8xf32>
    %cst_38 = arith.constant -1.000000e+09 : f32
    %68 = vector.broadcast %cst_38 : f32 to vector<8x8xf32>
    %69 = arith.select %67, %65, %68 : vector<8x8xi1>, vector<8x8xf32>
    %cst_39 = arith.constant dense<0xFF800000> : vector<8xf32>
    %70 = vector.multi_reduction <maximumf>, %69, %cst_39 [1] : vector<8x8xf32> to vector<8xf32>
    %71 = vector.shape_cast %70 : vector<8xf32> to vector<8x1xf32>
    %72 = vector.broadcast %71 : vector<8x1xf32> to vector<8x8xf32>
    %73 = arith.subf %69, %72 : vector<8x8xf32>
    %74 = math.exp %73 : vector<8x8xf32>
    %cst_40 = arith.constant dense<0.000000e+00> : vector<8xf32>
    %75 = vector.multi_reduction <add>, %74, %cst_40 [1] : vector<8x8xf32> to vector<8xf32>
    %76 = vector.shape_cast %75 : vector<8xf32> to vector<8x1xf32>
    %77 = tpu.reciprocal %76 {approx = true} : vector<8x1xf32> -> vector<8x1xf32>
    %78 = vector.broadcast %77 : vector<8x1xf32> to vector<8x8xf32>
    %79 = arith.mulf %74, %78 : vector<8x8xf32>
    %cst_41 = arith.constant dense<0.000000e+00> : vector<8x8xf32>
    %80 = tpu.matmul %79, %64, %cst_41 {dimension_numbers = #tpu.dot_dimension_numbers<[1], [0], [0], [1], [0, 0, 1, 1], [], []>} : vector<8x8xf32>, vector<8x8xf32>, vector<8x8xf32> -> vector<8x8xf32>
    %c2 = arith.constant 2 : index
    %c0_42 = arith.constant 0 : index
    %c0_43 = arith.constant 0 : index
    %81 = vector.load %arg7[%c2, %c0_42, %c0_43] : memref<4x8x32xf32, #tpu.memory_space<vmem>>, vector<1x8x32xf32>
    %82 = vector.shape_cast %81 : vector<1x8x32xf32> to vector<8x32xf32>
    %cst_44 = arith.constant dense<0.000000e+00> : vector<8x32xf32>
    %83 = tpu.matmul %80, %82, %cst_44 {dimension_numbers = #tpu.dot_dimension_numbers<[1], [0], [0], [1], [0, 0, 1, 1], [], []>} : vector<8x8xf32>, vector<8x32xf32>, vector<8x32xf32> -> vector<8x32xf32>
    %84 = arith.addf %61, %83 : vector<8x32xf32>
    %85 = vector.extract_strided_slice %13 {offsets = [0, 24], sizes = [8, 8], strides = [1, 1]} : vector<8x32xf32> to vector<8x8xf32>
    %86 = vector.extract_strided_slice %14 {offsets = [0, 24], sizes = [8, 8], strides = [1, 1]} : vector<8x32xf32> to vector<8x8xf32>
    %87 = vector.extract_strided_slice %15 {offsets = [0, 24], sizes = [8, 8], strides = [1, 1]} : vector<8x32xf32> to vector<8x8xf32>
    %cst_45 = arith.constant dense<0.000000e+00> : vector<8x8xf32>
    %88 = tpu.matmul %85, %86, %cst_45 {dimension_numbers = #tpu.dot_dimension_numbers<[1], [1], [0], [0], [0, 0, 1, 0], [], []>} : vector<8x8xf32>, vector<8x8xf32>, vector<8x8xf32> -> vector<8x8xf32>
    %cst_46 = arith.constant 0.000000e+00 : f32
    %89 = vector.broadcast %cst_46 : f32 to vector<8x8xf32>
    %90 = arith.cmpf one, %5, %89 : vector<8x8xf32>
    %cst_47 = arith.constant -1.000000e+09 : f32
    %91 = vector.broadcast %cst_47 : f32 to vector<8x8xf32>
    %92 = arith.select %90, %88, %91 : vector<8x8xi1>, vector<8x8xf32>
    %cst_48 = arith.constant dense<0xFF800000> : vector<8xf32>
    %93 = vector.multi_reduction <maximumf>, %92, %cst_48 [1] : vector<8x8xf32> to vector<8xf32>
    %94 = vector.shape_cast %93 : vector<8xf32> to vector<8x1xf32>
    %95 = vector.broadcast %94 : vector<8x1xf32> to vector<8x8xf32>
    %96 = arith.subf %92, %95 : vector<8x8xf32>
    %97 = math.exp %96 : vector<8x8xf32>
    %cst_49 = arith.constant dense<0.000000e+00> : vector<8xf32>
    %98 = vector.multi_reduction <add>, %97, %cst_49 [1] : vector<8x8xf32> to vector<8xf32>
    %99 = vector.shape_cast %98 : vector<8xf32> to vector<8x1xf32>
    %100 = tpu.reciprocal %99 {approx = true} : vector<8x1xf32> -> vector<8x1xf32>
    %101 = vector.broadcast %100 : vector<8x1xf32> to vector<8x8xf32>
    %102 = arith.mulf %97, %101 : vector<8x8xf32>
    %cst_50 = arith.constant dense<0.000000e+00> : vector<8x8xf32>
    %103 = tpu.matmul %102, %87, %cst_50 {dimension_numbers = #tpu.dot_dimension_numbers<[1], [0], [0], [1], [0, 0, 1, 1], [], []>} : vector<8x8xf32>, vector<8x8xf32>, vector<8x8xf32> -> vector<8x8xf32>
    %c3 = arith.constant 3 : index
    %c0_51 = arith.constant 0 : index
    %c0_52 = arith.constant 0 : index
    %104 = vector.load %arg7[%c3, %c0_51, %c0_52] : memref<4x8x32xf32, #tpu.memory_space<vmem>>, vector<1x8x32xf32>
    %105 = vector.shape_cast %104 : vector<1x8x32xf32> to vector<8x32xf32>
    %cst_53 = arith.constant dense<0.000000e+00> : vector<8x32xf32>
    %106 = tpu.matmul %103, %105, %cst_53 {dimension_numbers = #tpu.dot_dimension_numbers<[1], [0], [0], [1], [0, 0, 1, 1], [], []>} : vector<8x8xf32>, vector<8x32xf32>, vector<8x32xf32> -> vector<8x32xf32>
    %107 = arith.addf %84, %106 : vector<8x32xf32>
    %108 = vector.broadcast %16 : vector<1x32xf32> to vector<8x32xf32>
    %109 = arith.addf %107, %108 : vector<8x32xf32>
    %c0_54 = arith.constant 0 : index
    %c0_55 = arith.constant 0 : index
    %110 = vector.load %arg9[%c0_54, %c0_55] : memref<1x32xf32, #tpu.memory_space<vmem>>, vector<1x32xf32>
    %c0_56 = arith.constant 0 : index
    %c0_57 = arith.constant 0 : index
    %111 = vector.load %arg10[%c0_56, %c0_57] : memref<1x32xf32, #tpu.memory_space<vmem>>, vector<1x32xf32>
    %112 = arith.addf %1, %109 : vector<8x32xf32>
    %cst_58 = arith.constant dense<0.000000e+00> : vector<8xf32>
    %113 = vector.multi_reduction <add>, %112, %cst_58 [1] : vector<8x32xf32> to vector<8xf32>
    %114 = vector.shape_cast %113 : vector<8xf32> to vector<8x1xf32>
    %cst_59 = arith.constant 3.200000e+01 : f32
    %115 = vector.broadcast %cst_59 : f32 to vector<8x1xf32>
    %116 = arith.divf %114, %115 : vector<8x1xf32>
    %117 = vector.broadcast %116 : vector<8x1xf32> to vector<8x32xf32>
    %118 = arith.subf %112, %117 : vector<8x32xf32>
    %119 = arith.mulf %118, %118 : vector<8x32xf32>
    %cst_60 = arith.constant dense<0.000000e+00> : vector<8xf32>
    %120 = vector.multi_reduction <add>, %119, %cst_60 [1] : vector<8x32xf32> to vector<8xf32>
    %121 = vector.shape_cast %120 : vector<8xf32> to vector<8x1xf32>
    %cst_61 = arith.constant 3.200000e+01 : f32
    %122 = vector.broadcast %cst_61 : f32 to vector<8x1xf32>
    %123 = arith.divf %121, %122 : vector<8x1xf32>
    %124 = vector.broadcast %116 : vector<8x1xf32> to vector<8x32xf32>
    %125 = arith.subf %112, %124 : vector<8x32xf32>
    %cst_62 = arith.constant 9.99999974E-6 : f32
    %126 = vector.broadcast %cst_62 : f32 to vector<8x1xf32>
    %127 = arith.addf %123, %126 : vector<8x1xf32>
    %128 = math.rsqrt %127 : vector<8x1xf32>
    %129 = vector.broadcast %128 : vector<8x1xf32> to vector<8x32xf32>
    %130 = arith.mulf %125, %129 : vector<8x32xf32>
    %131 = vector.broadcast %110 : vector<1x32xf32> to vector<8x32xf32>
    %132 = arith.mulf %130, %131 : vector<8x32xf32>
    %133 = vector.broadcast %111 : vector<1x32xf32> to vector<8x32xf32>
    %134 = arith.addf %132, %133 : vector<8x32xf32>
    %c0_63 = arith.constant 0 : index
    %c0_64 = arith.constant 0 : index
    %135 = vector.load %arg11[%c0_63, %c0_64] : memref<32x32xf32, #tpu.memory_space<vmem>>, vector<32x32xf32>
    %cst_65 = arith.constant dense<0.000000e+00> : vector<8x32xf32>
    %136 = tpu.matmul %134, %135, %cst_65 {dimension_numbers = #tpu.dot_dimension_numbers<[1], [0], [0], [1], [0, 0, 1, 1], [], []>} : vector<8x32xf32>, vector<32x32xf32>, vector<8x32xf32> -> vector<8x32xf32>
    %c0_66 = arith.constant 0 : index
    %c0_67 = arith.constant 0 : index
    %137 = vector.load %arg12[%c0_66, %c0_67] : memref<1x32xf32, #tpu.memory_space<vmem>>, vector<1x32xf32>
    %138 = vector.broadcast %137 : vector<1x32xf32> to vector<8x32xf32>
    %139 = arith.addf %136, %138 : vector<8x32xf32>
    %c0_68 = arith.constant 0 : index
    %c0_69 = arith.constant 0 : index
    %140 = vector.load %arg13[%c0_68, %c0_69] : memref<32x64xf32, #tpu.memory_space<vmem>>, vector<32x64xf32>
    %cst_70 = arith.constant dense<0.000000e+00> : vector<8x64xf32>
    %141 = tpu.matmul %3, %140, %cst_70 {dimension_numbers = #tpu.dot_dimension_numbers<[1], [0], [0], [1], [0, 0, 1, 1], [], []>} : vector<8x32xf32>, vector<32x64xf32>, vector<8x64xf32> -> vector<8x64xf32>
    %c0_71 = arith.constant 0 : index
    %c0_72 = arith.constant 0 : index
    %142 = vector.load %arg14[%c0_71, %c0_72] : memref<1x64xf32, #tpu.memory_space<vmem>>, vector<1x64xf32>
    %143 = vector.broadcast %142 : vector<1x64xf32> to vector<8x64xf32>
    %144 = arith.addf %141, %143 : vector<8x64xf32>
    %145 = vector.extract_strided_slice %144 {offsets = [0, 0], sizes = [8, 32], strides = [1, 1]} : vector<8x64xf32> to vector<8x32xf32>
    %146 = vector.extract_strided_slice %144 {offsets = [0, 32], sizes = [8, 32], strides = [1, 1]} : vector<8x64xf32> to vector<8x32xf32>
    %c0_73 = arith.constant 0 : index
    %c0_74 = arith.constant 0 : index
    %147 = vector.load %arg16[%c0_73, %c0_74] : memref<1x32xf32, #tpu.memory_space<vmem>>, vector<1x32xf32>
    %148 = vector.extract_strided_slice %139 {offsets = [0, 0], sizes = [8, 8], strides = [1, 1]} : vector<8x32xf32> to vector<8x8xf32>
    %149 = vector.extract_strided_slice %145 {offsets = [0, 0], sizes = [8, 8], strides = [1, 1]} : vector<8x32xf32> to vector<8x8xf32>
    %150 = vector.extract_strided_slice %146 {offsets = [0, 0], sizes = [8, 8], strides = [1, 1]} : vector<8x32xf32> to vector<8x8xf32>
    %cst_75 = arith.constant dense<0.000000e+00> : vector<8x8xf32>
    %151 = tpu.matmul %148, %149, %cst_75 {dimension_numbers = #tpu.dot_dimension_numbers<[1], [1], [0], [0], [0, 0, 1, 0], [], []>} : vector<8x8xf32>, vector<8x8xf32>, vector<8x8xf32> -> vector<8x8xf32>
    %cst_76 = arith.constant 0.000000e+00 : f32
    %152 = vector.broadcast %cst_76 : f32 to vector<1x8xf32>
    %153 = arith.cmpf one, %7, %152 : vector<1x8xf32>
    %cst_77 = arith.constant -1.000000e+09 : f32
    %154 = vector.shape_cast %153 : vector<1x8xi1> to vector<1x8xi1>
    %155 = vector.broadcast %154 : vector<1x8xi1> to vector<8x8xi1>
    %156 = vector.broadcast %cst_77 : f32 to vector<8x8xf32>
    %157 = arith.select %155, %151, %156 : vector<8x8xi1>, vector<8x8xf32>
    %cst_78 = arith.constant dense<0xFF800000> : vector<8xf32>
    %158 = vector.multi_reduction <maximumf>, %157, %cst_78 [1] : vector<8x8xf32> to vector<8xf32>
    %159 = vector.shape_cast %158 : vector<8xf32> to vector<8x1xf32>
    %160 = vector.broadcast %159 : vector<8x1xf32> to vector<8x8xf32>
    %161 = arith.subf %157, %160 : vector<8x8xf32>
    %162 = math.exp %161 : vector<8x8xf32>
    %cst_79 = arith.constant dense<0.000000e+00> : vector<8xf32>
    %163 = vector.multi_reduction <add>, %162, %cst_79 [1] : vector<8x8xf32> to vector<8xf32>
    %164 = vector.shape_cast %163 : vector<8xf32> to vector<8x1xf32>
    %165 = tpu.reciprocal %164 {approx = true} : vector<8x1xf32> -> vector<8x1xf32>
    %166 = vector.broadcast %165 : vector<8x1xf32> to vector<8x8xf32>
    %167 = arith.mulf %162, %166 : vector<8x8xf32>
    %cst_80 = arith.constant dense<0.000000e+00> : vector<8x8xf32>
    %168 = tpu.matmul %167, %150, %cst_80 {dimension_numbers = #tpu.dot_dimension_numbers<[1], [0], [0], [1], [0, 0, 1, 1], [], []>} : vector<8x8xf32>, vector<8x8xf32>, vector<8x8xf32> -> vector<8x8xf32>
    %c0_81 = arith.constant 0 : index
    %c0_82 = arith.constant 0 : index
    %c0_83 = arith.constant 0 : index
    %169 = vector.load %arg15[%c0_81, %c0_82, %c0_83] : memref<4x8x32xf32, #tpu.memory_space<vmem>>, vector<1x8x32xf32>
    %170 = vector.shape_cast %169 : vector<1x8x32xf32> to vector<8x32xf32>
    %cst_84 = arith.constant dense<0.000000e+00> : vector<8x32xf32>
    %171 = tpu.matmul %168, %170, %cst_84 {dimension_numbers = #tpu.dot_dimension_numbers<[1], [0], [0], [1], [0, 0, 1, 1], [], []>} : vector<8x8xf32>, vector<8x32xf32>, vector<8x32xf32> -> vector<8x32xf32>
    %172 = vector.extract_strided_slice %139 {offsets = [0, 8], sizes = [8, 8], strides = [1, 1]} : vector<8x32xf32> to vector<8x8xf32>
    %173 = vector.extract_strided_slice %145 {offsets = [0, 8], sizes = [8, 8], strides = [1, 1]} : vector<8x32xf32> to vector<8x8xf32>
    %174 = vector.extract_strided_slice %146 {offsets = [0, 8], sizes = [8, 8], strides = [1, 1]} : vector<8x32xf32> to vector<8x8xf32>
    %cst_85 = arith.constant dense<0.000000e+00> : vector<8x8xf32>
    %175 = tpu.matmul %172, %173, %cst_85 {dimension_numbers = #tpu.dot_dimension_numbers<[1], [1], [0], [0], [0, 0, 1, 0], [], []>} : vector<8x8xf32>, vector<8x8xf32>, vector<8x8xf32> -> vector<8x8xf32>
    %cst_86 = arith.constant 0.000000e+00 : f32
    %176 = vector.broadcast %cst_86 : f32 to vector<1x8xf32>
    %177 = arith.cmpf one, %7, %176 : vector<1x8xf32>
    %cst_87 = arith.constant -1.000000e+09 : f32
    %178 = vector.shape_cast %177 : vector<1x8xi1> to vector<1x8xi1>
    %179 = vector.broadcast %178 : vector<1x8xi1> to vector<8x8xi1>
    %180 = vector.broadcast %cst_87 : f32 to vector<8x8xf32>
    %181 = arith.select %179, %175, %180 : vector<8x8xi1>, vector<8x8xf32>
    %cst_88 = arith.constant dense<0xFF800000> : vector<8xf32>
    %182 = vector.multi_reduction <maximumf>, %181, %cst_88 [1] : vector<8x8xf32> to vector<8xf32>
    %183 = vector.shape_cast %182 : vector<8xf32> to vector<8x1xf32>
    %184 = vector.broadcast %183 : vector<8x1xf32> to vector<8x8xf32>
    %185 = arith.subf %181, %184 : vector<8x8xf32>
    %186 = math.exp %185 : vector<8x8xf32>
    %cst_89 = arith.constant dense<0.000000e+00> : vector<8xf32>
    %187 = vector.multi_reduction <add>, %186, %cst_89 [1] : vector<8x8xf32> to vector<8xf32>
    %188 = vector.shape_cast %187 : vector<8xf32> to vector<8x1xf32>
    %189 = tpu.reciprocal %188 {approx = true} : vector<8x1xf32> -> vector<8x1xf32>
    %190 = vector.broadcast %189 : vector<8x1xf32> to vector<8x8xf32>
    %191 = arith.mulf %186, %190 : vector<8x8xf32>
    %cst_90 = arith.constant dense<0.000000e+00> : vector<8x8xf32>
    %192 = tpu.matmul %191, %174, %cst_90 {dimension_numbers = #tpu.dot_dimension_numbers<[1], [0], [0], [1], [0, 0, 1, 1], [], []>} : vector<8x8xf32>, vector<8x8xf32>, vector<8x8xf32> -> vector<8x8xf32>
    %c1_91 = arith.constant 1 : index
    %c0_92 = arith.constant 0 : index
    %c0_93 = arith.constant 0 : index
    %193 = vector.load %arg15[%c1_91, %c0_92, %c0_93] : memref<4x8x32xf32, #tpu.memory_space<vmem>>, vector<1x8x32xf32>
    %194 = vector.shape_cast %193 : vector<1x8x32xf32> to vector<8x32xf32>
    %cst_94 = arith.constant dense<0.000000e+00> : vector<8x32xf32>
    %195 = tpu.matmul %192, %194, %cst_94 {dimension_numbers = #tpu.dot_dimension_numbers<[1], [0], [0], [1], [0, 0, 1, 1], [], []>} : vector<8x8xf32>, vector<8x32xf32>, vector<8x32xf32> -> vector<8x32xf32>
    %196 = arith.addf %171, %195 : vector<8x32xf32>
    %197 = vector.extract_strided_slice %139 {offsets = [0, 16], sizes = [8, 8], strides = [1, 1]} : vector<8x32xf32> to vector<8x8xf32>
    %198 = vector.extract_strided_slice %145 {offsets = [0, 16], sizes = [8, 8], strides = [1, 1]} : vector<8x32xf32> to vector<8x8xf32>
    %199 = vector.extract_strided_slice %146 {offsets = [0, 16], sizes = [8, 8], strides = [1, 1]} : vector<8x32xf32> to vector<8x8xf32>
    %cst_95 = arith.constant dense<0.000000e+00> : vector<8x8xf32>
    %200 = tpu.matmul %197, %198, %cst_95 {dimension_numbers = #tpu.dot_dimension_numbers<[1], [1], [0], [0], [0, 0, 1, 0], [], []>} : vector<8x8xf32>, vector<8x8xf32>, vector<8x8xf32> -> vector<8x8xf32>
    %cst_96 = arith.constant 0.000000e+00 : f32
    %201 = vector.broadcast %cst_96 : f32 to vector<1x8xf32>
    %202 = arith.cmpf one, %7, %201 : vector<1x8xf32>
    %cst_97 = arith.constant -1.000000e+09 : f32
    %203 = vector.shape_cast %202 : vector<1x8xi1> to vector<1x8xi1>
    %204 = vector.broadcast %203 : vector<1x8xi1> to vector<8x8xi1>
    %205 = vector.broadcast %cst_97 : f32 to vector<8x8xf32>
    %206 = arith.select %204, %200, %205 : vector<8x8xi1>, vector<8x8xf32>
    %cst_98 = arith.constant dense<0xFF800000> : vector<8xf32>
    %207 = vector.multi_reduction <maximumf>, %206, %cst_98 [1] : vector<8x8xf32> to vector<8xf32>
    %208 = vector.shape_cast %207 : vector<8xf32> to vector<8x1xf32>
    %209 = vector.broadcast %208 : vector<8x1xf32> to vector<8x8xf32>
    %210 = arith.subf %206, %209 : vector<8x8xf32>
    %211 = math.exp %210 : vector<8x8xf32>
    %cst_99 = arith.constant dense<0.000000e+00> : vector<8xf32>
    %212 = vector.multi_reduction <add>, %211, %cst_99 [1] : vector<8x8xf32> to vector<8xf32>
    %213 = vector.shape_cast %212 : vector<8xf32> to vector<8x1xf32>
    %214 = tpu.reciprocal %213 {approx = true} : vector<8x1xf32> -> vector<8x1xf32>
    %215 = vector.broadcast %214 : vector<8x1xf32> to vector<8x8xf32>
    %216 = arith.mulf %211, %215 : vector<8x8xf32>
    %cst_100 = arith.constant dense<0.000000e+00> : vector<8x8xf32>
    %217 = tpu.matmul %216, %199, %cst_100 {dimension_numbers = #tpu.dot_dimension_numbers<[1], [0], [0], [1], [0, 0, 1, 1], [], []>} : vector<8x8xf32>, vector<8x8xf32>, vector<8x8xf32> -> vector<8x8xf32>
    %c2_101 = arith.constant 2 : index
    %c0_102 = arith.constant 0 : index
    %c0_103 = arith.constant 0 : index
    %218 = vector.load %arg15[%c2_101, %c0_102, %c0_103] : memref<4x8x32xf32, #tpu.memory_space<vmem>>, vector<1x8x32xf32>
    %219 = vector.shape_cast %218 : vector<1x8x32xf32> to vector<8x32xf32>
    %cst_104 = arith.constant dense<0.000000e+00> : vector<8x32xf32>
    %220 = tpu.matmul %217, %219, %cst_104 {dimension_numbers = #tpu.dot_dimension_numbers<[1], [0], [0], [1], [0, 0, 1, 1], [], []>} : vector<8x8xf32>, vector<8x32xf32>, vector<8x32xf32> -> vector<8x32xf32>
    %221 = arith.addf %196, %220 : vector<8x32xf32>
    %222 = vector.extract_strided_slice %139 {offsets = [0, 24], sizes = [8, 8], strides = [1, 1]} : vector<8x32xf32> to vector<8x8xf32>
    %223 = vector.extract_strided_slice %145 {offsets = [0, 24], sizes = [8, 8], strides = [1, 1]} : vector<8x32xf32> to vector<8x8xf32>
    %224 = vector.extract_strided_slice %146 {offsets = [0, 24], sizes = [8, 8], strides = [1, 1]} : vector<8x32xf32> to vector<8x8xf32>
    %cst_105 = arith.constant dense<0.000000e+00> : vector<8x8xf32>
    %225 = tpu.matmul %222, %223, %cst_105 {dimension_numbers = #tpu.dot_dimension_numbers<[1], [1], [0], [0], [0, 0, 1, 0], [], []>} : vector<8x8xf32>, vector<8x8xf32>, vector<8x8xf32> -> vector<8x8xf32>
    %cst_106 = arith.constant 0.000000e+00 : f32
    %226 = vector.broadcast %cst_106 : f32 to vector<1x8xf32>
    %227 = arith.cmpf one, %7, %226 : vector<1x8xf32>
    %cst_107 = arith.constant -1.000000e+09 : f32
    %228 = vector.shape_cast %227 : vector<1x8xi1> to vector<1x8xi1>
    %229 = vector.broadcast %228 : vector<1x8xi1> to vector<8x8xi1>
    %230 = vector.broadcast %cst_107 : f32 to vector<8x8xf32>
    %231 = arith.select %229, %225, %230 : vector<8x8xi1>, vector<8x8xf32>
    %cst_108 = arith.constant dense<0xFF800000> : vector<8xf32>
    %232 = vector.multi_reduction <maximumf>, %231, %cst_108 [1] : vector<8x8xf32> to vector<8xf32>
    %233 = vector.shape_cast %232 : vector<8xf32> to vector<8x1xf32>
    %234 = vector.broadcast %233 : vector<8x1xf32> to vector<8x8xf32>
    %235 = arith.subf %231, %234 : vector<8x8xf32>
    %236 = math.exp %235 : vector<8x8xf32>
    %cst_109 = arith.constant dense<0.000000e+00> : vector<8xf32>
    %237 = vector.multi_reduction <add>, %236, %cst_109 [1] : vector<8x8xf32> to vector<8xf32>
    %238 = vector.shape_cast %237 : vector<8xf32> to vector<8x1xf32>
    %239 = tpu.reciprocal %238 {approx = true} : vector<8x1xf32> -> vector<8x1xf32>
    %240 = vector.broadcast %239 : vector<8x1xf32> to vector<8x8xf32>
    %241 = arith.mulf %236, %240 : vector<8x8xf32>
    %cst_110 = arith.constant dense<0.000000e+00> : vector<8x8xf32>
    %242 = tpu.matmul %241, %224, %cst_110 {dimension_numbers = #tpu.dot_dimension_numbers<[1], [0], [0], [1], [0, 0, 1, 1], [], []>} : vector<8x8xf32>, vector<8x8xf32>, vector<8x8xf32> -> vector<8x8xf32>
    %c3_111 = arith.constant 3 : index
    %c0_112 = arith.constant 0 : index
    %c0_113 = arith.constant 0 : index
    %243 = vector.load %arg15[%c3_111, %c0_112, %c0_113] : memref<4x8x32xf32, #tpu.memory_space<vmem>>, vector<1x8x32xf32>
    %244 = vector.shape_cast %243 : vector<1x8x32xf32> to vector<8x32xf32>
    %cst_114 = arith.constant dense<0.000000e+00> : vector<8x32xf32>
    %245 = tpu.matmul %242, %244, %cst_114 {dimension_numbers = #tpu.dot_dimension_numbers<[1], [0], [0], [1], [0, 0, 1, 1], [], []>} : vector<8x8xf32>, vector<8x32xf32>, vector<8x32xf32> -> vector<8x32xf32>
    %246 = arith.addf %221, %245 : vector<8x32xf32>
    %247 = vector.broadcast %147 : vector<1x32xf32> to vector<8x32xf32>
    %248 = arith.addf %246, %247 : vector<8x32xf32>
    %c0_115 = arith.constant 0 : index
    %c0_116 = arith.constant 0 : index
    %249 = vector.load %arg17[%c0_115, %c0_116] : memref<1x32xf32, #tpu.memory_space<vmem>>, vector<1x32xf32>
    %c0_117 = arith.constant 0 : index
    %c0_118 = arith.constant 0 : index
    %250 = vector.load %arg18[%c0_117, %c0_118] : memref<1x32xf32, #tpu.memory_space<vmem>>, vector<1x32xf32>
    %251 = arith.addf %134, %248 : vector<8x32xf32>
    %cst_119 = arith.constant dense<0.000000e+00> : vector<8xf32>
    %252 = vector.multi_reduction <add>, %251, %cst_119 [1] : vector<8x32xf32> to vector<8xf32>
    %253 = vector.shape_cast %252 : vector<8xf32> to vector<8x1xf32>
    %cst_120 = arith.constant 3.200000e+01 : f32
    %254 = vector.broadcast %cst_120 : f32 to vector<8x1xf32>
    %255 = arith.divf %253, %254 : vector<8x1xf32>
    %256 = vector.broadcast %255 : vector<8x1xf32> to vector<8x32xf32>
    %257 = arith.subf %251, %256 : vector<8x32xf32>
    %258 = arith.mulf %257, %257 : vector<8x32xf32>
    %cst_121 = arith.constant dense<0.000000e+00> : vector<8xf32>
    %259 = vector.multi_reduction <add>, %258, %cst_121 [1] : vector<8x32xf32> to vector<8xf32>
    %260 = vector.shape_cast %259 : vector<8xf32> to vector<8x1xf32>
    %cst_122 = arith.constant 3.200000e+01 : f32
    %261 = vector.broadcast %cst_122 : f32 to vector<8x1xf32>
    %262 = arith.divf %260, %261 : vector<8x1xf32>
    %263 = vector.broadcast %255 : vector<8x1xf32> to vector<8x32xf32>
    %264 = arith.subf %251, %263 : vector<8x32xf32>
    %cst_123 = arith.constant 9.99999974E-6 : f32
    %265 = vector.broadcast %cst_123 : f32 to vector<8x1xf32>
    %266 = arith.addf %262, %265 : vector<8x1xf32>
    %267 = math.rsqrt %266 : vector<8x1xf32>
    %268 = vector.broadcast %267 : vector<8x1xf32> to vector<8x32xf32>
    %269 = arith.mulf %264, %268 : vector<8x32xf32>
    %270 = vector.broadcast %249 : vector<1x32xf32> to vector<8x32xf32>
    %271 = arith.mulf %269, %270 : vector<8x32xf32>
    %272 = vector.broadcast %250 : vector<1x32xf32> to vector<8x32xf32>
    %273 = arith.addf %271, %272 : vector<8x32xf32>
    %c0_124 = arith.constant 0 : index
    %c0_125 = arith.constant 0 : index
    %274 = vector.load %arg19[%c0_124, %c0_125] : memref<32x64xf32, #tpu.memory_space<vmem>>, vector<32x64xf32>
    %c0_126 = arith.constant 0 : index
    %c0_127 = arith.constant 0 : index
    %275 = vector.load %arg20[%c0_126, %c0_127] : memref<1x64xf32, #tpu.memory_space<vmem>>, vector<1x64xf32>
    %c0_128 = arith.constant 0 : index
    %c0_129 = arith.constant 0 : index
    %276 = vector.load %arg21[%c0_128, %c0_129] : memref<64x32xf32, #tpu.memory_space<vmem>>, vector<64x32xf32>
    %c0_130 = arith.constant 0 : index
    %c0_131 = arith.constant 0 : index
    %277 = vector.load %arg22[%c0_130, %c0_131] : memref<1x32xf32, #tpu.memory_space<vmem>>, vector<1x32xf32>
    %cst_132 = arith.constant dense<0.000000e+00> : vector<8x64xf32>
    %278 = tpu.matmul %273, %274, %cst_132 {dimension_numbers = #tpu.dot_dimension_numbers<[1], [0], [0], [1], [0, 0, 1, 1], [], []>} : vector<8x32xf32>, vector<32x64xf32>, vector<8x64xf32> -> vector<8x64xf32>
    %279 = vector.broadcast %275 : vector<1x64xf32> to vector<8x64xf32>
    %280 = arith.addf %278, %279 : vector<8x64xf32>
    %cst_133 = arith.constant 0.000000e+00 : f32
    %281 = vector.broadcast %cst_133 : f32 to vector<8x64xf32>
    %282 = arith.maximumf %280, %281 : vector<8x64xf32>
    %cst_134 = arith.constant dense<0.000000e+00> : vector<8x32xf32>
    %283 = tpu.matmul %282, %276, %cst_134 {dimension_numbers = #tpu.dot_dimension_numbers<[1], [0], [0], [1], [0, 0, 1, 1], [], []>} : vector<8x64xf32>, vector<64x32xf32>, vector<8x32xf32> -> vector<8x32xf32>
    %284 = vector.broadcast %277 : vector<1x32xf32> to vector<8x32xf32>
    %285 = arith.addf %283, %284 : vector<8x32xf32>
    %c0_135 = arith.constant 0 : index
    %c0_136 = arith.constant 0 : index
    %286 = vector.load %arg23[%c0_135, %c0_136] : memref<1x32xf32, #tpu.memory_space<vmem>>, vector<1x32xf32>
    %c0_137 = arith.constant 0 : index
    %c0_138 = arith.constant 0 : index
    %287 = vector.load %arg24[%c0_137, %c0_138] : memref<1x32xf32, #tpu.memory_space<vmem>>, vector<1x32xf32>
    %288 = arith.addf %273, %285 : vector<8x32xf32>
    %cst_139 = arith.constant dense<0.000000e+00> : vector<8xf32>
    %289 = vector.multi_reduction <add>, %288, %cst_139 [1] : vector<8x32xf32> to vector<8xf32>
    %290 = vector.shape_cast %289 : vector<8xf32> to vector<8x1xf32>
    %cst_140 = arith.constant 3.200000e+01 : f32
    %291 = vector.broadcast %cst_140 : f32 to vector<8x1xf32>
    %292 = arith.divf %290, %291 : vector<8x1xf32>
    %293 = vector.broadcast %292 : vector<8x1xf32> to vector<8x32xf32>
    %294 = arith.subf %288, %293 : vector<8x32xf32>
    %295 = arith.mulf %294, %294 : vector<8x32xf32>
    %cst_141 = arith.constant dense<0.000000e+00> : vector<8xf32>
    %296 = vector.multi_reduction <add>, %295, %cst_141 [1] : vector<8x32xf32> to vector<8xf32>
    %297 = vector.shape_cast %296 : vector<8xf32> to vector<8x1xf32>
    %cst_142 = arith.constant 3.200000e+01 : f32
    %298 = vector.broadcast %cst_142 : f32 to vector<8x1xf32>
    %299 = arith.divf %297, %298 : vector<8x1xf32>
    %300 = vector.broadcast %292 : vector<8x1xf32> to vector<8x32xf32>
    %301 = arith.subf %288, %300 : vector<8x32xf32>
    %cst_143 = arith.constant 9.99999974E-6 : f32
    %302 = vector.broadcast %cst_143 : f32 to vector<8x1xf32>
    %303 = arith.addf %299, %302 : vector<8x1xf32>
    %304 = math.rsqrt %303 : vector<8x1xf32>
    %305 = vector.broadcast %304 : vector<8x1xf32> to vector<8x32xf32>
    %306 = arith.mulf %301, %305 : vector<8x32xf32>
    %307 = vector.broadcast %286 : vector<1x32xf32> to vector<8x32xf32>
    %308 = arith.mulf %306, %307 : vector<8x32xf32>
    %309 = vector.broadcast %287 : vector<1x32xf32> to vector<8x32xf32>
    %310 = arith.addf %308, %309 : vector<8x32xf32>
    %c0_144 = arith.constant 0 : index
    %c0_145 = arith.constant 0 : index
    %c0_146 = arith.constant 0 : index
    %311 = vector.load %arg25[%c0_144, %c0_145, %c0_146] : memref<1x8x32xf32, #tpu.memory_space<vmem>>, vector<1x8x32xf32>
    %312 = vector.shape_cast %311 : vector<1x8x32xf32> to vector<8x32xf32>
    %313 = vector.shape_cast %310 : vector<8x32xf32> to vector<1x8x32xf32>
    tpu.vector_store %arg25[%c0_144, %c0_145, %c0_146], %313 {strides = array<i32>} : memref<1x8x32xf32, #tpu.memory_space<vmem>>, vector<1x8x32xf32>,
    return
  }
  func.func @transform_0(%arg0: i32) -> (i32, i32, i32) {
    %c0_i32 = arith.constant 0 : i32
    %c0_i32_0 = arith.constant 0 : i32
    %c0_i32_1 = arith.constant 0 : i32
    return %arg0, %c0_i32, %c0_i32_0 : i32, i32, i32
  }
  func.func @transform_1(%arg0: i32) -> (i32, i32, i32) {
    %c0_i32 = arith.constant 0 : i32
    %c0_i32_0 = arith.constant 0 : i32
    %c0_i32_1 = arith.constant 0 : i32
    return %arg0, %c0_i32, %c0_i32_0 : i32, i32, i32
  }
  func.func @transform_2(%arg0: i32) -> (i32, i32, i32) {
    %c0_i32 = arith.constant 0 : i32
    %c0_i32_0 = arith.constant 0 : i32
    %c0_i32_1 = arith.constant 0 : i32
    return %arg0, %c0_i32, %c0_i32_0 : i32, i32, i32
  }
  func.func @transform_3(%arg0: i32) -> (i32, i32, i32) {
    %c0_i32 = arith.constant 0 : i32
    %c0_i32_0 = arith.constant 0 : i32
    %c0_i32_1 = arith.constant 0 : i32
    return %arg0, %c0_i32, %c0_i32_0 : i32, i32, i32
  }
  func.func @transform_4(%arg0: i32) -> (i32, i32) {
    %c0_i32 = arith.constant 0 : i32
    %c0_i32_0 = arith.constant 0 : i32
    %c0_i32_1 = arith.constant 0 : i32
    return %c0_i32, %c0_i32_0 : i32, i32
  }
  func.func @transform_5(%arg0: i32) -> (i32, i32) {
    %c0_i32 = arith.constant 0 : i32
    %c0_i32_0 = arith.constant 0 : i32
    %c0_i32_1 = arith.constant 0 : i32
    return %c0_i32, %c0_i32_0 : i32, i32
  }
  func.func @transform_6(%arg0: i32) -> (i32, i32, i32) {
    %c0_i32 = arith.constant 0 : i32
    %c0_i32_0 = arith.constant 0 : i32
    %c0_i32_1 = arith.constant 0 : i32
    %c0_i32_2 = arith.constant 0 : i32
    return %c0_i32, %c0_i32_0, %c0_i32_1 : i32, i32, i32
  }
  func.func @transform_7(%arg0: i32) -> (i32, i32) {
    %c0_i32 = arith.constant 0 : i32
    %c0_i32_0 = arith.constant 0 : i32
    %c0_i32_1 = arith.constant 0 : i32
    return %c0_i32, %c0_i32_0 : i32, i32
  }
  func.func @transform_8(%arg0: i32) -> (i32, i32) {
    %c0_i32 = arith.constant 0 : i32
    %c0_i32_0 = arith.constant 0 : i32
    %c0_i32_1 = arith.constant 0 : i32
    return %c0_i32, %c0_i32_0 : i32, i32
  }
  func.func @transform_9(%arg0: i32) -> (i32, i32) {
    %c0_i32 = arith.constant 0 : i32
    %c0_i32_0 = arith.constant 0 : i32
    %c0_i32_1 = arith.constant 0 : i32
    return %c0_i32, %c0_i32_0 : i32, i32
  }
  func.func @transform_10(%arg0: i32) -> (i32, i32) {
    %c0_i32 = arith.constant 0 : i32
    %c0_i32_0 = arith.constant 0 : i32
    %c0_i32_1 = arith.constant 0 : i32
    return %c0_i32, %c0_i32_0 : i32, i32
  }
  func.func @transform_11(%arg0: i32) -> (i32, i32) {
    %c0_i32 = arith.constant 0 : i32
    %c0_i32_0 = arith.constant 0 : i32
    %c0_i32_1 = arith.constant 0 : i32
    return %c0_i32, %c0_i32_0 : i32, i32
  }
  func.func @transform_12(%arg0: i32) -> (i32, i32) {
    %c0_i32 = arith.constant 0 : i32
    %c0_i32_0 = arith.constant 0 : i32
    %c0_i32_1 = arith.constant 0 : i32
    return %c0_i32, %c0_i32_0 : i32, i32
  }
  func.func @transform_13(%arg0: i32) -> (i32, i32) {
    %c0_i32 = arith.constant 0 : i32
    %c0_i32_0 = arith.constant 0 : i32
    %c0_i32_1 = arith.constant 0 : i32
    return %c0_i32, %c0_i32_0 : i32, i32
  }
  func.func @transform_14(%arg0: i32) -> (i32, i32, i32) {
    %c0_i32 = arith.constant 0 : i32
    %c0_i32_0 = arith.constant 0 : i32
    %c0_i32_1 = arith.constant 0 : i32
    %c0_i32_2 = arith.constant 0 : i32
    return %c0_i32, %c0_i32_0, %c0_i32_1 : i32, i32, i32
  }
  func.func @transform_15(%arg0: i32) -> (i32, i32) {
    %c0_i32 = arith.constant 0 : i32
    %c0_i32_0 = arith.constant 0 : i32
    %c0_i32_1 = arith.constant 0 : i32
    return %c0_i32, %c0_i32_0 : i32, i32
  }
  func.func @transform_16(%arg0: i32) -> (i32, i32) {
    %c0_i32 = arith.constant 0 : i32
    %c0_i32_0 = arith.constant 0 : i32
    %c0_i32_1 = arith.constant 0 : i32
    return %c0_i32, %c0_i32_0 : i32, i32
  }
  func.func @transform_17(%arg0: i32) -> (i32, i32) {
    %c0_i32 = arith.constant 0 : i32
    %c0_i32_0 = arith.constant 0 : i32
    %c0_i32_1 = arith.constant 0 : i32
    return %c0_i32, %c0_i32_0 : i32, i32
  }
  func.func @transform_18(%arg0: i32) -> (i32, i32) {
    %c0_i32 = arith.constant 0 : i32
    %c0_i32_0 = arith.constant 0 : i32
    %c0_i32_1 = arith.constant 0 : i32
    return %c0_i32, %c0_i32_0 : i32, i32
  }
  func.func @transform_19(%arg0: i32) -> (i32, i32) {
    %c0_i32 = arith.constant 0 : i32
    %c0_i32_0 = arith.constant 0 : i32
    %c0_i32_1 = arith.constant 0 : i32
    return %c0_i32, %c0_i32_0 : i32, i32
  }
  func.func @transform_20(%arg0: i32) -> (i32, i32) {
    %c0_i32 = arith.constant 0 : i32
    %c0_i32_0 = arith.constant 0 : i32
    %c0_i32_1 = arith.constant 0 : i32
    return %c0_i32, %c0_i32_0 : i32, i32
  }
  func.func @transform_21(%arg0: i32) -> (i32, i32) {
    %c0_i32 = arith.constant 0 : i32
    %c0_i32_0 = arith.constant 0 : i32
    %c0_i32_1 = arith.constant 0 : i32
    return %c0_i32, %c0_i32_0 : i32, i32
  }
  func.func @transform_22(%arg0: i32) -> (i32, i32) {
    %c0_i32 = arith.constant 0 : i32
    %c0_i32_0 = arith.constant 0 : i32
    %c0_i32_1 = arith.constant 0 : i32
    return %c0_i32, %c0_i32_0 : i32, i32
  }
  func.func @transform_23(%arg0: i32) -> (i32, i32) {
    %c0_i32 = arith.constant 0 : i32
    %c0_i32_0 = arith.constant 0 : i32
    %c0_i32_1 = arith.constant 0 : i32
    return %c0_i32, %c0_i32_0 : i32, i32
  }
  func.func @transform_24(%arg0: i32) -> (i32, i32, i32) {
    %c0_i32 = arith.constant 0 : i32
    %c0_i32_0 = arith.constant 0 : i32
    %c0_i32_1 = arith.constant 0 : i32
    return %arg0, %c0_i32, %c0_i32_0 : i32, i32, i32
  }
}

module attributes {stable_mosaic.version = 11 : i64} {
  func.func @_decoder_layer_kernel(%arg0: i32, %arg1: memref<1x8x32xf32, #tpu.memory_space<vmem>>, %arg2: memref<1x8x32xf32, #tpu.memory_space<vmem>>, %arg3: memref<1x8x8xf32, #tpu.memory_space<vmem>>, %arg4: memref<1x1x8xf32, #tpu.memory_space<vmem>>, %arg5: memref<32x96xf32, #tpu.memory_space<vmem>>, %arg6: memref<1x96xf32, #tpu.memory_space<vmem>>, %arg7: memref<4x8x32xf32, #tpu.memory_space<vmem>>, %arg8: memref<1x32xf32, #tpu.memory_space<vmem>>, %arg9: memref<1x32xf32, #tpu.memory_space<vmem>>, %arg10: memref<1x32xf32, #tpu.memory_space<vmem>>, %arg11: memref<32x32xf32, #tpu.memory_space<vmem>>, %arg12: memref<1x32xf32, #tpu.memory_space<vmem>>, %arg13: memref<32x64xf32, #tpu.memory_space<vmem>>, %arg14: memref<1x64xf32, #tpu.memory_space<vmem>>, %arg15: memref<4x8x32xf32, #tpu.memory_space<vmem>>, %arg16: memref<1x32xf32, #tpu.memory_space<vmem>>, %arg17: memref<1x32xf32, #tpu.memory_space<vmem>>, %arg18: memref<1x32xf32, #tpu.memory_space<vmem>>, %arg19: memref<32x64xf32, #tpu.memory_space<vmem>>, %arg20: memref<1x64xf32, #tpu.memory_space<vmem>>, %arg21: memref<64x32xf32, #tpu.memory_space<vmem>>, %arg22: memref<1x32xf32, #tpu.memory_space<vmem>>, %arg23: memref<1x32xf32, #tpu.memory_space<vmem>>, %arg24: memref<1x32xf32, #tpu.memory_space<vmem>>, %arg25: memref<1x8x32xf32, #tpu.memory_space<vmem>>) attributes {dimension_semantics = [#tpu.dimension_semantics<parallel>], iteration_bounds = array<i64: 2>, scalar_prefetch = 0 : i64, scratch_operands = 0 : i64, tpu.core_type = #tpu.core_type<tc>, window_params = [{transform_indices = @transform_0, window_bounds = array<i64: 1, 8, 32>}, {transform_indices = @transform_1, window_bounds = array<i64: 1, 8, 32>}, {transform_indices = @transform_2, window_bounds = array<i64: 1, 8, 8>}, {transform_indices = @transform_3, window_bounds = array<i64: 1, 1, 8>}, {pipeline_mode = #tpu.pipeline_mode<synchronous>, transform_indices = @transform_4, window_bounds = array<i64: 32, 96>}, {pipeline_mode = #tpu.pipeline_mode<synchronous>, transform_indices = @transform_5, window_bounds = array<i64: 1, 96>}, {pipeline_mode = #tpu.pipeline_mode<synchronous>, transform_indices = @transform_6, window_bounds = array<i64: 4, 8, 32>}, {pipeline_mode = #tpu.pipeline_mode<synchronous>, transform_indices = @transform_7, window_bounds = array<i64: 1, 32>}, {pipeline_mode = #tpu.pipeline_mode<synchronous>, transform_indices = @transform_8, window_bounds = array<i64: 1, 32>}, {pipeline_mode = #tpu.pipeline_mode<synchronous>, transform_indices = @transform_9, window_bounds = array<i64: 1, 32>}, {pipeline_mode = #tpu.pipeline_mode<synchronous>, transform_indices = @transform_10, window_bounds = array<i64: 32, 32>}, {pipeline_mode = #tpu.pipeline_mode<synchronous>, transform_indices = @transform_11, window_bounds = array<i64: 1, 32>}, {pipeline_mode = #tpu.pipeline_mode<synchronous>, transform_indices = @transform_12, window_bounds = array<i64: 32, 64>}, {pipeline_mode = #tpu.pipeline_mode<synchronous>, transform_indices = @transform_13, window_bounds = array<i64: 1, 64>}, {pipeline_mode = #tpu.pipeline_mode<synchronous>, transform_indices = @transform_14, window_bounds = array<i64: 4, 8, 32>}, {pipeline_mode = #tpu.pipeline_mode<synchronous>, transform_indices = @transform_15, window_bounds = array<i64: 1, 32>}, {pipeline_mode = #tpu.pipeline_mode<synchronous>, transform_indices = @transform_16, window_bounds = array<i64: 1, 32>}, {pipeline_mode = #tpu.pipeline_mode<synchronous>, transform_indices = @transform_17, window_bounds = array<i64: 1, 32>}, {pipeline_mode = #tpu.pipeline_mode<synchronous>, transform_indices = @transform_18, window_bounds = array<i64: 32, 64>}, {pipeline_mode = #tpu.pipeline_mode<synchronous>, transform_indices = @transform_19, window_bounds = array<i64: 1, 64>}, {pipeline_mode = #tpu.pipeline_mode<synchronous>, transform_indices = @transform_20, window_bounds = array<i64: 64, 32>}, {pipeline_mode = #tpu.pipeline_mode<synchronous>, transform_indices = @transform_21, window_bounds = array<i64: 1, 32>}, {pipeline_mode = #tpu.pipeline_mode<synchronous>, transform_indices = @transform_22, window_bounds = array<i64: 1, 32>}, {pipeline_mode = #tpu.pipeline_mode<synchronous>, transform_indices = @transform_23, window_bounds = array<i64: 1, 32>}, {transform_indices = @transform_24, window_bounds = array<i64: 1, 8, 32>}]} {
    %c0 = arith.constant 0 : index
    %c0_0 = arith.constant 0 : index
    %c0_1 = arith.constant 0 : index
    %0 = vector.load %arg1[%c0, %c0_0, %c0_1] : memref<1x8x32xf32, #tpu.memory_space<vmem>>, vector<1x8x32xf32>
    %1 = vector.shape_cast %0 : vector<1x8x32xf32> to vector<8x32xf32>
    %c0_2 = arith.constant 0 : index
    %c0_3 = arith.constant 0 : index
    %c0_4 = arith.constant 0 : index
    %2 = vector.load %arg2[%c0_2, %c0_3, %c0_4] : memref<1x8x32xf32, #tpu.memory_space<vmem>>, vector<1x8x32xf32>
    %3 = vector.shape_cast %2 : vector<1x8x32xf32> to vector<8x32xf32>
    %c0_5 = arith.constant 0 : index
    %c0_6 = arith.constant 0 : index
    %c0_7 = arith.constant 0 : index
    %4 = vector.load %arg3[%c0_5, %c0_6, %c0_7] : memref<1x8x8xf32, #tpu.memory_space<vmem>>, vector<1x8x8xf32>
    %5 = vector.shape_cast %4 : vector<1x8x8xf32> to vector<8x8xf32>
    %c0_8 = arith.constant 0 : index
    %c0_9 = arith.constant 0 : index
    %c0_10 = arith.constant 0 : index
    %6 = vector.load %arg4[%c0_8, %c0_9, %c0_10] : memref<1x1x8xf32, #tpu.memory_space<vmem>>, vector<1x1x8xf32>
    %7 = vector.shape_cast %6 : vector<1x1x8xf32> to vector<1x8xf32>
    %c0_11 = arith.constant 0 : index
    %c0_12 = arith.constant 0 : index
    %8 = vector.load %arg5[%c0_11, %c0_12] : memref<32x96xf32, #tpu.memory_space<vmem>>, vector<32x96xf32>
    %cst = arith.constant dense<0.000000e+00> : vector<8x96xf32>
    %9 = tpu.matmul %1, %8, %cst {dimension_numbers = #tpu.dot_dimension_numbers<[1], [0], [0], [1], [0, 0, 1, 1], [], []>} : vector<8x32xf32>, vector<32x96xf32>, vector<8x96xf32> -> vector<8x96xf32>
    %c0_13 = arith.constant 0 : index
    %c0_14 = arith.constant 0 : index
    %10 = vector.load %arg6[%c0_13, %c0_14] : memref<1x96xf32, #tpu.memory_space<vmem>>, vector<1x96xf32>
    %11 = vector.broadcast %10 : vector<1x96xf32> to vector<8x96xf32>
    %12 = arith.addf %9, %11 : vector<8x96xf32>
    %13 = vector.extract_strided_slice %12 {offsets = [0, 0], sizes = [8, 32], strides = [1, 1]} : vector<8x96xf32> to vector<8x32xf32>
    %14 = vector.extract_strided_slice %12 {offsets = [0, 32], sizes = [8, 32], strides = [1, 1]} : vector<8x96xf32> to vector<8x32xf32>
    %15 = vector.extract_strided_slice %12 {offsets = [0, 64], sizes = [8, 32], strides = [1, 1]} : vector<8x96xf32> to vector<8x32xf32>
    %c0_15 = arith.constant 0 : index
    %c0_16 = arith.constant 0 : index
    %16 = vector.load %arg8[%c0_15, %c0_16] : memref<1x32xf32, #tpu.memory_space<vmem>>, vector<1x32xf32>
    %17 = vector.extract_strided_slice %13 {offsets = [0, 0], sizes = [8, 8], strides = [1, 1]} : vector<8x32xf32> to vector<8x8xf32>
    %18 = vector.extract_strided_slice %14 {offsets = [0, 0], sizes = [8, 8], strides = [1, 1]} : vector<8x32xf32> to vector<8x8xf32>
    %19 = vector.extract_strided_slice %15 {offsets = [0, 0], sizes = [8, 8], strides = [1, 1]} : vector<8x32xf32> to vector<8x8xf32>
    %cst_17 = arith.constant dense<0.000000e+00> : vector<8x8xf32>
    %20 = tpu.matmul %17, %18, %cst_17 {dimension_numbers = #tpu.dot_dimension_numbers<[1], [1], [0], [0], [0, 0, 1, 0], [], []>} : vector<8x8xf32>, vector<8x8xf32>, vector<8x8xf32> -> vector<8x8xf32>
    %cst_18 = arith.constant 0.000000e+00 : f32
    %21 = vector.broadcast %cst_18 : f32 to vector<8x8xf32>
    %22 = arith.cmpf one, %5, %21 : vector<8x8xf32>
    %cst_19 = arith.constant -1.000000e+09 : f32
    %23 = vector.broadcast %cst_19 : f32 to vector<8x8xf32>
    %24 = arith.select %22, %20, %23 : vector<8x8xi1>, vector<8x8xf32>
    %cst_20 = arith.constant dense<0xFF800000> : vector<8xf32>
    %25 = vector.multi_reduction <maximumf>, %24, %cst_20 [1] : vector<8x8xf32> to vector<8xf32>
    %26 = vector.shape_cast %25 : vector<8xf32> to vector<8x1xf32>
    %27 = vector.broadcast %26 : vector<8x1xf32> to vector<8x8xf32>
    %28 = arith.subf %24, %27 : vector<8x8xf32>
    %29 = math.exp %28 : vector<8x8xf32>
    %cst_21 = arith.constant dense<0.000000e+00> : vector<8xf32>
    %30 = vector.multi_reduction <add>, %29, %cst_21 [1] : vector<8x8xf32> to vector<8xf32>
    %31 = vector.shape_cast %30 : vector<8xf32> to vector<8x1xf32>
    %32 = tpu.reciprocal %31 {approx = true} : vector<8x1xf32> -> vector<8x1xf32>
    %33 = vector.broadcast %32 : vector<8x1xf32> to vector<8x8xf32>
    %34 = arith.mulf %29, %33 : vector<8x8xf32>
    %cst_22 = arith.constant dense<0.000000e+00> : vector<8x8xf32>
    %35 = tpu.matmul %34, %19, %cst_22 {dimension_numbers = #tpu.dot_dimension_numbers<[1], [0], [0], [1], [0, 0, 1, 1], [], []>} : vector<8x8xf32>, vector<8x8xf32>, vector<8x8xf32> -> vector<8x8xf32>
    %c0_23 = arith.constant 0 : index
    %c0_24 = arith.constant 0 : index
    %c0_25 = arith.constant 0 : index
    %36 = vector.load %arg7[%c0_23, %c0_24, %c0_25] : memref<4x8x32xf32, #tpu.memory_space<vmem>>, vector<1x8x32xf32>
    %37 = vector.shape_cast %36 : vector<1x8x32xf32> to vector<8x32xf32>
    %cst_26 = arith.constant dense<0.000000e+00> : vector<8x32xf32>
    %38 = tpu.matmul %35, %37, %cst_26 {dimension_numbers = #tpu.dot_dimension_numbers<[1], [0], [0], [1], [0, 0, 1, 1], [], []>} : vector<8x8xf32>, vector<8x32xf32>, vector<8x32xf32> -> vector<8x32xf32>
    %39 = vector.extract_strided_slice %13 {offsets = [0, 8], sizes = [8, 8], strides = [1, 1]} : vector<8x32xf32> to vector<8x8xf32>
    %40 = vector.extract_strided_slice %14 {offsets = [0, 8], sizes = [8, 8], strides = [1, 1]} : vector<8x32xf32> to vector<8x8xf32>
    %41 = vector.extract_strided_slice %15 {offsets = [0, 8], sizes = [8, 8], strides = [1, 1]} : vector<8x32xf32> to vector<8x8xf32>
    %cst_27 = arith.constant dense<0.000000e+00> : vector<8x8xf32>
    %42 = tpu.matmul %39, %40, %cst_27 {dimension_numbers = #tpu.dot_dimension_numbers<[1], [1], [0], [0], [0, 0, 1, 0], [], []>} : vector<8x8xf32>, vector<8x8xf32>, vector<8x8xf32> -> vector<8x8xf32>
    %cst_28 = arith.constant 0.000000e+00 : f32
    %43 = vector.broadcast %cst_28 : f32 to vector<8x8xf32>
    %44 = arith.cmpf one, %5, %43 : vector<8x8xf32>
    %cst_29 = arith.constant -1.000000e+09 : f32
    %45 = vector.broadcast %cst_29 : f32 to vector<8x8xf32>
    %46 = arith.select %44, %42, %45 : vector<8x8xi1>, vector<8x8xf32>
    %cst_30 = arith.constant dense<0xFF800000> : vector<8xf32>
    %47 = vector.multi_reduction <maximumf>, %46, %cst_30 [1] : vector<8x8xf32> to vector<8xf32>
    %48 = vector.shape_cast %47 : vector<8xf32> to vector<8x1xf32>
    %49 = vector.broadcast %48 : vector<8x1xf32> to vector<8x8xf32>
    %50 = arith.subf %46, %49 : vector<8x8xf32>
    %51 = math.exp %50 : vector<8x8xf32>
    %cst_31 = arith.constant dense<0.000000e+00> : vector<8xf32>
    %52 = vector.multi_reduction <add>, %51, %cst_31 [1] : vector<8x8xf32> to vector<8xf32>
    %53 = vector.shape_cast %52 : vector<8xf32> to vector<8x1xf32>
    %54 = tpu.reciprocal %53 {approx = true} : vector<8x1xf32> -> vector<8x1xf32>
    %55 = vector.broadcast %54 : vector<8x1xf32> to vector<8x8xf32>
    %56 = arith.mulf %51, %55 : vector<8x8xf32>
    %cst_32 = arith.constant dense<0.000000e+00> : vector<8x8xf32>
    %57 = tpu.matmul %56, %41, %cst_32 {dimension_numbers = #tpu.dot_dimension_numbers<[1], [0], [0], [1], [0, 0, 1, 1], [], []>} : vector<8x8xf32>, vector<8x8xf32>, vector<8x8xf32> -> vector<8x8xf32>
    %c1 = arith.constant 1 : index
    %c0_33 = arith.constant 0 : index
    %c0_34 = arith.constant 0 : index
    %58 = vector.load %arg7[%c1, %c0_33, %c0_34] : memref<4x8x32xf32, #tpu.memory_space<vmem>>, vector<1x8x32xf32>
    %59 = vector.shape_cast %58 : vector<1x8x32xf32> to vector<8x32xf32>
    %cst_35 = arith.constant dense<0.000000e+00> : vector<8x32xf32>
    %60 = tpu.matmul %57, %59, %cst_35 {dimension_numbers = #tpu.dot_dimension_numbers<[1], [0], [0], [1], [0, 0, 1, 1], [], []>} : vector<8x8xf32>, vector<8x32xf32>, vector<8x32xf32> -> vector<8x32xf32>
    %61 = arith.addf %38, %60 : vector<8x32xf32>
    %62 = vector.extract_strided_slice %13 {offsets = [0, 16], sizes = [8, 8], strides = [1, 1]} : vector<8x32xf32> to vector<8x8xf32>
    %63 = vector.extract_strided_slice %14 {offsets = [0, 16], sizes = [8, 8], strides = [1, 1]} : vector<8x32xf32> to vector<8x8xf32>
    %64 = vector.extract_strided_slice %15 {offsets = [0, 16], sizes = [8, 8], strides = [1, 1]} : vector<8x32xf32> to vector<8x8xf32>
    %cst_36 = arith.constant dense<0.000000e+00> : vector<8x8xf32>
    %65 = tpu.matmul %62, %63, %cst_36 {dimension_numbers = #tpu.dot_dimension_numbers<[1], [1], [0], [0], [0, 0, 1, 0], [], []>} : vector<8x8xf32>, vector<8x8xf32>, vector<8x8xf32> -> vector<8x8xf32>
    %cst_37 = arith.constant 0.000000e+00 : f32
    %66 = vector.broadcast %cst_37 : f32 to vector<8x8xf32>
    %67 = arith.cmpf one, %5, %66 : vector<8x8xf32>
    %cst_38 = arith.constant -1.000000e+09 : f32
    %68 = vector.broadcast %cst_38 : f32 to vector<8x8xf32>
    %69 = arith.select %67, %65, %68 : vector<8x8xi1>, vector<8x8xf32>
    %cst_39 = arith.constant dense<0xFF800000> : vector<8xf32>
    %70 = vector.multi_reduction <maximumf>, %69, %cst_39 [1] : vector<8x8xf32> to vector<8xf32>
    %71 = vector.shape_cast %70 : vector<8xf32> to vector<8x1xf32>
    %72 = vector.broadcast %71 : vector<8x1xf32> to vector<8x8xf32>
    %73 = arith.subf %69, %72 : vector<8x8xf32>
    %74 = math.exp %73 : vector<8x8xf32>
    %cst_40 = arith.constant dense<0.000000e+00> : vector<8xf32>
    %75 = vector.multi_reduction <add>, %74, %cst_40 [1] : vector<8x8xf32> to vector<8xf32>
    %76 = vector.shape_cast %75 : vector<8xf32> to vector<8x1xf32>
    %77 = tpu.reciprocal %76 {approx = true} : vector<8x1xf32> -> vector<8x1xf32>
    %78 = vector.broadcast %77 : vector<8x1xf32> to vector<8x8xf32>
    %79 = arith.mulf %74, %78 : vector<8x8xf32>
    %cst_41 = arith.constant dense<0.000000e+00> : vector<8x8xf32>
    %80 = tpu.matmul %79, %64, %cst_41 {dimension_numbers = #tpu.dot_dimension_numbers<[1], [0], [0], [1], [0, 0, 1, 1], [], []>} : vector<8x8xf32>, vector<8x8xf32>, vector<8x8xf32> -> vector<8x8xf32>
    %c2 = arith.constant 2 : index
    %c0_42 = arith.constant 0 : index
    %c0_43 = arith.constant 0 : index
    %81 = vector.load %arg7[%c2, %c0_42, %c0_43] : memref<4x8x32xf32, #tpu.memory_space<vmem>>, vector<1x8x32xf32>
    %82 = vector.shape_cast %81 : vector<1x8x32xf32> to vector<8x32xf32>
    %cst_44 = arith.constant dense<0.000000e+00> : vector<8x32xf32>
    %83 = tpu.matmul %80, %82, %cst_44 {dimension_numbers = #tpu.dot_dimension_numbers<[1], [0], [0], [1], [0, 0, 1, 1], [], []>} : vector<8x8xf32>, vector<8x32xf32>, vector<8x32xf32> -> vector<8x32xf32>
    %84 = arith.addf %61, %83 : vector<8x32xf32>
    %85 = vector.extract_strided_slice %13 {offsets = [0, 24], sizes = [8, 8], strides = [1, 1]} : vector<8x32xf32> to vector<8x8xf32>
    %86 = vector.extract_strided_slice %14 {offsets = [0, 24], sizes = [8, 8], strides = [1, 1]} : vector<8x32xf32> to vector<8x8xf32>
    %87 = vector.extract_strided_slice %15 {offsets = [0, 24], sizes = [8, 8], strides = [1, 1]} : vector<8x32xf32> to vector<8x8xf32>
    %cst_45 = arith.constant dense<0.000000e+00> : vector<8x8xf32>
    %88 = tpu.matmul %85, %86, %cst_45 {dimension_numbers = #tpu.dot_dimension_numbers<[1], [1], [0], [0], [0, 0, 1, 0], [], []>} : vector<8x8xf32>, vector<8x8xf32>, vector<8x8xf32> -> vector<8x8xf32>
    %cst_46 = arith.constant 0.000000e+00 : f32
    %89 = vector.broadcast %cst_46 : f32 to vector<8x8xf32>
    %90 = arith.cmpf one, %5, %89 : vector<8x8xf32>
    %cst_47 = arith.constant -1.000000e+09 : f32
    %91 = vector.broadcast %cst_47 : f32 to vector<8x8xf32>
    %92 = arith.select %90, %88, %91 : vector<8x8xi1>, vector<8x8xf32>
    %cst_48 = arith.constant dense<0xFF800000> : vector<8xf32>
    %93 = vector.multi_reduction <maximumf>, %92, %cst_48 [1] : vector<8x8xf32> to vector<8xf32>
    %94 = vector.shape_cast %93 : vector<8xf32> to vector<8x1xf32>
    %95 = vector.broadcast %94 : vector<8x1xf32> to vector<8x8xf32>
    %96 = arith.subf %92, %95 : vector<8x8xf32>
    %97 = math.exp %96 : vector<8x8xf32>
    %cst_49 = arith.constant dense<0.000000e+00> : vector<8xf32>
    %98 = vector.multi_reduction <add>, %97, %cst_49 [1] : vector<8x8xf32> to vector<8xf32>
    %99 = vector.shape_cast %98 : vector<8xf32> to vector<8x1xf32>
    %100 = tpu.reciprocal %99 {approx = true} : vector<8x1xf32> -> vector<8x1xf32>
    %101 = vector.broadcast %100 : vector<8x1xf32> to vector<8x8xf32>
    %102 = arith.mulf %97, %101 : vector<8x8xf32>
    %cst_50 = arith.constant dense<0.000000e+00> : vector<8x8xf32>
    %103 = tpu.matmul %102, %87, %cst_50 {dimension_numbers = #tpu.dot_dimension_numbers<[1], [0], [0], [1], [0, 0, 1, 1], [], []>} : vector<8x8xf32>, vector<8x8xf32>, vector<8x8xf32> -> vector<8x8xf32>
    %c3 = arith.constant 3 : index
    %c0_51 = arith.constant 0 : index
    %c0_52 = arith.constant 0 : index
    %104 = vector.load %arg7[%c3, %c0_51, %c0_52] : memref<4x8x32xf32, #tpu.memory_space<vmem>>, vector<1x8x32xf32>
    %105 = vector.shape_cast %104 : vector<1x8x32xf32> to vector<8x32xf32>
    %cst_53 = arith.constant dense<0.000000e+00> : vector<8x32xf32>
    %106 = tpu.matmul %103, %105, %cst_53 {dimension_numbers = #tpu.dot_dimension_numbers<[1], [0], [0], [1], [0, 0, 1, 1], [], []>} : vector<8x8xf32>, vector<8x32xf32>, vector<8x32xf32> -> vector<8x32xf32>
    %107 = arith.addf %84, %106 : vector<8x32xf32>
    %108 = vector.broadcast %16 : vector<1x32xf32> to vector<8x32xf32>
    %109 = arith.addf %107, %108 : vector<8x32xf32>
    %c0_54 = arith.constant 0 : index
    %c0_55 = arith.constant 0 : index
    %110 = vector.load %arg9[%c0_54, %c0_55] : memref<1x32xf32, #tpu.memory_space<vmem>>, vector<1x32xf32>
    %c0_56 = arith.constant 0 : index
    %c0_57 = arith.constant 0 : index
    %111 = vector.load %arg10[%c0_56, %c0_57] : memref<1x32xf32, #tpu.memory_space<vmem>>, vector<1x32xf32>
    %112 = arith.addf %1, %109 : vector<8x32xf32>
    %cst_58 = arith.constant dense<0.000000e+00> : vector<8xf32>
    %113 = vector.multi_reduction <add>, %112, %cst_58 [1] : vector<8x32xf32> to vector<8xf32>
    %114 = vector.shape_cast %113 : vector<8xf32> to vector<8x1xf32>
    %cst_59 = arith.constant 3.200000e+01 : f32
    %115 = vector.broadcast %cst_59 : f32 to vector<8x1xf32>
    %116 = arith.divf %114, %115 : vector<8x1xf32>
    %117 = vector.broadcast %116 : vector<8x1xf32> to vector<8x32xf32>
    %118 = arith.subf %112, %117 : vector<8x32xf32>
    %119 = arith.mulf %118, %118 : vector<8x32xf32>
    %cst_60 = arith.constant dense<0.000000e+00> : vector<8xf32>
    %120 = vector.multi_reduction <add>, %119, %cst_60 [1] : vector<8x32xf32> to vector<8xf32>
    %121 = vector.shape_cast %120 : vector<8xf32> to vector<8x1xf32>
    %cst_61 = arith.constant 3.200000e+01 : f32
    %122 = vector.broadcast %cst_61 : f32 to vector<8x1xf32>
    %123 = arith.divf %121, %122 : vector<8x1xf32>
    %124 = vector.broadcast %116 : vector<8x1xf32> to vector<8x32xf32>
    %125 = arith.subf %112, %124 : vector<8x32xf32>
    %cst_62 = arith.constant 9.99999974E-6 : f32
    %126 = vector.broadcast %cst_62 : f32 to vector<8x1xf32>
    %127 = arith.addf %123, %126 : vector<8x1xf32>
    %128 = math.rsqrt %127 : vector<8x1xf32>
    %129 = vector.broadcast %128 : vector<8x1xf32> to vector<8x32xf32>
    %130 = arith.mulf %125, %129 : vector<8x32xf32>
    %131 = vector.broadcast %110 : vector<1x32xf32> to vector<8x32xf32>
    %132 = arith.mulf %130, %131 : vector<8x32xf32>
    %133 = vector.broadcast %111 : vector<1x32xf32> to vector<8x32xf32>
    %134 = arith.addf %132, %133 : vector<8x32xf32>
    %c0_63 = arith.constant 0 : index
    %c0_64 = arith.constant 0 : index
    %135 = vector.load %arg11[%c0_63, %c0_64] : memref<32x32xf32, #tpu.memory_space<vmem>>, vector<32x32xf32>
    %cst_65 = arith.constant dense<0.000000e+00> : vector<8x32xf32>
    %136 = tpu.matmul %134, %135, %cst_65 {dimension_numbers = #tpu.dot_dimension_numbers<[1], [0], [0], [1], [0, 0, 1, 1], [], []>} : vector<8x32xf32>, vector<32x32xf32>, vector<8x32xf32> -> vector<8x32xf32>
    %c0_66 = arith.constant 0 : index
    %c0_67 = arith.constant 0 : index
    %137 = vector.load %arg12[%c0_66, %c0_67] : memref<1x32xf32, #tpu.memory_space<vmem>>, vector<1x32xf32>
    %138 = vector.broadcast %137 : vector<1x32xf32> to vector<8x32xf32>
    %139 = arith.addf %136, %138 : vector<8x32xf32>
    %c0_68 = arith.constant 0 : index
    %c0_69 = arith.constant 0 : index
    %140 = vector.load %arg13[%c0_68, %c0_69] : memref<32x64xf32, #tpu.memory_space<vmem>>, vector<32x64xf32>
    %cst_70 = arith.constant dense<0.000000e+00> : vector<8x64xf32>
    %141 = tpu.matmul %3, %140, %cst_70 {dimension_numbers = #tpu.dot_dimension_numbers<[1], [0], [0], [1], [0, 0, 1, 1], [], []>} : vector<8x32xf32>, vector<32x64xf32>, vector<8x64xf32> -> vector<8x64xf32>
    %c0_71 = arith.constant 0 : index
    %c0_72 = arith.constant 0 : index
    %142 = vector.load %arg14[%c0_71, %c0_72] : memref<1x64xf32, #tpu.memory_space<vmem>>, vector<1x64xf32>
    %143 = vector.broadcast %142 : vector<1x64xf32> to vector<8x64xf32>
    %144 = arith.addf %141, %143 : vector<8x64xf32>
    %145 = vector.extract_strided_slice %144 {offsets = [0, 0], sizes = [8, 32], strides = [1, 1]} : vector<8x64xf32> to vector<8x32xf32>
    %146 = vector.extract_strided_slice %144 {offsets = [0, 32], sizes = [8, 32], strides = [1, 1]} : vector<8x64xf32> to vector<8x32xf32>
    %c0_73 = arith.constant 0 : index
    %c0_74 = arith.constant 0 : index
    %147 = vector.load %arg16[%c0_73, %c0_74] : memref<1x32xf32, #tpu.memory_space<vmem>>, vector<1x32xf32>
    %148 = vector.extract_strided_slice %139 {offsets = [0, 0], sizes = [8, 8], strides = [1, 1]} : vector<8x32xf32> to vector<8x8xf32>
    %149 = vector.extract_strided_slice %145 {offsets = [0, 0], sizes = [8, 8], strides = [1, 1]} : vector<8x32xf32> to vector<8x8xf32>
    %150 = vector.extract_strided_slice %146 {offsets = [0, 0], sizes = [8, 8], strides = [1, 1]} : vector<8x32xf32> to vector<8x8xf32>
    %cst_75 = arith.constant dense<0.000000e+00> : vector<8x8xf32>
    %151 = tpu.matmul %148, %149, %cst_75 {dimension_numbers = #tpu.dot_dimension_numbers<[1], [1], [0], [0], [0, 0, 1, 0], [], []>} : vector<8x8xf32>, vector<8x8xf32>, vector<8x8xf32> -> vector<8x8xf32>
    %cst_76 = arith.constant 0.000000e+00 : f32
    %152 = vector.broadcast %cst_76 : f32 to vector<1x8xf32>
    %153 = arith.cmpf one, %7, %152 : vector<1x8xf32>
    %cst_77 = arith.constant -1.000000e+09 : f32
    %154 = vector.shape_cast %153 : vector<1x8xi1> to vector<1x8xi1>
    %155 = vector.broadcast %154 : vector<1x8xi1> to vector<8x8xi1>
    %156 = vector.broadcast %cst_77 : f32 to vector<8x8xf32>
    %157 = arith.select %155, %151, %156 : vector<8x8xi1>, vector<8x8xf32>
    %cst_78 = arith.constant dense<0xFF800000> : vector<8xf32>
    %158 = vector.multi_reduction <maximumf>, %157, %cst_78 [1] : vector<8x8xf32> to vector<8xf32>
    %159 = vector.shape_cast %158 : vector<8xf32> to vector<8x1xf32>
    %160 = vector.broadcast %159 : vector<8x1xf32> to vector<8x8xf32>
    %161 = arith.subf %157, %160 : vector<8x8xf32>
    %162 = math.exp %161 : vector<8x8xf32>
    %cst_79 = arith.constant dense<0.000000e+00> : vector<8xf32>
    %163 = vector.multi_reduction <add>, %162, %cst_79 [1] : vector<8x8xf32> to vector<8xf32>
    %164 = vector.shape_cast %163 : vector<8xf32> to vector<8x1xf32>
    %165 = tpu.reciprocal %164 {approx = true} : vector<8x1xf32> -> vector<8x1xf32>
    %166 = vector.broadcast %165 : vector<8x1xf32> to vector<8x8xf32>
    %167 = arith.mulf %162, %166 : vector<8x8xf32>
    %cst_80 = arith.constant dense<0.000000e+00> : vector<8x8xf32>
    %168 = tpu.matmul %167, %150, %cst_80 {dimension_numbers = #tpu.dot_dimension_numbers<[1], [0], [0], [1], [0, 0, 1, 1], [], []>} : vector<8x8xf32>, vector<8x8xf32>, vector<8x8xf32> -> vector<8x8xf32>
    %c0_81 = arith.constant 0 : index
    %c0_82 = arith.constant 0 : index
    %c0_83 = arith.constant 0 : index
    %169 = vector.load %arg15[%c0_81, %c0_82, %c0_83] : memref<4x8x32xf32, #tpu.memory_space<vmem>>, vector<1x8x32xf32>
    %170 = vector.shape_cast %169 : vector<1x8x32xf32> to vector<8x32xf32>
    %cst_84 = arith.constant dense<0.000000e+00> : vector<8x32xf32>
    %171 = tpu.matmul %168, %170, %cst_84 {dimension_numbers = #tpu.dot_dimension_numbers<[1], [0], [0], [1], [0, 0, 1, 1], [], []>} : vector<8x8xf32>, vector<8x32xf32>, vector<8x32xf32> -> vector<8x32xf32>
    %172 = vector.extract_strided_slice %139 {offsets = [0, 8], sizes = [8, 8], strides = [1, 1]} : vector<8x32xf32> to vector<8x8xf32>
    %173 = vector.extract_strided_slice %145 {offsets = [0, 8], sizes = [8, 8], strides = [1, 1]} : vector<8x32xf32> to vector<8x8xf32>
    %174 = vector.extract_strided_slice %146 {offsets = [0, 8], sizes = [8, 8], strides = [1, 1]} : vector<8x32xf32> to vector<8x8xf32>
    %cst_85 = arith.constant dense<0.000000e+00> : vector<8x8xf32>
    %175 = tpu.matmul %172, %173, %cst_85 {dimension_numbers = #tpu.dot_dimension_numbers<[1], [1], [0], [0], [0, 0, 1, 0], [], []>} : vector<8x8xf32>, vector<8x8xf32>, vector<8x8xf32> -> vector<8x8xf32>
    %cst_86 = arith.constant 0.000000e+00 : f32
    %176 = vector.broadcast %cst_86 : f32 to vector<1x8xf32>
    %177 = arith.cmpf one, %7, %176 : vector<1x8xf32>
    %cst_87 = arith.constant -1.000000e+09 : f32
    %178 = vector.shape_cast %177 : vector<1x8xi1> to vector<1x8xi1>
    %179 = vector.broadcast %178 : vector<1x8xi1> to vector<8x8xi1>
    %180 = vector.broadcast %cst_87 : f32 to vector<8x8xf32>
    %181 = arith.select %179, %175, %180 : vector<8x8xi1>, vector<8x8xf32>
    %cst_88 = arith.constant dense<0xFF800000> : vector<8xf32>
    %182 = vector.multi_reduction <maximumf>, %181, %cst_88 [1] : vector<8x8xf32> to vector<8xf32>
    %183 = vector.shape_cast %182 : vector<8xf32> to vector<8x1xf32>
    %184 = vector.broadcast %183 : vector<8x1xf32> to vector<8x8xf32>
    %185 = arith.subf %181, %184 : vector<8x8xf32>
    %186 = math.exp %185 : vector<8x8xf32>
    %cst_89 = arith.constant dense<0.000000e+00> : vector<8xf32>
    %187 = vector.multi_reduction <add>, %186, %cst_89 [1] : vector<8x8xf32> to vector<8xf32>
    %188 = vector.shape_cast %187 : vector<8xf32> to vector<8x1xf32>
    %189 = tpu.reciprocal %188 {approx = true} : vector<8x1xf32> -> vector<8x1xf32>
    %190 = vector.broadcast %189 : vector<8x1xf32> to vector<8x8xf32>
    %191 = arith.mulf %186, %190 : vector<8x8xf32>
    %cst_90 = arith.constant dense<0.000000e+00> : vector<8x8xf32>
    %192 = tpu.matmul %191, %174, %cst_90 {dimension_numbers = #tpu.dot_dimension_numbers<[1], [0], [0], [1], [0, 0, 1, 1], [], []>} : vector<8x8xf32>, vector<8x8xf32>, vector<8x8xf32> -> vector<8x8xf32>
    %c1_91 = arith.constant 1 : index
    %c0_92 = arith.constant 0 : index
    %c0_93 = arith.constant 0 : index
    %193 = vector.load %arg15[%c1_91, %c0_92, %c0_93] : memref<4x8x32xf32, #tpu.memory_space<vmem>>, vector<1x8x32xf32>
    %194 = vector.shape_cast %193 : vector<1x8x32xf32> to vector<8x32xf32>
    %cst_94 = arith.constant dense<0.000000e+00> : vector<8x32xf32>
    %195 = tpu.matmul %192, %194, %cst_94 {dimension_numbers = #tpu.dot_dimension_numbers<[1], [0], [0], [1], [0, 0, 1, 1], [], []>} : vector<8x8xf32>, vector<8x32xf32>, vector<8x32xf32> -> vector<8x32xf32>
    %196 = arith.addf %171, %195 : vector<8x32xf32>
    %197 = vector.extract_strided_slice %139 {offsets = [0, 16], sizes = [8, 8], strides = [1, 1]} : vector<8x32xf32> to vector<8x8xf32>
    %198 = vector.extract_strided_slice %145 {offsets = [0, 16], sizes = [8, 8], strides = [1, 1]} : vector<8x32xf32> to vector<8x8xf32>
    %199 = vector.extract_strided_slice %146 {offsets = [0, 16], sizes = [8, 8], strides = [1, 1]} : vector<8x32xf32> to vector<8x8xf32>
    %cst_95 = arith.constant dense<0.000000e+00> : vector<8x8xf32>
    %200 = tpu.matmul %197, %198, %cst_95 {dimension_numbers = #tpu.dot_dimension_numbers<[1], [1], [0], [0], [0, 0, 1, 0], [], []>} : vector<8x8xf32>, vector<8x8xf32>, vector<8x8xf32> -> vector<8x8xf32>
    %cst_96 = arith.constant 0.000000e+00 : f32
    %201 = vector.broadcast %cst_96 : f32 to vector<1x8xf32>
    %202 = arith.cmpf one, %7, %201 : vector<1x8xf32>
    %cst_97 = arith.constant -1.000000e+09 : f32
    %203 = vector.shape_cast %202 : vector<1x8xi1> to vector<1x8xi1>
    %204 = vector.broadcast %203 : vector<1x8xi1> to vector<8x8xi1>
    %205 = vector.broadcast %cst_97 : f32 to vector<8x8xf32>
    %206 = arith.select %204, %200, %205 : vector<8x8xi1>, vector<8x8xf32>
    %cst_98 = arith.constant dense<0xFF800000> : vector<8xf32>
    %207 = vector.multi_reduction <maximumf>, %206, %cst_98 [1] : vector<8x8xf32> to vector<8xf32>
    %208 = vector.shape_cast %207 : vector<8xf32> to vector<8x1xf32>
    %209 = vector.broadcast %208 : vector<8x1xf32> to vector<8x8xf32>
    %210 = arith.subf %206, %209 : vector<8x8xf32>
    %211 = math.exp %210 : vector<8x8xf32>
    %cst_99 = arith.constant dense<0.000000e+00> : vector<8xf32>
    %212 = vector.multi_reduction <add>, %211, %cst_99 [1] : vector<8x8xf32> to vector<8xf32>
    %213 = vector.shape_cast %212 : vector<8xf32> to vector<8x1xf32>
    %214 = tpu.reciprocal %213 {approx = true} : vector<8x1xf32> -> vector<8x1xf32>
    %215 = vector.broadcast %214 : vector<8x1xf32> to vector<8x8xf32>
    %216 = arith.mulf %211, %215 : vector<8x8xf32>
    %cst_100 = arith.constant dense<0.000000e+00> : vector<8x8xf32>
    %217 = tpu.matmul %216, %199, %cst_100 {dimension_numbers = #tpu.dot_dimension_numbers<[1], [0], [0], [1], [0, 0, 1, 1], [], []>} : vector<8x8xf32>, vector<8x8xf32>, vector<8x8xf32> -> vector<8x8xf32>
    %c2_101 = arith.constant 2 : index
    %c0_102 = arith.constant 0 : index
    %c0_103 = arith.constant 0 : index
    %218 = vector.load %arg15[%c2_101, %c0_102, %c0_103] : memref<4x8x32xf32, #tpu.memory_space<vmem>>, vector<1x8x32xf32>
    %219 = vector.shape_cast %218 : vector<1x8x32xf32> to vector<8x32xf32>
    %cst_104 = arith.constant dense<0.000000e+00> : vector<8x32xf32>
    %220 = tpu.matmul %217, %219, %cst_104 {dimension_numbers = #tpu.dot_dimension_numbers<[1], [0], [0], [1], [0, 0, 1, 1], [], []>} : vector<8x8xf32>, vector<8x32xf32>, vector<8x32xf32> -> vector<8x32xf32>
    %221 = arith.addf %196, %220 : vector<8x32xf32>
    %222 = vector.extract_strided_slice %139 {offsets = [0, 24], sizes = [8, 8], strides = [1, 1]} : vector<8x32xf32> to vector<8x8xf32>
    %223 = vector.extract_strided_slice %145 {offsets = [0, 24], sizes = [8, 8], strides = [1, 1]} : vector<8x32xf32> to vector<8x8xf32>
    %224 = vector.extract_strided_slice %146 {offsets = [0, 24], sizes = [8, 8], strides = [1, 1]} : vector<8x32xf32> to vector<8x8xf32>
    %cst_105 = arith.constant dense<0.000000e+00> : vector<8x8xf32>
    %225 = tpu.matmul %222, %223, %cst_105 {dimension_numbers = #tpu.dot_dimension_numbers<[1], [1], [0], [0], [0, 0, 1, 0], [], []>} : vector<8x8xf32>, vector<8x8xf32>, vector<8x8xf32> -> vector<8x8xf32>
    %cst_106 = arith.constant 0.000000e+00 : f32
    %226 = vector.broadcast %cst_106 : f32 to vector<1x8xf32>
    %227 = arith.cmpf one, %7, %226 : vector<1x8xf32>
    %cst_107 = arith.constant -1.000000e+09 : f32
    %228 = vector.shape_cast %227 : vector<1x8xi1> to vector<1x8xi1>
    %229 = vector.broadcast %228 : vector<1x8xi1> to vector<8x8xi1>
    %230 = vector.broadcast %cst_107 : f32 to vector<8x8xf32>
    %231 = arith.select %229, %225, %230 : vector<8x8xi1>, vector<8x8xf32>
    %cst_108 = arith.constant dense<0xFF800000> : vector<8xf32>
    %232 = vector.multi_reduction <maximumf>, %231, %cst_108 [1] : vector<8x8xf32> to vector<8xf32>
    %233 = vector.shape_cast %232 : vector<8xf32> to vector<8x1xf32>
    %234 = vector.broadcast %233 : vector<8x1xf32> to vector<8x8xf32>
    %235 = arith.subf %231, %234 : vector<8x8xf32>
    %236 = math.exp %235 : vector<8x8xf32>
    %cst_109 = arith.constant dense<0.000000e+00> : vector<8xf32>
    %237 = vector.multi_reduction <add>, %236, %cst_109 [1] : vector<8x8xf32> to vector<8xf32>
    %238 = vector.shape_cast %237 : vector<8xf32> to vector<8x1xf32>
    %239 = tpu.reciprocal %238 {approx = true} : vector<8x1xf32> -> vector<8x1xf32>
    %240 = vector.broadcast %239 : vector<8x1xf32> to vector<8x8xf32>
    %241 = arith.mulf %236, %240 : vector<8x8xf32>
    %cst_110 = arith.constant dense<0.000000e+00> : vector<8x8xf32>
    %242 = tpu.matmul %241, %224, %cst_110 {dimension_numbers = #tpu.dot_dimension_numbers<[1], [0], [0], [1], [0, 0, 1, 1], [], []>} : vector<8x8xf32>, vector<8x8xf32>, vector<8x8xf32> -> vector<8x8xf32>
    %c3_111 = arith.constant 3 : index
    %c0_112 = arith.constant 0 : index
    %c0_113 = arith.constant 0 : index
    %243 = vector.load %arg15[%c3_111, %c0_112, %c0_113] : memref<4x8x32xf32, #tpu.memory_space<vmem>>, vector<1x8x32xf32>
    %244 = vector.shape_cast %243 : vector<1x8x32xf32> to vector<8x32xf32>
    %cst_114 = arith.constant dense<0.000000e+00> : vector<8x32xf32>
    %245 = tpu.matmul %242, %244, %cst_114 {dimension_numbers = #tpu.dot_dimension_numbers<[1], [0], [0], [1], [0, 0, 1, 1], [], []>} : vector<8x8xf32>, vector<8x32xf32>, vector<8x32xf32> -> vector<8x32xf32>
    %246 = arith.addf %221, %245 : vector<8x32xf32>
    %247 = vector.broadcast %147 : vector<1x32xf32> to vector<8x32xf32>
    %248 = arith.addf %246, %247 : vector<8x32xf32>
    %c0_115 = arith.constant 0 : index
    %c0_116 = arith.constant 0 : index
    %249 = vector.load %arg17[%c0_115, %c0_116] : memref<1x32xf32, #tpu.memory_space<vmem>>, vector<1x32xf32>
    %c0_117 = arith.constant 0 : index
    %c0_118 = arith.constant 0 : index
    %250 = vector.load %arg18[%c0_117, %c0_118] : memref<1x32xf32, #tpu.memory_space<vmem>>, vector<1x32xf32>
    %251 = arith.addf %134, %248 : vector<8x32xf32>
    %cst_119 = arith.constant dense<0.000000e+00> : vector<8xf32>
    %252 = vector.multi_reduction <add>, %251, %cst_119 [1] : vector<8x32xf32> to vector<8xf32>
    %253 = vector.shape_cast %252 : vector<8xf32> to vector<8x1xf32>
    %cst_120 = arith.constant 3.200000e+01 : f32
    %254 = vector.broadcast %cst_120 : f32 to vector<8x1xf32>
    %255 = arith.divf %253, %254 : vector<8x1xf32>
    %256 = vector.broadcast %255 : vector<8x1xf32> to vector<8x32xf32>
    %257 = arith.subf %251, %256 : vector<8x32xf32>
    %258 = arith.mulf %257, %257 : vector<8x32xf32>
    %cst_121 = arith.constant dense<0.000000e+00> : vector<8xf32>
    %259 = vector.multi_reduction <add>, %258, %cst_121 [1] : vector<8x32xf32> to vector<8xf32>
    %260 = vector.shape_cast %259 : vector<8xf32> to vector<8x1xf32>
    %cst_122 = arith.constant 3.200000e+01 : f32
    %261 = vector.broadcast %cst_122 : f32 to vector<8x1xf32>
    %262 = arith.divf %260, %261 : vector<8x1xf32>
    %263 = vector.broadcast %255 : vector<8x1xf32> to vector<8x32xf32>
    %264 = arith.subf %251, %263 : vector<8x32xf32>
    %cst_123 = arith.constant 9.99999974E-6 : f32
    %265 = vector.broadcast %cst_123 : f32 to vector<8x1xf32>
    %266 = arith.addf %262, %265 : vector<8x1xf32>
    %267 = math.rsqrt %266 : vector<8x1xf32>
    %268 = vector.broadcast %267 : vector<8x1xf32> to vector<8x32xf32>
    %269 = arith.mulf %264, %268 : vector<8x32xf32>
    %270 = vector.broadcast %249 : vector<1x32xf32> to vector<8x32xf32>
    %271 = arith.mulf %269, %270 : vector<8x32xf32>
    %272 = vector.broadcast %250 : vector<1x32xf32> to vector<8x32xf32>
    %273 = arith.addf %271, %272 : vector<8x32xf32>
    %c0_124 = arith.constant 0 : index
    %c0_125 = arith.constant 0 : index
    %274 = vector.load %arg19[%c0_124, %c0_125] : memref<32x64xf32, #tpu.memory_space<vmem>>, vector<32x64xf32>
    %c0_126 = arith.constant 0 : index
    %c0_127 = arith.constant 0 : index
    %275 = vector.load %arg20[%c0_126, %c0_127] : memref<1x64xf32, #tpu.memory_space<vmem>>, vector<1x64xf32>
    %c0_128 = arith.constant 0 : index
    %c0_129 = arith.constant 0 : index
    %276 = vector.load %arg21[%c0_128, %c0_129] : memref<64x32xf32, #tpu.memory_space<vmem>>, vector<64x32xf32>
    %c0_130 = arith.constant 0 : index
    %c0_131 = arith.constant 0 : index
    %277 = vector.load %arg22[%c0_130, %c0_131] : memref<1x32xf32, #tpu.memory_space<vmem>>, vector<1x32xf32>
    %cst_132 = arith.constant dense<0.000000e+00> : vector<8x64xf32>
    %278 = tpu.matmul %273, %274, %cst_132 {dimension_numbers = #tpu.dot_dimension_numbers<[1], [0], [0], [1], [0, 0, 1, 1], [], []>} : vector<8x32xf32>, vector<32x64xf32>, vector<8x64xf32> -> vector<8x64xf32>
    %279 = vector.broadcast %275 : vector<1x64xf32> to vector<8x64xf32>
    %280 = arith.addf %278, %279 : vector<8x64xf32>
    %cst_133 = arith.constant 0.000000e+00 : f32
    %281 = vector.broadcast %cst_133 : f32 to vector<8x64xf32>
    %282 = arith.maximumf %280, %281 : vector<8x64xf32>
    %cst_134 = arith.constant dense<0.000000e+00> : vector<8x32xf32>
    %283 = tpu.matmul %282, %276, %cst_134 {dimension_numbers = #tpu.dot_dimension_numbers<[1], [0], [0], [1], [0, 0, 1, 1], [], []>} : vector<8x64xf32>, vector<64x32xf32>, vector<8x32xf32> -> vector<8x32xf32>
    %284 = vector.broadcast %277 : vector<1x32xf32> to vector<8x32xf32>
    %285 = arith.addf %283, %284 : vector<8x32xf32>
    %c0_135 = arith.constant 0 : index
    %c0_136 = arith.constant 0 : index
    %286 = vector.load %arg23[%c0_135, %c0_136] : memref<1x32xf32, #tpu.memory_space<vmem>>, vector<1x32xf32>
    %c0_137 = arith.constant 0 : index
    %c0_138 = arith.constant 0 : index
    %287 = vector.load %arg24[%c0_137, %c0_138] : memref<1x32xf32, #tpu.memory_space<vmem>>, vector<1x32xf32>
    %288 = arith.addf %273, %285 : vector<8x32xf32>
    %cst_139 = arith.constant dense<0.000000e+00> : vector<8xf32>
    %289 = vector.multi_reduction <add>, %288, %cst_139 [1] : vector<8x32xf32> to vector<8xf32>
    %290 = vector.shape_cast %289 : vector<8xf32> to vector<8x1xf32>
    %cst_140 = arith.constant 3.200000e+01 : f32
    %291 = vector.broadcast %cst_140 : f32 to vector<8x1xf32>
    %292 = arith.divf %290, %291 : vector<8x1xf32>
    %293 = vector.broadcast %292 : vector<8x1xf32> to vector<8x32xf32>
    %294 = arith.subf %288, %293 : vector<8x32xf32>
    %295 = arith.mulf %294, %294 : vector<8x32xf32>
    %cst_141 = arith.constant dense<0.000000e+00> : vector<8xf32>
    %296 = vector.multi_reduction <add>, %295, %cst_141 [1] : vector<8x32xf32> to vector<8xf32>
    %297 = vector.shape_cast %296 : vector<8xf32> to vector<8x1xf32>
    %cst_142 = arith.constant 3.200000e+01 : f32
    %298 = vector.broadcast %cst_142 : f32 to vector<8x1xf32>
    %299 = arith.divf %297, %298 : vector<8x1xf32>
    %300 = vector.broadcast %292 : vector<8x1xf32> to vector<8x32xf32>
    %301 = arith.subf %288, %300 : vector<8x32xf32>
    %cst_143 = arith.constant 9.99999974E-6 : f32
    %302 = vector.broadcast %cst_143 : f32 to vector<8x1xf32>
    %303 = arith.addf %299, %302 : vector<8x1xf32>
    %304 = math.rsqrt %303 : vector<8x1xf32>
    %305 = vector.broadcast %304 : vector<8x1xf32> to vector<8x32xf32>
    %306 = arith.mulf %301, %305 : vector<8x32xf32>
    %307 = vector.broadcast %286 : vector<1x32xf32> to vector<8x32xf32>
    %308 = arith.mulf %306, %307 : vector<8x32xf32>
    %309 = vector.broadcast %287 : vector<1x32xf32> to vector<8x32xf32>
    %310 = arith.addf %308, %309 : vector<8x32xf32>
    %c0_144 = arith.constant 0 : index
    %c0_145 = arith.constant 0 : index
    %c0_146 = arith.constant 0 : index
    %311 = vector.load %arg25[%c0_144, %c0_145, %c0_146] : memref<1x8x32xf32, #tpu.memory_space<vmem>>, vector<1x8x32xf32>
    %312 = vector.shape_cast %311 : vector<1x8x32xf32> to vector<8x32xf32>
    %313 = vector.shape_cast %310 : vector<8x32xf32> to vector<1x8x32xf32>
    tpu.vector_store %arg25[%c0_144, %c0_145, %c0_146], %313 {strides = array<i32>} : memref<1x8x32xf32, #tpu.memory_space<vmem>>, vector<1x8x32xf32>,
    return
  }
  func.func @transform_0(%arg0: i32) -> (i32, i32, i32) {
    %c0_i32 = arith.constant 0 : i32
    %c0_i32_0 = arith.constant 0 : i32
    %c0_i32_1 = arith.constant 0 : i32
    return %arg0, %c0_i32, %c0_i32_0 : i32, i32, i32
  }
  func.func @transform_1(%arg0: i32) -> (i32, i32, i32) {
    %c0_i32 = arith.constant 0 : i32
    %c0_i32_0 = arith.constant 0 : i32
    %c0_i32_1 = arith.constant 0 : i32
    return %arg0, %c0_i32, %c0_i32_0 : i32, i32, i32
  }
  func.func @transform_2(%arg0: i32) -> (i32, i32, i32) {
    %c0_i32 = arith.constant 0 : i32
    %c0_i32_0 = arith.constant 0 : i32
    %c0_i32_1 = arith.constant 0 : i32
    return %arg0, %c0_i32, %c0_i32_0 : i32, i32, i32
  }
  func.func @transform_3(%arg0: i32) -> (i32, i32, i32) {
    %c0_i32 = arith.constant 0 : i32
    %c0_i32_0 = arith.constant 0 : i32
    %c0_i32_1 = arith.constant 0 : i32
    return %arg0, %c0_i32, %c0_i32_0 : i32, i32, i32
  }
  func.func @transform_4(%arg0: i32) -> (i32, i32) {
    %c0_i32 = arith.constant 0 : i32
    %c0_i32_0 = arith.constant 0 : i32
    %c0_i32_1 = arith.constant 0 : i32
    return %c0_i32, %c0_i32_0 : i32, i32
  }
  func.func @transform_5(%arg0: i32) -> (i32, i32) {
    %c0_i32 = arith.constant 0 : i32
    %c0_i32_0 = arith.constant 0 : i32
    %c0_i32_1 = arith.constant 0 : i32
    return %c0_i32, %c0_i32_0 : i32, i32
  }
  func.func @transform_6(%arg0: i32) -> (i32, i32, i32) {
    %c0_i32 = arith.constant 0 : i32
    %c0_i32_0 = arith.constant 0 : i32
    %c0_i32_1 = arith.constant 0 : i32
    %c0_i32_2 = arith.constant 0 : i32
    return %c0_i32, %c0_i32_0, %c0_i32_1 : i32, i32, i32
  }
  func.func @transform_7(%arg0: i32) -> (i32, i32) {
    %c0_i32 = arith.constant 0 : i32
    %c0_i32_0 = arith.constant 0 : i32
    %c0_i32_1 = arith.constant 0 : i32
    return %c0_i32, %c0_i32_0 : i32, i32
  }
  func.func @transform_8(%arg0: i32) -> (i32, i32) {
    %c0_i32 = arith.constant 0 : i32
    %c0_i32_0 = arith.constant 0 : i32
    %c0_i32_1 = arith.constant 0 : i32
    return %c0_i32, %c0_i32_0 : i32, i32
  }
  func.func @transform_9(%arg0: i32) -> (i32, i32) {
    %c0_i32 = arith.constant 0 : i32
    %c0_i32_0 = arith.constant 0 : i32
    %c0_i32_1 = arith.constant 0 : i32
    return %c0_i32, %c0_i32_0 : i32, i32
  }
  func.func @transform_10(%arg0: i32) -> (i32, i32) {
    %c0_i32 = arith.constant 0 : i32
    %c0_i32_0 = arith.constant 0 : i32
    %c0_i32_1 = arith.constant 0 : i32
    return %c0_i32, %c0_i32_0 : i32, i32
  }
  func.func @transform_11(%arg0: i32) -> (i32, i32) {
    %c0_i32 = arith.constant 0 : i32
    %c0_i32_0 = arith.constant 0 : i32
    %c0_i32_1 = arith.constant 0 : i32
    return %c0_i32, %c0_i32_0 : i32, i32
  }
  func.func @transform_12(%arg0: i32) -> (i32, i32) {
    %c0_i32 = arith.constant 0 : i32
    %c0_i32_0 = arith.constant 0 : i32
    %c0_i32_1 = arith.constant 0 : i32
    return %c0_i32, %c0_i32_0 : i32, i32
  }
  func.func @transform_13(%arg0: i32) -> (i32, i32) {
    %c0_i32 = arith.constant 0 : i32
    %c0_i32_0 = arith.constant 0 : i32
    %c0_i32_1 = arith.constant 0 : i32
    return %c0_i32, %c0_i32_0 : i32, i32
  }
  func.func @transform_14(%arg0: i32) -> (i32, i32, i32) {
    %c0_i32 = arith.constant 0 : i32
    %c0_i32_0 = arith.constant 0 : i32
    %c0_i32_1 = arith.constant 0 : i32
    %c0_i32_2 = arith.constant 0 : i32
    return %c0_i32, %c0_i32_0, %c0_i32_1 : i32, i32, i32
  }
  func.func @transform_15(%arg0: i32) -> (i32, i32) {
    %c0_i32 = arith.constant 0 : i32
    %c0_i32_0 = arith.constant 0 : i32
    %c0_i32_1 = arith.constant 0 : i32
    return %c0_i32, %c0_i32_0 : i32, i32
  }
  func.func @transform_16(%arg0: i32) -> (i32, i32) {
    %c0_i32 = arith.constant 0 : i32
    %c0_i32_0 = arith.constant 0 : i32
    %c0_i32_1 = arith.constant 0 : i32
    return %c0_i32, %c0_i32_0 : i32, i32
  }
  func.func @transform_17(%arg0: i32) -> (i32, i32) {
    %c0_i32 = arith.constant 0 : i32
    %c0_i32_0 = arith.constant 0 : i32
    %c0_i32_1 = arith.constant 0 : i32
    return %c0_i32, %c0_i32_0 : i32, i32
  }
  func.func @transform_18(%arg0: i32) -> (i32, i32) {
    %c0_i32 = arith.constant 0 : i32
    %c0_i32_0 = arith.constant 0 : i32
    %c0_i32_1 = arith.constant 0 : i32
    return %c0_i32, %c0_i32_0 : i32, i32
  }
  func.func @transform_19(%arg0: i32) -> (i32, i32) {
    %c0_i32 = arith.constant 0 : i32
    %c0_i32_0 = arith.constant 0 : i32
    %c0_i32_1 = arith.constant 0 : i32
    return %c0_i32, %c0_i32_0 : i32, i32
  }
  func.func @transform_20(%arg0: i32) -> (i32, i32) {
    %c0_i32 = arith.constant 0 : i32
    %c0_i32_0 = arith.constant 0 : i32
    %c0_i32_1 = arith.constant 0 : i32
    return %c0_i32, %c0_i32_0 : i32, i32
  }
  func.func @transform_21(%arg0: i32) -> (i32, i32) {
    %c0_i32 = arith.constant 0 : i32
    %c0_i32_0 = arith.constant 0 : i32
    %c0_i32_1 = arith.constant 0 : i32
    return %c0_i32, %c0_i32_0 : i32, i32
  }
  func.func @transform_22(%arg0: i32) -> (i32, i32) {
    %c0_i32 = arith.constant 0 : i32
    %c0_i32_0 = arith.constant 0 : i32
    %c0_i32_1 = arith.constant 0 : i32
    return %c0_i32, %c0_i32_0 : i32, i32
  }
  func.func @transform_23(%arg0: i32) -> (i32, i32) {
    %c0_i32 = arith.constant 0 : i32
    %c0_i32_0 = arith.constant 0 : i32
    %c0_i32_1 = arith.constant 0 : i32
    return %c0_i32, %c0_i32_0 : i32, i32
  }
  func.func @transform_24(%arg0: i32) -> (i32, i32, i32) {
    %c0_i32 = arith.constant 0 : i32
    %c0_i32_0 = arith.constant 0 : i32
    %c0_i32_1 = arith.constant 0 : i32
    return %arg0, %c0_i32, %c0_i32_0 : i32, i32, i32
  }
}

</mosaic_0001>

<llo_original>
// kernel: transformer_forward.9
$region0: #{transformer_forward.9}
  #allocation0 [shape = 'u32[]', space=smem, size = 0x4, offset = 0x4, fixed_abs, tag = 'smem constant byte address 0x4 - core index']
  #allocation1 [shape = 'u32[72,128]{1,0:T(1,128)}', space=vmem, size = 0x9000, scoped, tag = 'internal scratch']
  %s0 = inlined_call_operand.vmem [shape: f32[16,32], index: 0, kind: input, shape index: {}]
  %s1 = inlined_call_operand.vmem [shape: f32[32,128], index: 1, kind: input, shape index: {}]
  %s2 = inlined_call_operand.vmem [shape: f32[1,128], index: 2, kind: input, shape index: {}]
  %s3 = inlined_call_operand.vmem [shape: f32[16,128], index: 3, kind: output, shape index: {}]
  %s4 = sld [smem:[#allocation0]]
  $region22: #{transformer_forward.9} parent=0
    _
  %s6 = ssub.s32 1, %s4
  %s7 = scalar_select 0, %s6, %s4
  // Predicated region
  $region2: #{transformer_forward.9} parent=0 // pred_check
    _
  $region3: #{transformer_forward.9} parent=0 // pred_check_branch
    %9 = sbr.rel (0) target = $region5
  $region4: #{transformer_forward.9} parent=0 // pred_region
    _
  $region5: #{transformer_forward.9} parent=0 // pred_fallthru
    _
  // Predicated region
  $region6: #{transformer_forward.9} parent=0 // pred_check
    _
  $region7: #{transformer_forward.9} parent=0 // pred_check_branch
    %11 = sbr.rel (0) target = $region9
  $region8: #{transformer_forward.9} parent=0 // pred_region
    _
  $region9: #{transformer_forward.9} parent=0 // pred_fallthru
    _
  // Predicated region
  $region10: #{transformer_forward.9} parent=0 // pred_check
    _
  $region11: #{transformer_forward.9} parent=0 // pred_check_branch
    %13 = sbr.rel (0) target = $region13
  $region12: #{transformer_forward.9} parent=0 // pred_region
    _
  $region13: #{transformer_forward.9} parent=0 // pred_fallthru
    _
  %v14 = vld [vmem:[%s0] sm:$0xff]
  %v15 = vld [vmem:[%s0 + $0x8] sm:$0xff]
  %v16 = vld [vmem:[%s1] sm:$0xff]
  %v17 = vld [vmem:[%s1 + $0x8] sm:$0xff]
  %v18 = vld [vmem:[%s1 + $0x10] sm:$0xff]
  %v19 = vld [vmem:[%s1 + $0x18] sm:$0xff]
  %v20 = vld [vmem:[%s2] sm:$0x1]
  %v22 = vperm.slane %v20, 0
  %vm24 = vcmask 261120
  %v26 = vsel %vm24, %v14, 0
  %v29 = vsel %vm24, %v15, 0
  %31 = vmatpush.msra.mxu0 0.0
  %32 = vmatpush.msra.mxu0 0.0
  %33 = vmatpush.msra.mxu0 0.0
  %34 = vmatpush.msra.mxu0 0.0
  %35 = vmatpush.msra.mxu0 0.0
  %36 = vmatpush.msra.mxu0 0.0
  %37 = vmatpush.msra.mxu0 0.0
  %38 = vmatpush.msra.mxu0 0.0
  %39 = vmatpush.msra.mxu0 0.0
  %40 = vmatpush.msra.mxu0 0.0
  %41 = vmatpush.msra.mxu0 0.0
  %42 = vmatpush.msra.mxu0 0.0
  %43 = vmatpush.msra.mxu0 %v19
  %44 = vmatpush.msra.mxu0 %v18
  %45 = vmatpush.msra.mxu0 %v17
  %46 = vmatpush.msra.mxu0 %v16
  %47 = vmatmul.f32.gmra.mxu0 %v26
  %v48 = vpop.f32.mrf.mxu0
  %v49 = vadd.f32 %v22, %v48
  %50 = vmatmul.f32.gmra.mxu0 %v29
  %v51 = vpop.f32.mrf.mxu0
  %v52 = vadd.f32 %v22, %v51
  %53 = vdwg.mxu0
  %54 = vst [vmem:[%s3] sm:$0xff] %v49
  %55 = vst [vmem:[%s3 + $0x8] sm:$0xff] %v52
  // Predicated region
  $region14: #{transformer_forward.9} parent=0 // pred_check
    _
  $region15: #{transformer_forward.9} parent=0 // pred_check_branch
    %57 = sbr.rel (0) target = $region17
  $region16: #{transformer_forward.9} parent=0 // pred_region
    _
  $region17: #{transformer_forward.9} parent=0 // pred_fallthru
    _
  // Predicated region
  $region18: #{transformer_forward.9} parent=0 // pred_check
    _
  $region19: #{transformer_forward.9} parent=0 // pred_check_branch
    %59 = sbr.rel (0) target = $region21
  $region20: #{transformer_forward.9} parent=0 // pred_region
    _
  $region21: #{transformer_forward.9} parent=0 // pred_fallthru
    _

// kernel: transformer_forward.5
$region0: #{transformer_forward.5}
  #allocation0 [shape = 'u32[]', space=smem, size = 0x4, offset = 0x4, fixed_abs, tag = 'smem constant byte address 0x4 - core index']
  #allocation1 [shape = 'u32[72,128]{1,0:T(1,128)}', space=vmem, size = 0x9000, scoped, tag = 'internal scratch']
  %s0 = inlined_call_operand.vmem [shape: f32[2,8,32], index: 0, kind: input, shape index: {}]
  %s1 = inlined_call_operand.vmem [shape: f32[2,1,8], index: 1, kind: input, shape index: {}]
  %s2 = inlined_call_operand.vmem [shape: f32[32,96], index: 2, kind: input, shape index: {}]
  %s3 = inlined_call_operand.vmem [shape: f32[1,96], index: 3, kind: input, shape index: {}]
  %s4 = inlined_call_operand.vmem [shape: f32[4,8,32], index: 4, kind: input, shape index: {}]
  %s5 = inlined_call_operand.vmem [shape: f32[1,32], index: 5, kind: input, shape index: {}]
  %s6 = inlined_call_operand.vmem [shape: f32[1,32], index: 6, kind: input, shape index: {}]
  %s7 = inlined_call_operand.vmem [shape: f32[1,32], index: 7, kind: input, shape index: {}]
  %s8 = inlined_call_operand.vmem [shape: f32[32,64], index: 8, kind: input, shape index: {}]
  %s9 = inlined_call_operand.vmem [shape: f32[1,64], index: 9, kind: input, shape index: {}]
  %s10 = inlined_call_operand.vmem [shape: f32[64,32], index: 10, kind: input, shape index: {}]
  %s11 = inlined_call_operand.vmem [shape: f32[1,32], index: 11, kind: input, shape index: {}]
  %s12 = inlined_call_operand.vmem [shape: f32[1,32], index: 12, kind: input, shape index: {}]
  %s13 = inlined_call_operand.vmem [shape: f32[1,32], index: 13, kind: input, shape index: {}]
  %s14 = inlined_call_operand.vmem [shape: f32[2,8,32], index: 14, kind: output, shape index: {}]
  %s15 = sld [smem:[#allocation0]]
  $region89: #{transformer_forward.5} parent=0
    _
  %s17 = ssub.s32 1, %s15
  %s18 = scalar_select 0, %s17, %s15
  loop: start=0, step=1, limit=4
  $region2: #{transformer_forward.5} parent=0 // loop_pre_header
    _
  $region3: #{transformer_forward.5} parent=0 // loop_header
    %s20 = sphi 0, %s24
    %p21 = scmp.ge.s32.totalorder %s20, 4
    %s30 = sphi 0, %s32
    %s33 = sphi 0, %s30
    %s34 = sphi 0, %s33
    %s50 = sphi 0, %s34
    %s56 = sphi 0, %s58
    %s59 = sphi 0, %s56
    %s60 = sphi 0, %s59
    %s76 = sphi 0, %s60
    %s80 = sphi 0, %s80
    %s82 = sphi 0, %s80
    %s83 = sphi 0, %s82
    %s97 = sphi 0, %s83
    %s101 = sphi 0, %s101
    %s103 = sphi 0, %s101
    %s104 = sphi 0, %s103
    %s118 = sphi 0, %s104
    %s122 = sphi 0, %s122
    %s124 = sphi 0, %s122
    %s125 = sphi 0, %s124
    %s139 = sphi 0, %s125
    %s143 = sphi 0, %s143
    %s145 = sphi 0, %s143
    %s146 = sphi 0, %s145
    %s160 = sphi 0, %s146
    %s164 = sphi 0, %s164
    %s166 = sphi 0, %s164
    %s167 = sphi 0, %s166
    %s181 = sphi 0, %s167
    %s185 = sphi 0, %s185
    %s187 = sphi 0, %s185
    %s188 = sphi 0, %s187
    %s202 = sphi 0, %s188
    %s206 = sphi 0, %s206
    %s208 = sphi 0, %s206
    %s209 = sphi 0, %s208
    %s223 = sphi 0, %s209
    %s227 = sphi 0, %s227
    %s229 = sphi 0, %s227
    %s230 = sphi 0, %s229
    %s244 = sphi 0, %s230
    %s248 = sphi 0, %s248
    %s250 = sphi 0, %s248
    %s251 = sphi 0, %s250
    %s265 = sphi 0, %s251
    %s269 = sphi 0, %s269
    %s271 = sphi 0, %s269
    %s272 = sphi 0, %s271
    %s286 = sphi 0, %s272
    %s290 = sphi 0, %s290
    %s292 = sphi 0, %s290
    %s293 = sphi 0, %s292
    %s307 = sphi 0, %s293
    %s311 = sphi 0, %s311
    %s313 = sphi 0, %s311
    %s314 = sphi 0, %s313
    %s328 = sphi 0, %s314
    %s334 = sphi 0, %s336
    %s337 = sphi 0, %s334
    %s338 = sphi 0, %s337
    %s354 = sphi 0, %s338
  $region4: #{transformer_forward.5} parent=0 // loop_header_branch
    %23 = sbr.rel (%p21) target = $region8
  $region5: #{transformer_forward.5} parent=0 // loop_body
    %s25 = ssub.s32 %s20, 1
    %s26 = ssub.s32 %s20, 2
    %s27 = sadd.s32 %s20, 1
    %s28 = ssub.s32 %s20, %s27
    %p29 = scmp.eq.s32.totalorder %s28, 0
    %s31 = sadd.s32 %s30, 1
    %s32 = scalar_select %p29, %s30, %s31
    %p35 = pneg %p29
    %p36 = scmp.eq.s32.totalorder %s20, 1
    %p37 = por %p35, %p36
    %p38 = scmp.ne.s32.totalorder %s30, %s33
    %p39 = scmp.eq.s32.totalorder %s20, 0
    %p40 = por %p38, %p39
    %p41 = scmp.ne.s32.totalorder %s30, %s33
    %p42 = scmp.eq.s32.totalorder %s25, 1
    %p43 = por %p41, %p42
    %p44 = scmp.ne.s32.totalorder %s33, %s34
    %p45 = scmp.eq.s32.totalorder %s25, 0
    %p46 = por %p44, %p45
    %p47 = scmp.ne.s32.totalorder %s33, %s34
    %p48 = scmp.eq.s32.totalorder %s26, 1
    %p49 = por %p47, %p48
    %p51 = scmp.ne.s32.totalorder %s34, %s50
    %p52 = scmp.eq.s32.totalorder %s26, 0
    %p53 = por %p51, %p52
    %s54 = ssub.s32 %s20, %s27
    %p55 = scmp.eq.s32.totalorder %s54, 0
    %s57 = sadd.s32 %s56, 1
    %s58 = scalar_select %p55, %s56, %s57
    %p61 = pneg %p55
    %p62 = scmp.eq.s32.totalorder %s20, 1
    %p63 = por %p61, %p62
    %p64 = scmp.ne.s32.totalorder %s56, %s59
    %p65 = scmp.eq.s32.totalorder %s20, 0
    %p66 = por %p64, %p65
    %p67 = scmp.ne.s32.totalorder %s56, %s59
    %p68 = scmp.eq.s32.totalorder %s25, 1
    %p69 = por %p67, %p68
    %p70 = scmp.ne.s32.totalorder %s59, %s60
    %p71 = scmp.eq.s32.totalorder %s25, 0
    %p72 = por %p70, %p71
    %p73 = scmp.ne.s32.totalorder %s59, %s60
    %p74 = scmp.eq.s32.totalorder %s26, 1
    %p75 = por %p73, %p74
    %p77 = scmp.ne.s32.totalorder %s60, %s76
    %p78 = scmp.eq.s32.totalorder %s26, 0
    %p79 = por %p77, %p78
    %s81 = sadd.s32 %s80, 1
    %p84 = scmp.eq.s32.totalorder %s20, 1
    %p85 = scmp.ne.s32.totalorder %s80, %s82
    %p86 = scmp.eq.s32.totalorder %s20, 0
    %p87 = por %p85, %p86
    %p88 = scmp.ne.s32.totalorder %s80, %s82
    %p89 = scmp.eq.s32.totalorder %s25, 1
    %p90 = por %p88, %p89
    %p91 = scmp.ne.s32.totalorder %s82, %s83
    %p92 = scmp.eq.s32.totalorder %s25, 0
    %p93 = por %p91, %p92
    %p94 = scmp.ne.s32.totalorder %s82, %s83
    %p95 = scmp.eq.s32.totalorder %s26, 1
    %p96 = por %p94, %p95
    %p98 = scmp.ne.s32.totalorder %s83, %s97
    %p99 = scmp.eq.s32.totalorder %s26, 0
    %p100 = por %p98, %p99
    %s102 = sadd.s32 %s101, 1
    %p105 = scmp.eq.s32.totalorder %s20, 1
    %p106 = scmp.ne.s32.totalorder %s101, %s103
    %p107 = scmp.eq.s32.totalorder %s20, 0
    %p108 = por %p106, %p107
    %p109 = scmp.ne.s32.totalorder %s101, %s103
    %p110 = scmp.eq.s32.totalorder %s25, 1
    %p111 = por %p109, %p110
    %p112 = scmp.ne.s32.totalorder %s103, %s104
    %p113 = scmp.eq.s32.totalorder %s25, 0
    %p114 = por %p112, %p113
    %p115 = scmp.ne.s32.totalorder %s103, %s104
    %p116 = scmp.eq.s32.totalorder %s26, 1
    %p117 = por %p115, %p116
    %p119 = scmp.ne.s32.totalorder %s104, %s118
    %p120 = scmp.eq.s32.totalorder %s26, 0
    %p121 = por %p119, %p120
    %s123 = sadd.s32 %s122, 1
    %p126 = scmp.eq.s32.totalorder %s20, 1
    %p127 = scmp.ne.s32.totalorder %s122, %s124
    %p128 = scmp.eq.s32.totalorder %s20, 0
    %p129 = por %p127, %p128
    %p130 = scmp.ne.s32.totalorder %s122, %s124
    %p131 = scmp.eq.s32.totalorder %s25, 1
    %p132 = por %p130, %p131
    %p133 = scmp.ne.s32.totalorder %s124, %s125
    %p134 = scmp.eq.s32.totalorder %s25, 0
    %p135 = por %p133, %p134
    %p136 = scmp.ne.s32.totalorder %s124, %s125
    %p137 = scmp.eq.s32.totalorder %s26, 1
    %p138 = por %p136, %p137
    %p140 = scmp.ne.s32.totalorder %s125, %s139
    %p141 = scmp.eq.s32.totalorder %s26, 0
    %p142 = por %p140, %p141
    %s144 = sadd.s32 %s143, 1
    %p147 = scmp.eq.s32.totalorder %s20, 1
    %p148 = scmp.ne.s32.totalorder %s143, %s145
    %p149 = scmp.eq.s32.totalorder %s20, 0
    %p150 = por %p148, %p149
    %p151 = scmp.ne.s32.totalorder %s143, %s145
    %p152 = scmp.eq.s32.totalorder %s25, 1
    %p153 = por %p151, %p152
    %p154 = scmp.ne.s32.totalorder %s145, %s146
    %p155 = scmp.eq.s32.totalorder %s25, 0
    %p156 = por %p154, %p155
    %p157 = scmp.ne.s32.totalorder %s145, %s146
    %p158 = scmp.eq.s32.totalorder %s26, 1
    %p159 = por %p157, %p158
    %p161 = scmp.ne.s32.totalorder %s146, %s160
    %p162 = scmp.eq.s32.totalorder %s26, 0
    %p163 = por %p161, %p162
    %s165 = sadd.s32 %s164, 1
    %p168 = scmp.eq.s32.totalorder %s20, 1
    %p169 = scmp.ne.s32.totalorder %s164, %s166
    %p170 = scmp.eq.s32.totalorder %s20, 0
    %p171 = por %p169, %p170
    %p172 = scmp.ne.s32.totalorder %s164, %s166
    %p173 = scmp.eq.s32.totalorder %s25, 1
    %p174 = por %p172, %p173
    %p175 = scmp.ne.s32.totalorder %s166, %s167
    %p176 = scmp.eq.s32.totalorder %s25, 0
    %p177 = por %p175, %p176
    %p178 = scmp.ne.s32.totalorder %s166, %s167
    %p179 = scmp.eq.s32.totalorder %s26, 1
    %p180 = por %p178, %p179
    %p182 = scmp.ne.s32.totalorder %s167, %s181
    %p183 = scmp.eq.s32.totalorder %s26, 0
    %p184 = por %p182, %p183
    %s186 = sadd.s32 %s185, 1
    %p189 = scmp.eq.s32.totalorder %s20, 1
    %p190 = scmp.ne.s32.totalorder %s185, %s187
    %p191 = scmp.eq.s32.totalorder %s20, 0
    %p192 = por %p190, %p191
    %p193 = scmp.ne.s32.totalorder %s185, %s187
    %p194 = scmp.eq.s32.totalorder %s25, 1
    %p195 = por %p193, %p194
    %p196 = scmp.ne.s32.totalorder %s187, %s188
    %p197 = scmp.eq.s32.totalorder %s25, 0
    %p198 = por %p196, %p197
    %p199 = scmp.ne.s32.totalorder %s187, %s188
    %p200 = scmp.eq.s32.totalorder %s26, 1
    %p201 = por %p199, %p200
    %p203 = scmp.ne.s32.totalorder %s188, %s202
    %p204 = scmp.eq.s32.totalorder %s26, 0
    %p205 = por %p203, %p204
    %s207 = sadd.s32 %s206, 1
    %p210 = scmp.eq.s32.totalorder %s20, 1
    %p211 = scmp.ne.s32.totalorder %s206, %s208
    %p212 = scmp.eq.s32.totalorder %s20, 0
    %p213 = por %p211, %p212
    %p214 = scmp.ne.s32.totalorder %s206, %s208
    %p215 = scmp.eq.s32.totalorder %s25, 1
    %p216 = por %p214, %p215
    %p217 = scmp.ne.s32.totalorder %s208, %s209
    %p218 = scmp.eq.s32.totalorder %s25, 0
    %p219 = por %p217, %p218
    %p220 = scmp.ne.s32.totalorder %s208, %s209
    %p221 = scmp.eq.s32.totalorder %s26, 1
    %p222 = por %p220, %p221
    %p224 = scmp.ne.s32.totalorder %s209, %s223
    %p225 = scmp.eq.s32.totalorder %s26, 0
    %p226 = por %p224, %p225
    %s228 = sadd.s32 %s227, 1
    %p231 = scmp.eq.s32.totalorder %s20, 1
    %p232 = scmp.ne.s32.totalorder %s227, %s229
    %p233 = scmp.eq.s32.totalorder %s20, 0
    %p234 = por %p232, %p233
    %p235 = scmp.ne.s32.totalorder %s227, %s229
    %p236 = scmp.eq.s32.totalorder %s25, 1
    %p237 = por %p235, %p236
    %p238 = scmp.ne.s32.totalorder %s229, %s230
    %p239 = scmp.eq.s32.totalorder %s25, 0
    %p240 = por %p238, %p239
    %p241 = scmp.ne.s32.totalorder %s229, %s230
    %p242 = scmp.eq.s32.totalorder %s26, 1
    %p243 = por %p241, %p242
    %p245 = scmp.ne.s32.totalorder %s230, %s244
    %p246 = scmp.eq.s32.totalorder %s26, 0
    %p247 = por %p245, %p246
    %s249 = sadd.s32 %s248, 1
    %p252 = scmp.eq.s32.totalorder %s20, 1
    %p253 = scmp.ne.s32.totalorder %s248, %s250
    %p254 = scmp.eq.s32.totalorder %s20, 0
    %p255 = por %p253, %p254
    %p256 = scmp.ne.s32.totalorder %s248, %s250
    %p257 = scmp.eq.s32.totalorder %s25, 1
    %p258 = por %p256, %p257
    %p259 = scmp.ne.s32.totalorder %s250, %s251
    %p260 = scmp.eq.s32.totalorder %s25, 0
    %p261 = por %p259, %p260
    %p262 = scmp.ne.s32.totalorder %s250, %s251
    %p263 = scmp.eq.s32.totalorder %s26, 1
    %p264 = por %p262, %p263
    %p266 = scmp.ne.s32.totalorder %s251, %s265
    %p267 = scmp.eq.s32.totalorder %s26, 0
    %p268 = por %p266, %p267
    %s270 = sadd.s32 %s269, 1
    %p273 = scmp.eq.s32.totalorder %s20, 1
    %p274 = scmp.ne.s32.totalorder %s269, %s271
    %p275 = scmp.eq.s32.totalorder %s20, 0
    %p276 = por %p274, %p275
    %p277 = scmp.ne.s32.totalorder %s269, %s271
    %p278 = scmp.eq.s32.totalorder %s25, 1
    %p279 = por %p277, %p278
    %p280 = scmp.ne.s32.totalorder %s271, %s272
    %p281 = scmp.eq.s32.totalorder %s25, 0
    %p282 = por %p280, %p281
    %p283 = scmp.ne.s32.totalorder %s271, %s272
    %p284 = scmp.eq.s32.totalorder %s26, 1
    %p285 = por %p283, %p284
    %p287 = scmp.ne.s32.totalorder %s272, %s286
    %p288 = scmp.eq.s32.totalorder %s26, 0
    %p289 = por %p287, %p288
    %s291 = sadd.s32 %s290, 1
    %p294 = scmp.eq.s32.totalorder %s20, 1
    %p295 = scmp.ne.s32.totalorder %s290, %s292
    %p296 = scmp.eq.s32.totalorder %s20, 0
    %p297 = por %p295, %p296
    %p298 = scmp.ne.s32.totalorder %s290, %s292
    %p299 = scmp.eq.s32.totalorder %s25, 1
    %p300 = por %p298, %p299
    %p301 = scmp.ne.s32.totalorder %s292, %s293
    %p302 = scmp.eq.s32.totalorder %s25, 0
    %p303 = por %p301, %p302
    %p304 = scmp.ne.s32.totalorder %s292, %s293
    %p305 = scmp.eq.s32.totalorder %s26, 1
    %p306 = por %p304, %p305
    %p308 = scmp.ne.s32.totalorder %s293, %s307
    %p309 = scmp.eq.s32.totalorder %s26, 0
    %p310 = por %p308, %p309
    %s312 = sadd.s32 %s311, 1
    %p315 = scmp.eq.s32.totalorder %s20, 1
    %p316 = scmp.ne.s32.totalorder %s311, %s313
    %p317 = scmp.eq.s32.totalorder %s20, 0
    %p318 = por %p316, %p317
    %p319 = scmp.ne.s32.totalorder %s311, %s313
    %p320 = scmp.eq.s32.totalorder %s25, 1
    %p321 = por %p319, %p320
    %p322 = scmp.ne.s32.totalorder %s313, %s314
    %p323 = scmp.eq.s32.totalorder %s25, 0
    %p324 = por %p322, %p323
    %p325 = scmp.ne.s32.totalorder %s313, %s314
    %p326 = scmp.eq.s32.totalorder %s26, 1
    %p327 = por %p325, %p326
    %p329 = scmp.ne.s32.totalorder %s314, %s328
    %p330 = scmp.eq.s32.totalorder %s26, 0
    %p331 = por %p329, %p330
    %s332 = ssub.s32 %s20, %s27
    %p333 = scmp.eq.s32.totalorder %s332, 0
    %s335 = sadd.s32 %s334, 1
    %s336 = scalar_select %p333, %s334, %s335
    %p339 = pneg %p333
    %p340 = scmp.eq.s32.totalorder %s20, 1
    %p341 = por %p339, %p340
    %p342 = scmp.ne.s32.totalorder %s334, %s337
    %p343 = scmp.eq.s32.totalorder %s20, 0
    %p344 = por %p342, %p343
    %p345 = scmp.ne.s32.totalorder %s334, %s337
    %p346 = scmp.eq.s32.totalorder %s25, 1
    %p347 = por %p345, %p346
    %p348 = scmp.ne.s32.totalorder %s337, %s338
    %p349 = scmp.eq.s32.totalorder %s25, 0
    %p350 = por %p348, %p349
    %p351 = scmp.ne.s32.totalorder %s337, %s338
    %p352 = scmp.eq.s32.totalorder %s26, 1
    %p353 = por %p351, %p352
    %p355 = scmp.ne.s32.totalorder %s338, %s354
    %p356 = scmp.eq.s32.totalorder %s26, 0
    %p357 = por %p355, %p356
    %p358 = scmp.le.s32.totalorder 1, %s20
    %p359 = scmp.lt.s32.totalorder %s20, 3
    %p360 = pnand %p358, %p359
    %p361 = pneg %p360
    // Predicated region
    $region9: #{transformer_forward.5} parent=5 // pred_check
      _
    $region10: #{transformer_forward.5} parent=5 // pred_check_branch
      %363 = sbr.rel (%p360) target = $region12
    $region11: #{transformer_forward.5} parent=5 // pred_region
      %s364 = ssub.s32 %s20, 1
      // Predicated region
      $region13: #{transformer_forward.5} parent=11 // pred_check
        %p365 = pneg %p93
      $region14: #{transformer_forward.5} parent=11 // pred_check_branch
        %367 = sbr.rel (%p365) target = $region16
      $region15: #{transformer_forward.5} parent=11 // pred_region
        _
      $region16: #{transformer_forward.5} parent=11 // pred_fallthru
        _
      // Predicated region
      $region17: #{transformer_forward.5} parent=11 // pred_check
        %p368 = pneg %p114
      $region18: #{transformer_forward.5} parent=11 // pred_check_branch
        %370 = sbr.rel (%p368) target = $region20
      $region19: #{transformer_forward.5} parent=11 // pred_region
        _
      $region20: #{transformer_forward.5} parent=11 // pred_fallthru
        _
      // Predicated region
      $region21: #{transformer_forward.5} parent=11 // pred_check
        %p371 = pneg %p135
      $region22: #{transformer_forward.5} parent=11 // pred_check_branch
        %373 = sbr.rel (%p371) target = $region24
      $region23: #{transformer_forward.5} parent=11 // pred_region
        _
      $region24: #{transformer_forward.5} parent=11 // pred_fallthru
        _
      // Predicated region
      $region25: #{transformer_forward.5} parent=11 // pred_check
        %p374 = pneg %p156
      $region26: #{transformer_forward.5} parent=11 // pred_check_branch
        %376 = sbr.rel (%p374) target = $region28
      $region27: #{transformer_forward.5} parent=11 // pred_region
        _
      $region28: #{transformer_forward.5} parent=11 // pred_fallthru
        _
      // Predicated region
      $region29: #{transformer_forward.5} parent=11 // pred_check
        %p377 = pneg %p177
      $region30: #{transformer_forward.5} parent=11 // pred_check_branch
        %379 = sbr.rel (%p377) target = $region32
      $region31: #{transformer_forward.5} parent=11 // pred_region
        _
      $region32: #{transformer_forward.5} parent=11 // pred_fallthru
        _
      // Predicated region
      $region33: #{transformer_forward.5} parent=11 // pred_check
        %p380 = pneg %p198
      $region34: #{transformer_forward.5} parent=11 // pred_check_branch
        %382 = sbr.rel (%p380) target = $region36
      $region35: #{transformer_forward.5} parent=11 // pred_region
        _
      $region36: #{transformer_forward.5} parent=11 // pred_fallthru
        _
      // Predicated region
      $region37: #{transformer_forward.5} parent=11 // pred_check
        %p383 = pneg %p219
      $region38: #{transformer_forward.5} parent=11 // pred_check_branch
        %385 = sbr.rel (%p383) target = $region40
      $region39: #{transformer_forward.5} parent=11 // pred_region
        _
      $region40: #{transformer_forward.5} parent=11 // pred_fallthru
        _
      // Predicated region
      $region41: #{transformer_forward.5} parent=11 // pred_check
        %p386 = pneg %p240
      $region42: #{transformer_forward.5} parent=11 // pred_check_branch
        %388 = sbr.rel (%p386) target = $region44
      $region43: #{transformer_forward.5} parent=11 // pred_region
        _
      $region44: #{transformer_forward.5} parent=11 // pred_fallthru
        _
      // Predicated region
      $region45: #{transformer_forward.5} parent=11 // pred_check
        %p389 = pneg %p261
      $region46: #{transformer_forward.5} parent=11 // pred_check_branch
        %391 = sbr.rel (%p389) target = $region48
      $region47: #{transformer_forward.5} parent=11 // pred_region
        _
      $region48: #{transformer_forward.5} parent=11 // pred_fallthru
        _
      // Predicated region
      $region49: #{transformer_forward.5} parent=11 // pred_check
        %p392 = pneg %p282
      $region50: #{transformer_forward.5} parent=11 // pred_check_branch
        %394 = sbr.rel (%p392) target = $region52
      $region51: #{transformer_forward.5} parent=11 // pred_region
        _
      $region52: #{transformer_forward.5} parent=11 // pred_fallthru
        _
      // Predicated region
      $region53: #{transformer_forward.5} parent=11 // pred_check
        %p395 = pneg %p303
      $region54: #{transformer_forward.5} parent=11 // pred_check_branch
        %397 = sbr.rel (%p395) target = $region56
      $region55: #{transformer_forward.5} parent=11 // pred_region
        _
      $region56: #{transformer_forward.5} parent=11 // pred_fallthru
        _
      // Predicated region
      $region57: #{transformer_forward.5} parent=11 // pred_check
        %p398 = pneg %p324
      $region58: #{transformer_forward.5} parent=11 // pred_check_branch
        %400 = sbr.rel (%p398) target = $region60
      $region59: #{transformer_forward.5} parent=11 // pred_region
        _
      $region60: #{transformer_forward.5} parent=11 // pred_fallthru
        _
    $region12: #{transformer_forward.5} parent=5 // pred_fallthru
      _
    %p401 = scmp.lt.s32.totalorder %s20, 2
    // Predicated region
    $region61: #{transformer_forward.5} parent=5 // pred_check
      %p402 = pneg %p401
    $region62: #{transformer_forward.5} parent=5 // pred_check_branch
      %404 = sbr.rel (%p402) target = $region64
    $region63: #{transformer_forward.5} parent=5 // pred_region
      // Predicated region
      $region65: #{transformer_forward.5} parent=63 // pred_check
        %p405 = pneg %p40
      $region66: #{transformer_forward.5} parent=63 // pred_check_branch
        %407 = sbr.rel (%p405) target = $region68
      $region67: #{transformer_forward.5} parent=63 // pred_region
        %p408 = scmp.lt.s32.totalorder %s20, 1
        %s409 = scalar_select %p408, %s20, 1
        %s410 = smul.addr %s409, 8
        %s411 = scalar_lea.vmem %s0, %s410
      $region68: #{transformer_forward.5} parent=63 // pred_fallthru
        _
      // Predicated region
      $region69: #{transformer_forward.5} parent=63 // pred_check
        %p412 = pneg %p66
      $region70: #{transformer_forward.5} parent=63 // pred_check_branch
        %414 = sbr.rel (%p412) target = $region72
      $region71: #{transformer_forward.5} parent=63 // pred_region
        %p415 = scmp.lt.s32.totalorder %s20, 1
        %s416 = scalar_select %p415, %s20, 1
        %s417 = scalar_lea.vmem %s1, %s416
      $region72: #{transformer_forward.5} parent=63 // pred_fallthru
        _
    $region64: #{transformer_forward.5} parent=5 // pred_fallthru
      _
    %p418 = scmp.le.s32.totalorder 1, %s20
    %p419 = scmp.lt.s32.totalorder %s20, 3
    %p420 = pnand %p418, %p419
    %p421 = pneg %p420
    // Predicated region
    $region73: #{transformer_forward.5} parent=5 // pred_check
      _
    $region74: #{transformer_forward.5} parent=5 // pred_check_branch
      %423 = sbr.rel (%p420) target = $region76
    $region75: #{transformer_forward.5} parent=5 // pred_region
      %s424 = ssub.s32 %s20, 1
      %p425 = scmp.lt.s32.totalorder %s25, 1
      %s426 = scalar_select %p425, %s25, 1
      %s427 = smul.addr %s426, 8
      %s428 = scalar_lea.vmem %s0, %s427
      %p429 = pneg %p46
      %p430 = pneg %p43
      %p431 = scmp.lt.s32.totalorder %s25, 1
      %s432 = scalar_select %p431, %s25, 1
      %s433 = scalar_lea.vmem %s1, %s432
      %p434 = pneg %p72
      %p435 = pneg %p69
      %p436 = pneg %p93
      %p437 = pneg %p90
      %p438 = pneg %p114
      %p439 = pneg %p111
      %p440 = pneg %p135
      %p441 = pneg %p132
      %p442 = pneg %p156
      %p443 = pneg %p153
      %p444 = pneg %p177
      %p445 = pneg %p174
      %p446 = pneg %p198
      %p447 = pneg %p195
      %p448 = pneg %p219
      %p449 = pneg %p216
      %p450 = pneg %p240
      %p451 = pneg %p237
      %p452 = pneg %p261
      %p453 = pneg %p258
      %p454 = pneg %p282
      %p455 = pneg %p279
      %p456 = pneg %p303
      %p457 = pneg %p300
      %p458 = pneg %p324
      %p459 = pneg %p321
      %p460 = pneg %p350
      %p461 = pneg %p347
      %p462 = scmp.lt.s32.totalorder %s25, 1
      %s463 = scalar_select %p462, %s25, 1
      %s464 = smul.addr %s463, 8
      %s465 = scalar_lea.vmem %s14, %s464
      %p466 = scmp.lt.s32.totalorder %s25, 1
      %s467 = scalar_select %p466, %s25, 1
      %s468 = smul.addr %s467, 8
      %s469 = scalar_lea.vmem %s0, %s468
      %p470 = scmp.lt.s32.totalorder %s25, 1
      %s471 = scalar_select %p470, %s25, 1
      %s472 = scalar_lea.vmem %s1, %s471
      %p473 = scmp.lt.s32.totalorder %s25, 1
      %s474 = scalar_select %p473, %s25, 1
      %s475 = smul.addr %s474, 8
      %s476 = scalar_lea.vmem %s14, %s475
      %v477 = vld [vmem:[%s469] sm:$0xff]
      %v478 = vld [vmem:[%s472] sm:$0x1]
      %v479 = vld [vmem:[%s2] sm:$0xff]
      %v480 = vld [vmem:[%s2 + $0x8] sm:$0xff]
      %v481 = vld [vmem:[%s2 + $0x10] sm:$0xff]
      %v482 = vld [vmem:[%s2 + $0x18] sm:$0xff]
      %v483 = vld [vmem:[%s3] sm:$0x1]
      %v485 = vperm.slane %v483, 0
      %vm487 = vcmask 261120
      %v489 = vsel %vm487, %v477, 0
      %491 = vmatpush.msra.mxu0 0.0
      %492 = vmatpush.msra.mxu0 0.0
      %493 = vmatpush.msra.mxu0 0.0
      %494 = vmatpush.msra.mxu0 0.0
      %495 = vmatpush.msra.mxu0 0.0
      %496 = vmatpush.msra.mxu0 0.0
      %497 = vmatpush.msra.mxu0 0.0
      %498 = vmatpush.msra.mxu0 0.0
      %499 = vmatpush.msra.mxu0 0.0
      %500 = vmatpush.msra.mxu0 0.0
      %501 = vmatpush.msra.mxu0 0.0
      %502 = vmatpush.msra.mxu0 0.0
      %503 = vmatpush.msra.mxu0 %v482
      %504 = vmatpush.msra.mxu0 %v481
      %505 = vmatpush.msra.mxu0 %v480
      %506 = vmatpush.msra.mxu0 %v479
      %507 = vmatmul.f32.gmra.mxu0 %v489
      %v508 = vpop.f32.mrf.mxu0
      %v509 = vadd.f32 %v485, %v508
      %510 = vdwg.mxu0
      %v511 = vld [vmem:[%s5] sm:$0x1]
      %513 = vrot.lane.b32.xlu0 %v509, 96
      %v514 = vpop.permute.xlu0 %513
      %vm515 = vcmask 64512
      %v516 = vsel %vm515, %v509, 0
      %v518 = vsel %vm515, %v514, 0
      %520 = vmatpush.xpose.msra.mxu0 0.0
      %521 = vmatpush.xpose.msra.mxu0 0.0
      %522 = vmatpush.xpose.msra.mxu0 0.0
      %523 = vmatpush.xpose.msra.mxu0 0.0
      %524 = vmatpush.xpose.msra.mxu0 0.0
      %525 = vmatpush.xpose.msra.mxu0 0.0
      %526 = vmatpush.xpose.msra.mxu0 0.0
      %527 = vmatpush.xpose.msra.mxu0 0.0
      %528 = vmatpush.xpose.msra.mxu0 0.0
      %529 = vmatpush.xpose.msra.mxu0 0.0
      %530 = vmatpush.xpose.msra.mxu0 0.0
      %531 = vmatpush.xpose.msra.mxu0 0.0
      %532 = vmatpush.xpose.msra.mxu0 0.0
      %533 = vmatpush.xpose.msra.mxu0 0.0
      %534 = vmatpush.xpose.msra.mxu0 0.0
      %535 = vmatpush.xpose.msra.mxu0 %v518
      %536 = vmatmul.f32.gmra.mxu0 %v516
      %v537 = vpop.f32.mrf.mxu0
      %v538 = vadd.f32 0.0, %v537
      %539 = vdwg.mxu0
      %vm540 = vcmp.ne.f32.partialorder %v478, 0.0
      %v541 = vsel %vm540, 1, 0
      %v542 = vperm.slane %v541, 0
      %vm543 = vcmp.eq.s32.totalorder %v542, 1
      %v544 = vsel %vm543, %v538, -1e+09
      %v545 = vsel %vm515, %v544, -inf
      %546 = vmax.xlane.f32.xlu0 %v545
      %v547 = vpop.xlane.xlu0 %546
      %v548 = vsub.f32 %v544, %v547
      %v549 = vmul.f32 %v548, 1.442695
      %v550 = vpow.pop %v549
      %v551 = vsel %vm515, %v550, 0.0
      %552 = vadd.xlane.f32.xlu0 %v551
      %v553 = vpop.xlane.xlu0 %552
      %v554 = vrcp.pop %v553
      %v555 = vmul.f32 %v550, %v554
      %556 = vrot.lane.b32.xlu0 %v509, 64
      %v557 = vpop.permute.xlu0 %556
      %v560 = vsel %vm515, %v555, 0
      %562 = vmatpush.msra.mxu0 0.0
      %563 = vmatpush.msra.mxu0 0.0
      %564 = vmatpush.msra.mxu0 0.0
      %565 = vmatpush.msra.mxu0 0.0
      %566 = vmatpush.msra.mxu0 0.0
      %567 = vmatpush.msra.mxu0 0.0
      %568 = vmatpush.msra.mxu0 0.0
      %569 = vmatpush.msra.mxu0 0.0
      %570 = vmatpush.msra.mxu0 0.0
      %571 = vmatpush.msra.mxu0 0.0
      %572 = vmatpush.msra.mxu0 0.0
      %573 = vmatpush.msra.mxu0 0.0
      %574 = vmatpush.msra.mxu0 0.0
      %575 = vmatpush.msra.mxu0 0.0
      %576 = vmatpush.msra.mxu0 0.0
      %577 = vmatpush.msra.mxu0 %v557
      %578 = vmatmul.f32.gmra.mxu0 %v560
      %v579 = vpop.f32.mrf.mxu0
      %v580 = vadd.f32 0.0, %v579
      %581 = vdwg.mxu0
      %v582 = vld [vmem:[%s4] sm:$0xff]
      %583 = vrot.lane.b32.xlu0 %v509, 120
      %v584 = vpop.permute.xlu0 %583
      %585 = vrot.lane.b32.xlu0 %v509, 88
      %v586 = vpop.permute.xlu0 %585
      %v587 = vsel %vm515, %v584, 0
      %v589 = vsel %vm515, %v586, 0
      %591 = vmatpush.xpose.msra.mxu0 0.0
      %592 = vmatpush.xpose.msra.mxu0 0.0
      %593 = vmatpush.xpose.msra.mxu0 0.0
      %594 = vmatpush.xpose.msra.mxu0 0.0
      %595 = vmatpush.xpose.msra.mxu0 0.0
      %596 = vmatpush.xpose.msra.mxu0 0.0
      %597 = vmatpush.xpose.msra.mxu0 0.0
      %598 = vmatpush.xpose.msra.mxu0 0.0
      %599 = vmatpush.xpose.msra.mxu0 0.0
      %600 = vmatpush.xpose.msra.mxu0 0.0
      %601 = vmatpush.xpose.msra.mxu0 0.0
      %602 = vmatpush.xpose.msra.mxu0 0.0
      %603 = vmatpush.xpose.msra.mxu0 0.0
      %604 = vmatpush.xpose.msra.mxu0 0.0
      %605 = vmatpush.xpose.msra.mxu0 0.0
      %606 = vmatpush.xpose.msra.mxu0 %v589
      %607 = vmatmul.f32.gmra.mxu0 %v587
      %v608 = vpop.f32.mrf.mxu0
      %v609 = vadd.f32 0.0, %v608
      %610 = vdwg.mxu0
      %v611 = vsel %vm543, %v609, -1e+09
      %v612 = vsel %vm515, %v611, -inf
      %613 = vmax.xlane.f32.xlu0 %v612
      %v614 = vpop.xlane.xlu0 %613
      %v615 = vsub.f32 %v611, %v614
      %v616 = vmul.f32 %v615, 1.442695
      %v617 = vpow.pop %v616
      %v618 = vsel %vm515, %v617, 0.0
      %619 = vadd.xlane.f32.xlu0 %v618
      %v620 = vpop.xlane.xlu0 %619
      %v621 = vrcp.pop %v620
      %v622 = vmul.f32 %v617, %v621
      %623 = vrot.lane.b32.xlu0 %v509, 56
      %v624 = vpop.permute.xlu0 %623
      %v627 = vsel %vm515, %v622, 0
      %629 = vmatpush.msra.mxu0 0.0
      %630 = vmatpush.msra.mxu0 0.0
      %631 = vmatpush.msra.mxu0 0.0
      %632 = vmatpush.msra.mxu0 0.0
      %633 = vmatpush.msra.mxu0 0.0
      %634 = vmatpush.msra.mxu0 0.0
      %635 = vmatpush.msra.mxu0 0.0
      %636 = vmatpush.msra.mxu0 0.0
      %637 = vmatpush.msra.mxu0 0.0
      %638 = vmatpush.msra.mxu0 0.0
      %639 = vmatpush.msra.mxu0 0.0
      %640 = vmatpush.msra.mxu0 0.0
      %641 = vmatpush.msra.mxu0 0.0
      %642 = vmatpush.msra.mxu0 0.0
      %643 = vmatpush.msra.mxu0 0.0
      %644 = vmatpush.msra.mxu0 %v624
      %645 = vmatmul.f32.gmra.mxu0 %v627
      %v646 = vpop.f32.mrf.mxu0
      %v647 = vadd.f32 0.0, %v646
      %648 = vdwg.mxu0
      %s649 = scalar_lea.vmem %s4, 8
      %v650 = vld [vmem:[%s649] sm:$0xff]
      %v652 = vsel %vm515, %v647, 0
      %654 = vmatpush.msra.mxu0 0.0
      %655 = vmatpush.msra.mxu0 0.0
      %656 = vmatpush.msra.mxu0 0.0
      %657 = vmatpush.msra.mxu0 0.0
      %658 = vmatpush.msra.mxu0 0.0
      %659 = vmatpush.msra.mxu0 0.0
      %660 = vmatpush.msra.mxu0 0.0
      %661 = vmatpush.msra.mxu0 0.0
      %662 = vmatpush.msra.mxu0 0.0
      %663 = vmatpush.msra.mxu0 0.0
      %664 = vmatpush.msra.mxu0 0.0
      %665 = vmatpush.msra.mxu0 0.0
      %666 = vmatpush.msra.mxu0 0.0
      %667 = vmatpush.msra.mxu0 0.0
      %668 = vmatpush.msra.mxu0 0.0
      %669 = vmatpush.msra.mxu0 %v650
      %670 = vmatmul.f32.gmra.mxu0 %v652
      %v671 = vpop.f32.mrf.mxu0
      %v672 = vadd.f32 0.0, %v671
      %673 = vdwg.mxu0
      %v675 = vsel %vm515, %v580, 0
      %677 = vmatpush.msra.mxu0 0.0
      %678 = vmatpush.msra.mxu0 0.0
      %679 = vmatpush.msra.mxu0 0.0
      %680 = vmatpush.msra.mxu0 0.0
      %681 = vmatpush.msra.mxu0 0.0
      %682 = vmatpush.msra.mxu0 0.0
      %683 = vmatpush.msra.mxu0 0.0
      %684 = vmatpush.msra.mxu0 0.0
      %685 = vmatpush.msra.mxu0 0.0
      %686 = vmatpush.msra.mxu0 0.0
      %687 = vmatpush.msra.mxu0 0.0
      %688 = vmatpush.msra.mxu0 0.0
      %689 = vmatpush.msra.mxu0 0.0
      %690 = vmatpush.msra.mxu0 0.0
      %691 = vmatpush.msra.mxu0 0.0
      %692 = vmatpush.msra.mxu0 %v582
      %693 = vmatmul.f32.gmra.mxu0 %v675
      %v694 = vpop.f32.mrf.mxu0
      %v695 = vadd.f32 %v672, %v694
      %696 = vdwg.mxu0
      %697 = vrot.lane.b32.xlu0 %v509, 112
      %v698 = vpop.permute.xlu0 %697
      %699 = vrot.lane.b32.xlu0 %v509, 80
      %v700 = vpop.permute.xlu0 %699
      %v701 = vsel %vm515, %v698, 0
      %v703 = vsel %vm515, %v700, 0
      %705 = vmatpush.xpose.msra.mxu0 0.0
      %706 = vmatpush.xpose.msra.mxu0 0.0
      %707 = vmatpush.xpose.msra.mxu0 0.0
      %708 = vmatpush.xpose.msra.mxu0 0.0
      %709 = vmatpush.xpose.msra.mxu0 0.0
      %710 = vmatpush.xpose.msra.mxu0 0.0
      %711 = vmatpush.xpose.msra.mxu0 0.0
      %712 = vmatpush.xpose.msra.mxu0 0.0
      %713 = vmatpush.xpose.msra.mxu0 0.0
      %714 = vmatpush.xpose.msra.mxu0 0.0
      %715 = vmatpush.xpose.msra.mxu0 0.0
      %716 = vmatpush.xpose.msra.mxu0 0.0
      %717 = vmatpush.xpose.msra.mxu0 0.0
      %718 = vmatpush.xpose.msra.mxu0 0.0
      %719 = vmatpush.xpose.msra.mxu0 0.0
      %720 = vmatpush.xpose.msra.mxu0 %v703
      %721 = vmatmul.f32.gmra.mxu0 %v701
      %v722 = vpop.f32.mrf.mxu0
      %v723 = vadd.f32 0.0, %v722
      %724 = vdwg.mxu0
      %v725 = vsel %vm543, %v723, -1e+09
      %v726 = vsel %vm515, %v725, -inf
      %727 = vmax.xlane.f32.xlu0 %v726
      %v728 = vpop.xlane.xlu0 %727
      %v729 = vsub.f32 %v725, %v728
      %v730 = vmul.f32 %v729, 1.442695
      %v731 = vpow.pop %v730
      %v732 = vsel %vm515, %v731, 0.0
      %733 = vadd.xlane.f32.xlu0 %v732
      %v734 = vpop.xlane.xlu0 %733
      %v735 = vrcp.pop %v734
      %v736 = vmul.f32 %v731, %v735
      %737 = vrot.lane.b32.xlu0 %v509, 48
      %v738 = vpop.permute.xlu0 %737
      %v741 = vsel %vm515, %v736, 0
      %743 = vmatpush.msra.mxu0 0.0
      %744 = vmatpush.msra.mxu0 0.0
      %745 = vmatpush.msra.mxu0 0.0
      %746 = vmatpush.msra.mxu0 0.0
      %747 = vmatpush.msra.mxu0 0.0
      %748 = vmatpush.msra.mxu0 0.0
      %749 = vmatpush.msra.mxu0 0.0
      %750 = vmatpush.msra.mxu0 0.0
      %751 = vmatpush.msra.mxu0 0.0
      %752 = vmatpush.msra.mxu0 0.0
      %753 = vmatpush.msra.mxu0 0.0
      %754 = vmatpush.msra.mxu0 0.0
      %755 = vmatpush.msra.mxu0 0.0
      %756 = vmatpush.msra.mxu0 0.0
      %757 = vmatpush.msra.mxu0 0.0
      %758 = vmatpush.msra.mxu0 %v738
      %759 = vmatmul.f32.gmra.mxu0 %v741
      %v760 = vpop.f32.mrf.mxu0
      %v761 = vadd.f32 0.0, %v760
      %762 = vdwg.mxu0
      %s763 = scalar_lea.vmem %s4, 16
      %v764 = vld [vmem:[%s763] sm:$0xff]
      %v766 = vsel %vm515, %v761, 0
      %768 = vmatpush.msra.mxu0 0.0
      %769 = vmatpush.msra.mxu0 0.0
      %770 = vmatpush.msra.mxu0 0.0
      %771 = vmatpush.msra.mxu0 0.0
      %772 = vmatpush.msra.mxu0 0.0
      %773 = vmatpush.msra.mxu0 0.0
      %774 = vmatpush.msra.mxu0 0.0
      %775 = vmatpush.msra.mxu0 0.0
      %776 = vmatpush.msra.mxu0 0.0
      %777 = vmatpush.msra.mxu0 0.0
      %778 = vmatpush.msra.mxu0 0.0
      %779 = vmatpush.msra.mxu0 0.0
      %780 = vmatpush.msra.mxu0 0.0
      %781 = vmatpush.msra.mxu0 0.0
      %782 = vmatpush.msra.mxu0 0.0
      %783 = vmatpush.msra.mxu0 %v764
      %784 = vmatmul.f32.gmra.mxu0 %v766
      %v785 = vpop.f32.mrf.mxu0
      %v786 = vadd.f32 0.0, %v785
      %787 = vdwg.mxu0
      %v788 = vadd.f32 %v695, %v786
      %789 = vrot.lane.b32.xlu0 %v509, 104
      %v790 = vpop.permute.xlu0 %789
      %791 = vrot.lane.b32.xlu0 %v509, 72
      %v792 = vpop.permute.xlu0 %791
      %v793 = vsel %vm515, %v790, 0
      %v795 = vsel %vm515, %v792, 0
      %797 = vmatpush.xpose.msra.mxu0 0.0
      %798 = vmatpush.xpose.msra.mxu0 0.0
      %799 = vmatpush.xpose.msra.mxu0 0.0
      %800 = vmatpush.xpose.msra.mxu0 0.0
      %801 = vmatpush.xpose.msra.mxu0 0.0
      %802 = vmatpush.xpose.msra.mxu0 0.0
      %803 = vmatpush.xpose.msra.mxu0 0.0
      %804 = vmatpush.xpose.msra.mxu0 0.0
      %805 = vmatpush.xpose.msra.mxu0 0.0
      %806 = vmatpush.xpose.msra.mxu0 0.0
      %807 = vmatpush.xpose.msra.mxu0 0.0
      %808 = vmatpush.xpose.msra.mxu0 0.0
      %809 = vmatpush.xpose.msra.mxu0 0.0
      %810 = vmatpush.xpose.msra.mxu0 0.0
      %811 = vmatpush.xpose.msra.mxu0 0.0
      %812 = vmatpush.xpose.msra.mxu0 %v795
      %813 = vmatmul.f32.gmra.mxu0 %v793
      %v814 = vpop.f32.mrf.mxu0
      %v815 = vadd.f32 0.0, %v814
      %816 = vdwg.mxu0
      %v817 = vsel %vm543, %v815, -1e+09
      %v818 = vsel %vm515, %v817, -inf
      %819 = vmax.xlane.f32.xlu0 %v818
      %v820 = vpop.xlane.xlu0 %819
      %v821 = vsub.f32 %v817, %v820
      %v822 = vmul.f32 %v821, 1.442695
      %v823 = vpow.pop %v822
      %v824 = vsel %vm515, %v823, 0.0
      %825 = vadd.xlane.f32.xlu0 %v824
      %v826 = vpop.xlane.xlu0 %825
      %v827 = vrcp.pop %v826
      %v828 = vmul.f32 %v823, %v827
      %829 = vrot.lane.b32.xlu0 %v509, 40
      %v830 = vpop.permute.xlu0 %829
      %v833 = vsel %vm515, %v828, 0
      %835 = vmatpush.msra.mxu0 0.0
      %836 = vmatpush.msra.mxu0 0.0
      %837 = vmatpush.msra.mxu0 0.0
      %838 = vmatpush.msra.mxu0 0.0
      %839 = vmatpush.msra.mxu0 0.0
      %840 = vmatpush.msra.mxu0 0.0
      %841 = vmatpush.msra.mxu0 0.0
      %842 = vmatpush.msra.mxu0 0.0
      %843 = vmatpush.msra.mxu0 0.0
      %844 = vmatpush.msra.mxu0 0.0
      %845 = vmatpush.msra.mxu0 0.0
      %846 = vmatpush.msra.mxu0 0.0
      %847 = vmatpush.msra.mxu0 0.0
      %848 = vmatpush.msra.mxu0 0.0
      %849 = vmatpush.msra.mxu0 0.0
      %850 = vmatpush.msra.mxu0 %v830
      %851 = vmatmul.f32.gmra.mxu0 %v833
      %v852 = vpop.f32.mrf.mxu0
      %v853 = vadd.f32 0.0, %v852
      %854 = vdwg.mxu0
      %s855 = scalar_lea.vmem %s4, 24
      %v856 = vld [vmem:[%s855] sm:$0xff]
      %v858 = vsel %vm515, %v853, 0
      %860 = vmatpush.msra.mxu0 0.0
      %861 = vmatpush.msra.mxu0 0.0
      %862 = vmatpush.msra.mxu0 0.0
      %863 = vmatpush.msra.mxu0 0.0
      %864 = vmatpush.msra.mxu0 0.0
      %865 = vmatpush.msra.mxu0 0.0
      %866 = vmatpush.msra.mxu0 0.0
      %867 = vmatpush.msra.mxu0 0.0
      %868 = vmatpush.msra.mxu0 0.0
      %869 = vmatpush.msra.mxu0 0.0
      %870 = vmatpush.msra.mxu0 0.0
      %871 = vmatpush.msra.mxu0 0.0
      %872 = vmatpush.msra.mxu0 0.0
      %873 = vmatpush.msra.mxu0 0.0
      %874 = vmatpush.msra.mxu0 0.0
      %875 = vmatpush.msra.mxu0 %v856
      %876 = vmatmul.f32.gmra.mxu0 %v858
      %v877 = vpop.f32.mrf.mxu0
      %v878 = vadd.f32 0.0, %v877
      %879 = vdwg.mxu0
      %v880 = vadd.f32 %v788, %v878
      %v882 = vperm.slane %v511, 0
      %v884 = vadd.f32 %v880, %v882
      %v885 = vld [vmem:[%s6] sm:$0x1]
      %v886 = vld [vmem:[%s7] sm:$0x1]
      %v887 = vadd.f32 %v477, %v884
      %v888 = vsel %vm487, %v887, 0.0
      %889 = vadd.xlane.f32.xlu0 %v888
      %v890 = vpop.xlane.xlu0 %889
      %v891 = vrcp.pop 32.0
      %v892 = vmul.f32 32.0, %v891
      %v893 = vsub.f32 1.0, %v892
      %v894 = vmul.f32 %v891, %v893
      %v895 = vadd.f32 %v891, %v894
      %vm896 = vweird.f32 %v891
      %v897 = vsel %vm896, %v891, %v895
      %v898 = vmul.f32 %v890, %v897
      %v899 = vsub.f32 %v887, %v898
      %v900 = vmul.f32 %v899, %v899
      %v901 = vsel %vm487, %v900, 0.0
      %902 = vadd.xlane.f32.xlu0 %v901
      %v903 = vpop.xlane.xlu0 %902
      %v904 = vmul.f32 %v903, %v897
      %v905 = vadd.f32 %v904, 1e-05
      %v906 = vrsqrt.pop %v905
      %v907 = vmul.f32 %v906, %v905
      %v908 = vmul.f32 %v907, %v906
      %v909 = vmul.f32 0.5, %v908
      %v910 = vsub.f32 1.5, %v909
      %v911 = vmul.f32 %v906, %v910
      %vm912 = vweird.f32 %v905
      %vm913 = vweird.f32 %v906
      %vm914 = vmor %vm912, %vm913
      %v915 = vsel %vm914, %v906, %v911
      %v916 = vmul.f32 %v899, %v915
      %v918 = vperm.slane %v885, 0
      %v920 = vmul.f32 %v916, %v918
      %v922 = vperm.slane %v886, 0
      %v924 = vadd.f32 %v920, %v922
      %v925 = vld [vmem:[%s8] sm:$0xff]
      %v926 = vld [vmem:[%s8 + $0x8] sm:$0xff]
      %v927 = vld [vmem:[%s8 + $0x10] sm:$0xff]
      %v928 = vld [vmem:[%s8 + $0x18] sm:$0xff]
      %v929 = vld [vmem:[%s9] sm:$0x1]
      %v930 = vld [vmem:[%s10] sm:$0xff]
      %v931 = vld [vmem:[%s10 + $0x8] sm:$0xff]
      %v932 = vld [vmem:[%s10 + $0x10] sm:$0xff]
      %v933 = vld [vmem:[%s10 + $0x18] sm:$0xff]
      %v934 = vld [vmem:[%s10 + $0x20] sm:$0xff]
      %v935 = vld [vmem:[%s10 + $0x28] sm:$0xff]
      %v936 = vld [vmem:[%s10 + $0x30] sm:$0xff]
      %v937 = vld [vmem:[%s10 + $0x38] sm:$0xff]
      %v938 = vld [vmem:[%s11] sm:$0x1]
      %v940 = vperm.slane %v929, 0
      %v943 = vsel %vm487, %v924, 0
      %945 = vmatpush.msra.mxu0 0.0
      %946 = vmatpush.msra.mxu0 0.0
      %947 = vmatpush.msra.mxu0 0.0
      %948 = vmatpush.msra.mxu0 0.0
      %949 = vmatpush.msra.mxu0 0.0
      %950 = vmatpush.msra.mxu0 0.0
      %951 = vmatpush.msra.mxu0 0.0
      %952 = vmatpush.msra.mxu0 0.0
      %953 = vmatpush.msra.mxu0 0.0
      %954 = vmatpush.msra.mxu0 0.0
      %955 = vmatpush.msra.mxu0 0.0
      %956 = vmatpush.msra.mxu0 0.0
      %957 = vmatpush.msra.mxu0 %v928
      %958 = vmatpush.msra.mxu0 %v927
      %959 = vmatpush.msra.mxu0 %v926
      %960 = vmatpush.msra.mxu0 %v925
      %961 = vmatmul.f32.gmra.mxu0 %v943
      %v962 = vpop.f32.mrf.mxu0
      %v963 = vadd.f32 %v940, %v962
      %964 = vdwg.mxu0
      %v965 = vmax.f32 %v963, 0.0
      %v967 = vperm.slane %v938, 0
      %vm969 = vcmask 523264
      %v971 = vsel %vm969, %v965, 0
      %973 = vmatpush.msra.mxu0 0.0
      %974 = vmatpush.msra.mxu0 0.0
      %975 = vmatpush.msra.mxu0 0.0
      %976 = vmatpush.msra.mxu0 0.0
      %977 = vmatpush.msra.mxu0 0.0
      %978 = vmatpush.msra.mxu0 0.0
      %979 = vmatpush.msra.mxu0 0.0
      %980 = vmatpush.msra.mxu0 0.0
      %981 = vmatpush.msra.mxu0 %v937
      %982 = vmatpush.msra.mxu0 %v936
      %983 = vmatpush.msra.mxu0 %v935
      %984 = vmatpush.msra.mxu0 %v934
      %985 = vmatpush.msra.mxu0 %v933
      %986 = vmatpush.msra.mxu0 %v932
      %987 = vmatpush.msra.mxu0 %v931
      %988 = vmatpush.msra.mxu0 %v930
      %989 = vmatmul.f32.gmra.mxu0 %v971
      %v990 = vpop.f32.mrf.mxu0
      %v991 = vadd.f32 %v967, %v990
      %992 = vdwg.mxu0
      %v993 = vld [vmem:[%s12] sm:$0x1]
      %v994 = vld [vmem:[%s13] sm:$0x1]
      %v995 = vadd.f32 %v924, %v991
      %v996 = vsel %vm487, %v995, 0.0
      %997 = vadd.xlane.f32.xlu0 %v996
      %v998 = vpop.xlane.xlu0 %997
      %v999 = vmul.f32 %v998, %v897
      %v1000 = vsub.f32 %v995, %v999
      %v1001 = vmul.f32 %v1000, %v1000
      %v1002 = vsel %vm487, %v1001, 0.0
      %1003 = vadd.xlane.f32.xlu0 %v1002
      %v1004 = vpop.xlane.xlu0 %1003
      %v1005 = vmul.f32 %v1004, %v897
      %v1006 = vadd.f32 %v1005, 1e-05
      %v1007 = vrsqrt.pop %v1006
      %v1008 = vmul.f32 %v1007, %v1006
      %v1009 = vmul.f32 %v1008, %v1007
      %v1010 = vmul.f32 0.5, %v1009
      %v1011 = vsub.f32 1.5, %v1010
      %v1012 = vmul.f32 %v1007, %v1011
      %vm1013 = vweird.f32 %v1006
      %vm1014 = vweird.f32 %v1007
      %vm1015 = vmor %vm1013, %vm1014
      %v1016 = vsel %vm1015, %v1007, %v1012
      %v1017 = vmul.f32 %v1000, %v1016
      %v1019 = vperm.slane %v993, 0
      %v1021 = vmul.f32 %v1017, %v1019
      %v1023 = vperm.slane %v994, 0
      %v1025 = vadd.f32 %v1021, %v1023
      %1026 = vst.msk [vmem:[%s476] sm:$0xff] %vm487, %v1025
      %p1027 = scmp.lt.s32.totalorder %s25, 1
      %s1028 = scalar_select %p1027, %s25, 1
      %s1029 = smul.addr %s1028, 8
      %s1030 = scalar_lea.vmem %s14, %s1029
      // Predicated region
      $region77: #{transformer_forward.5} parent=75 // pred_check
        %p1031 = pneg %p347
      $region78: #{transformer_forward.5} parent=75 // pred_check_branch
        %1033 = sbr.rel (%p1031) target = $region80
      $region79: #{transformer_forward.5} parent=75 // pred_region
        _
      $region80: #{transformer_forward.5} parent=75 // pred_fallthru
        _
    $region76: #{transformer_forward.5} parent=5 // pred_fallthru
      _
    %p1034 = scmp.le.s32.totalorder 2, %s20
    // Predicated region
    $region81: #{transformer_forward.5} parent=5 // pred_check
      %p1035 = pneg %p1034
    $region82: #{transformer_forward.5} parent=5 // pred_check_branch
      %1037 = sbr.rel (%p1035) target = $region84
    $region83: #{transformer_forward.5} parent=5 // pred_region
      %s1038 = ssub.s32 %s20, 2
      // Predicated region
      $region85: #{transformer_forward.5} parent=83 // pred_check
        %p1039 = pneg %p353
      $region86: #{transformer_forward.5} parent=83 // pred_check_branch
        %1041 = sbr.rel (%p1039) target = $region88
      $region87: #{transformer_forward.5} parent=83 // pred_region
        %p1042 = scmp.lt.s32.totalorder %s26, 1
        %s1043 = scalar_select %p1042, %s26, 1
        %s1044 = smul.addr %s1043, 8
        %s1045 = scalar_lea.vmem %s14, %s1044
      $region88: #{transformer_forward.5} parent=83 // pred_fallthru
        _
    $region84: #{transformer_forward.5} parent=5 // pred_fallthru
      _
  $region6: #{transformer_forward.5} parent=0 // loop_footer
    %s24 = sadd.s32 1, %s20
  $region7: #{transformer_forward.5} parent=0 // loop_footer_branch
    %19 = sbr.rel target = $region3
  $region8: #{transformer_forward.5} parent=0 // loop_exit
    _

// kernel: transformer_forward.8
$region0: #{transformer_forward.8}
  #allocation0 [shape = 'u32[]', space=smem, size = 0x4, offset = 0x4, fixed_abs, tag = 'smem constant byte address 0x4 - core index']
  #allocation1 [shape = 'u32[72,128]{1,0:T(1,128)}', space=vmem, size = 0x9000, scoped, tag = 'internal scratch']
  %s0 = inlined_call_operand.vmem [shape: f32[2,8,32], index: 0, kind: input, shape index: {}]
  %s1 = inlined_call_operand.vmem [shape: f32[2,8,32], index: 1, kind: input, shape index: {}]
  %s2 = inlined_call_operand.vmem [shape: f32[2,8,8], index: 2, kind: input, shape index: {}]
  %s3 = inlined_call_operand.vmem [shape: f32[2,1,8], index: 3, kind: input, shape index: {}]
  %s4 = inlined_call_operand.vmem [shape: f32[32,96], index: 4, kind: input, shape index: {}]
  %s5 = inlined_call_operand.hbm [shape: f32[1,96], index: 5, kind: input, shape index: {}]
  %s6 = inlined_call_operand.vmem [shape: f32[4,8,32], index: 6, kind: input, shape index: {}]
  %s7 = inlined_call_operand.hbm [shape: f32[1,32], index: 7, kind: input, shape index: {}]
  %s8 = inlined_call_operand.hbm [shape: f32[1,32], index: 8, kind: input, shape index: {}]
  %s9 = inlined_call_operand.hbm [shape: f32[1,32], index: 9, kind: input, shape index: {}]
  %s10 = inlined_call_operand.vmem [shape: f32[32,32], index: 10, kind: input, shape index: {}]
  %s11 = inlined_call_operand.hbm [shape: f32[1,32], index: 11, kind: input, shape index: {}]
  %s12 = inlined_call_operand.vmem [shape: f32[32,64], index: 12, kind: input, shape index: {}]
  %s13 = inlined_call_operand.hbm [shape: f32[1,64], index: 13, kind: input, shape index: {}]
  %s14 = inlined_call_operand.vmem [shape: f32[4,8,32], index: 14, kind: input, shape index: {}]
  %s15 = inlined_call_operand.hbm [shape: f32[1,32], index: 15, kind: input, shape index: {}]
  %s16 = inlined_call_operand.hbm [shape: f32[1,32], index: 16, kind: input, shape index: {}]
  %s17 = inlined_call_operand.hbm [shape: f32[1,32], index: 17, kind: input, shape index: {}]
  %s18 = inlined_call_operand.vmem [shape: f32[32,64], index: 18, kind: input, shape index: {}]
  %s19 = inlined_call_operand.hbm [shape: f32[1,64], index: 19, kind: input, shape index: {}]
  %s20 = inlined_call_operand.vmem [shape: f32[64,32], index: 20, kind: input, shape index: {}]
  %s21 = inlined_call_operand.hbm [shape: f32[1,32], index: 21, kind: input, shape index: {}]
  %s22 = inlined_call_operand.hbm [shape: f32[1,32], index: 22, kind: input, shape index: {}]
  %s23 = inlined_call_operand.hbm [shape: f32[1,32], index: 23, kind: input, shape index: {}]
  %s24 = inlined_call_operand.vmem [shape: f32[2,8,32], index: 24, kind: output, shape index: {}]
  %s25 = sld [smem:[#allocation0]]
  $region181: #{transformer_forward.8} parent=0
    _
  %s27 = ssub.s32 1, %s25
  %s28 = scalar_select 0, %s27, %s25
  $region1: #{transformer_forward.8} parent=0
    #allocation2 [shape = 'u8[512]{0}', space=vmem, size = 0x400, scoped, tag = 'input window, operand 5, single buffered']
    #allocation3 [shape = 's32[2]{0}', space=sflag, size = 0x8, scoped, tag = 'scoped memory for transformer_forward.8']
    #allocation4 [shape = 'u8[512]{0}', space=vmem, size = 0x400, scoped, tag = 'input window, operand 7, single buffered']
    #allocation5 [shape = 's32[1]{0}', space=sflag, size = 0x4, scoped, tag = 'scoped memory for transformer_forward.8']
    #allocation6 [shape = 'u8[512]{0}', space=vmem, size = 0x400, scoped, tag = 'input window, operand 8, single buffered']
    #allocation7 [shape = 'u8[512]{0}', space=vmem, size = 0x400, scoped, tag = 'input window, operand 9, single buffered']
    #allocation8 [shape = 's32[1]{0}', space=sflag, size = 0x4, scoped, tag = 'scoped memory for transformer_forward.8']
    #allocation9 [shape = 'u8[512]{0}', space=vmem, size = 0x400, scoped, tag = 'input window, operand 11, single buffered']
    #allocation10 [shape = 'u8[512]{0}', space=vmem, size = 0x400, scoped, tag = 'input window, operand 13, single buffered']
    #allocation11 [shape = 's32[1]{0}', space=sflag, size = 0x4, scoped, tag = 'scoped memory for transformer_forward.8']
    #allocation12 [shape = 'u8[512]{0}', space=vmem, size = 0x400, scoped, tag = 'input window, operand 15, single buffered']
    #allocation13 [shape = 'u8[512]{0}', space=vmem, size = 0x400, scoped, tag = 'input window, operand 16, single buffered']
    #allocation14 [shape = 's32[1]{0}', space=sflag, size = 0x4, scoped, tag = 'scoped memory for transformer_forward.8']
    #allocation15 [shape = 'u8[512]{0}', space=vmem, size = 0x400, scoped, tag = 'input window, operand 17, single buffered']
    #allocation16 [shape = 'u8[512]{0}', space=vmem, size = 0x400, scoped, tag = 'input window, operand 19, single buffered']
    #allocation17 [shape = 's32[1]{0}', space=sflag, size = 0x4, scoped, tag = 'scoped memory for transformer_forward.8']
    #allocation18 [shape = 'u8[512]{0}', space=vmem, size = 0x400, scoped, tag = 'input window, operand 21, single buffered']
    #allocation19 [shape = 'u8[512]{0}', space=vmem, size = 0x400, scoped, tag = 'input window, operand 22, single buffered']
    #allocation20 [shape = 's32[1]{0}', space=sflag, size = 0x4, scoped, tag = 'scoped memory for transformer_forward.8']
    #allocation21 [shape = 'u8[512]{0}', space=vmem, size = 0x400, scoped, tag = 'input window, operand 23, single buffered']
    %29 = vsyncpa [#allocation3], 0
    %30 = vsyncpa [#allocation5], 0
    %31 = vsyncpa [#allocation8], 0
    %32 = vsyncpa [#allocation11], 0
    %33 = vsyncpa [#allocation14], 0
    %34 = vsyncpa [#allocation17], 0
    %35 = vsyncpa [#allocation20], 0
    loop: start=0, step=1, limit=4
    $region2: #{transformer_forward.8} parent=1 // loop_pre_header
      _
    $region3: #{transformer_forward.8} parent=1 // loop_header
      %s37 = sphi 0, %s41
      %p38 = scmp.ge.s32.totalorder %s37, 4
      %s47 = sphi 0, %s49
      %s50 = sphi 0, %s47
      %s51 = sphi 0, %s50
      %s67 = sphi 0, %s51
      %s73 = sphi 0, %s75
      %s76 = sphi 0, %s73
      %s77 = sphi 0, %s76
      %s93 = sphi 0, %s77
      %s99 = sphi 0, %s101
      %s102 = sphi 0, %s99
      %s103 = sphi 0, %s102
      %s119 = sphi 0, %s103
      %s125 = sphi 0, %s127
      %s128 = sphi 0, %s125
      %s129 = sphi 0, %s128
      %s145 = sphi 0, %s129
      %s149 = sphi 0, %s149
      %s151 = sphi 0, %s149
      %s152 = sphi 0, %s151
      %s166 = sphi 0, %s152
      %s170 = sphi 0, %s170
      %s172 = sphi 0, %s170
      %s173 = sphi 0, %s172
      %s187 = sphi 0, %s173
      %s191 = sphi 0, %s191
      %s193 = sphi 0, %s191
      %s194 = sphi 0, %s193
      %s208 = sphi 0, %s194
      %s212 = sphi 0, %s212
      %s214 = sphi 0, %s212
      %s215 = sphi 0, %s214
      %s229 = sphi 0, %s215
      %s233 = sphi 0, %s233
      %s235 = sphi 0, %s233
      %s236 = sphi 0, %s235
      %s250 = sphi 0, %s236
      %s254 = sphi 0, %s254
      %s256 = sphi 0, %s254
      %s257 = sphi 0, %s256
      %s271 = sphi 0, %s257
      %s275 = sphi 0, %s275
      %s277 = sphi 0, %s275
      %s278 = sphi 0, %s277
      %s292 = sphi 0, %s278
      %s296 = sphi 0, %s296
      %s298 = sphi 0, %s296
      %s299 = sphi 0, %s298
      %s313 = sphi 0, %s299
      %s317 = sphi 0, %s317
      %s319 = sphi 0, %s317
      %s320 = sphi 0, %s319
      %s334 = sphi 0, %s320
      %s338 = sphi 0, %s338
      %s340 = sphi 0, %s338
      %s341 = sphi 0, %s340
      %s355 = sphi 0, %s341
      %s359 = sphi 0, %s359
      %s361 = sphi 0, %s359
      %s362 = sphi 0, %s361
      %s376 = sphi 0, %s362
      %s380 = sphi 0, %s380
      %s382 = sphi 0, %s380
      %s383 = sphi 0, %s382
      %s397 = sphi 0, %s383
      %s401 = sphi 0, %s401
      %s403 = sphi 0, %s401
      %s404 = sphi 0, %s403
      %s418 = sphi 0, %s404
      %s422 = sphi 0, %s422
      %s424 = sphi 0, %s422
      %s425 = sphi 0, %s424
      %s439 = sphi 0, %s425
      %s443 = sphi 0, %s443
      %s445 = sphi 0, %s443
      %s446 = sphi 0, %s445
      %s460 = sphi 0, %s446
      %s464 = sphi 0, %s464
      %s466 = sphi 0, %s464
      %s467 = sphi 0, %s466
      %s481 = sphi 0, %s467
      %s485 = sphi 0, %s485
      %s487 = sphi 0, %s485
      %s488 = sphi 0, %s487
      %s502 = sphi 0, %s488
      %s506 = sphi 0, %s506
      %s508 = sphi 0, %s506
      %s509 = sphi 0, %s508
      %s523 = sphi 0, %s509
      %s527 = sphi 0, %s527
      %s529 = sphi 0, %s527
      %s530 = sphi 0, %s529
      %s544 = sphi 0, %s530
      %s548 = sphi 0, %s548
      %s550 = sphi 0, %s548
      %s551 = sphi 0, %s550
      %s565 = sphi 0, %s551
      %s571 = sphi 0, %s573
      %s574 = sphi 0, %s571
      %s575 = sphi 0, %s574
      %s591 = sphi 0, %s575
    $region4: #{transformer_forward.8} parent=1 // loop_header_branch
      %40 = sbr.rel (%p38) target = $region8
    $region5: #{transformer_forward.8} parent=1 // loop_body
      %s42 = ssub.s32 %s37, 1
      %s43 = ssub.s32 %s37, 2
      %s44 = sadd.s32 %s37, 1
      %s45 = ssub.s32 %s37, %s44
      %p46 = scmp.eq.s32.totalorder %s45, 0
      %s48 = sadd.s32 %s47, 1
      %s49 = scalar_select %p46, %s47, %s48
      %p52 = pneg %p46
      %p53 = scmp.eq.s32.totalorder %s37, 1
      %p54 = por %p52, %p53
      %p55 = scmp.ne.s32.totalorder %s47, %s50
      %p56 = scmp.eq.s32.totalorder %s37, 0
      %p57 = por %p55, %p56
      %p58 = scmp.ne.s32.totalorder %s47, %s50
      %p59 = scmp.eq.s32.totalorder %s42, 1
      %p60 = por %p58, %p59
      %p61 = scmp.ne.s32.totalorder %s50, %s51
      %p62 = scmp.eq.s32.totalorder %s42, 0
      %p63 = por %p61, %p62
      %p64 = scmp.ne.s32.totalorder %s50, %s51
      %p65 = scmp.eq.s32.totalorder %s43, 1
      %p66 = por %p64, %p65
      %p68 = scmp.ne.s32.totalorder %s51, %s67
      %p69 = scmp.eq.s32.totalorder %s43, 0
      %p70 = por %p68, %p69
      %s71 = ssub.s32 %s37, %s44
      %p72 = scmp.eq.s32.totalorder %s71, 0
      %s74 = sadd.s32 %s73, 1
      %s75 = scalar_select %p72, %s73, %s74
      %p78 = pneg %p72
      %p79 = scmp.eq.s32.totalorder %s37, 1
      %p80 = por %p78, %p79
      %p81 = scmp.ne.s32.totalorder %s73, %s76
      %p82 = scmp.eq.s32.totalorder %s37, 0
      %p83 = por %p81, %p82
      %p84 = scmp.ne.s32.totalorder %s73, %s76
      %p85 = scmp.eq.s32.totalorder %s42, 1
      %p86 = por %p84, %p85
      %p87 = scmp.ne.s32.totalorder %s76, %s77
      %p88 = scmp.eq.s32.totalorder %s42, 0
      %p89 = por %p87, %p88
      %p90 = scmp.ne.s32.totalorder %s76, %s77
      %p91 = scmp.eq.s32.totalorder %s43, 1
      %p92 = por %p90, %p91
      %p94 = scmp.ne.s32.totalorder %s77, %s93
      %p95 = scmp.eq.s32.totalorder %s43, 0
      %p96 = por %p94, %p95
      %s97 = ssub.s32 %s37, %s44
      %p98 = scmp.eq.s32.totalorder %s97, 0
      %s100 = sadd.s32 %s99, 1
      %s101 = scalar_select %p98, %s99, %s100
      %p104 = pneg %p98
      %p105 = scmp.eq.s32.totalorder %s37, 1
      %p106 = por %p104, %p105
      %p107 = scmp.ne.s32.totalorder %s99, %s102
      %p108 = scmp.eq.s32.totalorder %s37, 0
      %p109 = por %p107, %p108
      %p110 = scmp.ne.s32.totalorder %s99, %s102
      %p111 = scmp.eq.s32.totalorder %s42, 1
      %p112 = por %p110, %p111
      %p113 = scmp.ne.s32.totalorder %s102, %s103
      %p114 = scmp.eq.s32.totalorder %s42, 0
      %p115 = por %p113, %p114
      %p116 = scmp.ne.s32.totalorder %s102, %s103
      %p117 = scmp.eq.s32.totalorder %s43, 1
      %p118 = por %p116, %p117
      %p120 = scmp.ne.s32.totalorder %s103, %s119
      %p121 = scmp.eq.s32.totalorder %s43, 0
      %p122 = por %p120, %p121
      %s123 = ssub.s32 %s37, %s44
      %p124 = scmp.eq.s32.totalorder %s123, 0
      %s126 = sadd.s32 %s125, 1
      %s127 = scalar_select %p124, %s125, %s126
      %p130 = pneg %p124
      %p131 = scmp.eq.s32.totalorder %s37, 1
      %p132 = por %p130, %p131
      %p133 = scmp.ne.s32.totalorder %s125, %s128
      %p134 = scmp.eq.s32.totalorder %s37, 0
      %p135 = por %p133, %p134
      %p136 = scmp.ne.s32.totalorder %s125, %s128
      %p137 = scmp.eq.s32.totalorder %s42, 1
      %p138 = por %p136, %p137
      %p139 = scmp.ne.s32.totalorder %s128, %s129
      %p140 = scmp.eq.s32.totalorder %s42, 0
      %p141 = por %p139, %p140
      %p142 = scmp.ne.s32.totalorder %s128, %s129
      %p143 = scmp.eq.s32.totalorder %s43, 1
      %p144 = por %p142, %p143
      %p146 = scmp.ne.s32.totalorder %s129, %s145
      %p147 = scmp.eq.s32.totalorder %s43, 0
      %p148 = por %p146, %p147
      %s150 = sadd.s32 %s149, 1
      %p153 = scmp.eq.s32.totalorder %s37, 1
      %p154 = scmp.ne.s32.totalorder %s149, %s151
      %p155 = scmp.eq.s32.totalorder %s37, 0
      %p156 = por %p154, %p155
      %p157 = scmp.ne.s32.totalorder %s149, %s151
      %p158 = scmp.eq.s32.totalorder %s42, 1
      %p159 = por %p157, %p158
      %p160 = scmp.ne.s32.totalorder %s151, %s152
      %p161 = scmp.eq.s32.totalorder %s42, 0
      %p162 = por %p160, %p161
      %p163 = scmp.ne.s32.totalorder %s151, %s152
      %p164 = scmp.eq.s32.totalorder %s43, 1
      %p165 = por %p163, %p164
      %p167 = scmp.ne.s32.totalorder %s152, %s166
      %p168 = scmp.eq.s32.totalorder %s43, 0
      %p169 = por %p167, %p168
      %s171 = sadd.s32 %s170, 1
      %p174 = scmp.eq.s32.totalorder %s37, 1
      %p175 = scmp.ne.s32.totalorder %s170, %s172
      %p176 = scmp.eq.s32.totalorder %s37, 0
      %p177 = por %p175, %p176
      %p178 = scmp.ne.s32.totalorder %s170, %s172
      %p179 = scmp.eq.s32.totalorder %s42, 1
      %p180 = por %p178, %p179
      %p181 = scmp.ne.s32.totalorder %s172, %s173
      %p182 = scmp.eq.s32.totalorder %s42, 0
      %p183 = por %p181, %p182
      %p184 = scmp.ne.s32.totalorder %s172, %s173
      %p185 = scmp.eq.s32.totalorder %s43, 1
      %p186 = por %p184, %p185
      %p188 = scmp.ne.s32.totalorder %s173, %s187
      %p189 = scmp.eq.s32.totalorder %s43, 0
      %p190 = por %p188, %p189
      %s192 = sadd.s32 %s191, 1
      %p195 = scmp.eq.s32.totalorder %s37, 1
      %p196 = scmp.ne.s32.totalorder %s191, %s193
      %p197 = scmp.eq.s32.totalorder %s37, 0
      %p198 = por %p196, %p197
      %p199 = scmp.ne.s32.totalorder %s191, %s193
      %p200 = scmp.eq.s32.totalorder %s42, 1
      %p201 = por %p199, %p200
      %p202 = scmp.ne.s32.totalorder %s193, %s194
      %p203 = scmp.eq.s32.totalorder %s42, 0
      %p204 = por %p202, %p203
      %p205 = scmp.ne.s32.totalorder %s193, %s194
      %p206 = scmp.eq.s32.totalorder %s43, 1
      %p207 = por %p205, %p206
      %p209 = scmp.ne.s32.totalorder %s194, %s208
      %p210 = scmp.eq.s32.totalorder %s43, 0
      %p211 = por %p209, %p210
      %s213 = sadd.s32 %s212, 1
      %p216 = scmp.eq.s32.totalorder %s37, 1
      %p217 = scmp.ne.s32.totalorder %s212, %s214
      %p218 = scmp.eq.s32.totalorder %s37, 0
      %p219 = por %p217, %p218
      %p220 = scmp.ne.s32.totalorder %s212, %s214
      %p221 = scmp.eq.s32.totalorder %s42, 1
      %p222 = por %p220, %p221
      %p223 = scmp.ne.s32.totalorder %s214, %s215
      %p224 = scmp.eq.s32.totalorder %s42, 0
      %p225 = por %p223, %p224
      %p226 = scmp.ne.s32.totalorder %s214, %s215
      %p227 = scmp.eq.s32.totalorder %s43, 1
      %p228 = por %p226, %p227
      %p230 = scmp.ne.s32.totalorder %s215, %s229
      %p231 = scmp.eq.s32.totalorder %s43, 0
      %p232 = por %p230, %p231
      %s234 = sadd.s32 %s233, 1
      %p237 = scmp.eq.s32.totalorder %s37, 1
      %p238 = scmp.ne.s32.totalorder %s233, %s235
      %p239 = scmp.eq.s32.totalorder %s37, 0
      %p240 = por %p238, %p239
      %p241 = scmp.ne.s32.totalorder %s233, %s235
      %p242 = scmp.eq.s32.totalorder %s42, 1
      %p243 = por %p241, %p242
      %p244 = scmp.ne.s32.totalorder %s235, %s236
      %p245 = scmp.eq.s32.totalorder %s42, 0
      %p246 = por %p244, %p245
      %p247 = scmp.ne.s32.totalorder %s235, %s236
      %p248 = scmp.eq.s32.totalorder %s43, 1
      %p249 = por %p247, %p248
      %p251 = scmp.ne.s32.totalorder %s236, %s250
      %p252 = scmp.eq.s32.totalorder %s43, 0
      %p253 = por %p251, %p252
      %s255 = sadd.s32 %s254, 1
      %p258 = scmp.eq.s32.totalorder %s37, 1
      %p259 = scmp.ne.s32.totalorder %s254, %s256
      %p260 = scmp.eq.s32.totalorder %s37, 0
      %p261 = por %p259, %p260
      %p262 = scmp.ne.s32.totalorder %s254, %s256
      %p263 = scmp.eq.s32.totalorder %s42, 1
      %p264 = por %p262, %p263
      %p265 = scmp.ne.s32.totalorder %s256, %s257
      %p266 = scmp.eq.s32.totalorder %s42, 0
      %p267 = por %p265, %p266
      %p268 = scmp.ne.s32.totalorder %s256, %s257
      %p269 = scmp.eq.s32.totalorder %s43, 1
      %p270 = por %p268, %p269
      %p272 = scmp.ne.s32.totalorder %s257, %s271
      %p273 = scmp.eq.s32.totalorder %s43, 0
      %p274 = por %p272, %p273
      %s276 = sadd.s32 %s275, 1
      %p279 = scmp.eq.s32.totalorder %s37, 1
      %p280 = scmp.ne.s32.totalorder %s275, %s277
      %p281 = scmp.eq.s32.totalorder %s37, 0
      %p282 = por %p280, %p281
      %p283 = scmp.ne.s32.totalorder %s275, %s277
      %p284 = scmp.eq.s32.totalorder %s42, 1
      %p285 = por %p283, %p284
      %p286 = scmp.ne.s32.totalorder %s277, %s278
      %p287 = scmp.eq.s32.totalorder %s42, 0
      %p288 = por %p286, %p287
      %p289 = scmp.ne.s32.totalorder %s277, %s278
      %p290 = scmp.eq.s32.totalorder %s43, 1
      %p291 = por %p289, %p290
      %p293 = scmp.ne.s32.totalorder %s278, %s292
      %p294 = scmp.eq.s32.totalorder %s43, 0
      %p295 = por %p293, %p294
      %s297 = sadd.s32 %s296, 1
      %p300 = scmp.eq.s32.totalorder %s37, 1
      %p301 = scmp.ne.s32.totalorder %s296, %s298
      %p302 = scmp.eq.s32.totalorder %s37, 0
      %p303 = por %p301, %p302
      %p304 = scmp.ne.s32.totalorder %s296, %s298
      %p305 = scmp.eq.s32.totalorder %s42, 1
      %p306 = por %p304, %p305
      %p307 = scmp.ne.s32.totalorder %s298, %s299
      %p308 = scmp.eq.s32.totalorder %s42, 0
      %p309 = por %p307, %p308
      %p310 = scmp.ne.s32.totalorder %s298, %s299
      %p311 = scmp.eq.s32.totalorder %s43, 1
      %p312 = por %p310, %p311
      %p314 = scmp.ne.s32.totalorder %s299, %s313
      %p315 = scmp.eq.s32.totalorder %s43, 0
      %p316 = por %p314, %p315
      %s318 = sadd.s32 %s317, 1
      %p321 = scmp.eq.s32.totalorder %s37, 1
      %p322 = scmp.ne.s32.totalorder %s317, %s319
      %p323 = scmp.eq.s32.totalorder %s37, 0
      %p324 = por %p322, %p323
      %p325 = scmp.ne.s32.totalorder %s317, %s319
      %p326 = scmp.eq.s32.totalorder %s42, 1
      %p327 = por %p325, %p326
      %p328 = scmp.ne.s32.totalorder %s319, %s320
      %p329 = scmp.eq.s32.totalorder %s42, 0
      %p330 = por %p328, %p329
      %p331 = scmp.ne.s32.totalorder %s319, %s320
      %p332 = scmp.eq.s32.totalorder %s43, 1
      %p333 = por %p331, %p332
      %p335 = scmp.ne.s32.totalorder %s320, %s334
      %p336 = scmp.eq.s32.totalorder %s43, 0
      %p337 = por %p335, %p336
      %s339 = sadd.s32 %s338, 1
      %p342 = scmp.eq.s32.totalorder %s37, 1
      %p343 = scmp.ne.s32.totalorder %s338, %s340
      %p344 = scmp.eq.s32.totalorder %s37, 0
      %p345 = por %p343, %p344
      %p346 = scmp.ne.s32.totalorder %s338, %s340
      %p347 = scmp.eq.s32.totalorder %s42, 1
      %p348 = por %p346, %p347
      %p349 = scmp.ne.s32.totalorder %s340, %s341
      %p350 = scmp.eq.s32.totalorder %s42, 0
      %p351 = por %p349, %p350
      %p352 = scmp.ne.s32.totalorder %s340, %s341
      %p353 = scmp.eq.s32.totalorder %s43, 1
      %p354 = por %p352, %p353
      %p356 = scmp.ne.s32.totalorder %s341, %s355
      %p357 = scmp.eq.s32.totalorder %s43, 0
      %p358 = por %p356, %p357
      %s360 = sadd.s32 %s359, 1
      %p363 = scmp.eq.s32.totalorder %s37, 1
      %p364 = scmp.ne.s32.totalorder %s359, %s361
      %p365 = scmp.eq.s32.totalorder %s37, 0
      %p366 = por %p364, %p365
      %p367 = scmp.ne.s32.totalorder %s359, %s361
      %p368 = scmp.eq.s32.totalorder %s42, 1
      %p369 = por %p367, %p368
      %p370 = scmp.ne.s32.totalorder %s361, %s362
      %p371 = scmp.eq.s32.totalorder %s42, 0
      %p372 = por %p370, %p371
      %p373 = scmp.ne.s32.totalorder %s361, %s362
      %p374 = scmp.eq.s32.totalorder %s43, 1
      %p375 = por %p373, %p374
      %p377 = scmp.ne.s32.totalorder %s362, %s376
      %p378 = scmp.eq.s32.totalorder %s43, 0
      %p379 = por %p377, %p378
      %s381 = sadd.s32 %s380, 1
      %p384 = scmp.eq.s32.totalorder %s37, 1
      %p385 = scmp.ne.s32.totalorder %s380, %s382
      %p386 = scmp.eq.s32.totalorder %s37, 0
      %p387 = por %p385, %p386
      %p388 = scmp.ne.s32.totalorder %s380, %s382
      %p389 = scmp.eq.s32.totalorder %s42, 1
      %p390 = por %p388, %p389
      %p391 = scmp.ne.s32.totalorder %s382, %s383
      %p392 = scmp.eq.s32.totalorder %s42, 0
      %p393 = por %p391, %p392
      %p394 = scmp.ne.s32.totalorder %s382, %s383
      %p395 = scmp.eq.s32.totalorder %s43, 1
      %p396 = por %p394, %p395
      %p398 = scmp.ne.s32.totalorder %s383, %s397
      %p399 = scmp.eq.s32.totalorder %s43, 0
      %p400 = por %p398, %p399
      %s402 = sadd.s32 %s401, 1
      %p405 = scmp.eq.s32.totalorder %s37, 1
      %p406 = scmp.ne.s32.totalorder %s401, %s403
      %p407 = scmp.eq.s32.totalorder %s37, 0
      %p408 = por %p406, %p407
      %p409 = scmp.ne.s32.totalorder %s401, %s403
      %p410 = scmp.eq.s32.totalorder %s42, 1
      %p411 = por %p409, %p410
      %p412 = scmp.ne.s32.totalorder %s403, %s404
      %p413 = scmp.eq.s32.totalorder %s42, 0
      %p414 = por %p412, %p413
      %p415 = scmp.ne.s32.totalorder %s403, %s404
      %p416 = scmp.eq.s32.totalorder %s43, 1
      %p417 = por %p415, %p416
      %p419 = scmp.ne.s32.totalorder %s404, %s418
      %p420 = scmp.eq.s32.totalorder %s43, 0
      %p421 = por %p419, %p420
      %s423 = sadd.s32 %s422, 1
      %p426 = scmp.eq.s32.totalorder %s37, 1
      %p427 = scmp.ne.s32.totalorder %s422, %s424
      %p428 = scmp.eq.s32.totalorder %s37, 0
      %p429 = por %p427, %p428
      %p430 = scmp.ne.s32.totalorder %s422, %s424
      %p431 = scmp.eq.s32.totalorder %s42, 1
      %p432 = por %p430, %p431
      %p433 = scmp.ne.s32.totalorder %s424, %s425
      %p434 = scmp.eq.s32.totalorder %s42, 0
      %p435 = por %p433, %p434
      %p436 = scmp.ne.s32.totalorder %s424, %s425
      %p437 = scmp.eq.s32.totalorder %s43, 1
      %p438 = por %p436, %p437
      %p440 = scmp.ne.s32.totalorder %s425, %s439
      %p441 = scmp.eq.s32.totalorder %s43, 0
      %p442 = por %p440, %p441
      %s444 = sadd.s32 %s443, 1
      %p447 = scmp.eq.s32.totalorder %s37, 1
      %p448 = scmp.ne.s32.totalorder %s443, %s445
      %p449 = scmp.eq.s32.totalorder %s37, 0
      %p450 = por %p448, %p449
      %p451 = scmp.ne.s32.totalorder %s443, %s445
      %p452 = scmp.eq.s32.totalorder %s42, 1
      %p453 = por %p451, %p452
      %p454 = scmp.ne.s32.totalorder %s445, %s446
      %p455 = scmp.eq.s32.totalorder %s42, 0
      %p456 = por %p454, %p455
      %p457 = scmp.ne.s32.totalorder %s445, %s446
      %p458 = scmp.eq.s32.totalorder %s43, 1
      %p459 = por %p457, %p458
      %p461 = scmp.ne.s32.totalorder %s446, %s460
      %p462 = scmp.eq.s32.totalorder %s43, 0
      %p463 = por %p461, %p462
      %s465 = sadd.s32 %s464, 1
      %p468 = scmp.eq.s32.totalorder %s37, 1
      %p469 = scmp.ne.s32.totalorder %s464, %s466
      %p470 = scmp.eq.s32.totalorder %s37, 0
      %p471 = por %p469, %p470
      %p472 = scmp.ne.s32.totalorder %s464, %s466
      %p473 = scmp.eq.s32.totalorder %s42, 1
      %p474 = por %p472, %p473
      %p475 = scmp.ne.s32.totalorder %s466, %s467
      %p476 = scmp.eq.s32.totalorder %s42, 0
      %p477 = por %p475, %p476
      %p478 = scmp.ne.s32.totalorder %s466, %s467
      %p479 = scmp.eq.s32.totalorder %s43, 1
      %p480 = por %p478, %p479
      %p482 = scmp.ne.s32.totalorder %s467, %s481
      %p483 = scmp.eq.s32.totalorder %s43, 0
      %p484 = por %p482, %p483
      %s486 = sadd.s32 %s485, 1
      %p489 = scmp.eq.s32.totalorder %s37, 1
      %p490 = scmp.ne.s32.totalorder %s485, %s487
      %p491 = scmp.eq.s32.totalorder %s37, 0
      %p492 = por %p490, %p491
      %p493 = scmp.ne.s32.totalorder %s485, %s487
      %p494 = scmp.eq.s32.totalorder %s42, 1
      %p495 = por %p493, %p494
      %p496 = scmp.ne.s32.totalorder %s487, %s488
      %p497 = scmp.eq.s32.totalorder %s42, 0
      %p498 = por %p496, %p497
      %p499 = scmp.ne.s32.totalorder %s487, %s488
      %p500 = scmp.eq.s32.totalorder %s43, 1
      %p501 = por %p499, %p500
      %p503 = scmp.ne.s32.totalorder %s488, %s502
      %p504 = scmp.eq.s32.totalorder %s43, 0
      %p505 = por %p503, %p504
      %s507 = sadd.s32 %s506, 1
      %p510 = scmp.eq.s32.totalorder %s37, 1
      %p511 = scmp.ne.s32.totalorder %s506, %s508
      %p512 = scmp.eq.s32.totalorder %s37, 0
      %p513 = por %p511, %p512
      %p514 = scmp.ne.s32.totalorder %s506, %s508
      %p515 = scmp.eq.s32.totalorder %s42, 1
      %p516 = por %p514, %p515
      %p517 = scmp.ne.s32.totalorder %s508, %s509
      %p518 = scmp.eq.s32.totalorder %s42, 0
      %p519 = por %p517, %p518
      %p520 = scmp.ne.s32.totalorder %s508, %s509
      %p521 = scmp.eq.s32.totalorder %s43, 1
      %p522 = por %p520, %p521
      %p524 = scmp.ne.s32.totalorder %s509, %s523
      %p525 = scmp.eq.s32.totalorder %s43, 0
      %p526 = por %p524, %p525
      %s528 = sadd.s32 %s527, 1
      %p531 = scmp.eq.s32.totalorder %s37, 1
      %p532 = scmp.ne.s32.totalorder %s527, %s529
      %p533 = scmp.eq.s32.totalorder %s37, 0
      %p534 = por %p532, %p533
      %p535 = scmp.ne.s32.totalorder %s527, %s529
      %p536 = scmp.eq.s32.totalorder %s42, 1
      %p537 = por %p535, %p536
      %p538 = scmp.ne.s32.totalorder %s529, %s530
      %p539 = scmp.eq.s32.totalorder %s42, 0
      %p540 = por %p538, %p539
      %p541 = scmp.ne.s32.totalorder %s529, %s530
      %p542 = scmp.eq.s32.totalorder %s43, 1
      %p543 = por %p541, %p542
      %p545 = scmp.ne.s32.totalorder %s530, %s544
      %p546 = scmp.eq.s32.totalorder %s43, 0
      %p547 = por %p545, %p546
      %s549 = sadd.s32 %s548, 1
      %p552 = scmp.eq.s32.totalorder %s37, 1
      %p553 = scmp.ne.s32.totalorder %s548, %s550
      %p554 = scmp.eq.s32.totalorder %s37, 0
      %p555 = por %p553, %p554
      %p556 = scmp.ne.s32.totalorder %s548, %s550
      %p557 = scmp.eq.s32.totalorder %s42, 1
      %p558 = por %p556, %p557
      %p559 = scmp.ne.s32.totalorder %s550, %s551
      %p560 = scmp.eq.s32.totalorder %s42, 0
      %p561 = por %p559, %p560
      %p562 = scmp.ne.s32.totalorder %s550, %s551
      %p563 = scmp.eq.s32.totalorder %s43, 1
      %p564 = por %p562, %p563
      %p566 = scmp.ne.s32.totalorder %s551, %s565
      %p567 = scmp.eq.s32.totalorder %s43, 0
      %p568 = por %p566, %p567
      %s569 = ssub.s32 %s37, %s44
      %p570 = scmp.eq.s32.totalorder %s569, 0
      %s572 = sadd.s32 %s571, 1
      %s573 = scalar_select %p570, %s571, %s572
      %p576 = pneg %p570
      %p577 = scmp.eq.s32.totalorder %s37, 1
      %p578 = por %p576, %p577
      %p579 = scmp.ne.s32.totalorder %s571, %s574
      %p580 = scmp.eq.s32.totalorder %s37, 0
      %p581 = por %p579, %p580
      %p582 = scmp.ne.s32.totalorder %s571, %s574
      %p583 = scmp.eq.s32.totalorder %s42, 1
      %p584 = por %p582, %p583
      %p585 = scmp.ne.s32.totalorder %s574, %s575
      %p586 = scmp.eq.s32.totalorder %s42, 0
      %p587 = por %p585, %p586
      %p588 = scmp.ne.s32.totalorder %s574, %s575
      %p589 = scmp.eq.s32.totalorder %s43, 1
      %p590 = por %p588, %p589
      %p592 = scmp.ne.s32.totalorder %s575, %s591
      %p593 = scmp.eq.s32.totalorder %s43, 0
      %p594 = por %p592, %p593
      %p595 = scmp.le.s32.totalorder 1, %s37
      %p596 = scmp.lt.s32.totalorder %s37, 3
      %p597 = pnand %p595, %p596
      %p598 = pneg %p597
      // Predicated region
      $region9: #{transformer_forward.8} parent=5 // pred_check
        _
      $region10: #{transformer_forward.8} parent=5 // pred_check_branch
        %600 = sbr.rel (%p597) target = $region12
      $region11: #{transformer_forward.8} parent=5 // pred_region
        %s601 = ssub.s32 %s37, 1
        // Predicated region
        $region13: #{transformer_forward.8} parent=11 // pred_check
          %p602 = pneg %p162
        $region14: #{transformer_forward.8} parent=11 // pred_check_branch
          %604 = sbr.rel (%p602) target = $region16
        $region15: #{transformer_forward.8} parent=11 // pred_region
          _
        $region16: #{transformer_forward.8} parent=11 // pred_fallthru
          _
        // Predicated region
        $region17: #{transformer_forward.8} parent=11 // pred_check
          %p605 = pneg %p183
        $region18: #{transformer_forward.8} parent=11 // pred_check_branch
          %607 = sbr.rel (%p605) target = $region20
        $region19: #{transformer_forward.8} parent=11 // pred_region
          %609 = vsyncadd [#allocation3], 0
          %s611 = sshll.u32 %s5, 4
          %s612 = int_to_ptr.hbm [resolvable:$true] %s611
          %s613 = sshll.u32 [#allocation2], 4
          %s614 = int_to_ptr.vmem [resolvable:$true] %s613
          %616 = dma.hbm_to_vmem [thread:$0]  %s612, 16, %s614, [#allocation3]
        $region20: #{transformer_forward.8} parent=11 // pred_fallthru
          _
        // Predicated region
        $region21: #{transformer_forward.8} parent=11 // pred_check
          %p617 = pneg %p204
        $region22: #{transformer_forward.8} parent=11 // pred_check_branch
          %619 = sbr.rel (%p617) target = $region24
        $region23: #{transformer_forward.8} parent=11 // pred_region
          _
        $region24: #{transformer_forward.8} parent=11 // pred_fallthru
          _
        // Predicated region
        $region25: #{transformer_forward.8} parent=11 // pred_check
          %p620 = pneg %p225
        $region26: #{transformer_forward.8} parent=11 // pred_check_branch
          %622 = sbr.rel (%p620) target = $region28
        $region27: #{transformer_forward.8} parent=11 // pred_region
          %624 = vsyncadd [#allocation5], 0
          %s626 = sshll.u32 %s7, 4
          %s627 = int_to_ptr.hbm [resolvable:$true] %s626
          %s628 = sshll.u32 [#allocation4], 4
          %s629 = int_to_ptr.vmem [resolvable:$true] %s628
          %631 = dma.hbm_to_vmem [thread:$0]  %s627, 16, %s629, [#allocation5]
        $region28: #{transformer_forward.8} parent=11 // pred_fallthru
          _
        // Predicated region
        $region29: #{transformer_forward.8} parent=11 // pred_check
          %p632 = pneg %p246
        $region30: #{transformer_forward.8} parent=11 // pred_check_branch
          %634 = sbr.rel (%p632) target = $region32
        $region31: #{transformer_forward.8} parent=11 // pred_region
          %636 = vsyncadd [#allocation5], 0
          %s638 = sshll.u32 %s8, 4
          %s639 = int_to_ptr.hbm [resolvable:$true] %s638
          %s640 = sshll.u32 [#allocation6], 4
          %s641 = int_to_ptr.vmem [resolvable:$true] %s640
          %643 = dma.hbm_to_vmem [thread:$0]  %s639, 16, %s641, [#allocation5]
        $region32: #{transformer_forward.8} parent=11 // pred_fallthru
          _
        // Predicated region
        $region33: #{transformer_forward.8} parent=11 // pred_check
          %p644 = pneg %p267
        $region34: #{transformer_forward.8} parent=11 // pred_check_branch
          %646 = sbr.rel (%p644) target = $region36
        $region35: #{transformer_forward.8} parent=11 // pred_region
          %648 = vsyncadd [#allocation8], 0
          %s650 = sshll.u32 %s9, 4
          %s651 = int_to_ptr.hbm [resolvable:$true] %s650
          %s652 = sshll.u32 [#allocation7], 4
          %s653 = int_to_ptr.vmem [resolvable:$true] %s652
          %655 = dma.hbm_to_vmem [thread:$0]  %s651, 16, %s653, [#allocation8]
        $region36: #{transformer_forward.8} parent=11 // pred_fallthru
          _
        // Predicated region
        $region37: #{transformer_forward.8} parent=11 // pred_check
          %p656 = pneg %p288
        $region38: #{transformer_forward.8} parent=11 // pred_check_branch
          %658 = sbr.rel (%p656) target = $region40
        $region39: #{transformer_forward.8} parent=11 // pred_region
          _
        $region40: #{transformer_forward.8} parent=11 // pred_fallthru
          _
        // Predicated region
        $region41: #{transformer_forward.8} parent=11 // pred_check
          %p659 = pneg %p309
        $region42: #{transformer_forward.8} parent=11 // pred_check_branch
          %661 = sbr.rel (%p659) target = $region44
        $region43: #{transformer_forward.8} parent=11 // pred_region
          %663 = vsyncadd [#allocation8], 0
          %s665 = sshll.u32 %s11, 4
          %s666 = int_to_ptr.hbm [resolvable:$true] %s665
          %s667 = sshll.u32 [#allocation9], 4
          %s668 = int_to_ptr.vmem [resolvable:$true] %s667
          %670 = dma.hbm_to_vmem [thread:$0]  %s666, 16, %s668, [#allocation8]
        $region44: #{transformer_forward.8} parent=11 // pred_fallthru
          _
        // Predicated region
        $region45: #{transformer_forward.8} parent=11 // pred_check
          %p671 = pneg %p330
        $region46: #{transformer_forward.8} parent=11 // pred_check_branch
          %673 = sbr.rel (%p671) target = $region48
        $region47: #{transformer_forward.8} parent=11 // pred_region
          _
        $region48: #{transformer_forward.8} parent=11 // pred_fallthru
          _
        // Predicated region
        $region49: #{transformer_forward.8} parent=11 // pred_check
          %p674 = pneg %p351
        $region50: #{transformer_forward.8} parent=11 // pred_check_branch
          %676 = sbr.rel (%p674) target = $region52
        $region51: #{transformer_forward.8} parent=11 // pred_region
          %678 = vsyncadd [#allocation11], 0
          %s680 = sshll.u32 %s13, 4
          %s681 = int_to_ptr.hbm [resolvable:$true] %s680
          %s682 = sshll.u32 [#allocation10], 4
          %s683 = int_to_ptr.vmem [resolvable:$true] %s682
          %685 = dma.hbm_to_vmem [thread:$0]  %s681, 16, %s683, [#allocation11]
        $region52: #{transformer_forward.8} parent=11 // pred_fallthru
          _
        // Predicated region
        $region53: #{transformer_forward.8} parent=11 // pred_check
          %p686 = pneg %p372
        $region54: #{transformer_forward.8} parent=11 // pred_check_branch
          %688 = sbr.rel (%p686) target = $region56
        $region55: #{transformer_forward.8} parent=11 // pred_region
          _
        $region56: #{transformer_forward.8} parent=11 // pred_fallthru
          _
        // Predicated region
        $region57: #{transformer_forward.8} parent=11 // pred_check
          %p689 = pneg %p393
        $region58: #{transformer_forward.8} parent=11 // pred_check_branch
          %691 = sbr.rel (%p689) target = $region60
        $region59: #{transformer_forward.8} parent=11 // pred_region
          %693 = vsyncadd [#allocation11], 0
          %s695 = sshll.u32 %s15, 4
          %s696 = int_to_ptr.hbm [resolvable:$true] %s695
          %s697 = sshll.u32 [#allocation12], 4
          %s698 = int_to_ptr.vmem [resolvable:$true] %s697
          %700 = dma.hbm_to_vmem [thread:$0]  %s696, 16, %s698, [#allocation11]
        $region60: #{transformer_forward.8} parent=11 // pred_fallthru
          _
        // Predicated region
        $region61: #{transformer_forward.8} parent=11 // pred_check
          %p701 = pneg %p414
        $region62: #{transformer_forward.8} parent=11 // pred_check_branch
          %703 = sbr.rel (%p701) target = $region64
        $region63: #{transformer_forward.8} parent=11 // pred_region
          %705 = vsyncadd [#allocation14], 0
          %s707 = sshll.u32 %s16, 4
          %s708 = int_to_ptr.hbm [resolvable:$true] %s707
          %s709 = sshll.u32 [#allocation13], 4
          %s710 = int_to_ptr.vmem [resolvable:$true] %s709
          %712 = dma.hbm_to_vmem [thread:$0]  %s708, 16, %s710, [#allocation14]
        $region64: #{transformer_forward.8} parent=11 // pred_fallthru
          _
        // Predicated region
        $region65: #{transformer_forward.8} parent=11 // pred_check
          %p713 = pneg %p435
        $region66: #{transformer_forward.8} parent=11 // pred_check_branch
          %715 = sbr.rel (%p713) target = $region68
        $region67: #{transformer_forward.8} parent=11 // pred_region
          %717 = vsyncadd [#allocation14], 0
          %s719 = sshll.u32 %s17, 4
          %s720 = int_to_ptr.hbm [resolvable:$true] %s719
          %s721 = sshll.u32 [#allocation15], 4
          %s722 = int_to_ptr.vmem [resolvable:$true] %s721
          %724 = dma.hbm_to_vmem [thread:$0]  %s720, 16, %s722, [#allocation14]
        $region68: #{transformer_forward.8} parent=11 // pred_fallthru
          _
        // Predicated region
        $region69: #{transformer_forward.8} parent=11 // pred_check
          %p725 = pneg %p456
        $region70: #{transformer_forward.8} parent=11 // pred_check_branch
          %727 = sbr.rel (%p725) target = $region72
        $region71: #{transformer_forward.8} parent=11 // pred_region
          _
        $region72: #{transformer_forward.8} parent=11 // pred_fallthru
          _
        // Predicated region
        $region73: #{transformer_forward.8} parent=11 // pred_check
          %p728 = pneg %p477
        $region74: #{transformer_forward.8} parent=11 // pred_check_branch
          %730 = sbr.rel (%p728) target = $region76
        $region75: #{transformer_forward.8} parent=11 // pred_region
          %732 = vsyncadd [#allocation17], 0
          %s734 = sshll.u32 %s19, 4
          %s735 = int_to_ptr.hbm [resolvable:$true] %s734
          %s736 = sshll.u32 [#allocation16], 4
          %s737 = int_to_ptr.vmem [resolvable:$true] %s736
          %739 = dma.hbm_to_vmem [thread:$0]  %s735, 16, %s737, [#allocation17]
        $region76: #{transformer_forward.8} parent=11 // pred_fallthru
          _
        // Predicated region
        $region77: #{transformer_forward.8} parent=11 // pred_check
          %p740 = pneg %p498
        $region78: #{transformer_forward.8} parent=11 // pred_check_branch
          %742 = sbr.rel (%p740) target = $region80
        $region79: #{transformer_forward.8} parent=11 // pred_region
          _
        $region80: #{transformer_forward.8} parent=11 // pred_fallthru
          _
        // Predicated region
        $region81: #{transformer_forward.8} parent=11 // pred_check
          %p743 = pneg %p519
        $region82: #{transformer_forward.8} parent=11 // pred_check_branch
          %745 = sbr.rel (%p743) target = $region84
        $region83: #{transformer_forward.8} parent=11 // pred_region
          %747 = vsyncadd [#allocation17], 0
          %s749 = sshll.u32 %s21, 4
          %s750 = int_to_ptr.hbm [resolvable:$true] %s749
          %s751 = sshll.u32 [#allocation18], 4
          %s752 = int_to_ptr.vmem [resolvable:$true] %s751
          %754 = dma.hbm_to_vmem [thread:$0]  %s750, 16, %s752, [#allocation17]
        $region84: #{transformer_forward.8} parent=11 // pred_fallthru
          _
        // Predicated region
        $region85: #{transformer_forward.8} parent=11 // pred_check
          %p755 = pneg %p540
        $region86: #{transformer_forward.8} parent=11 // pred_check_branch
          %757 = sbr.rel (%p755) target = $region88
        $region87: #{transformer_forward.8} parent=11 // pred_region
          %759 = vsyncadd [#allocation20], 0
          %s761 = sshll.u32 %s22, 4
          %s762 = int_to_ptr.hbm [resolvable:$true] %s761
          %s763 = sshll.u32 [#allocation19], 4
          %s764 = int_to_ptr.vmem [resolvable:$true] %s763
          %766 = dma.hbm_to_vmem [thread:$0]  %s762, 16, %s764, [#allocation20]
        $region88: #{transformer_forward.8} parent=11 // pred_fallthru
          _
        // Predicated region
        $region89: #{transformer_forward.8} parent=11 // pred_check
          %p767 = pneg %p561
        $region90: #{transformer_forward.8} parent=11 // pred_check_branch
          %769 = sbr.rel (%p767) target = $region92
        $region91: #{transformer_forward.8} parent=11 // pred_region
          %771 = vsyncadd [#allocation20], 0
          %s773 = sshll.u32 %s23, 4
          %s774 = int_to_ptr.hbm [resolvable:$true] %s773
          %s775 = sshll.u32 [#allocation21], 4
          %s776 = int_to_ptr.vmem [resolvable:$true] %s775
          %778 = dma.hbm_to_vmem [thread:$0]  %s774, 16, %s776, [#allocation20]
        $region92: #{transformer_forward.8} parent=11 // pred_fallthru
          _
      $region12: #{transformer_forward.8} parent=5 // pred_fallthru
        _
      %p779 = scmp.lt.s32.totalorder %s37, 2
      // Predicated region
      $region93: #{transformer_forward.8} parent=5 // pred_check
        %p780 = pneg %p779
      $region94: #{transformer_forward.8} parent=5 // pred_check_branch
        %782 = sbr.rel (%p780) target = $region96
      $region95: #{transformer_forward.8} parent=5 // pred_region
        // Predicated region
        $region97: #{transformer_forward.8} parent=95 // pred_check
          %p783 = pneg %p57
        $region98: #{transformer_forward.8} parent=95 // pred_check_branch
          %785 = sbr.rel (%p783) target = $region100
        $region99: #{transformer_forward.8} parent=95 // pred_region
          %p786 = scmp.lt.s32.totalorder %s37, 1
          %s787 = scalar_select %p786, %s37, 1
          %s788 = smul.addr %s787, 8
          %s789 = scalar_lea.vmem %s0, %s788
        $region100: #{transformer_forward.8} parent=95 // pred_fallthru
          _
        // Predicated region
        $region101: #{transformer_forward.8} parent=95 // pred_check
          %p790 = pneg %p83
        $region102: #{transformer_forward.8} parent=95 // pred_check_branch
          %792 = sbr.rel (%p790) target = $region104
        $region103: #{transformer_forward.8} parent=95 // pred_region
          %p793 = scmp.lt.s32.totalorder %s37, 1
          %s794 = scalar_select %p793, %s37, 1
          %s795 = smul.addr %s794, 8
          %s796 = scalar_lea.vmem %s1, %s795
        $region104: #{transformer_forward.8} parent=95 // pred_fallthru
          _
        // Predicated region
        $region105: #{transformer_forward.8} parent=95 // pred_check
          %p797 = pneg %p109
        $region106: #{transformer_forward.8} parent=95 // pred_check_branch
          %799 = sbr.rel (%p797) target = $region108
        $region107: #{transformer_forward.8} parent=95 // pred_region
          %p800 = scmp.lt.s32.totalorder %s37, 1
          %s801 = scalar_select %p800, %s37, 1
          %s802 = smul.addr %s801, 8
          %s803 = scalar_lea.vmem %s2, %s802
        $region108: #{transformer_forward.8} parent=95 // pred_fallthru
          _
        // Predicated region
        $region109: #{transformer_forward.8} parent=95 // pred_check
          %p804 = pneg %p135
        $region110: #{transformer_forward.8} parent=95 // pred_check_branch
          %806 = sbr.rel (%p804) target = $region112
        $region111: #{transformer_forward.8} parent=95 // pred_region
          %p807 = scmp.lt.s32.totalorder %s37, 1
          %s808 = scalar_select %p807, %s37, 1
          %s809 = scalar_lea.vmem %s3, %s808
        $region112: #{transformer_forward.8} parent=95 // pred_fallthru
          _
      $region96: #{transformer_forward.8} parent=5 // pred_fallthru
        _
      %p810 = scmp.le.s32.totalorder 1, %s37
      %p811 = scmp.lt.s32.totalorder %s37, 3
      %p812 = pnand %p810, %p811
      %p813 = pneg %p812
      // Predicated region
      $region113: #{transformer_forward.8} parent=5 // pred_check
        _
      $region114: #{transformer_forward.8} parent=5 // pred_check_branch
        %815 = sbr.rel (%p812) target = $region116
      $region115: #{transformer_forward.8} parent=5 // pred_region
        %s816 = ssub.s32 %s37, 1
        // Predicated region
        $region117: #{transformer_forward.8} parent=115 // pred_check
          %p817 = pneg %p183
        $region118: #{transformer_forward.8} parent=115 // pred_check_branch
          %819 = sbr.rel (%p817) target = $region120
        $region119: #{transformer_forward.8} parent=115 // pred_region
          %821 = dma.done [#allocation3], 16
        $region120: #{transformer_forward.8} parent=115 // pred_fallthru
          _
        // Predicated region
        $region121: #{transformer_forward.8} parent=115 // pred_check
          %p822 = pneg %p225
        $region122: #{transformer_forward.8} parent=115 // pred_check_branch
          %824 = sbr.rel (%p822) target = $region124
        $region123: #{transformer_forward.8} parent=115 // pred_region
          %826 = dma.done [#allocation5], 16
        $region124: #{transformer_forward.8} parent=115 // pred_fallthru
          _
        // Predicated region
        $region125: #{transformer_forward.8} parent=115 // pred_check
          %p827 = pneg %p246
        $region126: #{transformer_forward.8} parent=115 // pred_check_branch
          %829 = sbr.rel (%p827) target = $region128
        $region127: #{transformer_forward.8} parent=115 // pred_region
          %831 = dma.done [#allocation5], 16
        $region128: #{transformer_forward.8} parent=115 // pred_fallthru
          _
        // Predicated region
        $region129: #{transformer_forward.8} parent=115 // pred_check
          %p832 = pneg %p267
        $region130: #{transformer_forward.8} parent=115 // pred_check_branch
          %834 = sbr.rel (%p832) target = $region132
        $region131: #{transformer_forward.8} parent=115 // pred_region
          %836 = dma.done [#allocation8], 16
        $region132: #{transformer_forward.8} parent=115 // pred_fallthru
          _
        // Predicated region
        $region133: #{transformer_forward.8} parent=115 // pred_check
          %p837 = pneg %p309
        $region134: #{transformer_forward.8} parent=115 // pred_check_branch
          %839 = sbr.rel (%p837) target = $region136
        $region135: #{transformer_forward.8} parent=115 // pred_region
          %841 = dma.done [#allocation8], 16
        $region136: #{transformer_forward.8} parent=115 // pred_fallthru
          _
        // Predicated region
        $region137: #{transformer_forward.8} parent=115 // pred_check
          %p842 = pneg %p351
        $region138: #{transformer_forward.8} parent=115 // pred_check_branch
          %844 = sbr.rel (%p842) target = $region140
        $region139: #{transformer_forward.8} parent=115 // pred_region
          %846 = dma.done [#allocation11], 16
        $region140: #{transformer_forward.8} parent=115 // pred_fallthru
          _
        // Predicated region
        $region141: #{transformer_forward.8} parent=115 // pred_check
          %p847 = pneg %p393
        $region142: #{transformer_forward.8} parent=115 // pred_check_branch
          %849 = sbr.rel (%p847) target = $region144
        $region143: #{transformer_forward.8} parent=115 // pred_region
          %851 = dma.done [#allocation11], 16
        $region144: #{transformer_forward.8} parent=115 // pred_fallthru
          _
        // Predicated region
        $region145: #{transformer_forward.8} parent=115 // pred_check
          %p852 = pneg %p414
        $region146: #{transformer_forward.8} parent=115 // pred_check_branch
          %854 = sbr.rel (%p852) target = $region148
        $region147: #{transformer_forward.8} parent=115 // pred_region
          %856 = dma.done [#allocation14], 16
        $region148: #{transformer_forward.8} parent=115 // pred_fallthru
          _
        // Predicated region
        $region149: #{transformer_forward.8} parent=115 // pred_check
          %p857 = pneg %p435
        $region150: #{transformer_forward.8} parent=115 // pred_check_branch
          %859 = sbr.rel (%p857) target = $region152
        $region151: #{transformer_forward.8} parent=115 // pred_region
          %861 = dma.done [#allocation14], 16
        $region152: #{transformer_forward.8} parent=115 // pred_fallthru
          _
        // Predicated region
        $region153: #{transformer_forward.8} parent=115 // pred_check
          %p862 = pneg %p477
        $region154: #{transformer_forward.8} parent=115 // pred_check_branch
          %864 = sbr.rel (%p862) target = $region156
        $region155: #{transformer_forward.8} parent=115 // pred_region
          %866 = dma.done [#allocation17], 16
        $region156: #{transformer_forward.8} parent=115 // pred_fallthru
          _
        // Predicated region
        $region157: #{transformer_forward.8} parent=115 // pred_check
          %p867 = pneg %p519
        $region158: #{transformer_forward.8} parent=115 // pred_check_branch
          %869 = sbr.rel (%p867) target = $region160
        $region159: #{transformer_forward.8} parent=115 // pred_region
          %871 = dma.done [#allocation17], 16
        $region160: #{transformer_forward.8} parent=115 // pred_fallthru
          _
        // Predicated region
        $region161: #{transformer_forward.8} parent=115 // pred_check
          %p872 = pneg %p540
        $region162: #{transformer_forward.8} parent=115 // pred_check_branch
          %874 = sbr.rel (%p872) target = $region164
        $region163: #{transformer_forward.8} parent=115 // pred_region
          %876 = dma.done [#allocation20], 16
        $region164: #{transformer_forward.8} parent=115 // pred_fallthru
          _
        // Predicated region
        $region165: #{transformer_forward.8} parent=115 // pred_check
          %p877 = pneg %p561
        $region166: #{transformer_forward.8} parent=115 // pred_check_branch
          %879 = sbr.rel (%p877) target = $region168
        $region167: #{transformer_forward.8} parent=115 // pred_region
          %881 = dma.done [#allocation20], 16
        $region168: #{transformer_forward.8} parent=115 // pred_fallthru
          _
        %p882 = scmp.lt.s32.totalorder %s42, 1
        %s883 = scalar_select %p882, %s42, 1
        %s884 = smul.addr %s883, 8
        %s885 = scalar_lea.vmem %s0, %s884
        %p886 = pneg %p63
        %p887 = pneg %p60
        %p888 = scmp.lt.s32.totalorder %s42, 1
        %s889 = scalar_select %p888, %s42, 1
        %s890 = smul.addr %s889, 8
        %s891 = scalar_lea.vmem %s1, %s890
        %p892 = pneg %p89
        %p893 = pneg %p86
        %p894 = scmp.lt.s32.totalorder %s42, 1
        %s895 = scalar_select %p894, %s42, 1
        %s896 = smul.addr %s895, 8
        %s897 = scalar_lea.vmem %s2, %s896
        %p898 = pneg %p115
        %p899 = pneg %p112
        %p900 = scmp.lt.s32.totalorder %s42, 1
        %s901 = scalar_select %p900, %s42, 1
        %s902 = scalar_lea.vmem %s3, %s901
        %p903 = pneg %p141
        %p904 = pneg %p138
        %p905 = pneg %p162
        %p906 = pneg %p159
        %p907 = pneg %p183
        %p908 = pneg %p180
        %p909 = pneg %p204
        %p910 = pneg %p201
        %p911 = pneg %p225
        %p912 = pneg %p222
        %p913 = pneg %p246
        %p914 = pneg %p243
        %p915 = pneg %p267
        %p916 = pneg %p264
        %p917 = pneg %p288
        %p918 = pneg %p285
        %p919 = pneg %p309
        %p920 = pneg %p306
        %p921 = pneg %p330
        %p922 = pneg %p327
        %p923 = pneg %p351
        %p924 = pneg %p348
        %p925 = pneg %p372
        %p926 = pneg %p369
        %p927 = pneg %p393
        %p928 = pneg %p390
        %p929 = pneg %p414
        %p930 = pneg %p411
        %p931 = pneg %p435
        %p932 = pneg %p432
        %p933 = pneg %p456
        %p934 = pneg %p453
        %p935 = pneg %p477
        %p936 = pneg %p474
        %p937 = pneg %p498
        %p938 = pneg %p495
        %p939 = pneg %p519
        %p940 = pneg %p516
        %p941 = pneg %p540
        %p942 = pneg %p537
        %p943 = pneg %p561
        %p944 = pneg %p558
        %p945 = pneg %p587
        %p946 = pneg %p584
        %p947 = scmp.lt.s32.totalorder %s42, 1
        %s948 = scalar_select %p947, %s42, 1
        %s949 = smul.addr %s948, 8
        %s950 = scalar_lea.vmem %s24, %s949
        %p951 = scmp.lt.s32.totalorder %s42, 1
        %s952 = scalar_select %p951, %s42, 1
        %s953 = smul.addr %s952, 8
        %s954 = scalar_lea.vmem %s0, %s953
        %p955 = scmp.lt.s32.totalorder %s42, 1
        %s956 = scalar_select %p955, %s42, 1
        %s957 = smul.addr %s956, 8
        %s958 = scalar_lea.vmem %s1, %s957
        %p959 = scmp.lt.s32.totalorder %s42, 1
        %s960 = scalar_select %p959, %s42, 1
        %s961 = smul.addr %s960, 8
        %s962 = scalar_lea.vmem %s2, %s961
        %p963 = scmp.lt.s32.totalorder %s42, 1
        %s964 = scalar_select %p963, %s42, 1
        %s965 = scalar_lea.vmem %s3, %s964
        %p966 = scmp.lt.s32.totalorder %s42, 1
        %s967 = scalar_select %p966, %s42, 1
        %s968 = smul.addr %s967, 8
        %s969 = scalar_lea.vmem %s24, %s968
        %v970 = vld [vmem:[%s954] sm:$0xff]
        %v971 = vld [vmem:[%s958] sm:$0xff]
        %v972 = vld [vmem:[%s962] sm:$0xff]
        %v973 = vld [vmem:[%s965] sm:$0x1]
        %v974 = vld [vmem:[%s4] sm:$0xff]
        %v975 = vld [vmem:[%s4 + $0x8] sm:$0xff]
        %v976 = vld [vmem:[%s4 + $0x10] sm:$0xff]
        %v977 = vld [vmem:[%s4 + $0x18] sm:$0xff]
        %v978 = vld [vmem:[#allocation2] sm:$0x1]
        %v980 = vperm.slane %v978, 0
        %vm982 = vcmask 261120
        %v984 = vsel %vm982, %v970, 0
        %986 = vmatpush.msra.mxu0 0.0
        %987 = vmatpush.msra.mxu0 0.0
        %988 = vmatpush.msra.mxu0 0.0
        %989 = vmatpush.msra.mxu0 0.0
        %990 = vmatpush.msra.mxu0 0.0
        %991 = vmatpush.msra.mxu0 0.0
        %992 = vmatpush.msra.mxu0 0.0
        %993 = vmatpush.msra.mxu0 0.0
        %994 = vmatpush.msra.mxu0 0.0
        %995 = vmatpush.msra.mxu0 0.0
        %996 = vmatpush.msra.mxu0 0.0
        %997 = vmatpush.msra.mxu0 0.0
        %998 = vmatpush.msra.mxu0 %v977
        %999 = vmatpush.msra.mxu0 %v976
        %1000 = vmatpush.msra.mxu0 %v975
        %1001 = vmatpush.msra.mxu0 %v974
        %1002 = vmatmul.f32.gmra.mxu0 %v984
        %v1003 = vpop.f32.mrf.mxu0
        %v1004 = vadd.f32 %v980, %v1003
        %1005 = vdwg.mxu0
        %v1006 = vld [vmem:[#allocation4] sm:$0x1]
        %1008 = vrot.lane.b32.xlu0 %v1004, 96
        %v1009 = vpop.permute.xlu0 %1008
        %vm1010 = vcmask 64512
        %v1011 = vsel %vm1010, %v1004, 0
        %v1013 = vsel %vm1010, %v1009, 0
        %1015 = vmatpush.xpose.msra.mxu0 0.0
        %1016 = vmatpush.xpose.msra.mxu0 0.0
        %1017 = vmatpush.xpose.msra.mxu0 0.0
        %1018 = vmatpush.xpose.msra.mxu0 0.0
        %1019 = vmatpush.xpose.msra.mxu0 0.0
        %1020 = vmatpush.xpose.msra.mxu0 0.0
        %1021 = vmatpush.xpose.msra.mxu0 0.0
        %1022 = vmatpush.xpose.msra.mxu0 0.0
        %1023 = vmatpush.xpose.msra.mxu0 0.0
        %1024 = vmatpush.xpose.msra.mxu0 0.0
        %1025 = vmatpush.xpose.msra.mxu0 0.0
        %1026 = vmatpush.xpose.msra.mxu0 0.0
        %1027 = vmatpush.xpose.msra.mxu0 0.0
        %1028 = vmatpush.xpose.msra.mxu0 0.0
        %1029 = vmatpush.xpose.msra.mxu0 0.0
        %1030 = vmatpush.xpose.msra.mxu0 %v1013
        %1031 = vmatmul.f32.gmra.mxu0 %v1011
        %v1032 = vpop.f32.mrf.mxu0
        %v1033 = vadd.f32 0.0, %v1032
        %1034 = vdwg.mxu0
        %vm1035 = vcmp.ne.f32.partialorder %v972, 0.0
        %v1036 = vsel %vm1035, %v1033, -1e+09
        %v1037 = vsel %vm1010, %v1036, -inf
        %1038 = vmax.xlane.f32.xlu0 %v1037
        %v1039 = vpop.xlane.xlu0 %1038
        %v1040 = vsub.f32 %v1036, %v1039
        %v1041 = vmul.f32 %v1040, 1.442695
        %v1042 = vpow.pop %v1041
        %v1043 = vsel %vm1010, %v1042, 0.0
        %1044 = vadd.xlane.f32.xlu0 %v1043
        %v1045 = vpop.xlane.xlu0 %1044
        %v1046 = vrcp.pop %v1045
        %v1047 = vmul.f32 %v1042, %v1046
        %1048 = vrot.lane.b32.xlu0 %v1004, 64
        %v1049 = vpop.permute.xlu0 %1048
        %v1052 = vsel %vm1010, %v1047, 0
        %1054 = vmatpush.msra.mxu0 0.0
        %1055 = vmatpush.msra.mxu0 0.0
        %1056 = vmatpush.msra.mxu0 0.0
        %1057 = vmatpush.msra.mxu0 0.0
        %1058 = vmatpush.msra.mxu0 0.0
        %1059 = vmatpush.msra.mxu0 0.0
        %1060 = vmatpush.msra.mxu0 0.0
        %1061 = vmatpush.msra.mxu0 0.0
        %1062 = vmatpush.msra.mxu0 0.0
        %1063 = vmatpush.msra.mxu0 0.0
        %1064 = vmatpush.msra.mxu0 0.0
        %1065 = vmatpush.msra.mxu0 0.0
        %1066 = vmatpush.msra.mxu0 0.0
        %1067 = vmatpush.msra.mxu0 0.0
        %1068 = vmatpush.msra.mxu0 0.0
        %1069 = vmatpush.msra.mxu0 %v1049
        %1070 = vmatmul.f32.gmra.mxu0 %v1052
        %v1071 = vpop.f32.mrf.mxu0
        %v1072 = vadd.f32 0.0, %v1071
        %1073 = vdwg.mxu0
        %v1074 = vld [vmem:[%s6] sm:$0xff]
        %1075 = vrot.lane.b32.xlu0 %v1004, 120
        %v1076 = vpop.permute.xlu0 %1075
        %1077 = vrot.lane.b32.xlu0 %v1004, 88
        %v1078 = vpop.permute.xlu0 %1077
        %v1079 = vsel %vm1010, %v1076, 0
        %v1081 = vsel %vm1010, %v1078, 0
        %1083 = vmatpush.xpose.msra.mxu0 0.0
        %1084 = vmatpush.xpose.msra.mxu0 0.0
        %1085 = vmatpush.xpose.msra.mxu0 0.0
        %1086 = vmatpush.xpose.msra.mxu0 0.0
        %1087 = vmatpush.xpose.msra.mxu0 0.0
        %1088 = vmatpush.xpose.msra.mxu0 0.0
        %1089 = vmatpush.xpose.msra.mxu0 0.0
        %1090 = vmatpush.xpose.msra.mxu0 0.0
        %1091 = vmatpush.xpose.msra.mxu0 0.0
        %1092 = vmatpush.xpose.msra.mxu0 0.0
        %1093 = vmatpush.xpose.msra.mxu0 0.0
        %1094 = vmatpush.xpose.msra.mxu0 0.0
        %1095 = vmatpush.xpose.msra.mxu0 0.0
        %1096 = vmatpush.xpose.msra.mxu0 0.0
        %1097 = vmatpush.xpose.msra.mxu0 0.0
        %1098 = vmatpush.xpose.msra.mxu0 %v1081
        %1099 = vmatmul.f32.gmra.mxu0 %v1079
        %v1100 = vpop.f32.mrf.mxu0
        %v1101 = vadd.f32 0.0, %v1100
        %1102 = vdwg.mxu0
        %v1103 = vsel %vm1035, %v1101, -1e+09
        %v1104 = vsel %vm1010, %v1103, -inf
        %1105 = vmax.xlane.f32.xlu0 %v1104
        %v1106 = vpop.xlane.xlu0 %1105
        %v1107 = vsub.f32 %v1103, %v1106
        %v1108 = vmul.f32 %v1107, 1.442695
        %v1109 = vpow.pop %v1108
        %v1110 = vsel %vm1010, %v1109, 0.0
        %1111 = vadd.xlane.f32.xlu0 %v1110
        %v1112 = vpop.xlane.xlu0 %1111
        %v1113 = vrcp.pop %v1112
        %v1114 = vmul.f32 %v1109, %v1113
        %1115 = vrot.lane.b32.xlu0 %v1004, 56
        %v1116 = vpop.permute.xlu0 %1115
        %v1119 = vsel %vm1010, %v1114, 0
        %1121 = vmatpush.msra.mxu0 0.0
        %1122 = vmatpush.msra.mxu0 0.0
        %1123 = vmatpush.msra.mxu0 0.0
        %1124 = vmatpush.msra.mxu0 0.0
        %1125 = vmatpush.msra.mxu0 0.0
        %1126 = vmatpush.msra.mxu0 0.0
        %1127 = vmatpush.msra.mxu0 0.0
        %1128 = vmatpush.msra.mxu0 0.0
        %1129 = vmatpush.msra.mxu0 0.0
        %1130 = vmatpush.msra.mxu0 0.0
        %1131 = vmatpush.msra.mxu0 0.0
        %1132 = vmatpush.msra.mxu0 0.0
        %1133 = vmatpush.msra.mxu0 0.0
        %1134 = vmatpush.msra.mxu0 0.0
        %1135 = vmatpush.msra.mxu0 0.0
        %1136 = vmatpush.msra.mxu0 %v1116
        %1137 = vmatmul.f32.gmra.mxu0 %v1119
        %v1138 = vpop.f32.mrf.mxu0
        %v1139 = vadd.f32 0.0, %v1138
        %1140 = vdwg.mxu0
        %s1141 = scalar_lea.vmem %s6, 8
        %v1142 = vld [vmem:[%s1141] sm:$0xff]
        %v1144 = vsel %vm1010, %v1139, 0
        %1146 = vmatpush.msra.mxu0 0.0
        %1147 = vmatpush.msra.mxu0 0.0
        %1148 = vmatpush.msra.mxu0 0.0
        %1149 = vmatpush.msra.mxu0 0.0
        %1150 = vmatpush.msra.mxu0 0.0
        %1151 = vmatpush.msra.mxu0 0.0
        %1152 = vmatpush.msra.mxu0 0.0
        %1153 = vmatpush.msra.mxu0 0.0
        %1154 = vmatpush.msra.mxu0 0.0
        %1155 = vmatpush.msra.mxu0 0.0
        %1156 = vmatpush.msra.mxu0 0.0
        %1157 = vmatpush.msra.mxu0 0.0
        %1158 = vmatpush.msra.mxu0 0.0
        %1159 = vmatpush.msra.mxu0 0.0
        %1160 = vmatpush.msra.mxu0 0.0
        %1161 = vmatpush.msra.mxu0 %v1142
        %1162 = vmatmul.f32.gmra.mxu0 %v1144
        %v1163 = vpop.f32.mrf.mxu0
        %v1164 = vadd.f32 0.0, %v1163
        %1165 = vdwg.mxu0
        %v1167 = vsel %vm1010, %v1072, 0
        %1169 = vmatpush.msra.mxu0 0.0
        %1170 = vmatpush.msra.mxu0 0.0
        %1171 = vmatpush.msra.mxu0 0.0
        %1172 = vmatpush.msra.mxu0 0.0
        %1173 = vmatpush.msra.mxu0 0.0
        %1174 = vmatpush.msra.mxu0 0.0
        %1175 = vmatpush.msra.mxu0 0.0
        %1176 = vmatpush.msra.mxu0 0.0
        %1177 = vmatpush.msra.mxu0 0.0
        %1178 = vmatpush.msra.mxu0 0.0
        %1179 = vmatpush.msra.mxu0 0.0
        %1180 = vmatpush.msra.mxu0 0.0
        %1181 = vmatpush.msra.mxu0 0.0
        %1182 = vmatpush.msra.mxu0 0.0
        %1183 = vmatpush.msra.mxu0 0.0
        %1184 = vmatpush.msra.mxu0 %v1074
        %1185 = vmatmul.f32.gmra.mxu0 %v1167
        %v1186 = vpop.f32.mrf.mxu0
        %v1187 = vadd.f32 %v1164, %v1186
        %1188 = vdwg.mxu0
        %1189 = vrot.lane.b32.xlu0 %v1004, 112
        %v1190 = vpop.permute.xlu0 %1189
        %1191 = vrot.lane.b32.xlu0 %v1004, 80
        %v1192 = vpop.permute.xlu0 %1191
        %v1193 = vsel %vm1010, %v1190, 0
        %v1195 = vsel %vm1010, %v1192, 0
        %1197 = vmatpush.xpose.msra.mxu0 0.0
        %1198 = vmatpush.xpose.msra.mxu0 0.0
        %1199 = vmatpush.xpose.msra.mxu0 0.0
        %1200 = vmatpush.xpose.msra.mxu0 0.0
        %1201 = vmatpush.xpose.msra.mxu0 0.0
        %1202 = vmatpush.xpose.msra.mxu0 0.0
        %1203 = vmatpush.xpose.msra.mxu0 0.0
        %1204 = vmatpush.xpose.msra.mxu0 0.0
        %1205 = vmatpush.xpose.msra.mxu0 0.0
        %1206 = vmatpush.xpose.msra.mxu0 0.0
        %1207 = vmatpush.xpose.msra.mxu0 0.0
        %1208 = vmatpush.xpose.msra.mxu0 0.0
        %1209 = vmatpush.xpose.msra.mxu0 0.0
        %1210 = vmatpush.xpose.msra.mxu0 0.0
        %1211 = vmatpush.xpose.msra.mxu0 0.0
        %1212 = vmatpush.xpose.msra.mxu0 %v1195
        %1213 = vmatmul.f32.gmra.mxu0 %v1193
        %v1214 = vpop.f32.mrf.mxu0
        %v1215 = vadd.f32 0.0, %v1214
        %1216 = vdwg.mxu0
        %v1217 = vsel %vm1035, %v1215, -1e+09
        %v1218 = vsel %vm1010, %v1217, -inf
        %1219 = vmax.xlane.f32.xlu0 %v1218
        %v1220 = vpop.xlane.xlu0 %1219
        %v1221 = vsub.f32 %v1217, %v1220
        %v1222 = vmul.f32 %v1221, 1.442695
        %v1223 = vpow.pop %v1222
        %v1224 = vsel %vm1010, %v1223, 0.0
        %1225 = vadd.xlane.f32.xlu0 %v1224
        %v1226 = vpop.xlane.xlu0 %1225
        %v1227 = vrcp.pop %v1226
        %v1228 = vmul.f32 %v1223, %v1227
        %1229 = vrot.lane.b32.xlu0 %v1004, 48
        %v1230 = vpop.permute.xlu0 %1229
        %v1233 = vsel %vm1010, %v1228, 0
        %1235 = vmatpush.msra.mxu0 0.0
        %1236 = vmatpush.msra.mxu0 0.0
        %1237 = vmatpush.msra.mxu0 0.0
        %1238 = vmatpush.msra.mxu0 0.0
        %1239 = vmatpush.msra.mxu0 0.0
        %1240 = vmatpush.msra.mxu0 0.0
        %1241 = vmatpush.msra.mxu0 0.0
        %1242 = vmatpush.msra.mxu0 0.0
        %1243 = vmatpush.msra.mxu0 0.0
        %1244 = vmatpush.msra.mxu0 0.0
        %1245 = vmatpush.msra.mxu0 0.0
        %1246 = vmatpush.msra.mxu0 0.0
        %1247 = vmatpush.msra.mxu0 0.0
        %1248 = vmatpush.msra.mxu0 0.0
        %1249 = vmatpush.msra.mxu0 0.0
        %1250 = vmatpush.msra.mxu0 %v1230
        %1251 = vmatmul.f32.gmra.mxu0 %v1233
        %v1252 = vpop.f32.mrf.mxu0
        %v1253 = vadd.f32 0.0, %v1252
        %1254 = vdwg.mxu0
        %s1255 = scalar_lea.vmem %s6, 16
        %v1256 = vld [vmem:[%s1255] sm:$0xff]
        %v1258 = vsel %vm1010, %v1253, 0
        %1260 = vmatpush.msra.mxu0 0.0
        %1261 = vmatpush.msra.mxu0 0.0
        %1262 = vmatpush.msra.mxu0 0.0
        %1263 = vmatpush.msra.mxu0 0.0
        %1264 = vmatpush.msra.mxu0 0.0
        %1265 = vmatpush.msra.mxu0 0.0
        %1266 = vmatpush.msra.mxu0 0.0
        %1267 = vmatpush.msra.mxu0 0.0
        %1268 = vmatpush.msra.mxu0 0.0
        %1269 = vmatpush.msra.mxu0 0.0
        %1270 = vmatpush.msra.mxu0 0.0
        %1271 = vmatpush.msra.mxu0 0.0
        %1272 = vmatpush.msra.mxu0 0.0
        %1273 = vmatpush.msra.mxu0 0.0
        %1274 = vmatpush.msra.mxu0 0.0
        %1275 = vmatpush.msra.mxu0 %v1256
        %1276 = vmatmul.f32.gmra.mxu0 %v1258
        %v1277 = vpop.f32.mrf.mxu0
        %v1278 = vadd.f32 0.0, %v1277
        %1279 = vdwg.mxu0
        %v1280 = vadd.f32 %v1187, %v1278
        %1281 = vrot.lane.b32.xlu0 %v1004, 104
        %v1282 = vpop.permute.xlu0 %1281
        %1283 = vrot.lane.b32.xlu0 %v1004, 72
        %v1284 = vpop.permute.xlu0 %1283
        %v1285 = vsel %vm1010, %v1282, 0
        %v1287 = vsel %vm1010, %v1284, 0
        %1289 = vmatpush.xpose.msra.mxu0 0.0
        %1290 = vmatpush.xpose.msra.mxu0 0.0
        %1291 = vmatpush.xpose.msra.mxu0 0.0
        %1292 = vmatpush.xpose.msra.mxu0 0.0
        %1293 = vmatpush.xpose.msra.mxu0 0.0
        %1294 = vmatpush.xpose.msra.mxu0 0.0
        %1295 = vmatpush.xpose.msra.mxu0 0.0
        %1296 = vmatpush.xpose.msra.mxu0 0.0
        %1297 = vmatpush.xpose.msra.mxu0 0.0
        %1298 = vmatpush.xpose.msra.mxu0 0.0
        %1299 = vmatpush.xpose.msra.mxu0 0.0
        %1300 = vmatpush.xpose.msra.mxu0 0.0
        %1301 = vmatpush.xpose.msra.mxu0 0.0
        %1302 = vmatpush.xpose.msra.mxu0 0.0
        %1303 = vmatpush.xpose.msra.mxu0 0.0
        %1304 = vmatpush.xpose.msra.mxu0 %v1287
        %1305 = vmatmul.f32.gmra.mxu0 %v1285
        %v1306 = vpop.f32.mrf.mxu0
        %v1307 = vadd.f32 0.0, %v1306
        %1308 = vdwg.mxu0
        %v1309 = vsel %vm1035, %v1307, -1e+09
        %v1310 = vsel %vm1010, %v1309, -inf
        %1311 = vmax.xlane.f32.xlu0 %v1310
        %v1312 = vpop.xlane.xlu0 %1311
        %v1313 = vsub.f32 %v1309, %v1312
        %v1314 = vmul.f32 %v1313, 1.442695
        %v1315 = vpow.pop %v1314
        %v1316 = vsel %vm1010, %v1315, 0.0
        %1317 = vadd.xlane.f32.xlu0 %v1316
        %v1318 = vpop.xlane.xlu0 %1317
        %v1319 = vrcp.pop %v1318
        %v1320 = vmul.f32 %v1315, %v1319
        %1321 = vrot.lane.b32.xlu0 %v1004, 40
        %v1322 = vpop.permute.xlu0 %1321
        %v1325 = vsel %vm1010, %v1320, 0
        %1327 = vmatpush.msra.mxu0 0.0
        %1328 = vmatpush.msra.mxu0 0.0
        %1329 = vmatpush.msra.mxu0 0.0
        %1330 = vmatpush.msra.mxu0 0.0
        %1331 = vmatpush.msra.mxu0 0.0
        %1332 = vmatpush.msra.mxu0 0.0
        %1333 = vmatpush.msra.mxu0 0.0
        %1334 = vmatpush.msra.mxu0 0.0
        %1335 = vmatpush.msra.mxu0 0.0
        %1336 = vmatpush.msra.mxu0 0.0
        %1337 = vmatpush.msra.mxu0 0.0
        %1338 = vmatpush.msra.mxu0 0.0
        %1339 = vmatpush.msra.mxu0 0.0
        %1340 = vmatpush.msra.mxu0 0.0
        %1341 = vmatpush.msra.mxu0 0.0
        %1342 = vmatpush.msra.mxu0 %v1322
        %1343 = vmatmul.f32.gmra.mxu0 %v1325
        %v1344 = vpop.f32.mrf.mxu0
        %v1345 = vadd.f32 0.0, %v1344
        %1346 = vdwg.mxu0
        %s1347 = scalar_lea.vmem %s6, 24
        %v1348 = vld [vmem:[%s1347] sm:$0xff]
        %v1350 = vsel %vm1010, %v1345, 0
        %1352 = vmatpush.msra.mxu0 0.0
        %1353 = vmatpush.msra.mxu0 0.0
        %1354 = vmatpush.msra.mxu0 0.0
        %1355 = vmatpush.msra.mxu0 0.0
        %1356 = vmatpush.msra.mxu0 0.0
        %1357 = vmatpush.msra.mxu0 0.0
        %1358 = vmatpush.msra.mxu0 0.0
        %1359 = vmatpush.msra.mxu0 0.0
        %1360 = vmatpush.msra.mxu0 0.0
        %1361 = vmatpush.msra.mxu0 0.0
        %1362 = vmatpush.msra.mxu0 0.0
        %1363 = vmatpush.msra.mxu0 0.0
        %1364 = vmatpush.msra.mxu0 0.0
        %1365 = vmatpush.msra.mxu0 0.0
        %1366 = vmatpush.msra.mxu0 0.0
        %1367 = vmatpush.msra.mxu0 %v1348
        %1368 = vmatmul.f32.gmra.mxu0 %v1350
        %v1369 = vpop.f32.mrf.mxu0
        %v1370 = vadd.f32 0.0, %v1369
        %1371 = vdwg.mxu0
        %v1372 = vadd.f32 %v1280, %v1370
        %v1374 = vperm.slane %v1006, 0
        %v1376 = vadd.f32 %v1372, %v1374
        %v1377 = vld [vmem:[#allocation6] sm:$0x1]
        %v1378 = vld [vmem:[#allocation7] sm:$0x1]
        %v1379 = vadd.f32 %v970, %v1376
        %v1380 = vsel %vm982, %v1379, 0.0
        %1381 = vadd.xlane.f32.xlu0 %v1380
        %v1382 = vpop.xlane.xlu0 %1381
        %v1383 = vrcp.pop 32.0
        %v1384 = vmul.f32 32.0, %v1383
        %v1385 = vsub.f32 1.0, %v1384
        %v1386 = vmul.f32 %v1383, %v1385
        %v1387 = vadd.f32 %v1383, %v1386
        %vm1388 = vweird.f32 %v1383
        %v1389 = vsel %vm1388, %v1383, %v1387
        %v1390 = vmul.f32 %v1382, %v1389
        %v1391 = vsub.f32 %v1379, %v1390
        %v1392 = vmul.f32 %v1391, %v1391
        %v1393 = vsel %vm982, %v1392, 0.0
        %1394 = vadd.xlane.f32.xlu0 %v1393
        %v1395 = vpop.xlane.xlu0 %1394
        %v1396 = vmul.f32 %v1395, %v1389
        %v1397 = vadd.f32 %v1396, 1e-05
        %v1398 = vrsqrt.pop %v1397
        %v1399 = vmul.f32 %v1398, %v1397
        %v1400 = vmul.f32 %v1399, %v1398
        %v1401 = vmul.f32 0.5, %v1400
        %v1402 = vsub.f32 1.5, %v1401
        %v1403 = vmul.f32 %v1398, %v1402
        %vm1404 = vweird.f32 %v1397
        %vm1405 = vweird.f32 %v1398
        %vm1406 = vmor %vm1404, %vm1405
        %v1407 = vsel %vm1406, %v1398, %v1403
        %v1408 = vmul.f32 %v1391, %v1407
        %v1410 = vperm.slane %v1377, 0
        %v1412 = vmul.f32 %v1408, %v1410
        %v1414 = vperm.slane %v1378, 0
        %v1416 = vadd.f32 %v1412, %v1414
        %v1417 = vld [vmem:[%s10] sm:$0xff]
        %v1418 = vld [vmem:[%s10 + $0x8] sm:$0xff]
        %v1419 = vld [vmem:[%s10 + $0x10] sm:$0xff]
        %v1420 = vld [vmem:[%s10 + $0x18] sm:$0xff]
        %v1421 = vld [vmem:[#allocation9] sm:$0x1]
        %v1423 = vperm.slane %v1421, 0
        %v1426 = vsel %vm982, %v1416, 0
        %1428 = vmatpush.msra.mxu0 0.0
        %1429 = vmatpush.msra.mxu0 0.0
        %1430 = vmatpush.msra.mxu0 0.0
        %1431 = vmatpush.msra.mxu0 0.0
        %1432 = vmatpush.msra.mxu0 0.0
        %1433 = vmatpush.msra.mxu0 0.0
        %1434 = vmatpush.msra.mxu0 0.0
        %1435 = vmatpush.msra.mxu0 0.0
        %1436 = vmatpush.msra.mxu0 0.0
        %1437 = vmatpush.msra.mxu0 0.0
        %1438 = vmatpush.msra.mxu0 0.0
        %1439 = vmatpush.msra.mxu0 0.0
        %1440 = vmatpush.msra.mxu0 %v1420
        %1441 = vmatpush.msra.mxu0 %v1419
        %1442 = vmatpush.msra.mxu0 %v1418
        %1443 = vmatpush.msra.mxu0 %v1417
        %1444 = vmatmul.f32.gmra.mxu0 %v1426
        %v1445 = vpop.f32.mrf.mxu0
        %v1446 = vadd.f32 %v1423, %v1445
        %1447 = vdwg.mxu0
        %v1448 = vld [vmem:[%s12] sm:$0xff]
        %v1449 = vld [vmem:[%s12 + $0x8] sm:$0xff]
        %v1450 = vld [vmem:[%s12 + $0x10] sm:$0xff]
        %v1451 = vld [vmem:[%s12 + $0x18] sm:$0xff]
        %v1452 = vld [vmem:[#allocation10] sm:$0x1]
        %v1454 = vperm.slane %v1452, 0
        %v1457 = vsel %vm982, %v971, 0
        %1459 = vmatpush.msra.mxu0 0.0
        %1460 = vmatpush.msra.mxu0 0.0
        %1461 = vmatpush.msra.mxu0 0.0
        %1462 = vmatpush.msra.mxu0 0.0
        %1463 = vmatpush.msra.mxu0 0.0
        %1464 = vmatpush.msra.mxu0 0.0
        %1465 = vmatpush.msra.mxu0 0.0
        %1466 = vmatpush.msra.mxu0 0.0
        %1467 = vmatpush.msra.mxu0 0.0
        %1468 = vmatpush.msra.mxu0 0.0
        %1469 = vmatpush.msra.mxu0 0.0
        %1470 = vmatpush.msra.mxu0 0.0
        %1471 = vmatpush.msra.mxu0 %v1451
        %1472 = vmatpush.msra.mxu0 %v1450
        %1473 = vmatpush.msra.mxu0 %v1449
        %1474 = vmatpush.msra.mxu0 %v1448
        %1475 = vmatmul.f32.gmra.mxu0 %v1457
        %v1476 = vpop.f32.mrf.mxu0
        %v1477 = vadd.f32 %v1454, %v1476
        %1478 = vdwg.mxu0
        %v1479 = vld [vmem:[#allocation12] sm:$0x1]
        %v1481 = vsel %vm1010, %v1446, 0
        %v1484 = vsel %vm1010, %v1477, 0
        %1486 = vmatpush.xpose.msra.mxu0 0.0
        %1487 = vmatpush.xpose.msra.mxu0 0.0
        %1488 = vmatpush.xpose.msra.mxu0 0.0
        %1489 = vmatpush.xpose.msra.mxu0 0.0
        %1490 = vmatpush.xpose.msra.mxu0 0.0
        %1491 = vmatpush.xpose.msra.mxu0 0.0
        %1492 = vmatpush.xpose.msra.mxu0 0.0
        %1493 = vmatpush.xpose.msra.mxu0 0.0
        %1494 = vmatpush.xpose.msra.mxu0 0.0
        %1495 = vmatpush.xpose.msra.mxu0 0.0
        %1496 = vmatpush.xpose.msra.mxu0 0.0
        %1497 = vmatpush.xpose.msra.mxu0 0.0
        %1498 = vmatpush.xpose.msra.mxu0 0.0
        %1499 = vmatpush.xpose.msra.mxu0 0.0
        %1500 = vmatpush.xpose.msra.mxu0 0.0
        %1501 = vmatpush.xpose.msra.mxu0 %v1484
        %1502 = vmatmul.f32.gmra.mxu0 %v1481
        %v1503 = vpop.f32.mrf.mxu0
        %v1504 = vadd.f32 0.0, %v1503
        %1505 = vdwg.mxu0
        %vm1506 = vcmp.ne.f32.partialorder %v973, 0.0
        %v1507 = vsel %vm1506, 1, 0
        %v1508 = vperm.slane %v1507, 0
        %vm1509 = vcmp.eq.s32.totalorder %v1508, 1
        %v1510 = vsel %vm1509, %v1504, -1e+09
        %v1511 = vsel %vm1010, %v1510, -inf
        %1512 = vmax.xlane.f32.xlu0 %v1511
        %v1513 = vpop.xlane.xlu0 %1512
        %v1514 = vsub.f32 %v1510, %v1513
        %v1515 = vmul.f32 %v1514, 1.442695
        %v1516 = vpow.pop %v1515
        %v1517 = vsel %vm1010, %v1516, 0.0
        %1518 = vadd.xlane.f32.xlu0 %v1517
        %v1519 = vpop.xlane.xlu0 %1518
        %v1520 = vrcp.pop %v1519
        %v1521 = vmul.f32 %v1516, %v1520
        %1522 = vrot.lane.b32.xlu0 %v1477, 96
        %v1523 = vpop.permute.xlu0 %1522
        %v1526 = vsel %vm1010, %v1521, 0
        %1528 = vmatpush.msra.mxu0 0.0
        %1529 = vmatpush.msra.mxu0 0.0
        %1530 = vmatpush.msra.mxu0 0.0
        %1531 = vmatpush.msra.mxu0 0.0
        %1532 = vmatpush.msra.mxu0 0.0
        %1533 = vmatpush.msra.mxu0 0.0
        %1534 = vmatpush.msra.mxu0 0.0
        %1535 = vmatpush.msra.mxu0 0.0
        %1536 = vmatpush.msra.mxu0 0.0
        %1537 = vmatpush.msra.mxu0 0.0
        %1538 = vmatpush.msra.mxu0 0.0
        %1539 = vmatpush.msra.mxu0 0.0
        %1540 = vmatpush.msra.mxu0 0.0
        %1541 = vmatpush.msra.mxu0 0.0
        %1542 = vmatpush.msra.mxu0 0.0
        %1543 = vmatpush.msra.mxu0 %v1523
        %1544 = vmatmul.f32.gmra.mxu0 %v1526
        %v1545 = vpop.f32.mrf.mxu0
        %v1546 = vadd.f32 0.0, %v1545
        %1547 = vdwg.mxu0
        %v1548 = vld [vmem:[%s14] sm:$0xff]
        %1549 = vrot.lane.b32.xlu0 %v1446, 120
        %v1550 = vpop.permute.xlu0 %1549
        %1551 = vrot.lane.b32.xlu0 %v1477, 120
        %v1552 = vpop.permute.xlu0 %1551
        %v1553 = vsel %vm1010, %v1550, 0
        %v1555 = vsel %vm1010, %v1552, 0
        %1557 = vmatpush.xpose.msra.mxu0 0.0
        %1558 = vmatpush.xpose.msra.mxu0 0.0
        %1559 = vmatpush.xpose.msra.mxu0 0.0
        %1560 = vmatpush.xpose.msra.mxu0 0.0
        %1561 = vmatpush.xpose.msra.mxu0 0.0
        %1562 = vmatpush.xpose.msra.mxu0 0.0
        %1563 = vmatpush.xpose.msra.mxu0 0.0
        %1564 = vmatpush.xpose.msra.mxu0 0.0
        %1565 = vmatpush.xpose.msra.mxu0 0.0
        %1566 = vmatpush.xpose.msra.mxu0 0.0
        %1567 = vmatpush.xpose.msra.mxu0 0.0
        %1568 = vmatpush.xpose.msra.mxu0 0.0
        %1569 = vmatpush.xpose.msra.mxu0 0.0
        %1570 = vmatpush.xpose.msra.mxu0 0.0
        %1571 = vmatpush.xpose.msra.mxu0 0.0
        %1572 = vmatpush.xpose.msra.mxu0 %v1555
        %1573 = vmatmul.f32.gmra.mxu0 %v1553
        %v1574 = vpop.f32.mrf.mxu0
        %v1575 = vadd.f32 0.0, %v1574
        %1576 = vdwg.mxu0
        %v1577 = vsel %vm1509, %v1575, -1e+09
        %v1578 = vsel %vm1010, %v1577, -inf
        %1579 = vmax.xlane.f32.xlu0 %v1578
        %v1580 = vpop.xlane.xlu0 %1579
        %v1581 = vsub.f32 %v1577, %v1580
        %v1582 = vmul.f32 %v1581, 1.442695
        %v1583 = vpow.pop %v1582
        %v1584 = vsel %vm1010, %v1583, 0.0
        %1585 = vadd.xlane.f32.xlu0 %v1584
        %v1586 = vpop.xlane.xlu0 %1585
        %v1587 = vrcp.pop %v1586
        %v1588 = vmul.f32 %v1583, %v1587
        %1589 = vrot.lane.b32.xlu0 %v1477, 88
        %v1590 = vpop.permute.xlu0 %1589
        %v1593 = vsel %vm1010, %v1588, 0
        %1595 = vmatpush.msra.mxu0 0.0
        %1596 = vmatpush.msra.mxu0 0.0
        %1597 = vmatpush.msra.mxu0 0.0
        %1598 = vmatpush.msra.mxu0 0.0
        %1599 = vmatpush.msra.mxu0 0.0
        %1600 = vmatpush.msra.mxu0 0.0
        %1601 = vmatpush.msra.mxu0 0.0
        %1602 = vmatpush.msra.mxu0 0.0
        %1603 = vmatpush.msra.mxu0 0.0
        %1604 = vmatpush.msra.mxu0 0.0
        %1605 = vmatpush.msra.mxu0 0.0
        %1606 = vmatpush.msra.mxu0 0.0
        %1607 = vmatpush.msra.mxu0 0.0
        %1608 = vmatpush.msra.mxu0 0.0
        %1609 = vmatpush.msra.mxu0 0.0
        %1610 = vmatpush.msra.mxu0 %v1590
        %1611 = vmatmul.f32.gmra.mxu0 %v1593
        %v1612 = vpop.f32.mrf.mxu0
        %v1613 = vadd.f32 0.0, %v1612
        %1614 = vdwg.mxu0
        %s1615 = scalar_lea.vmem %s14, 8
        %v1616 = vld [vmem:[%s1615] sm:$0xff]
        %v1618 = vsel %vm1010, %v1613, 0
        %1620 = vmatpush.msra.mxu0 0.0
        %1621 = vmatpush.msra.mxu0 0.0
        %1622 = vmatpush.msra.mxu0 0.0
        %1623 = vmatpush.msra.mxu0 0.0
        %1624 = vmatpush.msra.mxu0 0.0
        %1625 = vmatpush.msra.mxu0 0.0
        %1626 = vmatpush.msra.mxu0 0.0
        %1627 = vmatpush.msra.mxu0 0.0
        %1628 = vmatpush.msra.mxu0 0.0
        %1629 = vmatpush.msra.mxu0 0.0
        %1630 = vmatpush.msra.mxu0 0.0
        %1631 = vmatpush.msra.mxu0 0.0
        %1632 = vmatpush.msra.mxu0 0.0
        %1633 = vmatpush.msra.mxu0 0.0
        %1634 = vmatpush.msra.mxu0 0.0
        %1635 = vmatpush.msra.mxu0 %v1616
        %1636 = vmatmul.f32.gmra.mxu0 %v1618
        %v1637 = vpop.f32.mrf.mxu0
        %v1638 = vadd.f32 0.0, %v1637
        %1639 = vdwg.mxu0
        %v1641 = vsel %vm1010, %v1546, 0
        %1643 = vmatpush.msra.mxu0 0.0
        %1644 = vmatpush.msra.mxu0 0.0
        %1645 = vmatpush.msra.mxu0 0.0
        %1646 = vmatpush.msra.mxu0 0.0
        %1647 = vmatpush.msra.mxu0 0.0
        %1648 = vmatpush.msra.mxu0 0.0
        %1649 = vmatpush.msra.mxu0 0.0
        %1650 = vmatpush.msra.mxu0 0.0
        %1651 = vmatpush.msra.mxu0 0.0
        %1652 = vmatpush.msra.mxu0 0.0
        %1653 = vmatpush.msra.mxu0 0.0
        %1654 = vmatpush.msra.mxu0 0.0
        %1655 = vmatpush.msra.mxu0 0.0
        %1656 = vmatpush.msra.mxu0 0.0
        %1657 = vmatpush.msra.mxu0 0.0
        %1658 = vmatpush.msra.mxu0 %v1548
        %1659 = vmatmul.f32.gmra.mxu0 %v1641
        %v1660 = vpop.f32.mrf.mxu0
        %v1661 = vadd.f32 %v1638, %v1660
        %1662 = vdwg.mxu0
        %1663 = vrot.lane.b32.xlu0 %v1446, 112
        %v1664 = vpop.permute.xlu0 %1663
        %1665 = vrot.lane.b32.xlu0 %v1477, 112
        %v1666 = vpop.permute.xlu0 %1665
        %v1667 = vsel %vm1010, %v1664, 0
        %v1669 = vsel %vm1010, %v1666, 0
        %1671 = vmatpush.xpose.msra.mxu0 0.0
        %1672 = vmatpush.xpose.msra.mxu0 0.0
        %1673 = vmatpush.xpose.msra.mxu0 0.0
        %1674 = vmatpush.xpose.msra.mxu0 0.0
        %1675 = vmatpush.xpose.msra.mxu0 0.0
        %1676 = vmatpush.xpose.msra.mxu0 0.0
        %1677 = vmatpush.xpose.msra.mxu0 0.0
        %1678 = vmatpush.xpose.msra.mxu0 0.0
        %1679 = vmatpush.xpose.msra.mxu0 0.0
        %1680 = vmatpush.xpose.msra.mxu0 0.0
        %1681 = vmatpush.xpose.msra.mxu0 0.0
        %1682 = vmatpush.xpose.msra.mxu0 0.0
        %1683 = vmatpush.xpose.msra.mxu0 0.0
        %1684 = vmatpush.xpose.msra.mxu0 0.0
        %1685 = vmatpush.xpose.msra.mxu0 0.0
        %1686 = vmatpush.xpose.msra.mxu0 %v1669
        %1687 = vmatmul.f32.gmra.mxu0 %v1667
        %v1688 = vpop.f32.mrf.mxu0
        %v1689 = vadd.f32 0.0, %v1688
        %1690 = vdwg.mxu0
        %v1691 = vsel %vm1509, %v1689, -1e+09
        %v1692 = vsel %vm1010, %v1691, -inf
        %1693 = vmax.xlane.f32.xlu0 %v1692
        %v1694 = vpop.xlane.xlu0 %1693
        %v1695 = vsub.f32 %v1691, %v1694
        %v1696 = vmul.f32 %v1695, 1.442695
        %v1697 = vpow.pop %v1696
        %v1698 = vsel %vm1010, %v1697, 0.0
        %1699 = vadd.xlane.f32.xlu0 %v1698
        %v1700 = vpop.xlane.xlu0 %1699
        %v1701 = vrcp.pop %v1700
        %v1702 = vmul.f32 %v1697, %v1701
        %1703 = vrot.lane.b32.xlu0 %v1477, 80
        %v1704 = vpop.permute.xlu0 %1703
        %v1707 = vsel %vm1010, %v1702, 0
        %1709 = vmatpush.msra.mxu0 0.0
        %1710 = vmatpush.msra.mxu0 0.0
        %1711 = vmatpush.msra.mxu0 0.0
        %1712 = vmatpush.msra.mxu0 0.0
        %1713 = vmatpush.msra.mxu0 0.0
        %1714 = vmatpush.msra.mxu0 0.0
        %1715 = vmatpush.msra.mxu0 0.0
        %1716 = vmatpush.msra.mxu0 0.0
        %1717 = vmatpush.msra.mxu0 0.0
        %1718 = vmatpush.msra.mxu0 0.0
        %1719 = vmatpush.msra.mxu0 0.0
        %1720 = vmatpush.msra.mxu0 0.0
        %1721 = vmatpush.msra.mxu0 0.0
        %1722 = vmatpush.msra.mxu0 0.0
        %1723 = vmatpush.msra.mxu0 0.0
        %1724 = vmatpush.msra.mxu0 %v1704
        %1725 = vmatmul.f32.gmra.mxu0 %v1707
        %v1726 = vpop.f32.mrf.mxu0
        %v1727 = vadd.f32 0.0, %v1726
        %1728 = vdwg.mxu0
        %s1729 = scalar_lea.vmem %s14, 16
        %v1730 = vld [vmem:[%s1729] sm:$0xff]
        %v1732 = vsel %vm1010, %v1727, 0
        %1734 = vmatpush.msra.mxu0 0.0
        %1735 = vmatpush.msra.mxu0 0.0
        %1736 = vmatpush.msra.mxu0 0.0
        %1737 = vmatpush.msra.mxu0 0.0
        %1738 = vmatpush.msra.mxu0 0.0
        %1739 = vmatpush.msra.mxu0 0.0
        %1740 = vmatpush.msra.mxu0 0.0
        %1741 = vmatpush.msra.mxu0 0.0
        %1742 = vmatpush.msra.mxu0 0.0
        %1743 = vmatpush.msra.mxu0 0.0
        %1744 = vmatpush.msra.mxu0 0.0
        %1745 = vmatpush.msra.mxu0 0.0
        %1746 = vmatpush.msra.mxu0 0.0
        %1747 = vmatpush.msra.mxu0 0.0
        %1748 = vmatpush.msra.mxu0 0.0
        %1749 = vmatpush.msra.mxu0 %v1730
        %1750 = vmatmul.f32.gmra.mxu0 %v1732
        %v1751 = vpop.f32.mrf.mxu0
        %v1752 = vadd.f32 0.0, %v1751
        %1753 = vdwg.mxu0
        %v1754 = vadd.f32 %v1661, %v1752
        %1755 = vrot.lane.b32.xlu0 %v1446, 104
        %v1756 = vpop.permute.xlu0 %1755
        %1757 = vrot.lane.b32.xlu0 %v1477, 104
        %v1758 = vpop.permute.xlu0 %1757
        %v1759 = vsel %vm1010, %v1756, 0
        %v1761 = vsel %vm1010, %v1758, 0
        %1763 = vmatpush.xpose.msra.mxu0 0.0
        %1764 = vmatpush.xpose.msra.mxu0 0.0
        %1765 = vmatpush.xpose.msra.mxu0 0.0
        %1766 = vmatpush.xpose.msra.mxu0 0.0
        %1767 = vmatpush.xpose.msra.mxu0 0.0
        %1768 = vmatpush.xpose.msra.mxu0 0.0
        %1769 = vmatpush.xpose.msra.mxu0 0.0
        %1770 = vmatpush.xpose.msra.mxu0 0.0
        %1771 = vmatpush.xpose.msra.mxu0 0.0
        %1772 = vmatpush.xpose.msra.mxu0 0.0
        %1773 = vmatpush.xpose.msra.mxu0 0.0
        %1774 = vmatpush.xpose.msra.mxu0 0.0
        %1775 = vmatpush.xpose.msra.mxu0 0.0
        %1776 = vmatpush.xpose.msra.mxu0 0.0
        %1777 = vmatpush.xpose.msra.mxu0 0.0
        %1778 = vmatpush.xpose.msra.mxu0 %v1761
        %1779 = vmatmul.f32.gmra.mxu0 %v1759
        %v1780 = vpop.f32.mrf.mxu0
        %v1781 = vadd.f32 0.0, %v1780
        %1782 = vdwg.mxu0
        %v1783 = vsel %vm1509, %v1781, -1e+09
        %v1784 = vsel %vm1010, %v1783, -inf
        %1785 = vmax.xlane.f32.xlu0 %v1784
        %v1786 = vpop.xlane.xlu0 %1785
        %v1787 = vsub.f32 %v1783, %v1786
        %v1788 = vmul.f32 %v1787, 1.442695
        %v1789 = vpow.pop %v1788
        %v1790 = vsel %vm1010, %v1789, 0.0
        %1791 = vadd.xlane.f32.xlu0 %v1790
        %v1792 = vpop.xlane.xlu0 %1791
        %v1793 = vrcp.pop %v1792
        %v1794 = vmul.f32 %v1789, %v1793
        %1795 = vrot.lane.b32.xlu0 %v1477, 72
        %v1796 = vpop.permute.xlu0 %1795
        %v1799 = vsel %vm1010, %v1794, 0
        %1801 = vmatpush.msra.mxu0 0.0
        %1802 = vmatpush.msra.mxu0 0.0
        %1803 = vmatpush.msra.mxu0 0.0
        %1804 = vmatpush.msra.mxu0 0.0
        %1805 = vmatpush.msra.mxu0 0.0
        %1806 = vmatpush.msra.mxu0 0.0
        %1807 = vmatpush.msra.mxu0 0.0
        %1808 = vmatpush.msra.mxu0 0.0
        %1809 = vmatpush.msra.mxu0 0.0
        %1810 = vmatpush.msra.mxu0 0.0
        %1811 = vmatpush.msra.mxu0 0.0
        %1812 = vmatpush.msra.mxu0 0.0
        %1813 = vmatpush.msra.mxu0 0.0
        %1814 = vmatpush.msra.mxu0 0.0
        %1815 = vmatpush.msra.mxu0 0.0
        %1816 = vmatpush.msra.mxu0 %v1796
        %1817 = vmatmul.f32.gmra.mxu0 %v1799
        %v1818 = vpop.f32.mrf.mxu0
        %v1819 = vadd.f32 0.0, %v1818
        %1820 = vdwg.mxu0
        %s1821 = scalar_lea.vmem %s14, 24
        %v1822 = vld [vmem:[%s1821] sm:$0xff]
        %v1824 = vsel %vm1010, %v1819, 0
        %1826 = vmatpush.msra.mxu0 0.0
        %1827 = vmatpush.msra.mxu0 0.0
        %1828 = vmatpush.msra.mxu0 0.0
        %1829 = vmatpush.msra.mxu0 0.0
        %1830 = vmatpush.msra.mxu0 0.0
        %1831 = vmatpush.msra.mxu0 0.0
        %1832 = vmatpush.msra.mxu0 0.0
        %1833 = vmatpush.msra.mxu0 0.0
        %1834 = vmatpush.msra.mxu0 0.0
        %1835 = vmatpush.msra.mxu0 0.0
        %1836 = vmatpush.msra.mxu0 0.0
        %1837 = vmatpush.msra.mxu0 0.0
        %1838 = vmatpush.msra.mxu0 0.0
        %1839 = vmatpush.msra.mxu0 0.0
        %1840 = vmatpush.msra.mxu0 0.0
        %1841 = vmatpush.msra.mxu0 %v1822
        %1842 = vmatmul.f32.gmra.mxu0 %v1824
        %v1843 = vpop.f32.mrf.mxu0
        %v1844 = vadd.f32 0.0, %v1843
        %1845 = vdwg.mxu0
        %v1846 = vadd.f32 %v1754, %v1844
        %v1848 = vperm.slane %v1479, 0
        %v1850 = vadd.f32 %v1846, %v1848
        %v1851 = vld [vmem:[#allocation13] sm:$0x1]
        %v1852 = vld [vmem:[#allocation15] sm:$0x1]
        %v1853 = vadd.f32 %v1416, %v1850
        %v1854 = vsel %vm982, %v1853, 0.0
        %1855 = vadd.xlane.f32.xlu0 %v1854
        %v1856 = vpop.xlane.xlu0 %1855
        %v1857 = vmul.f32 %v1856, %v1389
        %v1858 = vsub.f32 %v1853, %v1857
        %v1859 = vmul.f32 %v1858, %v1858
        %v1860 = vsel %vm982, %v1859, 0.0
        %1861 = vadd.xlane.f32.xlu0 %v1860
        %v1862 = vpop.xlane.xlu0 %1861
        %v1863 = vmul.f32 %v1862, %v1389
        %v1864 = vadd.f32 %v1863, 1e-05
        %v1865 = vrsqrt.pop %v1864
        %v1866 = vmul.f32 %v1865, %v1864
        %v1867 = vmul.f32 %v1866, %v1865
        %v1868 = vmul.f32 0.5, %v1867
        %v1869 = vsub.f32 1.5, %v1868
        %v1870 = vmul.f32 %v1865, %v1869
        %vm1871 = vweird.f32 %v1864
        %vm1872 = vweird.f32 %v1865
        %vm1873 = vmor %vm1871, %vm1872
        %v1874 = vsel %vm1873, %v1865, %v1870
        %v1875 = vmul.f32 %v1858, %v1874
        %v1877 = vperm.slane %v1851, 0
        %v1879 = vmul.f32 %v1875, %v1877
        %v1881 = vperm.slane %v1852, 0
        %v1883 = vadd.f32 %v1879, %v1881
        %v1884 = vld [vmem:[%s18] sm:$0xff]
        %v1885 = vld [vmem:[%s18 + $0x8] sm:$0xff]
        %v1886 = vld [vmem:[%s18 + $0x10] sm:$0xff]
        %v1887 = vld [vmem:[%s18 + $0x18] sm:$0xff]
        %v1888 = vld [vmem:[#allocation16] sm:$0x1]
        %v1889 = vld [vmem:[%s20] sm:$0xff]
        %v1890 = vld [vmem:[%s20 + $0x8] sm:$0xff]
        %v1891 = vld [vmem:[%s20 + $0x10] sm:$0xff]
        %v1892 = vld [vmem:[%s20 + $0x18] sm:$0xff]
        %v1893 = vld [vmem:[%s20 + $0x20] sm:$0xff]
        %v1894 = vld [vmem:[%s20 + $0x28] sm:$0xff]
        %v1895 = vld [vmem:[%s20 + $0x30] sm:$0xff]
        %v1896 = vld [vmem:[%s20 + $0x38] sm:$0xff]
        %v1897 = vld [vmem:[#allocation18] sm:$0x1]
        %v1899 = vperm.slane %v1888, 0
        %v1902 = vsel %vm982, %v1883, 0
        %1904 = vmatpush.msra.mxu0 0.0
        %1905 = vmatpush.msra.mxu0 0.0
        %1906 = vmatpush.msra.mxu0 0.0
        %1907 = vmatpush.msra.mxu0 0.0
        %1908 = vmatpush.msra.mxu0 0.0
        %1909 = vmatpush.msra.mxu0 0.0
        %1910 = vmatpush.msra.mxu0 0.0
        %1911 = vmatpush.msra.mxu0 0.0
        %1912 = vmatpush.msra.mxu0 0.0
        %1913 = vmatpush.msra.mxu0 0.0
        %1914 = vmatpush.msra.mxu0 0.0
        %1915 = vmatpush.msra.mxu0 0.0
        %1916 = vmatpush.msra.mxu0 %v1887
        %1917 = vmatpush.msra.mxu0 %v1886
        %1918 = vmatpush.msra.mxu0 %v1885
        %1919 = vmatpush.msra.mxu0 %v1884
        %1920 = vmatmul.f32.gmra.mxu0 %v1902
        %v1921 = vpop.f32.mrf.mxu0
        %v1922 = vadd.f32 %v1899, %v1921
        %1923 = vdwg.mxu0
        %v1924 = vmax.f32 %v1922, 0.0
        %v1926 = vperm.slane %v1897, 0
        %vm1928 = vcmask 523264
        %v1930 = vsel %vm1928, %v1924, 0
        %1932 = vmatpush.msra.mxu0 0.0
        %1933 = vmatpush.msra.mxu0 0.0
        %1934 = vmatpush.msra.mxu0 0.0
        %1935 = vmatpush.msra.mxu0 0.0
        %1936 = vmatpush.msra.mxu0 0.0
        %1937 = vmatpush.msra.mxu0 0.0
        %1938 = vmatpush.msra.mxu0 0.0
        %1939 = vmatpush.msra.mxu0 0.0
        %1940 = vmatpush.msra.mxu0 %v1896
        %1941 = vmatpush.msra.mxu0 %v1895
        %1942 = vmatpush.msra.mxu0 %v1894
        %1943 = vmatpush.msra.mxu0 %v1893
        %1944 = vmatpush.msra.mxu0 %v1892
        %1945 = vmatpush.msra.mxu0 %v1891
        %1946 = vmatpush.msra.mxu0 %v1890
        %1947 = vmatpush.msra.mxu0 %v1889
        %1948 = vmatmul.f32.gmra.mxu0 %v1930
        %v1949 = vpop.f32.mrf.mxu0
        %v1950 = vadd.f32 %v1926, %v1949
        %1951 = vdwg.mxu0
        %v1952 = vld [vmem:[#allocation19] sm:$0x1]
        %v1953 = vld [vmem:[#allocation21] sm:$0x1]
        %v1954 = vadd.f32 %v1883, %v1950
        %v1955 = vsel %vm982, %v1954, 0.0
        %1956 = vadd.xlane.f32.xlu0 %v1955
        %v1957 = vpop.xlane.xlu0 %1956
        %v1958 = vmul.f32 %v1957, %v1389
        %v1959 = vsub.f32 %v1954, %v1958
        %v1960 = vmul.f32 %v1959, %v1959
        %v1961 = vsel %vm982, %v1960, 0.0
        %1962 = vadd.xlane.f32.xlu0 %v1961
        %v1963 = vpop.xlane.xlu0 %1962
        %v1964 = vmul.f32 %v1963, %v1389
        %v1965 = vadd.f32 %v1964, 1e-05
        %v1966 = vrsqrt.pop %v1965
        %v1967 = vmul.f32 %v1966, %v1965
        %v1968 = vmul.f32 %v1967, %v1966
        %v1969 = vmul.f32 0.5, %v1968
        %v1970 = vsub.f32 1.5, %v1969
        %v1971 = vmul.f32 %v1966, %v1970
        %vm1972 = vweird.f32 %v1965
        %vm1973 = vweird.f32 %v1966
        %vm1974 = vmor %vm1972, %vm1973
        %v1975 = vsel %vm1974, %v1966, %v1971
        %v1976 = vmul.f32 %v1959, %v1975
        %v1978 = vperm.slane %v1952, 0
        %v1980 = vmul.f32 %v1976, %v1978
        %v1982 = vperm.slane %v1953, 0
        %v1984 = vadd.f32 %v1980, %v1982
        %1985 = vst.msk [vmem:[%s969] sm:$0xff] %vm982, %v1984
        %p1986 = scmp.lt.s32.totalorder %s42, 1
        %s1987 = scalar_select %p1986, %s42, 1
        %s1988 = smul.addr %s1987, 8
        %s1989 = scalar_lea.vmem %s24, %s1988
        // Predicated region
        $region169: #{transformer_forward.8} parent=115 // pred_check
          %p1990 = pneg %p584
        $region170: #{transformer_forward.8} parent=115 // pred_check_branch
          %1992 = sbr.rel (%p1990) target = $region172
        $region171: #{transformer_forward.8} parent=115 // pred_region
          _
        $region172: #{transformer_forward.8} parent=115 // pred_fallthru
          _
      $region116: #{transformer_forward.8} parent=5 // pred_fallthru
        _
      %p1993 = scmp.le.s32.totalorder 2, %s37
      // Predicated region
      $region173: #{transformer_forward.8} parent=5 // pred_check
        %p1994 = pneg %p1993
      $region174: #{transformer_forward.8} parent=5 // pred_check_branch
        %1996 = sbr.rel (%p1994) target = $region176
      $region175: #{transformer_forward.8} parent=5 // pred_region
        %s1997 = ssub.s32 %s37, 2
        // Predicated region
        $region177: #{transformer_forward.8} parent=175 // pred_check
          %p1998 = pneg %p590
        $region178: #{transformer_forward.8} parent=175 // pred_check_branch
          %2000 = sbr.rel (%p1998) target = $region180
        $region179: #{transformer_forward.8} parent=175 // pred_region
          %p2001 = scmp.lt.s32.totalorder %s43, 1
          %s2002 = scalar_select %p2001, %s43, 1
          %s2003 = smul.addr %s2002, 8
          %s2004 = scalar_lea.vmem %s24, %s2003
        $region180: #{transformer_forward.8} parent=175 // pred_fallthru
          _
      $region176: #{transformer_forward.8} parent=5 // pred_fallthru
        _
    $region6: #{transformer_forward.8} parent=1 // loop_footer
      %s41 = sadd.s32 1, %s37
    $region7: #{transformer_forward.8} parent=1 // loop_footer_branch
      %36 = sbr.rel target = $region3
    $region8: #{transformer_forward.8} parent=1 // loop_exit
      _
    %2005 = vsyncpa [#allocation3], 1
    %s2006 = scalar_lea.sflag [#allocation3], 1
    %2007 = vsyncpa %s2006, 1
    %2008 = vsyncpa [#allocation5], 1
    %2009 = vsyncpa [#allocation8], 1
    %2010 = vsyncpa [#allocation11], 1
    %2011 = vsyncpa [#allocation14], 1
    %2012 = vsyncpa [#allocation17], 1
    %2013 = vsyncpa [#allocation20], 1

// kernel: transformer_forward.7
$region0: #{transformer_forward.7}
  #allocation0 [shape = 'u32[]', space=smem, size = 0x4, offset = 0x4, fixed_abs, tag = 'smem constant byte address 0x4 - core index']
  #allocation1 [shape = 'u32[72,128]{1,0:T(1,128)}', space=vmem, size = 0x9000, scoped, tag = 'internal scratch']
  %s0 = inlined_call_operand.vmem [shape: f32[2,8,32], index: 0, kind: input, shape index: {}]
  %s1 = inlined_call_operand.vmem [shape: f32[2,8,32], index: 1, kind: input, shape index: {}]
  %s2 = inlined_call_operand.vmem [shape: f32[2,8,8], index: 2, kind: input, shape index: {}]
  %s3 = inlined_call_operand.vmem [shape: f32[2,1,8], index: 3, kind: input, shape index: {}]
  %s4 = inlined_call_operand.vmem [shape: f32[32,96], index: 4, kind: input, shape index: {}]
  %s5 = inlined_call_operand.vmem [shape: f32[1,96], index: 5, kind: input, shape index: {}]
  %s6 = inlined_call_operand.vmem [shape: f32[4,8,32], index: 6, kind: input, shape index: {}]
  %s7 = inlined_call_operand.vmem [shape: f32[1,32], index: 7, kind: input, shape index: {}]
  %s8 = inlined_call_operand.vmem [shape: f32[1,32], index: 8, kind: input, shape index: {}]
  %s9 = inlined_call_operand.vmem [shape: f32[1,32], index: 9, kind: input, shape index: {}]
  %s10 = inlined_call_operand.vmem [shape: f32[32,32], index: 10, kind: input, shape index: {}]
  %s11 = inlined_call_operand.vmem [shape: f32[1,32], index: 11, kind: input, shape index: {}]
  %s12 = inlined_call_operand.vmem [shape: f32[32,64], index: 12, kind: input, shape index: {}]
  %s13 = inlined_call_operand.vmem [shape: f32[1,64], index: 13, kind: input, shape index: {}]
  %s14 = inlined_call_operand.vmem [shape: f32[4,8,32], index: 14, kind: input, shape index: {}]
  %s15 = inlined_call_operand.vmem [shape: f32[1,32], index: 15, kind: input, shape index: {}]
  %s16 = inlined_call_operand.hbm [shape: f32[1,32], index: 16, kind: input, shape index: {}]
  %s17 = inlined_call_operand.hbm [shape: f32[1,32], index: 17, kind: input, shape index: {}]
  %s18 = inlined_call_operand.vmem [shape: f32[32,64], index: 18, kind: input, shape index: {}]
  %s19 = inlined_call_operand.hbm [shape: f32[1,64], index: 19, kind: input, shape index: {}]
  %s20 = inlined_call_operand.vmem [shape: f32[64,32], index: 20, kind: input, shape index: {}]
  %s21 = inlined_call_operand.hbm [shape: f32[1,32], index: 21, kind: input, shape index: {}]
  %s22 = inlined_call_operand.hbm [shape: f32[1,32], index: 22, kind: input, shape index: {}]
  %s23 = inlined_call_operand.hbm [shape: f32[1,32], index: 23, kind: input, shape index: {}]
  %s24 = inlined_call_operand.vmem [shape: f32[2,8,32], index: 24, kind: output, shape index: {}]
  %s25 = sld [smem:[#allocation0]]
  $region153: #{transformer_forward.7} parent=0
    _
  %s27 = ssub.s32 1, %s25
  %s28 = scalar_select 0, %s27, %s25
  $region1: #{transformer_forward.7} parent=0
    #allocation2 [shape = 'u8[512]{0}', space=vmem, size = 0x400, scoped, tag = 'input window, operand 16, single buffered']
    #allocation3 [shape = 's32[2]{0}', space=sflag, size = 0x8, scoped, tag = 'scoped memory for transformer_forward.7']
    #allocation4 [shape = 'u8[512]{0}', space=vmem, size = 0x400, scoped, tag = 'input window, operand 17, single buffered']
    #allocation5 [shape = 's32[1]{0}', space=sflag, size = 0x4, scoped, tag = 'scoped memory for transformer_forward.7']
    #allocation6 [shape = 'u8[512]{0}', space=vmem, size = 0x400, scoped, tag = 'input window, operand 19, single buffered']
    #allocation7 [shape = 'u8[512]{0}', space=vmem, size = 0x400, scoped, tag = 'input window, operand 21, single buffered']
    #allocation8 [shape = 's32[1]{0}', space=sflag, size = 0x4, scoped, tag = 'scoped memory for transformer_forward.7']
    #allocation9 [shape = 'u8[512]{0}', space=vmem, size = 0x400, scoped, tag = 'input window, operand 22, single buffered']
    #allocation10 [shape = 'u8[512]{0}', space=vmem, size = 0x400, scoped, tag = 'input window, operand 23, single buffered']
    #allocation11 [shape = 's32[1]{0}', space=sflag, size = 0x4, scoped, tag = 'scoped memory for transformer_forward.7']
    %29 = vsyncpa [#allocation3], 0
    %30 = vsyncpa [#allocation5], 0
    %31 = vsyncpa [#allocation8], 0
    %32 = vsyncpa [#allocation11], 0
    loop: start=0, step=1, limit=4
    $region2: #{transformer_forward.7} parent=1 // loop_pre_header
      _
    $region3: #{transformer_forward.7} parent=1 // loop_header
      %s34 = sphi 0, %s38
      %p35 = scmp.ge.s32.totalorder %s34, 4
      %s44 = sphi 0, %s46
      %s47 = sphi 0, %s44
      %s48 = sphi 0, %s47
      %s64 = sphi 0, %s48
      %s70 = sphi 0, %s72
      %s73 = sphi 0, %s70
      %s74 = sphi 0, %s73
      %s90 = sphi 0, %s74
      %s96 = sphi 0, %s98
      %s99 = sphi 0, %s96
      %s100 = sphi 0, %s99
      %s116 = sphi 0, %s100
      %s122 = sphi 0, %s124
      %s125 = sphi 0, %s122
      %s126 = sphi 0, %s125
      %s142 = sphi 0, %s126
      %s146 = sphi 0, %s146
      %s148 = sphi 0, %s146
      %s149 = sphi 0, %s148
      %s163 = sphi 0, %s149
      %s167 = sphi 0, %s167
      %s169 = sphi 0, %s167
      %s170 = sphi 0, %s169
      %s184 = sphi 0, %s170
      %s188 = sphi 0, %s188
      %s190 = sphi 0, %s188
      %s191 = sphi 0, %s190
      %s205 = sphi 0, %s191
      %s209 = sphi 0, %s209
      %s211 = sphi 0, %s209
      %s212 = sphi 0, %s211
      %s226 = sphi 0, %s212
      %s230 = sphi 0, %s230
      %s232 = sphi 0, %s230
      %s233 = sphi 0, %s232
      %s247 = sphi 0, %s233
      %s251 = sphi 0, %s251
      %s253 = sphi 0, %s251
      %s254 = sphi 0, %s253
      %s268 = sphi 0, %s254
      %s272 = sphi 0, %s272
      %s274 = sphi 0, %s272
      %s275 = sphi 0, %s274
      %s289 = sphi 0, %s275
      %s293 = sphi 0, %s293
      %s295 = sphi 0, %s293
      %s296 = sphi 0, %s295
      %s310 = sphi 0, %s296
      %s314 = sphi 0, %s314
      %s316 = sphi 0, %s314
      %s317 = sphi 0, %s316
      %s331 = sphi 0, %s317
      %s335 = sphi 0, %s335
      %s337 = sphi 0, %s335
      %s338 = sphi 0, %s337
      %s352 = sphi 0, %s338
      %s356 = sphi 0, %s356
      %s358 = sphi 0, %s356
      %s359 = sphi 0, %s358
      %s373 = sphi 0, %s359
      %s377 = sphi 0, %s377
      %s379 = sphi 0, %s377
      %s380 = sphi 0, %s379
      %s394 = sphi 0, %s380
      %s398 = sphi 0, %s398
      %s400 = sphi 0, %s398
      %s401 = sphi 0, %s400
      %s415 = sphi 0, %s401
      %s419 = sphi 0, %s419
      %s421 = sphi 0, %s419
      %s422 = sphi 0, %s421
      %s436 = sphi 0, %s422
      %s440 = sphi 0, %s440
      %s442 = sphi 0, %s440
      %s443 = sphi 0, %s442
      %s457 = sphi 0, %s443
      %s461 = sphi 0, %s461
      %s463 = sphi 0, %s461
      %s464 = sphi 0, %s463
      %s478 = sphi 0, %s464
      %s482 = sphi 0, %s482
      %s484 = sphi 0, %s482
      %s485 = sphi 0, %s484
      %s499 = sphi 0, %s485
      %s503 = sphi 0, %s503
      %s505 = sphi 0, %s503
      %s506 = sphi 0, %s505
      %s520 = sphi 0, %s506
      %s524 = sphi 0, %s524
      %s526 = sphi 0, %s524
      %s527 = sphi 0, %s526
      %s541 = sphi 0, %s527
      %s545 = sphi 0, %s545
      %s547 = sphi 0, %s545
      %s548 = sphi 0, %s547
      %s562 = sphi 0, %s548
      %s568 = sphi 0, %s570
      %s571 = sphi 0, %s568
      %s572 = sphi 0, %s571
      %s588 = sphi 0, %s572
    $region4: #{transformer_forward.7} parent=1 // loop_header_branch
      %37 = sbr.rel (%p35) target = $region8
    $region5: #{transformer_forward.7} parent=1 // loop_body
      %s39 = ssub.s32 %s34, 1
      %s40 = ssub.s32 %s34, 2
      %s41 = sadd.s32 %s34, 1
      %s42 = ssub.s32 %s34, %s41
      %p43 = scmp.eq.s32.totalorder %s42, 0
      %s45 = sadd.s32 %s44, 1
      %s46 = scalar_select %p43, %s44, %s45
      %p49 = pneg %p43
      %p50 = scmp.eq.s32.totalorder %s34, 1
      %p51 = por %p49, %p50
      %p52 = scmp.ne.s32.totalorder %s44, %s47
      %p53 = scmp.eq.s32.totalorder %s34, 0
      %p54 = por %p52, %p53
      %p55 = scmp.ne.s32.totalorder %s44, %s47
      %p56 = scmp.eq.s32.totalorder %s39, 1
      %p57 = por %p55, %p56
      %p58 = scmp.ne.s32.totalorder %s47, %s48
      %p59 = scmp.eq.s32.totalorder %s39, 0
      %p60 = por %p58, %p59
      %p61 = scmp.ne.s32.totalorder %s47, %s48
      %p62 = scmp.eq.s32.totalorder %s40, 1
      %p63 = por %p61, %p62
      %p65 = scmp.ne.s32.totalorder %s48, %s64
      %p66 = scmp.eq.s32.totalorder %s40, 0
      %p67 = por %p65, %p66
      %s68 = ssub.s32 %s34, %s41
      %p69 = scmp.eq.s32.totalorder %s68, 0
      %s71 = sadd.s32 %s70, 1
      %s72 = scalar_select %p69, %s70, %s71
      %p75 = pneg %p69
      %p76 = scmp.eq.s32.totalorder %s34, 1
      %p77 = por %p75, %p76
      %p78 = scmp.ne.s32.totalorder %s70, %s73
      %p79 = scmp.eq.s32.totalorder %s34, 0
      %p80 = por %p78, %p79
      %p81 = scmp.ne.s32.totalorder %s70, %s73
      %p82 = scmp.eq.s32.totalorder %s39, 1
      %p83 = por %p81, %p82
      %p84 = scmp.ne.s32.totalorder %s73, %s74
      %p85 = scmp.eq.s32.totalorder %s39, 0
      %p86 = por %p84, %p85
      %p87 = scmp.ne.s32.totalorder %s73, %s74
      %p88 = scmp.eq.s32.totalorder %s40, 1
      %p89 = por %p87, %p88
      %p91 = scmp.ne.s32.totalorder %s74, %s90
      %p92 = scmp.eq.s32.totalorder %s40, 0
      %p93 = por %p91, %p92
      %s94 = ssub.s32 %s34, %s41
      %p95 = scmp.eq.s32.totalorder %s94, 0
      %s97 = sadd.s32 %s96, 1
      %s98 = scalar_select %p95, %s96, %s97
      %p101 = pneg %p95
      %p102 = scmp.eq.s32.totalorder %s34, 1
      %p103 = por %p101, %p102
      %p104 = scmp.ne.s32.totalorder %s96, %s99
      %p105 = scmp.eq.s32.totalorder %s34, 0
      %p106 = por %p104, %p105
      %p107 = scmp.ne.s32.totalorder %s96, %s99
      %p108 = scmp.eq.s32.totalorder %s39, 1
      %p109 = por %p107, %p108
      %p110 = scmp.ne.s32.totalorder %s99, %s100
      %p111 = scmp.eq.s32.totalorder %s39, 0
      %p112 = por %p110, %p111
      %p113 = scmp.ne.s32.totalorder %s99, %s100
      %p114 = scmp.eq.s32.totalorder %s40, 1
      %p115 = por %p113, %p114
      %p117 = scmp.ne.s32.totalorder %s100, %s116
      %p118 = scmp.eq.s32.totalorder %s40, 0
      %p119 = por %p117, %p118
      %s120 = ssub.s32 %s34, %s41
      %p121 = scmp.eq.s32.totalorder %s120, 0
      %s123 = sadd.s32 %s122, 1
      %s124 = scalar_select %p121, %s122, %s123
      %p127 = pneg %p121
      %p128 = scmp.eq.s32.totalorder %s34, 1
      %p129 = por %p127, %p128
      %p130 = scmp.ne.s32.totalorder %s122, %s125
      %p131 = scmp.eq.s32.totalorder %s34, 0
      %p132 = por %p130, %p131
      %p133 = scmp.ne.s32.totalorder %s122, %s125
      %p134 = scmp.eq.s32.totalorder %s39, 1
      %p135 = por %p133, %p134
      %p136 = scmp.ne.s32.totalorder %s125, %s126
      %p137 = scmp.eq.s32.totalorder %s39, 0
      %p138 = por %p136, %p137
      %p139 = scmp.ne.s32.totalorder %s125, %s126
      %p140 = scmp.eq.s32.totalorder %s40, 1
      %p141 = por %p139, %p140
      %p143 = scmp.ne.s32.totalorder %s126, %s142
      %p144 = scmp.eq.s32.totalorder %s40, 0
      %p145 = por %p143, %p144
      %s147 = sadd.s32 %s146, 1
      %p150 = scmp.eq.s32.totalorder %s34, 1
      %p151 = scmp.ne.s32.totalorder %s146, %s148
      %p152 = scmp.eq.s32.totalorder %s34, 0
      %p153 = por %p151, %p152
      %p154 = scmp.ne.s32.totalorder %s146, %s148
      %p155 = scmp.eq.s32.totalorder %s39, 1
      %p156 = por %p154, %p155
      %p157 = scmp.ne.s32.totalorder %s148, %s149
      %p158 = scmp.eq.s32.totalorder %s39, 0
      %p159 = por %p157, %p158
      %p160 = scmp.ne.s32.totalorder %s148, %s149
      %p161 = scmp.eq.s32.totalorder %s40, 1
      %p162 = por %p160, %p161
      %p164 = scmp.ne.s32.totalorder %s149, %s163
      %p165 = scmp.eq.s32.totalorder %s40, 0
      %p166 = por %p164, %p165
      %s168 = sadd.s32 %s167, 1
      %p171 = scmp.eq.s32.totalorder %s34, 1
      %p172 = scmp.ne.s32.totalorder %s167, %s169
      %p173 = scmp.eq.s32.totalorder %s34, 0
      %p174 = por %p172, %p173
      %p175 = scmp.ne.s32.totalorder %s167, %s169
      %p176 = scmp.eq.s32.totalorder %s39, 1
      %p177 = por %p175, %p176
      %p178 = scmp.ne.s32.totalorder %s169, %s170
      %p179 = scmp.eq.s32.totalorder %s39, 0
      %p180 = por %p178, %p179
      %p181 = scmp.ne.s32.totalorder %s169, %s170
      %p182 = scmp.eq.s32.totalorder %s40, 1
      %p183 = por %p181, %p182
      %p185 = scmp.ne.s32.totalorder %s170, %s184
      %p186 = scmp.eq.s32.totalorder %s40, 0
      %p187 = por %p185, %p186
      %s189 = sadd.s32 %s188, 1
      %p192 = scmp.eq.s32.totalorder %s34, 1
      %p193 = scmp.ne.s32.totalorder %s188, %s190
      %p194 = scmp.eq.s32.totalorder %s34, 0
      %p195 = por %p193, %p194
      %p196 = scmp.ne.s32.totalorder %s188, %s190
      %p197 = scmp.eq.s32.totalorder %s39, 1
      %p198 = por %p196, %p197
      %p199 = scmp.ne.s32.totalorder %s190, %s191
      %p200 = scmp.eq.s32.totalorder %s39, 0
      %p201 = por %p199, %p200
      %p202 = scmp.ne.s32.totalorder %s190, %s191
      %p203 = scmp.eq.s32.totalorder %s40, 1
      %p204 = por %p202, %p203
      %p206 = scmp.ne.s32.totalorder %s191, %s205
      %p207 = scmp.eq.s32.totalorder %s40, 0
      %p208 = por %p206, %p207
      %s210 = sadd.s32 %s209, 1
      %p213 = scmp.eq.s32.totalorder %s34, 1
      %p214 = scmp.ne.s32.totalorder %s209, %s211
      %p215 = scmp.eq.s32.totalorder %s34, 0
      %p216 = por %p214, %p215
      %p217 = scmp.ne.s32.totalorder %s209, %s211
      %p218 = scmp.eq.s32.totalorder %s39, 1
      %p219 = por %p217, %p218
      %p220 = scmp.ne.s32.totalorder %s211, %s212
      %p221 = scmp.eq.s32.totalorder %s39, 0
      %p222 = por %p220, %p221
      %p223 = scmp.ne.s32.totalorder %s211, %s212
      %p224 = scmp.eq.s32.totalorder %s40, 1
      %p225 = por %p223, %p224
      %p227 = scmp.ne.s32.totalorder %s212, %s226
      %p228 = scmp.eq.s32.totalorder %s40, 0
      %p229 = por %p227, %p228
      %s231 = sadd.s32 %s230, 1
      %p234 = scmp.eq.s32.totalorder %s34, 1
      %p235 = scmp.ne.s32.totalorder %s230, %s232
      %p236 = scmp.eq.s32.totalorder %s34, 0
      %p237 = por %p235, %p236
      %p238 = scmp.ne.s32.totalorder %s230, %s232
      %p239 = scmp.eq.s32.totalorder %s39, 1
      %p240 = por %p238, %p239
      %p241 = scmp.ne.s32.totalorder %s232, %s233
      %p242 = scmp.eq.s32.totalorder %s39, 0
      %p243 = por %p241, %p242
      %p244 = scmp.ne.s32.totalorder %s232, %s233
      %p245 = scmp.eq.s32.totalorder %s40, 1
      %p246 = por %p244, %p245
      %p248 = scmp.ne.s32.totalorder %s233, %s247
      %p249 = scmp.eq.s32.totalorder %s40, 0
      %p250 = por %p248, %p249
      %s252 = sadd.s32 %s251, 1
      %p255 = scmp.eq.s32.totalorder %s34, 1
      %p256 = scmp.ne.s32.totalorder %s251, %s253
      %p257 = scmp.eq.s32.totalorder %s34, 0
      %p258 = por %p256, %p257
      %p259 = scmp.ne.s32.totalorder %s251, %s253
      %p260 = scmp.eq.s32.totalorder %s39, 1
      %p261 = por %p259, %p260
      %p262 = scmp.ne.s32.totalorder %s253, %s254
      %p263 = scmp.eq.s32.totalorder %s39, 0
      %p264 = por %p262, %p263
      %p265 = scmp.ne.s32.totalorder %s253, %s254
      %p266 = scmp.eq.s32.totalorder %s40, 1
      %p267 = por %p265, %p266
      %p269 = scmp.ne.s32.totalorder %s254, %s268
      %p270 = scmp.eq.s32.totalorder %s40, 0
      %p271 = por %p269, %p270
      %s273 = sadd.s32 %s272, 1
      %p276 = scmp.eq.s32.totalorder %s34, 1
      %p277 = scmp.ne.s32.totalorder %s272, %s274
      %p278 = scmp.eq.s32.totalorder %s34, 0
      %p279 = por %p277, %p278
      %p280 = scmp.ne.s32.totalorder %s272, %s274
      %p281 = scmp.eq.s32.totalorder %s39, 1
      %p282 = por %p280, %p281
      %p283 = scmp.ne.s32.totalorder %s274, %s275
      %p284 = scmp.eq.s32.totalorder %s39, 0
      %p285 = por %p283, %p284
      %p286 = scmp.ne.s32.totalorder %s274, %s275
      %p287 = scmp.eq.s32.totalorder %s40, 1
      %p288 = por %p286, %p287
      %p290 = scmp.ne.s32.totalorder %s275, %s289
      %p291 = scmp.eq.s32.totalorder %s40, 0
      %p292 = por %p290, %p291
      %s294 = sadd.s32 %s293, 1
      %p297 = scmp.eq.s32.totalorder %s34, 1
      %p298 = scmp.ne.s32.totalorder %s293, %s295
      %p299 = scmp.eq.s32.totalorder %s34, 0
      %p300 = por %p298, %p299
      %p301 = scmp.ne.s32.totalorder %s293, %s295
      %p302 = scmp.eq.s32.totalorder %s39, 1
      %p303 = por %p301, %p302
      %p304 = scmp.ne.s32.totalorder %s295, %s296
      %p305 = scmp.eq.s32.totalorder %s39, 0
      %p306 = por %p304, %p305
      %p307 = scmp.ne.s32.totalorder %s295, %s296
      %p308 = scmp.eq.s32.totalorder %s40, 1
      %p309 = por %p307, %p308
      %p311 = scmp.ne.s32.totalorder %s296, %s310
      %p312 = scmp.eq.s32.totalorder %s40, 0
      %p313 = por %p311, %p312
      %s315 = sadd.s32 %s314, 1
      %p318 = scmp.eq.s32.totalorder %s34, 1
      %p319 = scmp.ne.s32.totalorder %s314, %s316
      %p320 = scmp.eq.s32.totalorder %s34, 0
      %p321 = por %p319, %p320
      %p322 = scmp.ne.s32.totalorder %s314, %s316
      %p323 = scmp.eq.s32.totalorder %s39, 1
      %p324 = por %p322, %p323
      %p325 = scmp.ne.s32.totalorder %s316, %s317
      %p326 = scmp.eq.s32.totalorder %s39, 0
      %p327 = por %p325, %p326
      %p328 = scmp.ne.s32.totalorder %s316, %s317
      %p329 = scmp.eq.s32.totalorder %s40, 1
      %p330 = por %p328, %p329
      %p332 = scmp.ne.s32.totalorder %s317, %s331
      %p333 = scmp.eq.s32.totalorder %s40, 0
      %p334 = por %p332, %p333
      %s336 = sadd.s32 %s335, 1
      %p339 = scmp.eq.s32.totalorder %s34, 1
      %p340 = scmp.ne.s32.totalorder %s335, %s337
      %p341 = scmp.eq.s32.totalorder %s34, 0
      %p342 = por %p340, %p341
      %p343 = scmp.ne.s32.totalorder %s335, %s337
      %p344 = scmp.eq.s32.totalorder %s39, 1
      %p345 = por %p343, %p344
      %p346 = scmp.ne.s32.totalorder %s337, %s338
      %p347 = scmp.eq.s32.totalorder %s39, 0
      %p348 = por %p346, %p347
      %p349 = scmp.ne.s32.totalorder %s337, %s338
      %p350 = scmp.eq.s32.totalorder %s40, 1
      %p351 = por %p349, %p350
      %p353 = scmp.ne.s32.totalorder %s338, %s352
      %p354 = scmp.eq.s32.totalorder %s40, 0
      %p355 = por %p353, %p354
      %s357 = sadd.s32 %s356, 1
      %p360 = scmp.eq.s32.totalorder %s34, 1
      %p361 = scmp.ne.s32.totalorder %s356, %s358
      %p362 = scmp.eq.s32.totalorder %s34, 0
      %p363 = por %p361, %p362
      %p364 = scmp.ne.s32.totalorder %s356, %s358
      %p365 = scmp.eq.s32.totalorder %s39, 1
      %p366 = por %p364, %p365
      %p367 = scmp.ne.s32.totalorder %s358, %s359
      %p368 = scmp.eq.s32.totalorder %s39, 0
      %p369 = por %p367, %p368
      %p370 = scmp.ne.s32.totalorder %s358, %s359
      %p371 = scmp.eq.s32.totalorder %s40, 1
      %p372 = por %p370, %p371
      %p374 = scmp.ne.s32.totalorder %s359, %s373
      %p375 = scmp.eq.s32.totalorder %s40, 0
      %p376 = por %p374, %p375
      %s378 = sadd.s32 %s377, 1
      %p381 = scmp.eq.s32.totalorder %s34, 1
      %p382 = scmp.ne.s32.totalorder %s377, %s379
      %p383 = scmp.eq.s32.totalorder %s34, 0
      %p384 = por %p382, %p383
      %p385 = scmp.ne.s32.totalorder %s377, %s379
      %p386 = scmp.eq.s32.totalorder %s39, 1
      %p387 = por %p385, %p386
      %p388 = scmp.ne.s32.totalorder %s379, %s380
      %p389 = scmp.eq.s32.totalorder %s39, 0
      %p390 = por %p388, %p389
      %p391 = scmp.ne.s32.totalorder %s379, %s380
      %p392 = scmp.eq.s32.totalorder %s40, 1
      %p393 = por %p391, %p392
      %p395 = scmp.ne.s32.totalorder %s380, %s394
      %p396 = scmp.eq.s32.totalorder %s40, 0
      %p397 = por %p395, %p396
      %s399 = sadd.s32 %s398, 1
      %p402 = scmp.eq.s32.totalorder %s34, 1
      %p403 = scmp.ne.s32.totalorder %s398, %s400
      %p404 = scmp.eq.s32.totalorder %s34, 0
      %p405 = por %p403, %p404
      %p406 = scmp.ne.s32.totalorder %s398, %s400
      %p407 = scmp.eq.s32.totalorder %s39, 1
      %p408 = por %p406, %p407
      %p409 = scmp.ne.s32.totalorder %s400, %s401
      %p410 = scmp.eq.s32.totalorder %s39, 0
      %p411 = por %p409, %p410
      %p412 = scmp.ne.s32.totalorder %s400, %s401
      %p413 = scmp.eq.s32.totalorder %s40, 1
      %p414 = por %p412, %p413
      %p416 = scmp.ne.s32.totalorder %s401, %s415
      %p417 = scmp.eq.s32.totalorder %s40, 0
      %p418 = por %p416, %p417
      %s420 = sadd.s32 %s419, 1
      %p423 = scmp.eq.s32.totalorder %s34, 1
      %p424 = scmp.ne.s32.totalorder %s419, %s421
      %p425 = scmp.eq.s32.totalorder %s34, 0
      %p426 = por %p424, %p425
      %p427 = scmp.ne.s32.totalorder %s419, %s421
      %p428 = scmp.eq.s32.totalorder %s39, 1
      %p429 = por %p427, %p428
      %p430 = scmp.ne.s32.totalorder %s421, %s422
      %p431 = scmp.eq.s32.totalorder %s39, 0
      %p432 = por %p430, %p431
      %p433 = scmp.ne.s32.totalorder %s421, %s422
      %p434 = scmp.eq.s32.totalorder %s40, 1
      %p435 = por %p433, %p434
      %p437 = scmp.ne.s32.totalorder %s422, %s436
      %p438 = scmp.eq.s32.totalorder %s40, 0
      %p439 = por %p437, %p438
      %s441 = sadd.s32 %s440, 1
      %p444 = scmp.eq.s32.totalorder %s34, 1
      %p445 = scmp.ne.s32.totalorder %s440, %s442
      %p446 = scmp.eq.s32.totalorder %s34, 0
      %p447 = por %p445, %p446
      %p448 = scmp.ne.s32.totalorder %s440, %s442
      %p449 = scmp.eq.s32.totalorder %s39, 1
      %p450 = por %p448, %p449
      %p451 = scmp.ne.s32.totalorder %s442, %s443
      %p452 = scmp.eq.s32.totalorder %s39, 0
      %p453 = por %p451, %p452
      %p454 = scmp.ne.s32.totalorder %s442, %s443
      %p455 = scmp.eq.s32.totalorder %s40, 1
      %p456 = por %p454, %p455
      %p458 = scmp.ne.s32.totalorder %s443, %s457
      %p459 = scmp.eq.s32.totalorder %s40, 0
      %p460 = por %p458, %p459
      %s462 = sadd.s32 %s461, 1
      %p465 = scmp.eq.s32.totalorder %s34, 1
      %p466 = scmp.ne.s32.totalorder %s461, %s463
      %p467 = scmp.eq.s32.totalorder %s34, 0
      %p468 = por %p466, %p467
      %p469 = scmp.ne.s32.totalorder %s461, %s463
      %p470 = scmp.eq.s32.totalorder %s39, 1
      %p471 = por %p469, %p470
      %p472 = scmp.ne.s32.totalorder %s463, %s464
      %p473 = scmp.eq.s32.totalorder %s39, 0
      %p474 = por %p472, %p473
      %p475 = scmp.ne.s32.totalorder %s463, %s464
      %p476 = scmp.eq.s32.totalorder %s40, 1
      %p477 = por %p475, %p476
      %p479 = scmp.ne.s32.totalorder %s464, %s478
      %p480 = scmp.eq.s32.totalorder %s40, 0
      %p481 = por %p479, %p480
      %s483 = sadd.s32 %s482, 1
      %p486 = scmp.eq.s32.totalorder %s34, 1
      %p487 = scmp.ne.s32.totalorder %s482, %s484
      %p488 = scmp.eq.s32.totalorder %s34, 0
      %p489 = por %p487, %p488
      %p490 = scmp.ne.s32.totalorder %s482, %s484
      %p491 = scmp.eq.s32.totalorder %s39, 1
      %p492 = por %p490, %p491
      %p493 = scmp.ne.s32.totalorder %s484, %s485
      %p494 = scmp.eq.s32.totalorder %s39, 0
      %p495 = por %p493, %p494
      %p496 = scmp.ne.s32.totalorder %s484, %s485
      %p497 = scmp.eq.s32.totalorder %s40, 1
      %p498 = por %p496, %p497
      %p500 = scmp.ne.s32.totalorder %s485, %s499
      %p501 = scmp.eq.s32.totalorder %s40, 0
      %p502 = por %p500, %p501
      %s504 = sadd.s32 %s503, 1
      %p507 = scmp.eq.s32.totalorder %s34, 1
      %p508 = scmp.ne.s32.totalorder %s503, %s505
      %p509 = scmp.eq.s32.totalorder %s34, 0
      %p510 = por %p508, %p509
      %p511 = scmp.ne.s32.totalorder %s503, %s505
      %p512 = scmp.eq.s32.totalorder %s39, 1
      %p513 = por %p511, %p512
      %p514 = scmp.ne.s32.totalorder %s505, %s506
      %p515 = scmp.eq.s32.totalorder %s39, 0
      %p516 = por %p514, %p515
      %p517 = scmp.ne.s32.totalorder %s505, %s506
      %p518 = scmp.eq.s32.totalorder %s40, 1
      %p519 = por %p517, %p518
      %p521 = scmp.ne.s32.totalorder %s506, %s520
      %p522 = scmp.eq.s32.totalorder %s40, 0
      %p523 = por %p521, %p522
      %s525 = sadd.s32 %s524, 1
      %p528 = scmp.eq.s32.totalorder %s34, 1
      %p529 = scmp.ne.s32.totalorder %s524, %s526
      %p530 = scmp.eq.s32.totalorder %s34, 0
      %p531 = por %p529, %p530
      %p532 = scmp.ne.s32.totalorder %s524, %s526
      %p533 = scmp.eq.s32.totalorder %s39, 1
      %p534 = por %p532, %p533
      %p535 = scmp.ne.s32.totalorder %s526, %s527
      %p536 = scmp.eq.s32.totalorder %s39, 0
      %p537 = por %p535, %p536
      %p538 = scmp.ne.s32.totalorder %s526, %s527
      %p539 = scmp.eq.s32.totalorder %s40, 1
      %p540 = por %p538, %p539
      %p542 = scmp.ne.s32.totalorder %s527, %s541
      %p543 = scmp.eq.s32.totalorder %s40, 0
      %p544 = por %p542, %p543
      %s546 = sadd.s32 %s545, 1
      %p549 = scmp.eq.s32.totalorder %s34, 1
      %p550 = scmp.ne.s32.totalorder %s545, %s547
      %p551 = scmp.eq.s32.totalorder %s34, 0
      %p552 = por %p550, %p551
      %p553 = scmp.ne.s32.totalorder %s545, %s547
      %p554 = scmp.eq.s32.totalorder %s39, 1
      %p555 = por %p553, %p554
      %p556 = scmp.ne.s32.totalorder %s547, %s548
      %p557 = scmp.eq.s32.totalorder %s39, 0
      %p558 = por %p556, %p557
      %p559 = scmp.ne.s32.totalorder %s547, %s548
      %p560 = scmp.eq.s32.totalorder %s40, 1
      %p561 = por %p559, %p560
      %p563 = scmp.ne.s32.totalorder %s548, %s562
      %p564 = scmp.eq.s32.totalorder %s40, 0
      %p565 = por %p563, %p564
      %s566 = ssub.s32 %s34, %s41
      %p567 = scmp.eq.s32.totalorder %s566, 0
      %s569 = sadd.s32 %s568, 1
      %s570 = scalar_select %p567, %s568, %s569
      %p573 = pneg %p567
      %p574 = scmp.eq.s32.totalorder %s34, 1
      %p575 = por %p573, %p574
      %p576 = scmp.ne.s32.totalorder %s568, %s571
      %p577 = scmp.eq.s32.totalorder %s34, 0
      %p578 = por %p576, %p577
      %p579 = scmp.ne.s32.totalorder %s568, %s571
      %p580 = scmp.eq.s32.totalorder %s39, 1
      %p581 = por %p579, %p580
      %p582 = scmp.ne.s32.totalorder %s571, %s572
      %p583 = scmp.eq.s32.totalorder %s39, 0
      %p584 = por %p582, %p583
      %p585 = scmp.ne.s32.totalorder %s571, %s572
      %p586 = scmp.eq.s32.totalorder %s40, 1
      %p587 = por %p585, %p586
      %p589 = scmp.ne.s32.totalorder %s572, %s588
      %p590 = scmp.eq.s32.totalorder %s40, 0
      %p591 = por %p589, %p590
      %p592 = scmp.le.s32.totalorder 1, %s34
      %p593 = scmp.lt.s32.totalorder %s34, 3
      %p594 = pnand %p592, %p593
      %p595 = pneg %p594
      // Predicated region
      $region9: #{transformer_forward.7} parent=5 // pred_check
        _
      $region10: #{transformer_forward.7} parent=5 // pred_check_branch
        %597 = sbr.rel (%p594) target = $region12
      $region11: #{transformer_forward.7} parent=5 // pred_region
        %s598 = ssub.s32 %s34, 1
        // Predicated region
        $region13: #{transformer_forward.7} parent=11 // pred_check
          %p599 = pneg %p159
        $region14: #{transformer_forward.7} parent=11 // pred_check_branch
          %601 = sbr.rel (%p599) target = $region16
        $region15: #{transformer_forward.7} parent=11 // pred_region
          _
        $region16: #{transformer_forward.7} parent=11 // pred_fallthru
          _
        // Predicated region
        $region17: #{transformer_forward.7} parent=11 // pred_check
          %p602 = pneg %p180
        $region18: #{transformer_forward.7} parent=11 // pred_check_branch
          %604 = sbr.rel (%p602) target = $region20
        $region19: #{transformer_forward.7} parent=11 // pred_region
          _
        $region20: #{transformer_forward.7} parent=11 // pred_fallthru
          _
        // Predicated region
        $region21: #{transformer_forward.7} parent=11 // pred_check
          %p605 = pneg %p201
        $region22: #{transformer_forward.7} parent=11 // pred_check_branch
          %607 = sbr.rel (%p605) target = $region24
        $region23: #{transformer_forward.7} parent=11 // pred_region
          _
        $region24: #{transformer_forward.7} parent=11 // pred_fallthru
          _
        // Predicated region
        $region25: #{transformer_forward.7} parent=11 // pred_check
          %p608 = pneg %p222
        $region26: #{transformer_forward.7} parent=11 // pred_check_branch
          %610 = sbr.rel (%p608) target = $region28
        $region27: #{transformer_forward.7} parent=11 // pred_region
          _
        $region28: #{transformer_forward.7} parent=11 // pred_fallthru
          _
        // Predicated region
        $region29: #{transformer_forward.7} parent=11 // pred_check
          %p611 = pneg %p243
        $region30: #{transformer_forward.7} parent=11 // pred_check_branch
          %613 = sbr.rel (%p611) target = $region32
        $region31: #{transformer_forward.7} parent=11 // pred_region
          _
        $region32: #{transformer_forward.7} parent=11 // pred_fallthru
          _
        // Predicated region
        $region33: #{transformer_forward.7} parent=11 // pred_check
          %p614 = pneg %p264
        $region34: #{transformer_forward.7} parent=11 // pred_check_branch
          %616 = sbr.rel (%p614) target = $region36
        $region35: #{transformer_forward.7} parent=11 // pred_region
          _
        $region36: #{transformer_forward.7} parent=11 // pred_fallthru
          _
        // Predicated region
        $region37: #{transformer_forward.7} parent=11 // pred_check
          %p617 = pneg %p285
        $region38: #{transformer_forward.7} parent=11 // pred_check_branch
          %619 = sbr.rel (%p617) target = $region40
        $region39: #{transformer_forward.7} parent=11 // pred_region
          _
        $region40: #{transformer_forward.7} parent=11 // pred_fallthru
          _
        // Predicated region
        $region41: #{transformer_forward.7} parent=11 // pred_check
          %p620 = pneg %p306
        $region42: #{transformer_forward.7} parent=11 // pred_check_branch
          %622 = sbr.rel (%p620) target = $region44
        $region43: #{transformer_forward.7} parent=11 // pred_region
          _
        $region44: #{transformer_forward.7} parent=11 // pred_fallthru
          _
        // Predicated region
        $region45: #{transformer_forward.7} parent=11 // pred_check
          %p623 = pneg %p327
        $region46: #{transformer_forward.7} parent=11 // pred_check_branch
          %625 = sbr.rel (%p623) target = $region48
        $region47: #{transformer_forward.7} parent=11 // pred_region
          _
        $region48: #{transformer_forward.7} parent=11 // pred_fallthru
          _
        // Predicated region
        $region49: #{transformer_forward.7} parent=11 // pred_check
          %p626 = pneg %p348
        $region50: #{transformer_forward.7} parent=11 // pred_check_branch
          %628 = sbr.rel (%p626) target = $region52
        $region51: #{transformer_forward.7} parent=11 // pred_region
          _
        $region52: #{transformer_forward.7} parent=11 // pred_fallthru
          _
        // Predicated region
        $region53: #{transformer_forward.7} parent=11 // pred_check
          %p629 = pneg %p369
        $region54: #{transformer_forward.7} parent=11 // pred_check_branch
          %631 = sbr.rel (%p629) target = $region56
        $region55: #{transformer_forward.7} parent=11 // pred_region
          _
        $region56: #{transformer_forward.7} parent=11 // pred_fallthru
          _
        // Predicated region
        $region57: #{transformer_forward.7} parent=11 // pred_check
          %p632 = pneg %p390
        $region58: #{transformer_forward.7} parent=11 // pred_check_branch
          %634 = sbr.rel (%p632) target = $region60
        $region59: #{transformer_forward.7} parent=11 // pred_region
          _
        $region60: #{transformer_forward.7} parent=11 // pred_fallthru
          _
        // Predicated region
        $region61: #{transformer_forward.7} parent=11 // pred_check
          %p635 = pneg %p411
        $region62: #{transformer_forward.7} parent=11 // pred_check_branch
          %637 = sbr.rel (%p635) target = $region64
        $region63: #{transformer_forward.7} parent=11 // pred_region
          %639 = vsyncadd [#allocation3], 0
          %s641 = sshll.u32 %s16, 4
          %s642 = int_to_ptr.hbm [resolvable:$true] %s641
          %s643 = sshll.u32 [#allocation2], 4
          %s644 = int_to_ptr.vmem [resolvable:$true] %s643
          %646 = dma.hbm_to_vmem [thread:$0]  %s642, 16, %s644, [#allocation3]
        $region64: #{transformer_forward.7} parent=11 // pred_fallthru
          _
        // Predicated region
        $region65: #{transformer_forward.7} parent=11 // pred_check
          %p647 = pneg %p432
        $region66: #{transformer_forward.7} parent=11 // pred_check_branch
          %649 = sbr.rel (%p647) target = $region68
        $region67: #{transformer_forward.7} parent=11 // pred_region
          %651 = vsyncadd [#allocation5], 0
          %s653 = sshll.u32 %s17, 4
          %s654 = int_to_ptr.hbm [resolvable:$true] %s653
          %s655 = sshll.u32 [#allocation4], 4
          %s656 = int_to_ptr.vmem [resolvable:$true] %s655
          %658 = dma.hbm_to_vmem [thread:$0]  %s654, 16, %s656, [#allocation5]
        $region68: #{transformer_forward.7} parent=11 // pred_fallthru
          _
        // Predicated region
        $region69: #{transformer_forward.7} parent=11 // pred_check
          %p659 = pneg %p453
        $region70: #{transformer_forward.7} parent=11 // pred_check_branch
          %661 = sbr.rel (%p659) target = $region72
        $region71: #{transformer_forward.7} parent=11 // pred_region
          _
        $region72: #{transformer_forward.7} parent=11 // pred_fallthru
          _
        // Predicated region
        $region73: #{transformer_forward.7} parent=11 // pred_check
          %p662 = pneg %p474
        $region74: #{transformer_forward.7} parent=11 // pred_check_branch
          %664 = sbr.rel (%p662) target = $region76
        $region75: #{transformer_forward.7} parent=11 // pred_region
          %666 = vsyncadd [#allocation5], 0
          %s668 = sshll.u32 %s19, 4
          %s669 = int_to_ptr.hbm [resolvable:$true] %s668
          %s670 = sshll.u32 [#allocation6], 4
          %s671 = int_to_ptr.vmem [resolvable:$true] %s670
          %673 = dma.hbm_to_vmem [thread:$0]  %s669, 16, %s671, [#allocation5]
        $region76: #{transformer_forward.7} parent=11 // pred_fallthru
          _
        // Predicated region
        $region77: #{transformer_forward.7} parent=11 // pred_check
          %p674 = pneg %p495
        $region78: #{transformer_forward.7} parent=11 // pred_check_branch
          %676 = sbr.rel (%p674) target = $region80
        $region79: #{transformer_forward.7} parent=11 // pred_region
          _
        $region80: #{transformer_forward.7} parent=11 // pred_fallthru
          _
        // Predicated region
        $region81: #{transformer_forward.7} parent=11 // pred_check
          %p677 = pneg %p516
        $region82: #{transformer_forward.7} parent=11 // pred_check_branch
          %679 = sbr.rel (%p677) target = $region84
        $region83: #{transformer_forward.7} parent=11 // pred_region
          %681 = vsyncadd [#allocation8], 0
          %s683 = sshll.u32 %s21, 4
          %s684 = int_to_ptr.hbm [resolvable:$true] %s683
          %s685 = sshll.u32 [#allocation7], 4
          %s686 = int_to_ptr.vmem [resolvable:$true] %s685
          %688 = dma.hbm_to_vmem [thread:$0]  %s684, 16, %s686, [#allocation8]
        $region84: #{transformer_forward.7} parent=11 // pred_fallthru
          _
        // Predicated region
        $region85: #{transformer_forward.7} parent=11 // pred_check
          %p689 = pneg %p537
        $region86: #{transformer_forward.7} parent=11 // pred_check_branch
          %691 = sbr.rel (%p689) target = $region88
        $region87: #{transformer_forward.7} parent=11 // pred_region
          %693 = vsyncadd [#allocation8], 0
          %s695 = sshll.u32 %s22, 4
          %s696 = int_to_ptr.hbm [resolvable:$true] %s695
          %s697 = sshll.u32 [#allocation9], 4
          %s698 = int_to_ptr.vmem [resolvable:$true] %s697
          %700 = dma.hbm_to_vmem [thread:$0]  %s696, 16, %s698, [#allocation8]
        $region88: #{transformer_forward.7} parent=11 // pred_fallthru
          _
        // Predicated region
        $region89: #{transformer_forward.7} parent=11 // pred_check
          %p701 = pneg %p558
        $region90: #{transformer_forward.7} parent=11 // pred_check_branch
          %703 = sbr.rel (%p701) target = $region92
        $region91: #{transformer_forward.7} parent=11 // pred_region
          %705 = vsyncadd [#allocation11], 0
          %s707 = sshll.u32 %s23, 4
          %s708 = int_to_ptr.hbm [resolvable:$true] %s707
          %s709 = sshll.u32 [#allocation10], 4
          %s710 = int_to_ptr.vmem [resolvable:$true] %s709
          %712 = dma.hbm_to_vmem [thread:$0]  %s708, 16, %s710, [#allocation11]
        $region92: #{transformer_forward.7} parent=11 // pred_fallthru
          _
      $region12: #{transformer_forward.7} parent=5 // pred_fallthru
        _
      %p713 = scmp.lt.s32.totalorder %s34, 2
      // Predicated region
      $region93: #{transformer_forward.7} parent=5 // pred_check
        %p714 = pneg %p713
      $region94: #{transformer_forward.7} parent=5 // pred_check_branch
        %716 = sbr.rel (%p714) target = $region96
      $region95: #{transformer_forward.7} parent=5 // pred_region
        // Predicated region
        $region97: #{transformer_forward.7} parent=95 // pred_check
          %p717 = pneg %p54
        $region98: #{transformer_forward.7} parent=95 // pred_check_branch
          %719 = sbr.rel (%p717) target = $region100
        $region99: #{transformer_forward.7} parent=95 // pred_region
          %p720 = scmp.lt.s32.totalorder %s34, 1
          %s721 = scalar_select %p720, %s34, 1
          %s722 = smul.addr %s721, 8
          %s723 = scalar_lea.vmem %s0, %s722
        $region100: #{transformer_forward.7} parent=95 // pred_fallthru
          _
        // Predicated region
        $region101: #{transformer_forward.7} parent=95 // pred_check
          %p724 = pneg %p80
        $region102: #{transformer_forward.7} parent=95 // pred_check_branch
          %726 = sbr.rel (%p724) target = $region104
        $region103: #{transformer_forward.7} parent=95 // pred_region
          %p727 = scmp.lt.s32.totalorder %s34, 1
          %s728 = scalar_select %p727, %s34, 1
          %s729 = smul.addr %s728, 8
          %s730 = scalar_lea.vmem %s1, %s729
        $region104: #{transformer_forward.7} parent=95 // pred_fallthru
          _
        // Predicated region
        $region105: #{transformer_forward.7} parent=95 // pred_check
          %p731 = pneg %p106
        $region106: #{transformer_forward.7} parent=95 // pred_check_branch
          %733 = sbr.rel (%p731) target = $region108
        $region107: #{transformer_forward.7} parent=95 // pred_region
          %p734 = scmp.lt.s32.totalorder %s34, 1
          %s735 = scalar_select %p734, %s34, 1
          %s736 = smul.addr %s735, 8
          %s737 = scalar_lea.vmem %s2, %s736
        $region108: #{transformer_forward.7} parent=95 // pred_fallthru
          _
        // Predicated region
        $region109: #{transformer_forward.7} parent=95 // pred_check
          %p738 = pneg %p132
        $region110: #{transformer_forward.7} parent=95 // pred_check_branch
          %740 = sbr.rel (%p738) target = $region112
        $region111: #{transformer_forward.7} parent=95 // pred_region
          %p741 = scmp.lt.s32.totalorder %s34, 1
          %s742 = scalar_select %p741, %s34, 1
          %s743 = scalar_lea.vmem %s3, %s742
        $region112: #{transformer_forward.7} parent=95 // pred_fallthru
          _
      $region96: #{transformer_forward.7} parent=5 // pred_fallthru
        _
      %p744 = scmp.le.s32.totalorder 1, %s34
      %p745 = scmp.lt.s32.totalorder %s34, 3
      %p746 = pnand %p744, %p745
      %p747 = pneg %p746
      // Predicated region
      $region113: #{transformer_forward.7} parent=5 // pred_check
        _
      $region114: #{transformer_forward.7} parent=5 // pred_check_branch
        %749 = sbr.rel (%p746) target = $region116
      $region115: #{transformer_forward.7} parent=5 // pred_region
        %s750 = ssub.s32 %s34, 1
        // Predicated region
        $region117: #{transformer_forward.7} parent=115 // pred_check
          %p751 = pneg %p411
        $region118: #{transformer_forward.7} parent=115 // pred_check_branch
          %753 = sbr.rel (%p751) target = $region120
        $region119: #{transformer_forward.7} parent=115 // pred_region
          %755 = dma.done [#allocation3], 16
        $region120: #{transformer_forward.7} parent=115 // pred_fallthru
          _
        // Predicated region
        $region121: #{transformer_forward.7} parent=115 // pred_check
          %p756 = pneg %p432
        $region122: #{transformer_forward.7} parent=115 // pred_check_branch
          %758 = sbr.rel (%p756) target = $region124
        $region123: #{transformer_forward.7} parent=115 // pred_region
          %760 = dma.done [#allocation5], 16
        $region124: #{transformer_forward.7} parent=115 // pred_fallthru
          _
        // Predicated region
        $region125: #{transformer_forward.7} parent=115 // pred_check
          %p761 = pneg %p474
        $region126: #{transformer_forward.7} parent=115 // pred_check_branch
          %763 = sbr.rel (%p761) target = $region128
        $region127: #{transformer_forward.7} parent=115 // pred_region
          %765 = dma.done [#allocation5], 16
        $region128: #{transformer_forward.7} parent=115 // pred_fallthru
          _
        // Predicated region
        $region129: #{transformer_forward.7} parent=115 // pred_check
          %p766 = pneg %p516
        $region130: #{transformer_forward.7} parent=115 // pred_check_branch
          %768 = sbr.rel (%p766) target = $region132
        $region131: #{transformer_forward.7} parent=115 // pred_region
          %770 = dma.done [#allocation8], 16
        $region132: #{transformer_forward.7} parent=115 // pred_fallthru
          _
        // Predicated region
        $region133: #{transformer_forward.7} parent=115 // pred_check
          %p771 = pneg %p537
        $region134: #{transformer_forward.7} parent=115 // pred_check_branch
          %773 = sbr.rel (%p771) target = $region136
        $region135: #{transformer_forward.7} parent=115 // pred_region
          %775 = dma.done [#allocation8], 16
        $region136: #{transformer_forward.7} parent=115 // pred_fallthru
          _
        // Predicated region
        $region137: #{transformer_forward.7} parent=115 // pred_check
          %p776 = pneg %p558
        $region138: #{transformer_forward.7} parent=115 // pred_check_branch
          %778 = sbr.rel (%p776) target = $region140
        $region139: #{transformer_forward.7} parent=115 // pred_region
          %780 = dma.done [#allocation11], 16
        $region140: #{transformer_forward.7} parent=115 // pred_fallthru
          _
        %p781 = scmp.lt.s32.totalorder %s39, 1
        %s782 = scalar_select %p781, %s39, 1
        %s783 = smul.addr %s782, 8
        %s784 = scalar_lea.vmem %s0, %s783
        %p785 = pneg %p60
        %p786 = pneg %p57
        %p787 = scmp.lt.s32.totalorder %s39, 1
        %s788 = scalar_select %p787, %s39, 1
        %s789 = smul.addr %s788, 8
        %s790 = scalar_lea.vmem %s1, %s789
        %p791 = pneg %p86
        %p792 = pneg %p83
        %p793 = scmp.lt.s32.totalorder %s39, 1
        %s794 = scalar_select %p793, %s39, 1
        %s795 = smul.addr %s794, 8
        %s796 = scalar_lea.vmem %s2, %s795
        %p797 = pneg %p112
        %p798 = pneg %p109
        %p799 = scmp.lt.s32.totalorder %s39, 1
        %s800 = scalar_select %p799, %s39, 1
        %s801 = scalar_lea.vmem %s3, %s800
        %p802 = pneg %p138
        %p803 = pneg %p135
        %p804 = pneg %p159
        %p805 = pneg %p156
        %p806 = pneg %p180
        %p807 = pneg %p177
        %p808 = pneg %p201
        %p809 = pneg %p198
        %p810 = pneg %p222
        %p811 = pneg %p219
        %p812 = pneg %p243
        %p813 = pneg %p240
        %p814 = pneg %p264
        %p815 = pneg %p261
        %p816 = pneg %p285
        %p817 = pneg %p282
        %p818 = pneg %p306
        %p819 = pneg %p303
        %p820 = pneg %p327
        %p821 = pneg %p324
        %p822 = pneg %p348
        %p823 = pneg %p345
        %p824 = pneg %p369
        %p825 = pneg %p366
        %p826 = pneg %p390
        %p827 = pneg %p387
        %p828 = pneg %p411
        %p829 = pneg %p408
        %p830 = pneg %p432
        %p831 = pneg %p429
        %p832 = pneg %p453
        %p833 = pneg %p450
        %p834 = pneg %p474
        %p835 = pneg %p471
        %p836 = pneg %p495
        %p837 = pneg %p492
        %p838 = pneg %p516
        %p839 = pneg %p513
        %p840 = pneg %p537
        %p841 = pneg %p534
        %p842 = pneg %p558
        %p843 = pneg %p555
        %p844 = pneg %p584
        %p845 = pneg %p581
        %p846 = scmp.lt.s32.totalorder %s39, 1
        %s847 = scalar_select %p846, %s39, 1
        %s848 = smul.addr %s847, 8
        %s849 = scalar_lea.vmem %s24, %s848
        %p850 = scmp.lt.s32.totalorder %s39, 1
        %s851 = scalar_select %p850, %s39, 1
        %s852 = smul.addr %s851, 8
        %s853 = scalar_lea.vmem %s0, %s852
        %p854 = scmp.lt.s32.totalorder %s39, 1
        %s855 = scalar_select %p854, %s39, 1
        %s856 = smul.addr %s855, 8
        %s857 = scalar_lea.vmem %s1, %s856
        %p858 = scmp.lt.s32.totalorder %s39, 1
        %s859 = scalar_select %p858, %s39, 1
        %s860 = smul.addr %s859, 8
        %s861 = scalar_lea.vmem %s2, %s860
        %p862 = scmp.lt.s32.totalorder %s39, 1
        %s863 = scalar_select %p862, %s39, 1
        %s864 = scalar_lea.vmem %s3, %s863
        %p865 = scmp.lt.s32.totalorder %s39, 1
        %s866 = scalar_select %p865, %s39, 1
        %s867 = smul.addr %s866, 8
        %s868 = scalar_lea.vmem %s24, %s867
        %v869 = vld [vmem:[%s853] sm:$0xff]
        %v870 = vld [vmem:[%s857] sm:$0xff]
        %v871 = vld [vmem:[%s861] sm:$0xff]
        %v872 = vld [vmem:[%s864] sm:$0x1]
        %v873 = vld [vmem:[%s4] sm:$0xff]
        %v874 = vld [vmem:[%s4 + $0x8] sm:$0xff]
        %v875 = vld [vmem:[%s4 + $0x10] sm:$0xff]
        %v876 = vld [vmem:[%s4 + $0x18] sm:$0xff]
        %v877 = vld [vmem:[%s5] sm:$0x1]
        %v879 = vperm.slane %v877, 0
        %vm881 = vcmask 261120
        %v883 = vsel %vm881, %v869, 0
        %885 = vmatpush.msra.mxu0 0.0
        %886 = vmatpush.msra.mxu0 0.0
        %887 = vmatpush.msra.mxu0 0.0
        %888 = vmatpush.msra.mxu0 0.0
        %889 = vmatpush.msra.mxu0 0.0
        %890 = vmatpush.msra.mxu0 0.0
        %891 = vmatpush.msra.mxu0 0.0
        %892 = vmatpush.msra.mxu0 0.0
        %893 = vmatpush.msra.mxu0 0.0
        %894 = vmatpush.msra.mxu0 0.0
        %895 = vmatpush.msra.mxu0 0.0
        %896 = vmatpush.msra.mxu0 0.0
        %897 = vmatpush.msra.mxu0 %v876
        %898 = vmatpush.msra.mxu0 %v875
        %899 = vmatpush.msra.mxu0 %v874
        %900 = vmatpush.msra.mxu0 %v873
        %901 = vmatmul.f32.gmra.mxu0 %v883
        %v902 = vpop.f32.mrf.mxu0
        %v903 = vadd.f32 %v879, %v902
        %904 = vdwg.mxu0
        %v905 = vld [vmem:[%s7] sm:$0x1]
        %907 = vrot.lane.b32.xlu0 %v903, 96
        %v908 = vpop.permute.xlu0 %907
        %vm909 = vcmask 64512
        %v910 = vsel %vm909, %v903, 0
        %v912 = vsel %vm909, %v908, 0
        %914 = vmatpush.xpose.msra.mxu0 0.0
        %915 = vmatpush.xpose.msra.mxu0 0.0
        %916 = vmatpush.xpose.msra.mxu0 0.0
        %917 = vmatpush.xpose.msra.mxu0 0.0
        %918 = vmatpush.xpose.msra.mxu0 0.0
        %919 = vmatpush.xpose.msra.mxu0 0.0
        %920 = vmatpush.xpose.msra.mxu0 0.0
        %921 = vmatpush.xpose.msra.mxu0 0.0
        %922 = vmatpush.xpose.msra.mxu0 0.0
        %923 = vmatpush.xpose.msra.mxu0 0.0
        %924 = vmatpush.xpose.msra.mxu0 0.0
        %925 = vmatpush.xpose.msra.mxu0 0.0
        %926 = vmatpush.xpose.msra.mxu0 0.0
        %927 = vmatpush.xpose.msra.mxu0 0.0
        %928 = vmatpush.xpose.msra.mxu0 0.0
        %929 = vmatpush.xpose.msra.mxu0 %v912
        %930 = vmatmul.f32.gmra.mxu0 %v910
        %v931 = vpop.f32.mrf.mxu0
        %v932 = vadd.f32 0.0, %v931
        %933 = vdwg.mxu0
        %vm934 = vcmp.ne.f32.partialorder %v871, 0.0
        %v935 = vsel %vm934, %v932, -1e+09
        %v936 = vsel %vm909, %v935, -inf
        %937 = vmax.xlane.f32.xlu0 %v936
        %v938 = vpop.xlane.xlu0 %937
        %v939 = vsub.f32 %v935, %v938
        %v940 = vmul.f32 %v939, 1.442695
        %v941 = vpow.pop %v940
        %v942 = vsel %vm909, %v941, 0.0
        %943 = vadd.xlane.f32.xlu0 %v942
        %v944 = vpop.xlane.xlu0 %943
        %v945 = vrcp.pop %v944
        %v946 = vmul.f32 %v941, %v945
        %947 = vrot.lane.b32.xlu0 %v903, 64
        %v948 = vpop.permute.xlu0 %947
        %v951 = vsel %vm909, %v946, 0
        %953 = vmatpush.msra.mxu0 0.0
        %954 = vmatpush.msra.mxu0 0.0
        %955 = vmatpush.msra.mxu0 0.0
        %956 = vmatpush.msra.mxu0 0.0
        %957 = vmatpush.msra.mxu0 0.0
        %958 = vmatpush.msra.mxu0 0.0
        %959 = vmatpush.msra.mxu0 0.0
        %960 = vmatpush.msra.mxu0 0.0
        %961 = vmatpush.msra.mxu0 0.0
        %962 = vmatpush.msra.mxu0 0.0
        %963 = vmatpush.msra.mxu0 0.0
        %964 = vmatpush.msra.mxu0 0.0
        %965 = vmatpush.msra.mxu0 0.0
        %966 = vmatpush.msra.mxu0 0.0
        %967 = vmatpush.msra.mxu0 0.0
        %968 = vmatpush.msra.mxu0 %v948
        %969 = vmatmul.f32.gmra.mxu0 %v951
        %v970 = vpop.f32.mrf.mxu0
        %v971 = vadd.f32 0.0, %v970
        %972 = vdwg.mxu0
        %v973 = vld [vmem:[%s6] sm:$0xff]
        %974 = vrot.lane.b32.xlu0 %v903, 120
        %v975 = vpop.permute.xlu0 %974
        %976 = vrot.lane.b32.xlu0 %v903, 88
        %v977 = vpop.permute.xlu0 %976
        %v978 = vsel %vm909, %v975, 0
        %v980 = vsel %vm909, %v977, 0
        %982 = vmatpush.xpose.msra.mxu0 0.0
        %983 = vmatpush.xpose.msra.mxu0 0.0
        %984 = vmatpush.xpose.msra.mxu0 0.0
        %985 = vmatpush.xpose.msra.mxu0 0.0
        %986 = vmatpush.xpose.msra.mxu0 0.0
        %987 = vmatpush.xpose.msra.mxu0 0.0
        %988 = vmatpush.xpose.msra.mxu0 0.0
        %989 = vmatpush.xpose.msra.mxu0 0.0
        %990 = vmatpush.xpose.msra.mxu0 0.0
        %991 = vmatpush.xpose.msra.mxu0 0.0
        %992 = vmatpush.xpose.msra.mxu0 0.0
        %993 = vmatpush.xpose.msra.mxu0 0.0
        %994 = vmatpush.xpose.msra.mxu0 0.0
        %995 = vmatpush.xpose.msra.mxu0 0.0
        %996 = vmatpush.xpose.msra.mxu0 0.0
        %997 = vmatpush.xpose.msra.mxu0 %v980
        %998 = vmatmul.f32.gmra.mxu0 %v978
        %v999 = vpop.f32.mrf.mxu0
        %v1000 = vadd.f32 0.0, %v999
        %1001 = vdwg.mxu0
        %v1002 = vsel %vm934, %v1000, -1e+09
        %v1003 = vsel %vm909, %v1002, -inf
        %1004 = vmax.xlane.f32.xlu0 %v1003
        %v1005 = vpop.xlane.xlu0 %1004
        %v1006 = vsub.f32 %v1002, %v1005
        %v1007 = vmul.f32 %v1006, 1.442695
        %v1008 = vpow.pop %v1007
        %v1009 = vsel %vm909, %v1008, 0.0
        %1010 = vadd.xlane.f32.xlu0 %v1009
        %v1011 = vpop.xlane.xlu0 %1010
        %v1012 = vrcp.pop %v1011
        %v1013 = vmul.f32 %v1008, %v1012
        %1014 = vrot.lane.b32.xlu0 %v903, 56
        %v1015 = vpop.permute.xlu0 %1014
        %v1018 = vsel %vm909, %v1013, 0
        %1020 = vmatpush.msra.mxu0 0.0
        %1021 = vmatpush.msra.mxu0 0.0
        %1022 = vmatpush.msra.mxu0 0.0
        %1023 = vmatpush.msra.mxu0 0.0
        %1024 = vmatpush.msra.mxu0 0.0
        %1025 = vmatpush.msra.mxu0 0.0
        %1026 = vmatpush.msra.mxu0 0.0
        %1027 = vmatpush.msra.mxu0 0.0
        %1028 = vmatpush.msra.mxu0 0.0
        %1029 = vmatpush.msra.mxu0 0.0
        %1030 = vmatpush.msra.mxu0 0.0
        %1031 = vmatpush.msra.mxu0 0.0
        %1032 = vmatpush.msra.mxu0 0.0
        %1033 = vmatpush.msra.mxu0 0.0
        %1034 = vmatpush.msra.mxu0 0.0
        %1035 = vmatpush.msra.mxu0 %v1015
        %1036 = vmatmul.f32.gmra.mxu0 %v1018
        %v1037 = vpop.f32.mrf.mxu0
        %v1038 = vadd.f32 0.0, %v1037
        %1039 = vdwg.mxu0
        %s1040 = scalar_lea.vmem %s6, 8
        %v1041 = vld [vmem:[%s1040] sm:$0xff]
        %v1043 = vsel %vm909, %v1038, 0
        %1045 = vmatpush.msra.mxu0 0.0
        %1046 = vmatpush.msra.mxu0 0.0
        %1047 = vmatpush.msra.mxu0 0.0
        %1048 = vmatpush.msra.mxu0 0.0
        %1049 = vmatpush.msra.mxu0 0.0
        %1050 = vmatpush.msra.mxu0 0.0
        %1051 = vmatpush.msra.mxu0 0.0
        %1052 = vmatpush.msra.mxu0 0.0
        %1053 = vmatpush.msra.mxu0 0.0
        %1054 = vmatpush.msra.mxu0 0.0
        %1055 = vmatpush.msra.mxu0 0.0
        %1056 = vmatpush.msra.mxu0 0.0
        %1057 = vmatpush.msra.mxu0 0.0
        %1058 = vmatpush.msra.mxu0 0.0
        %1059 = vmatpush.msra.mxu0 0.0
        %1060 = vmatpush.msra.mxu0 %v1041
        %1061 = vmatmul.f32.gmra.mxu0 %v1043
        %v1062 = vpop.f32.mrf.mxu0
        %v1063 = vadd.f32 0.0, %v1062
        %1064 = vdwg.mxu0
        %v1066 = vsel %vm909, %v971, 0
        %1068 = vmatpush.msra.mxu0 0.0
        %1069 = vmatpush.msra.mxu0 0.0
        %1070 = vmatpush.msra.mxu0 0.0
        %1071 = vmatpush.msra.mxu0 0.0
        %1072 = vmatpush.msra.mxu0 0.0
        %1073 = vmatpush.msra.mxu0 0.0
        %1074 = vmatpush.msra.mxu0 0.0
        %1075 = vmatpush.msra.mxu0 0.0
        %1076 = vmatpush.msra.mxu0 0.0
        %1077 = vmatpush.msra.mxu0 0.0
        %1078 = vmatpush.msra.mxu0 0.0
        %1079 = vmatpush.msra.mxu0 0.0
        %1080 = vmatpush.msra.mxu0 0.0
        %1081 = vmatpush.msra.mxu0 0.0
        %1082 = vmatpush.msra.mxu0 0.0
        %1083 = vmatpush.msra.mxu0 %v973
        %1084 = vmatmul.f32.gmra.mxu0 %v1066
        %v1085 = vpop.f32.mrf.mxu0
        %v1086 = vadd.f32 %v1063, %v1085
        %1087 = vdwg.mxu0
        %1088 = vrot.lane.b32.xlu0 %v903, 112
        %v1089 = vpop.permute.xlu0 %1088
        %1090 = vrot.lane.b32.xlu0 %v903, 80
        %v1091 = vpop.permute.xlu0 %1090
        %v1092 = vsel %vm909, %v1089, 0
        %v1094 = vsel %vm909, %v1091, 0
        %1096 = vmatpush.xpose.msra.mxu0 0.0
        %1097 = vmatpush.xpose.msra.mxu0 0.0
        %1098 = vmatpush.xpose.msra.mxu0 0.0
        %1099 = vmatpush.xpose.msra.mxu0 0.0
        %1100 = vmatpush.xpose.msra.mxu0 0.0
        %1101 = vmatpush.xpose.msra.mxu0 0.0
        %1102 = vmatpush.xpose.msra.mxu0 0.0
        %1103 = vmatpush.xpose.msra.mxu0 0.0
        %1104 = vmatpush.xpose.msra.mxu0 0.0
        %1105 = vmatpush.xpose.msra.mxu0 0.0
        %1106 = vmatpush.xpose.msra.mxu0 0.0
        %1107 = vmatpush.xpose.msra.mxu0 0.0
        %1108 = vmatpush.xpose.msra.mxu0 0.0
        %1109 = vmatpush.xpose.msra.mxu0 0.0
        %1110 = vmatpush.xpose.msra.mxu0 0.0
        %1111 = vmatpush.xpose.msra.mxu0 %v1094
        %1112 = vmatmul.f32.gmra.mxu0 %v1092
        %v1113 = vpop.f32.mrf.mxu0
        %v1114 = vadd.f32 0.0, %v1113
        %1115 = vdwg.mxu0
        %v1116 = vsel %vm934, %v1114, -1e+09
        %v1117 = vsel %vm909, %v1116, -inf
        %1118 = vmax.xlane.f32.xlu0 %v1117
        %v1119 = vpop.xlane.xlu0 %1118
        %v1120 = vsub.f32 %v1116, %v1119
        %v1121 = vmul.f32 %v1120, 1.442695
        %v1122 = vpow.pop %v1121
        %v1123 = vsel %vm909, %v1122, 0.0
        %1124 = vadd.xlane.f32.xlu0 %v1123
        %v1125 = vpop.xlane.xlu0 %1124
        %v1126 = vrcp.pop %v1125
        %v1127 = vmul.f32 %v1122, %v1126
        %1128 = vrot.lane.b32.xlu0 %v903, 48
        %v1129 = vpop.permute.xlu0 %1128
        %v1132 = vsel %vm909, %v1127, 0
        %1134 = vmatpush.msra.mxu0 0.0
        %1135 = vmatpush.msra.mxu0 0.0
        %1136 = vmatpush.msra.mxu0 0.0
        %1137 = vmatpush.msra.mxu0 0.0
        %1138 = vmatpush.msra.mxu0 0.0
        %1139 = vmatpush.msra.mxu0 0.0
        %1140 = vmatpush.msra.mxu0 0.0
        %1141 = vmatpush.msra.mxu0 0.0
        %1142 = vmatpush.msra.mxu0 0.0
        %1143 = vmatpush.msra.mxu0 0.0
        %1144 = vmatpush.msra.mxu0 0.0
        %1145 = vmatpush.msra.mxu0 0.0
        %1146 = vmatpush.msra.mxu0 0.0
        %1147 = vmatpush.msra.mxu0 0.0
        %1148 = vmatpush.msra.mxu0 0.0
        %1149 = vmatpush.msra.mxu0 %v1129
        %1150 = vmatmul.f32.gmra.mxu0 %v1132
        %v1151 = vpop.f32.mrf.mxu0
        %v1152 = vadd.f32 0.0, %v1151
        %1153 = vdwg.mxu0
        %s1154 = scalar_lea.vmem %s6, 16
        %v1155 = vld [vmem:[%s1154] sm:$0xff]
        %v1157 = vsel %vm909, %v1152, 0
        %1159 = vmatpush.msra.mxu0 0.0
        %1160 = vmatpush.msra.mxu0 0.0
        %1161 = vmatpush.msra.mxu0 0.0
        %1162 = vmatpush.msra.mxu0 0.0
        %1163 = vmatpush.msra.mxu0 0.0
        %1164 = vmatpush.msra.mxu0 0.0
        %1165 = vmatpush.msra.mxu0 0.0
        %1166 = vmatpush.msra.mxu0 0.0
        %1167 = vmatpush.msra.mxu0 0.0
        %1168 = vmatpush.msra.mxu0 0.0
        %1169 = vmatpush.msra.mxu0 0.0
        %1170 = vmatpush.msra.mxu0 0.0
        %1171 = vmatpush.msra.mxu0 0.0
        %1172 = vmatpush.msra.mxu0 0.0
        %1173 = vmatpush.msra.mxu0 0.0
        %1174 = vmatpush.msra.mxu0 %v1155
        %1175 = vmatmul.f32.gmra.mxu0 %v1157
        %v1176 = vpop.f32.mrf.mxu0
        %v1177 = vadd.f32 0.0, %v1176
        %1178 = vdwg.mxu0
        %v1179 = vadd.f32 %v1086, %v1177
        %1180 = vrot.lane.b32.xlu0 %v903, 104
        %v1181 = vpop.permute.xlu0 %1180
        %1182 = vrot.lane.b32.xlu0 %v903, 72
        %v1183 = vpop.permute.xlu0 %1182
        %v1184 = vsel %vm909, %v1181, 0
        %v1186 = vsel %vm909, %v1183, 0
        %1188 = vmatpush.xpose.msra.mxu0 0.0
        %1189 = vmatpush.xpose.msra.mxu0 0.0
        %1190 = vmatpush.xpose.msra.mxu0 0.0
        %1191 = vmatpush.xpose.msra.mxu0 0.0
        %1192 = vmatpush.xpose.msra.mxu0 0.0
        %1193 = vmatpush.xpose.msra.mxu0 0.0
        %1194 = vmatpush.xpose.msra.mxu0 0.0
        %1195 = vmatpush.xpose.msra.mxu0 0.0
        %1196 = vmatpush.xpose.msra.mxu0 0.0
        %1197 = vmatpush.xpose.msra.mxu0 0.0
        %1198 = vmatpush.xpose.msra.mxu0 0.0
        %1199 = vmatpush.xpose.msra.mxu0 0.0
        %1200 = vmatpush.xpose.msra.mxu0 0.0
        %1201 = vmatpush.xpose.msra.mxu0 0.0
        %1202 = vmatpush.xpose.msra.mxu0 0.0
        %1203 = vmatpush.xpose.msra.mxu0 %v1186
        %1204 = vmatmul.f32.gmra.mxu0 %v1184
        %v1205 = vpop.f32.mrf.mxu0
        %v1206 = vadd.f32 0.0, %v1205
        %1207 = vdwg.mxu0
        %v1208 = vsel %vm934, %v1206, -1e+09
        %v1209 = vsel %vm909, %v1208, -inf
        %1210 = vmax.xlane.f32.xlu0 %v1209
        %v1211 = vpop.xlane.xlu0 %1210
        %v1212 = vsub.f32 %v1208, %v1211
        %v1213 = vmul.f32 %v1212, 1.442695
        %v1214 = vpow.pop %v1213
        %v1215 = vsel %vm909, %v1214, 0.0
        %1216 = vadd.xlane.f32.xlu0 %v1215
        %v1217 = vpop.xlane.xlu0 %1216
        %v1218 = vrcp.pop %v1217
        %v1219 = vmul.f32 %v1214, %v1218
        %1220 = vrot.lane.b32.xlu0 %v903, 40
        %v1221 = vpop.permute.xlu0 %1220
        %v1224 = vsel %vm909, %v1219, 0
        %1226 = vmatpush.msra.mxu0 0.0
        %1227 = vmatpush.msra.mxu0 0.0
        %1228 = vmatpush.msra.mxu0 0.0
        %1229 = vmatpush.msra.mxu0 0.0
        %1230 = vmatpush.msra.mxu0 0.0
        %1231 = vmatpush.msra.mxu0 0.0
        %1232 = vmatpush.msra.mxu0 0.0
        %1233 = vmatpush.msra.mxu0 0.0
        %1234 = vmatpush.msra.mxu0 0.0
        %1235 = vmatpush.msra.mxu0 0.0
        %1236 = vmatpush.msra.mxu0 0.0
        %1237 = vmatpush.msra.mxu0 0.0
        %1238 = vmatpush.msra.mxu0 0.0
        %1239 = vmatpush.msra.mxu0 0.0
        %1240 = vmatpush.msra.mxu0 0.0
        %1241 = vmatpush.msra.mxu0 %v1221
        %1242 = vmatmul.f32.gmra.mxu0 %v1224
        %v1243 = vpop.f32.mrf.mxu0
        %v1244 = vadd.f32 0.0, %v1243
        %1245 = vdwg.mxu0
        %s1246 = scalar_lea.vmem %s6, 24
        %v1247 = vld [vmem:[%s1246] sm:$0xff]
        %v1249 = vsel %vm909, %v1244, 0
        %1251 = vmatpush.msra.mxu0 0.0
        %1252 = vmatpush.msra.mxu0 0.0
        %1253 = vmatpush.msra.mxu0 0.0
        %1254 = vmatpush.msra.mxu0 0.0
        %1255 = vmatpush.msra.mxu0 0.0
        %1256 = vmatpush.msra.mxu0 0.0
        %1257 = vmatpush.msra.mxu0 0.0
        %1258 = vmatpush.msra.mxu0 0.0
        %1259 = vmatpush.msra.mxu0 0.0
        %1260 = vmatpush.msra.mxu0 0.0
        %1261 = vmatpush.msra.mxu0 0.0
        %1262 = vmatpush.msra.mxu0 0.0
        %1263 = vmatpush.msra.mxu0 0.0
        %1264 = vmatpush.msra.mxu0 0.0
        %1265 = vmatpush.msra.mxu0 0.0
        %1266 = vmatpush.msra.mxu0 %v1247
        %1267 = vmatmul.f32.gmra.mxu0 %v1249
        %v1268 = vpop.f32.mrf.mxu0
        %v1269 = vadd.f32 0.0, %v1268
        %1270 = vdwg.mxu0
        %v1271 = vadd.f32 %v1179, %v1269
        %v1273 = vperm.slane %v905, 0
        %v1275 = vadd.f32 %v1271, %v1273
        %v1276 = vld [vmem:[%s8] sm:$0x1]
        %v1277 = vld [vmem:[%s9] sm:$0x1]
        %v1278 = vadd.f32 %v869, %v1275
        %v1279 = vsel %vm881, %v1278, 0.0
        %1280 = vadd.xlane.f32.xlu0 %v1279
        %v1281 = vpop.xlane.xlu0 %1280
        %v1282 = vrcp.pop 32.0
        %v1283 = vmul.f32 32.0, %v1282
        %v1284 = vsub.f32 1.0, %v1283
        %v1285 = vmul.f32 %v1282, %v1284
        %v1286 = vadd.f32 %v1282, %v1285
        %vm1287 = vweird.f32 %v1282
        %v1288 = vsel %vm1287, %v1282, %v1286
        %v1289 = vmul.f32 %v1281, %v1288
        %v1290 = vsub.f32 %v1278, %v1289
        %v1291 = vmul.f32 %v1290, %v1290
        %v1292 = vsel %vm881, %v1291, 0.0
        %1293 = vadd.xlane.f32.xlu0 %v1292
        %v1294 = vpop.xlane.xlu0 %1293
        %v1295 = vmul.f32 %v1294, %v1288
        %v1296 = vadd.f32 %v1295, 1e-05
        %v1297 = vrsqrt.pop %v1296
        %v1298 = vmul.f32 %v1297, %v1296
        %v1299 = vmul.f32 %v1298, %v1297
        %v1300 = vmul.f32 0.5, %v1299
        %v1301 = vsub.f32 1.5, %v1300
        %v1302 = vmul.f32 %v1297, %v1301
        %vm1303 = vweird.f32 %v1296
        %vm1304 = vweird.f32 %v1297
        %vm1305 = vmor %vm1303, %vm1304
        %v1306 = vsel %vm1305, %v1297, %v1302
        %v1307 = vmul.f32 %v1290, %v1306
        %v1309 = vperm.slane %v1276, 0
        %v1311 = vmul.f32 %v1307, %v1309
        %v1313 = vperm.slane %v1277, 0
        %v1315 = vadd.f32 %v1311, %v1313
        %v1316 = vld [vmem:[%s10] sm:$0xff]
        %v1317 = vld [vmem:[%s10 + $0x8] sm:$0xff]
        %v1318 = vld [vmem:[%s10 + $0x10] sm:$0xff]
        %v1319 = vld [vmem:[%s10 + $0x18] sm:$0xff]
        %v1320 = vld [vmem:[%s11] sm:$0x1]
        %v1322 = vperm.slane %v1320, 0
        %v1325 = vsel %vm881, %v1315, 0
        %1327 = vmatpush.msra.mxu0 0.0
        %1328 = vmatpush.msra.mxu0 0.0
        %1329 = vmatpush.msra.mxu0 0.0
        %1330 = vmatpush.msra.mxu0 0.0
        %1331 = vmatpush.msra.mxu0 0.0
        %1332 = vmatpush.msra.mxu0 0.0
        %1333 = vmatpush.msra.mxu0 0.0
        %1334 = vmatpush.msra.mxu0 0.0
        %1335 = vmatpush.msra.mxu0 0.0
        %1336 = vmatpush.msra.mxu0 0.0
        %1337 = vmatpush.msra.mxu0 0.0
        %1338 = vmatpush.msra.mxu0 0.0
        %1339 = vmatpush.msra.mxu0 %v1319
        %1340 = vmatpush.msra.mxu0 %v1318
        %1341 = vmatpush.msra.mxu0 %v1317
        %1342 = vmatpush.msra.mxu0 %v1316
        %1343 = vmatmul.f32.gmra.mxu0 %v1325
        %v1344 = vpop.f32.mrf.mxu0
        %v1345 = vadd.f32 %v1322, %v1344
        %1346 = vdwg.mxu0
        %v1347 = vld [vmem:[%s12] sm:$0xff]
        %v1348 = vld [vmem:[%s12 + $0x8] sm:$0xff]
        %v1349 = vld [vmem:[%s12 + $0x10] sm:$0xff]
        %v1350 = vld [vmem:[%s12 + $0x18] sm:$0xff]
        %v1351 = vld [vmem:[%s13] sm:$0x1]
        %v1353 = vperm.slane %v1351, 0
        %v1356 = vsel %vm881, %v870, 0
        %1358 = vmatpush.msra.mxu0 0.0
        %1359 = vmatpush.msra.mxu0 0.0
        %1360 = vmatpush.msra.mxu0 0.0
        %1361 = vmatpush.msra.mxu0 0.0
        %1362 = vmatpush.msra.mxu0 0.0
        %1363 = vmatpush.msra.mxu0 0.0
        %1364 = vmatpush.msra.mxu0 0.0
        %1365 = vmatpush.msra.mxu0 0.0
        %1366 = vmatpush.msra.mxu0 0.0
        %1367 = vmatpush.msra.mxu0 0.0
        %1368 = vmatpush.msra.mxu0 0.0
        %1369 = vmatpush.msra.mxu0 0.0
        %1370 = vmatpush.msra.mxu0 %v1350
        %1371 = vmatpush.msra.mxu0 %v1349
        %1372 = vmatpush.msra.mxu0 %v1348
        %1373 = vmatpush.msra.mxu0 %v1347
        %1374 = vmatmul.f32.gmra.mxu0 %v1356
        %v1375 = vpop.f32.mrf.mxu0
        %v1376 = vadd.f32 %v1353, %v1375
        %1377 = vdwg.mxu0
        %v1378 = vld [vmem:[%s15] sm:$0x1]
        %v1380 = vsel %vm909, %v1345, 0
        %v1383 = vsel %vm909, %v1376, 0
        %1385 = vmatpush.xpose.msra.mxu0 0.0
        %1386 = vmatpush.xpose.msra.mxu0 0.0
        %1387 = vmatpush.xpose.msra.mxu0 0.0
        %1388 = vmatpush.xpose.msra.mxu0 0.0
        %1389 = vmatpush.xpose.msra.mxu0 0.0
        %1390 = vmatpush.xpose.msra.mxu0 0.0
        %1391 = vmatpush.xpose.msra.mxu0 0.0
        %1392 = vmatpush.xpose.msra.mxu0 0.0
        %1393 = vmatpush.xpose.msra.mxu0 0.0
        %1394 = vmatpush.xpose.msra.mxu0 0.0
        %1395 = vmatpush.xpose.msra.mxu0 0.0
        %1396 = vmatpush.xpose.msra.mxu0 0.0
        %1397 = vmatpush.xpose.msra.mxu0 0.0
        %1398 = vmatpush.xpose.msra.mxu0 0.0
        %1399 = vmatpush.xpose.msra.mxu0 0.0
        %1400 = vmatpush.xpose.msra.mxu0 %v1383
        %1401 = vmatmul.f32.gmra.mxu0 %v1380
        %v1402 = vpop.f32.mrf.mxu0
        %v1403 = vadd.f32 0.0, %v1402
        %1404 = vdwg.mxu0
        %vm1405 = vcmp.ne.f32.partialorder %v872, 0.0
        %v1406 = vsel %vm1405, 1, 0
        %v1407 = vperm.slane %v1406, 0
        %vm1408 = vcmp.eq.s32.totalorder %v1407, 1
        %v1409 = vsel %vm1408, %v1403, -1e+09
        %v1410 = vsel %vm909, %v1409, -inf
        %1411 = vmax.xlane.f32.xlu0 %v1410
        %v1412 = vpop.xlane.xlu0 %1411
        %v1413 = vsub.f32 %v1409, %v1412
        %v1414 = vmul.f32 %v1413, 1.442695
        %v1415 = vpow.pop %v1414
        %v1416 = vsel %vm909, %v1415, 0.0
        %1417 = vadd.xlane.f32.xlu0 %v1416
        %v1418 = vpop.xlane.xlu0 %1417
        %v1419 = vrcp.pop %v1418
        %v1420 = vmul.f32 %v1415, %v1419
        %1421 = vrot.lane.b32.xlu0 %v1376, 96
        %v1422 = vpop.permute.xlu0 %1421
        %v1425 = vsel %vm909, %v1420, 0
        %1427 = vmatpush.msra.mxu0 0.0
        %1428 = vmatpush.msra.mxu0 0.0
        %1429 = vmatpush.msra.mxu0 0.0
        %1430 = vmatpush.msra.mxu0 0.0
        %1431 = vmatpush.msra.mxu0 0.0
        %1432 = vmatpush.msra.mxu0 0.0
        %1433 = vmatpush.msra.mxu0 0.0
        %1434 = vmatpush.msra.mxu0 0.0
        %1435 = vmatpush.msra.mxu0 0.0
        %1436 = vmatpush.msra.mxu0 0.0
        %1437 = vmatpush.msra.mxu0 0.0
        %1438 = vmatpush.msra.mxu0 0.0
        %1439 = vmatpush.msra.mxu0 0.0
        %1440 = vmatpush.msra.mxu0 0.0
        %1441 = vmatpush.msra.mxu0 0.0
        %1442 = vmatpush.msra.mxu0 %v1422
        %1443 = vmatmul.f32.gmra.mxu0 %v1425
        %v1444 = vpop.f32.mrf.mxu0
        %v1445 = vadd.f32 0.0, %v1444
        %1446 = vdwg.mxu0
        %v1447 = vld [vmem:[%s14] sm:$0xff]
        %1448 = vrot.lane.b32.xlu0 %v1345, 120
        %v1449 = vpop.permute.xlu0 %1448
        %1450 = vrot.lane.b32.xlu0 %v1376, 120
        %v1451 = vpop.permute.xlu0 %1450
        %v1452 = vsel %vm909, %v1449, 0
        %v1454 = vsel %vm909, %v1451, 0
        %1456 = vmatpush.xpose.msra.mxu0 0.0
        %1457 = vmatpush.xpose.msra.mxu0 0.0
        %1458 = vmatpush.xpose.msra.mxu0 0.0
        %1459 = vmatpush.xpose.msra.mxu0 0.0
        %1460 = vmatpush.xpose.msra.mxu0 0.0
        %1461 = vmatpush.xpose.msra.mxu0 0.0
        %1462 = vmatpush.xpose.msra.mxu0 0.0
        %1463 = vmatpush.xpose.msra.mxu0 0.0
        %1464 = vmatpush.xpose.msra.mxu0 0.0
        %1465 = vmatpush.xpose.msra.mxu0 0.0
        %1466 = vmatpush.xpose.msra.mxu0 0.0
        %1467 = vmatpush.xpose.msra.mxu0 0.0
        %1468 = vmatpush.xpose.msra.mxu0 0.0
        %1469 = vmatpush.xpose.msra.mxu0 0.0
        %1470 = vmatpush.xpose.msra.mxu0 0.0
        %1471 = vmatpush.xpose.msra.mxu0 %v1454
        %1472 = vmatmul.f32.gmra.mxu0 %v1452
        %v1473 = vpop.f32.mrf.mxu0
        %v1474 = vadd.f32 0.0, %v1473
        %1475 = vdwg.mxu0
        %v1476 = vsel %vm1408, %v1474, -1e+09
        %v1477 = vsel %vm909, %v1476, -inf
        %1478 = vmax.xlane.f32.xlu0 %v1477
        %v1479 = vpop.xlane.xlu0 %1478
        %v1480 = vsub.f32 %v1476, %v1479
        %v1481 = vmul.f32 %v1480, 1.442695
        %v1482 = vpow.pop %v1481
        %v1483 = vsel %vm909, %v1482, 0.0
        %1484 = vadd.xlane.f32.xlu0 %v1483
        %v1485 = vpop.xlane.xlu0 %1484
        %v1486 = vrcp.pop %v1485
        %v1487 = vmul.f32 %v1482, %v1486
        %1488 = vrot.lane.b32.xlu0 %v1376, 88
        %v1489 = vpop.permute.xlu0 %1488
        %v1492 = vsel %vm909, %v1487, 0
        %1494 = vmatpush.msra.mxu0 0.0
        %1495 = vmatpush.msra.mxu0 0.0
        %1496 = vmatpush.msra.mxu0 0.0
        %1497 = vmatpush.msra.mxu0 0.0
        %1498 = vmatpush.msra.mxu0 0.0
        %1499 = vmatpush.msra.mxu0 0.0
        %1500 = vmatpush.msra.mxu0 0.0
        %1501 = vmatpush.msra.mxu0 0.0
        %1502 = vmatpush.msra.mxu0 0.0
        %1503 = vmatpush.msra.mxu0 0.0
        %1504 = vmatpush.msra.mxu0 0.0
        %1505 = vmatpush.msra.mxu0 0.0
        %1506 = vmatpush.msra.mxu0 0.0
        %1507 = vmatpush.msra.mxu0 0.0
        %1508 = vmatpush.msra.mxu0 0.0
        %1509 = vmatpush.msra.mxu0 %v1489
        %1510 = vmatmul.f32.gmra.mxu0 %v1492
        %v1511 = vpop.f32.mrf.mxu0
        %v1512 = vadd.f32 0.0, %v1511
        %1513 = vdwg.mxu0
        %s1514 = scalar_lea.vmem %s14, 8
        %v1515 = vld [vmem:[%s1514] sm:$0xff]
        %v1517 = vsel %vm909, %v1512, 0
        %1519 = vmatpush.msra.mxu0 0.0
        %1520 = vmatpush.msra.mxu0 0.0
        %1521 = vmatpush.msra.mxu0 0.0
        %1522 = vmatpush.msra.mxu0 0.0
        %1523 = vmatpush.msra.mxu0 0.0
        %1524 = vmatpush.msra.mxu0 0.0
        %1525 = vmatpush.msra.mxu0 0.0
        %1526 = vmatpush.msra.mxu0 0.0
        %1527 = vmatpush.msra.mxu0 0.0
        %1528 = vmatpush.msra.mxu0 0.0
        %1529 = vmatpush.msra.mxu0 0.0
        %1530 = vmatpush.msra.mxu0 0.0
        %1531 = vmatpush.msra.mxu0 0.0
        %1532 = vmatpush.msra.mxu0 0.0
        %1533 = vmatpush.msra.mxu0 0.0
        %1534 = vmatpush.msra.mxu0 %v1515
        %1535 = vmatmul.f32.gmra.mxu0 %v1517
        %v1536 = vpop.f32.mrf.mxu0
        %v1537 = vadd.f32 0.0, %v1536
        %1538 = vdwg.mxu0
        %v1540 = vsel %vm909, %v1445, 0
        %1542 = vmatpush.msra.mxu0 0.0
        %1543 = vmatpush.msra.mxu0 0.0
        %1544 = vmatpush.msra.mxu0 0.0
        %1545 = vmatpush.msra.mxu0 0.0
        %1546 = vmatpush.msra.mxu0 0.0
        %1547 = vmatpush.msra.mxu0 0.0
        %1548 = vmatpush.msra.mxu0 0.0
        %1549 = vmatpush.msra.mxu0 0.0
        %1550 = vmatpush.msra.mxu0 0.0
        %1551 = vmatpush.msra.mxu0 0.0
        %1552 = vmatpush.msra.mxu0 0.0
        %1553 = vmatpush.msra.mxu0 0.0
        %1554 = vmatpush.msra.mxu0 0.0
        %1555 = vmatpush.msra.mxu0 0.0
        %1556 = vmatpush.msra.mxu0 0.0
        %1557 = vmatpush.msra.mxu0 %v1447
        %1558 = vmatmul.f32.gmra.mxu0 %v1540
        %v1559 = vpop.f32.mrf.mxu0
        %v1560 = vadd.f32 %v1537, %v1559
        %1561 = vdwg.mxu0
        %1562 = vrot.lane.b32.xlu0 %v1345, 112
        %v1563 = vpop.permute.xlu0 %1562
        %1564 = vrot.lane.b32.xlu0 %v1376, 112
        %v1565 = vpop.permute.xlu0 %1564
        %v1566 = vsel %vm909, %v1563, 0
        %v1568 = vsel %vm909, %v1565, 0
        %1570 = vmatpush.xpose.msra.mxu0 0.0
        %1571 = vmatpush.xpose.msra.mxu0 0.0
        %1572 = vmatpush.xpose.msra.mxu0 0.0
        %1573 = vmatpush.xpose.msra.mxu0 0.0
        %1574 = vmatpush.xpose.msra.mxu0 0.0
        %1575 = vmatpush.xpose.msra.mxu0 0.0
        %1576 = vmatpush.xpose.msra.mxu0 0.0
        %1577 = vmatpush.xpose.msra.mxu0 0.0
        %1578 = vmatpush.xpose.msra.mxu0 0.0
        %1579 = vmatpush.xpose.msra.mxu0 0.0
        %1580 = vmatpush.xpose.msra.mxu0 0.0
        %1581 = vmatpush.xpose.msra.mxu0 0.0
        %1582 = vmatpush.xpose.msra.mxu0 0.0
        %1583 = vmatpush.xpose.msra.mxu0 0.0
        %1584 = vmatpush.xpose.msra.mxu0 0.0
        %1585 = vmatpush.xpose.msra.mxu0 %v1568
        %1586 = vmatmul.f32.gmra.mxu0 %v1566
        %v1587 = vpop.f32.mrf.mxu0
        %v1588 = vadd.f32 0.0, %v1587
        %1589 = vdwg.mxu0
        %v1590 = vsel %vm1408, %v1588, -1e+09
        %v1591 = vsel %vm909, %v1590, -inf
        %1592 = vmax.xlane.f32.xlu0 %v1591
        %v1593 = vpop.xlane.xlu0 %1592
        %v1594 = vsub.f32 %v1590, %v1593
        %v1595 = vmul.f32 %v1594, 1.442695
        %v1596 = vpow.pop %v1595
        %v1597 = vsel %vm909, %v1596, 0.0
        %1598 = vadd.xlane.f32.xlu0 %v1597
        %v1599 = vpop.xlane.xlu0 %1598
        %v1600 = vrcp.pop %v1599
        %v1601 = vmul.f32 %v1596, %v1600
        %1602 = vrot.lane.b32.xlu0 %v1376, 80
        %v1603 = vpop.permute.xlu0 %1602
        %v1606 = vsel %vm909, %v1601, 0
        %1608 = vmatpush.msra.mxu0 0.0
        %1609 = vmatpush.msra.mxu0 0.0
        %1610 = vmatpush.msra.mxu0 0.0
        %1611 = vmatpush.msra.mxu0 0.0
        %1612 = vmatpush.msra.mxu0 0.0
        %1613 = vmatpush.msra.mxu0 0.0
        %1614 = vmatpush.msra.mxu0 0.0
        %1615 = vmatpush.msra.mxu0 0.0
        %1616 = vmatpush.msra.mxu0 0.0
        %1617 = vmatpush.msra.mxu0 0.0
        %1618 = vmatpush.msra.mxu0 0.0
        %1619 = vmatpush.msra.mxu0 0.0
        %1620 = vmatpush.msra.mxu0 0.0
        %1621 = vmatpush.msra.mxu0 0.0
        %1622 = vmatpush.msra.mxu0 0.0
        %1623 = vmatpush.msra.mxu0 %v1603
        %1624 = vmatmul.f32.gmra.mxu0 %v1606
        %v1625 = vpop.f32.mrf.mxu0
        %v1626 = vadd.f32 0.0, %v1625
        %1627 = vdwg.mxu0
        %s1628 = scalar_lea.vmem %s14, 16
        %v1629 = vld [vmem:[%s1628] sm:$0xff]
        %v1631 = vsel %vm909, %v1626, 0
        %1633 = vmatpush.msra.mxu0 0.0
        %1634 = vmatpush.msra.mxu0 0.0
        %1635 = vmatpush.msra.mxu0 0.0
        %1636 = vmatpush.msra.mxu0 0.0
        %1637 = vmatpush.msra.mxu0 0.0
        %1638 = vmatpush.msra.mxu0 0.0
        %1639 = vmatpush.msra.mxu0 0.0
        %1640 = vmatpush.msra.mxu0 0.0
        %1641 = vmatpush.msra.mxu0 0.0
        %1642 = vmatpush.msra.mxu0 0.0
        %1643 = vmatpush.msra.mxu0 0.0
        %1644 = vmatpush.msra.mxu0 0.0
        %1645 = vmatpush.msra.mxu0 0.0
        %1646 = vmatpush.msra.mxu0 0.0
        %1647 = vmatpush.msra.mxu0 0.0
        %1648 = vmatpush.msra.mxu0 %v1629
        %1649 = vmatmul.f32.gmra.mxu0 %v1631
        %v1650 = vpop.f32.mrf.mxu0
        %v1651 = vadd.f32 0.0, %v1650
        %1652 = vdwg.mxu0
        %v1653 = vadd.f32 %v1560, %v1651
        %1654 = vrot.lane.b32.xlu0 %v1345, 104
        %v1655 = vpop.permute.xlu0 %1654
        %1656 = vrot.lane.b32.xlu0 %v1376, 104
        %v1657 = vpop.permute.xlu0 %1656
        %v1658 = vsel %vm909, %v1655, 0
        %v1660 = vsel %vm909, %v1657, 0
        %1662 = vmatpush.xpose.msra.mxu0 0.0
        %1663 = vmatpush.xpose.msra.mxu0 0.0
        %1664 = vmatpush.xpose.msra.mxu0 0.0
        %1665 = vmatpush.xpose.msra.mxu0 0.0
        %1666 = vmatpush.xpose.msra.mxu0 0.0
        %1667 = vmatpush.xpose.msra.mxu0 0.0
        %1668 = vmatpush.xpose.msra.mxu0 0.0
        %1669 = vmatpush.xpose.msra.mxu0 0.0
        %1670 = vmatpush.xpose.msra.mxu0 0.0
        %1671 = vmatpush.xpose.msra.mxu0 0.0
        %1672 = vmatpush.xpose.msra.mxu0 0.0
        %1673 = vmatpush.xpose.msra.mxu0 0.0
        %1674 = vmatpush.xpose.msra.mxu0 0.0
        %1675 = vmatpush.xpose.msra.mxu0 0.0
        %1676 = vmatpush.xpose.msra.mxu0 0.0
        %1677 = vmatpush.xpose.msra.mxu0 %v1660
        %1678 = vmatmul.f32.gmra.mxu0 %v1658
        %v1679 = vpop.f32.mrf.mxu0
        %v1680 = vadd.f32 0.0, %v1679
        %1681 = vdwg.mxu0
        %v1682 = vsel %vm1408, %v1680, -1e+09
        %v1683 = vsel %vm909, %v1682, -inf
        %1684 = vmax.xlane.f32.xlu0 %v1683
        %v1685 = vpop.xlane.xlu0 %1684
        %v1686 = vsub.f32 %v1682, %v1685
        %v1687 = vmul.f32 %v1686, 1.442695
        %v1688 = vpow.pop %v1687
        %v1689 = vsel %vm909, %v1688, 0.0
        %1690 = vadd.xlane.f32.xlu0 %v1689
        %v1691 = vpop.xlane.xlu0 %1690
        %v1692 = vrcp.pop %v1691
        %v1693 = vmul.f32 %v1688, %v1692
        %1694 = vrot.lane.b32.xlu0 %v1376, 72
        %v1695 = vpop.permute.xlu0 %1694
        %v1698 = vsel %vm909, %v1693, 0
        %1700 = vmatpush.msra.mxu0 0.0
        %1701 = vmatpush.msra.mxu0 0.0
        %1702 = vmatpush.msra.mxu0 0.0
        %1703 = vmatpush.msra.mxu0 0.0
        %1704 = vmatpush.msra.mxu0 0.0
        %1705 = vmatpush.msra.mxu0 0.0
        %1706 = vmatpush.msra.mxu0 0.0
        %1707 = vmatpush.msra.mxu0 0.0
        %1708 = vmatpush.msra.mxu0 0.0
        %1709 = vmatpush.msra.mxu0 0.0
        %1710 = vmatpush.msra.mxu0 0.0
        %1711 = vmatpush.msra.mxu0 0.0
        %1712 = vmatpush.msra.mxu0 0.0
        %1713 = vmatpush.msra.mxu0 0.0
        %1714 = vmatpush.msra.mxu0 0.0
        %1715 = vmatpush.msra.mxu0 %v1695
        %1716 = vmatmul.f32.gmra.mxu0 %v1698
        %v1717 = vpop.f32.mrf.mxu0
        %v1718 = vadd.f32 0.0, %v1717
        %1719 = vdwg.mxu0
        %s1720 = scalar_lea.vmem %s14, 24
        %v1721 = vld [vmem:[%s1720] sm:$0xff]
        %v1723 = vsel %vm909, %v1718, 0
        %1725 = vmatpush.msra.mxu0 0.0
        %1726 = vmatpush.msra.mxu0 0.0
        %1727 = vmatpush.msra.mxu0 0.0
        %1728 = vmatpush.msra.mxu0 0.0
        %1729 = vmatpush.msra.mxu0 0.0
        %1730 = vmatpush.msra.mxu0 0.0
        %1731 = vmatpush.msra.mxu0 0.0
        %1732 = vmatpush.msra.mxu0 0.0
        %1733 = vmatpush.msra.mxu0 0.0
        %1734 = vmatpush.msra.mxu0 0.0
        %1735 = vmatpush.msra.mxu0 0.0
        %1736 = vmatpush.msra.mxu0 0.0
        %1737 = vmatpush.msra.mxu0 0.0
        %1738 = vmatpush.msra.mxu0 0.0
        %1739 = vmatpush.msra.mxu0 0.0
        %1740 = vmatpush.msra.mxu0 %v1721
        %1741 = vmatmul.f32.gmra.mxu0 %v1723
        %v1742 = vpop.f32.mrf.mxu0
        %v1743 = vadd.f32 0.0, %v1742
        %1744 = vdwg.mxu0
        %v1745 = vadd.f32 %v1653, %v1743
        %v1747 = vperm.slane %v1378, 0
        %v1749 = vadd.f32 %v1745, %v1747
        %v1750 = vld [vmem:[#allocation2] sm:$0x1]
        %v1751 = vld [vmem:[#allocation4] sm:$0x1]
        %v1752 = vadd.f32 %v1315, %v1749
        %v1753 = vsel %vm881, %v1752, 0.0
        %1754 = vadd.xlane.f32.xlu0 %v1753
        %v1755 = vpop.xlane.xlu0 %1754
        %v1756 = vmul.f32 %v1755, %v1288
        %v1757 = vsub.f32 %v1752, %v1756
        %v1758 = vmul.f32 %v1757, %v1757
        %v1759 = vsel %vm881, %v1758, 0.0
        %1760 = vadd.xlane.f32.xlu0 %v1759
        %v1761 = vpop.xlane.xlu0 %1760
        %v1762 = vmul.f32 %v1761, %v1288
        %v1763 = vadd.f32 %v1762, 1e-05
        %v1764 = vrsqrt.pop %v1763
        %v1765 = vmul.f32 %v1764, %v1763
        %v1766 = vmul.f32 %v1765, %v1764
        %v1767 = vmul.f32 0.5, %v1766
        %v1768 = vsub.f32 1.5, %v1767
        %v1769 = vmul.f32 %v1764, %v1768
        %vm1770 = vweird.f32 %v1763
        %vm1771 = vweird.f32 %v1764
        %vm1772 = vmor %vm1770, %vm1771
        %v1773 = vsel %vm1772, %v1764, %v1769
        %v1774 = vmul.f32 %v1757, %v1773
        %v1776 = vperm.slane %v1750, 0
        %v1778 = vmul.f32 %v1774, %v1776
        %v1780 = vperm.slane %v1751, 0
        %v1782 = vadd.f32 %v1778, %v1780
        %v1783 = vld [vmem:[%s18] sm:$0xff]
        %v1784 = vld [vmem:[%s18 + $0x8] sm:$0xff]
        %v1785 = vld [vmem:[%s18 + $0x10] sm:$0xff]
        %v1786 = vld [vmem:[%s18 + $0x18] sm:$0xff]
        %v1787 = vld [vmem:[#allocation6] sm:$0x1]
        %v1788 = vld [vmem:[%s20] sm:$0xff]
        %v1789 = vld [vmem:[%s20 + $0x8] sm:$0xff]
        %v1790 = vld [vmem:[%s20 + $0x10] sm:$0xff]
        %v1791 = vld [vmem:[%s20 + $0x18] sm:$0xff]
        %v1792 = vld [vmem:[%s20 + $0x20] sm:$0xff]
        %v1793 = vld [vmem:[%s20 + $0x28] sm:$0xff]
        %v1794 = vld [vmem:[%s20 + $0x30] sm:$0xff]
        %v1795 = vld [vmem:[%s20 + $0x38] sm:$0xff]
        %v1796 = vld [vmem:[#allocation7] sm:$0x1]
        %v1798 = vperm.slane %v1787, 0
        %v1801 = vsel %vm881, %v1782, 0
        %1803 = vmatpush.msra.mxu0 0.0
        %1804 = vmatpush.msra.mxu0 0.0
        %1805 = vmatpush.msra.mxu0 0.0
        %1806 = vmatpush.msra.mxu0 0.0
        %1807 = vmatpush.msra.mxu0 0.0
        %1808 = vmatpush.msra.mxu0 0.0
        %1809 = vmatpush.msra.mxu0 0.0
        %1810 = vmatpush.msra.mxu0 0.0
        %1811 = vmatpush.msra.mxu0 0.0
        %1812 = vmatpush.msra.mxu0 0.0
        %1813 = vmatpush.msra.mxu0 0.0
        %1814 = vmatpush.msra.mxu0 0.0
        %1815 = vmatpush.msra.mxu0 %v1786
        %1816 = vmatpush.msra.mxu0 %v1785
        %1817 = vmatpush.msra.mxu0 %v1784
        %1818 = vmatpush.msra.mxu0 %v1783
        %1819 = vmatmul.f32.gmra.mxu0 %v1801
        %v1820 = vpop.f32.mrf.mxu0
        %v1821 = vadd.f32 %v1798, %v1820
        %1822 = vdwg.mxu0
        %v1823 = vmax.f32 %v1821, 0.0
        %v1825 = vperm.slane %v1796, 0
        %vm1827 = vcmask 523264
        %v1829 = vsel %vm1827, %v1823, 0
        %1831 = vmatpush.msra.mxu0 0.0
        %1832 = vmatpush.msra.mxu0 0.0
        %1833 = vmatpush.msra.mxu0 0.0
        %1834 = vmatpush.msra.mxu0 0.0
        %1835 = vmatpush.msra.mxu0 0.0
        %1836 = vmatpush.msra.mxu0 0.0
        %1837 = vmatpush.msra.mxu0 0.0
        %1838 = vmatpush.msra.mxu0 0.0
        %1839 = vmatpush.msra.mxu0 %v1795
        %1840 = vmatpush.msra.mxu0 %v1794
        %1841 = vmatpush.msra.mxu0 %v1793
        %1842 = vmatpush.msra.mxu0 %v1792
        %1843 = vmatpush.msra.mxu0 %v1791
        %1844 = vmatpush.msra.mxu0 %v1790
        %1845 = vmatpush.msra.mxu0 %v1789
        %1846 = vmatpush.msra.mxu0 %v1788
        %1847 = vmatmul.f32.gmra.mxu0 %v1829
        %v1848 = vpop.f32.mrf.mxu0
        %v1849 = vadd.f32 %v1825, %v1848
        %1850 = vdwg.mxu0
        %v1851 = vld [vmem:[#allocation9] sm:$0x1]
        %v1852 = vld [vmem:[#allocation10] sm:$0x1]
        %v1853 = vadd.f32 %v1782, %v1849
        %v1854 = vsel %vm881, %v1853, 0.0
        %1855 = vadd.xlane.f32.xlu0 %v1854
        %v1856 = vpop.xlane.xlu0 %1855
        %v1857 = vmul.f32 %v1856, %v1288
        %v1858 = vsub.f32 %v1853, %v1857
        %v1859 = vmul.f32 %v1858, %v1858
        %v1860 = vsel %vm881, %v1859, 0.0
        %1861 = vadd.xlane.f32.xlu0 %v1860
        %v1862 = vpop.xlane.xlu0 %1861
        %v1863 = vmul.f32 %v1862, %v1288
        %v1864 = vadd.f32 %v1863, 1e-05
        %v1865 = vrsqrt.pop %v1864
        %v1866 = vmul.f32 %v1865, %v1864
        %v1867 = vmul.f32 %v1866, %v1865
        %v1868 = vmul.f32 0.5, %v1867
        %v1869 = vsub.f32 1.5, %v1868
        %v1870 = vmul.f32 %v1865, %v1869
        %vm1871 = vweird.f32 %v1864
        %vm1872 = vweird.f32 %v1865
        %vm1873 = vmor %vm1871, %vm1872
        %v1874 = vsel %vm1873, %v1865, %v1870
        %v1875 = vmul.f32 %v1858, %v1874
        %v1877 = vperm.slane %v1851, 0
        %v1879 = vmul.f32 %v1875, %v1877
        %v1881 = vperm.slane %v1852, 0
        %v1883 = vadd.f32 %v1879, %v1881
        %1884 = vst.msk [vmem:[%s868] sm:$0xff] %vm881, %v1883
        %p1885 = scmp.lt.s32.totalorder %s39, 1
        %s1886 = scalar_select %p1885, %s39, 1
        %s1887 = smul.addr %s1886, 8
        %s1888 = scalar_lea.vmem %s24, %s1887
        // Predicated region
        $region141: #{transformer_forward.7} parent=115 // pred_check
          %p1889 = pneg %p581
        $region142: #{transformer_forward.7} parent=115 // pred_check_branch
          %1891 = sbr.rel (%p1889) target = $region144
        $region143: #{transformer_forward.7} parent=115 // pred_region
          _
        $region144: #{transformer_forward.7} parent=115 // pred_fallthru
          _
      $region116: #{transformer_forward.7} parent=5 // pred_fallthru
        _
      %p1892 = scmp.le.s32.totalorder 2, %s34
      // Predicated region
      $region145: #{transformer_forward.7} parent=5 // pred_check
        %p1893 = pneg %p1892
      $region146: #{transformer_forward.7} parent=5 // pred_check_branch
        %1895 = sbr.rel (%p1893) target = $region148
      $region147: #{transformer_forward.7} parent=5 // pred_region
        %s1896 = ssub.s32 %s34, 2
        // Predicated region
        $region149: #{transformer_forward.7} parent=147 // pred_check
          %p1897 = pneg %p587
        $region150: #{transformer_forward.7} parent=147 // pred_check_branch
          %1899 = sbr.rel (%p1897) target = $region152
        $region151: #{transformer_forward.7} parent=147 // pred_region
          %p1900 = scmp.lt.s32.totalorder %s40, 1
          %s1901 = scalar_select %p1900, %s40, 1
          %s1902 = smul.addr %s1901, 8
          %s1903 = scalar_lea.vmem %s24, %s1902
        $region152: #{transformer_forward.7} parent=147 // pred_fallthru
          _
      $region148: #{transformer_forward.7} parent=5 // pred_fallthru
        _
    $region6: #{transformer_forward.7} parent=1 // loop_footer
      %s38 = sadd.s32 1, %s34
    $region7: #{transformer_forward.7} parent=1 // loop_footer_branch
      %33 = sbr.rel target = $region3
    $region8: #{transformer_forward.7} parent=1 // loop_exit
      _
    %1904 = vsyncpa [#allocation3], 1
    %s1905 = scalar_lea.sflag [#allocation3], 1
    %1906 = vsyncpa %s1905, 1
    %1907 = vsyncpa [#allocation5], 1
    %1908 = vsyncpa [#allocation8], 1
    %1909 = vsyncpa [#allocation11], 1

</llo_original>
